<compile_context>
chip_gen: v7x
topology: tpu7x:2x2x1
jax: 0.10.0
libtpu: 0.0.40
codegen_flags: <defaults>
</compile_context>

<pallas_src>
import functools
import math

import jax
import jax.numpy as jnp
from jax.experimental import pallas as pl
from jax.experimental.pallas import tpu as pltpu

# Small-but-aligned BERT config: hidden and seq are lane friendly and
# head_dim = hidden // heads = 128 (so every per-head slice is 128-lane aligned).
_CONFIG = dict(
    vocab_size=1000,
    hidden=256,
    layers=2,
    heads=2,
    intermediate=1024,
    max_position=128,
    type_vocab=2,
    ln_eps=1e-12,
)


# ----------------------------------------------------------------------------
# Shared in-kernel LayerNorm (f32 statistics)
# ----------------------------------------------------------------------------


def _layernorm(x, g, b, eps):
    mu = jnp.mean(x, axis=-1, keepdims=True)
    xc = x - mu
    var = jnp.mean(xc * xc, axis=-1, keepdims=True)
    return xc * jax.lax.rsqrt(var + eps) * g + b


# ----------------------------------------------------------------------------
# Embeddings: word + position + token-type + LayerNorm (one kernel)
# ----------------------------------------------------------------------------


def _embed_ln_kernel(word_ref, pos_ref, type_ref, g_ref, b_ref, o_ref, *, eps):
    x = word_ref[...] + pos_ref[...] + type_ref[...]          # (S, H) f32
    o_ref[...] = _layernorm(x, g_ref[...], b_ref[...], eps).astype(o_ref.dtype)


def embed_layernorm(word, pos, type_row, gamma, beta, eps):
    B, S, H = word.shape
    return pl.pallas_call(
        functools.partial(_embed_ln_kernel, eps=eps),
        out_shape=jax.ShapeDtypeStruct((B, S, H), jnp.bfloat16),
        grid=(B,),
        in_specs=[pl.BlockSpec((None, S, H), lambda b: (b, 0, 0)),
                  pl.BlockSpec((S, H), lambda b: (0, 0)),
                  pl.BlockSpec((1, H), lambda b: (0, 0)),
                  pl.BlockSpec((1, H), lambda b: (0, 0)),
                  pl.BlockSpec((1, H), lambda b: (0, 0))],
        out_specs=pl.BlockSpec((None, S, H), lambda b: (b, 0, 0)),
        compiler_params=pltpu.CompilerParams(dimension_semantics=("parallel",)),
    )(word, pos, type_row, gamma, beta)


# ----------------------------------------------------------------------------
# Fused attention block: QKV GEMM + softmax(QK^T/sqrt(d) + mask) V
#                       + output projection + residual + LayerNorm
# One grid step per batch element; head split/merge is done in-kernel on
# 128-lane-aligned slices of the packed QKV weight / output-proj weight.
# ----------------------------------------------------------------------------


def _attn_block_kernel(x_ref, wqkv_ref, bqkv_ref, wo_ref, bo_ref,
                       g_ref, b_ref, mask_ref, o_ref, *, nh, eps):
    x = x_ref[...]                                            # (S, H) bf16
    S, H = x.shape
    hd = H // nh
    scale = 1.0 / math.sqrt(hd)
    mask = mask_ref[...]                                      # (1, S) f32 additive bias
    attn = x.astype(jnp.float32) + bo_ref[...]                # residual + out-proj bias

    for h in range(nh):                                       # static, small head count
        qo, ko, vo = h * hd, H + h * hd, 2 * H + h * hd
        q = (jnp.dot(x, wqkv_ref[:, qo:qo + hd],
                     preferred_element_type=jnp.float32) + bqkv_ref[:, qo:qo + hd]) * scale
        k = (jnp.dot(x, wqkv_ref[:, ko:ko + hd],
                     preferred_element_type=jnp.float32) + bqkv_ref[:, ko:ko + hd])
        v = (jnp.dot(x, wqkv_ref[:, vo:vo + hd],
                     preferred_element_type=jnp.float32) + bqkv_ref[:, vo:vo + hd])
        s = jax.lax.dot_general(q.astype(jnp.bfloat16), k.astype(jnp.bfloat16),
                                (((1,), (1,)), ((), ())),
                                preferred_element_type=jnp.float32)        # (S, S)
        s = s + mask
        m = jnp.max(s, axis=-1, keepdims=True)
        p = jnp.exp(s - m)
        p = p / jnp.sum(p, axis=-1, keepdims=True)            # exact normalisation
        ctx = jnp.dot(p.astype(jnp.bfloat16), v.astype(jnp.bfloat16),
                      preferred_element_type=jnp.float32)                   # (S, hd)
        attn = attn + jnp.dot(ctx.astype(jnp.bfloat16),
                              wo_ref[h * hd:(h + 1) * hd, :],
                              preferred_element_type=jnp.float32)           # (S, H)

    o_ref[...] = _layernorm(attn, g_ref[...], b_ref[...], eps).astype(o_ref.dtype)


def attention_block(x, p, mask_bias, nh, eps):
    B, S, H = x.shape
    return pl.pallas_call(
        functools.partial(_attn_block_kernel, nh=nh, eps=eps),
        out_shape=jax.ShapeDtypeStruct((B, S, H), jnp.bfloat16),
        grid=(B,),
        in_specs=[pl.BlockSpec((None, S, H), lambda b: (b, 0, 0)),
                  pl.BlockSpec((H, 3 * H), lambda b: (0, 0)),
                  pl.BlockSpec((1, 3 * H), lambda b: (0, 0)),
                  pl.BlockSpec((H, H), lambda b: (0, 0)),
                  pl.BlockSpec((1, H), lambda b: (0, 0)),
                  pl.BlockSpec((1, H), lambda b: (0, 0)),
                  pl.BlockSpec((1, H), lambda b: (0, 0)),
                  pl.BlockSpec((None, 1, S), lambda b: (b, 0, 0))],
        out_specs=pl.BlockSpec((None, S, H), lambda b: (b, 0, 0)),
        compiler_params=pltpu.CompilerParams(dimension_semantics=("parallel",)),
    )(x, p["w_qkv"], p["b_qkv"], p["w_o"], p["b_o"],
      p["ln1_g"], p["ln1_b"], mask_bias)


# ----------------------------------------------------------------------------
# Fused FFN block: up-proj + GELU + down-proj + residual + LayerNorm.
# The intermediate dim is processed in 128-lane-aligned chunks so live values
# stay small (no big f32 intermediate spilling out of vregs).
# ----------------------------------------------------------------------------


def _ffn_block_kernel(x_ref, wi_ref, bi_ref, wf_ref, bf_ref,
                      g_ref, b_ref, o_ref, *, eps, chunk):
    x = x_ref[...]                                            # (S, H) bf16
    I = wi_ref.shape[1]
    out = x.astype(jnp.float32) + bf_ref[...]                 # residual + down-proj bias
    for c in range(0, I, chunk):                              # static chunk loop
        h = jnp.dot(x, wi_ref[:, c:c + chunk],
                    preferred_element_type=jnp.float32) + bi_ref[:, c:c + chunk]
        h = jax.nn.gelu(h, approximate=True).astype(jnp.bfloat16)
        out = out + jnp.dot(h, wf_ref[c:c + chunk, :],
                            preferred_element_type=jnp.float32)
    o_ref[...] = _layernorm(out, g_ref[...], b_ref[...], eps).astype(o_ref.dtype)


def ffn_block(x, p, eps, chunk=256):
    B, S, H = x.shape
    I = p["w_i"].shape[1]
    chunk = min(chunk, I)
    return pl.pallas_call(
        functools.partial(_ffn_block_kernel, eps=eps, chunk=chunk),
        out_shape=jax.ShapeDtypeStruct((B, S, H), jnp.bfloat16),
        grid=(B,),
        in_specs=[pl.BlockSpec((None, S, H), lambda b: (b, 0, 0)),
                  pl.BlockSpec((H, I), lambda b: (0, 0)),
                  pl.BlockSpec((1, I), lambda b: (0, 0)),
                  pl.BlockSpec((I, H), lambda b: (0, 0)),
                  pl.BlockSpec((1, H), lambda b: (0, 0)),
                  pl.BlockSpec((1, H), lambda b: (0, 0)),
                  pl.BlockSpec((1, H), lambda b: (0, 0))],
        out_specs=pl.BlockSpec((None, S, H), lambda b: (b, 0, 0)),
        compiler_params=pltpu.CompilerParams(dimension_semantics=("parallel",)),
    )(x, p["w_i"], p["b_i"], p["w_f"], p["b_f"], p["ln2_g"], p["ln2_b"])


# ----------------------------------------------------------------------------
# Parameter construction (deterministic synthetic init, BERT-style)
# ----------------------------------------------------------------------------


def make_bert_params(key, cfg):
    counter = [0]

    def nk():
        counter[0] += 1
        return jax.random.fold_in(key, counter[0])

    H, I = cfg["hidden"], cfg["intermediate"]
    std = 0.02

    params = {
        "word_emb": jax.random.normal(nk(), (cfg["vocab_size"], H), jnp.float32) * std,
        "pos_emb": jax.random.normal(nk(), (cfg["max_position"], H), jnp.float32) * std,
        "type_emb": jax.random.normal(nk(), (cfg["type_vocab"], H), jnp.float32) * std,
        "emb_ln_g": jnp.ones((1, H), jnp.float32),
        "emb_ln_b": jnp.zeros((1, H), jnp.float32),
        "layers": [],
    }
    for _ in range(cfg["layers"]):
        lp = {
            "w_qkv": (jax.random.normal(nk(), (H, 3 * H), jnp.float32) * std).astype(jnp.bfloat16),
            "b_qkv": jnp.zeros((1, 3 * H), jnp.float32),
            "w_o": (jax.random.normal(nk(), (H, H), jnp.float32) * std).astype(jnp.bfloat16),
            "b_o": jnp.zeros((1, H), jnp.float32),
            "ln1_g": jnp.ones((1, H), jnp.float32),
            "ln1_b": jnp.zeros((1, H), jnp.float32),
            "w_i": (jax.random.normal(nk(), (H, I), jnp.float32) * std).astype(jnp.bfloat16),
            "b_i": jnp.zeros((1, I), jnp.float32),
            "w_f": (jax.random.normal(nk(), (I, H), jnp.float32) * std).astype(jnp.bfloat16),
            "b_f": jnp.zeros((1, H), jnp.float32),
            "ln2_g": jnp.ones((1, H), jnp.float32),
            "ln2_b": jnp.zeros((1, H), jnp.float32),
        }
        params["layers"].append(lp)
    return params


# ----------------------------------------------------------------------------
# Forward pass (== Bert.forward for the non-distilbert branch)
# ----------------------------------------------------------------------------


def bert_forward(params, input_ids, mask, *, all_emb=False, cfg=_CONFIG):
    B, S = input_ids.shape
    H = cfg["hidden"]

    # Token embedding gather in XLA, then word+pos+type+LayerNorm in one kernel.
    word = jnp.take(params["word_emb"], input_ids, axis=0)          # (B, S, H) f32
    x = embed_layernorm(word, params["pos_emb"][:S], params["type_emb"][:1],
                        params["emb_ln_g"], params["emb_ln_b"], cfg["ln_eps"])

    # Extended attention mask: 0 for valid tokens, large negative for padding.
    mask_bias = ((1.0 - mask.astype(jnp.float32)) * -1e9).reshape(B, 1, S)

    for lp in params["layers"]:
        x = attention_block(x, lp, mask_bias, cfg["heads"], cfg["ln_eps"])
        x = ffn_block(x, lp, cfg["ln_eps"])

    hidden = x.astype(jnp.float32)                                   # (B, S, H)
    if all_emb:
        return hidden[:, :]          # all token embeddings (B, S, H)
    return hidden[:, 0]              # CLS embedding (B, H)


# ----------------------------------------------------------------------------


if __name__ == "__main__":
    # hparams mirroring the PyTorch wrapper (non-distilbert branch).
    hparams = {"model": "bert-base-uncased", "b_drop": 0.1,
               "freeze_emb": True, "freeze": 2, "all_emb": False}

    key = jax.random.PRNGKey(0)
    pkey, ikey = jax.random.split(key)

    params = make_bert_params(pkey, _CONFIG)

    B, S = 2, _CONFIG["max_position"]
    input_ids = jax.random.randint(ikey, (B, S), 0, _CONFIG["vocab_size"],
                                   dtype=jnp.int32)
    lengths = jnp.array([S, S - 32], jnp.int32)
    mask = (jnp.arange(S)[None, :] < lengths[:, None]).astype(jnp.int32)

    forward = jax.jit(functools.partial(bert_forward, all_emb=hparams["all_emb"]))
    out = jax.block_until_ready(forward(params, input_ids, mask))

    assert out.shape == (B, _CONFIG["hidden"]), out.shape
    assert out.dtype == jnp.float32, out.dtype
    assert bool(jnp.all(jnp.isfinite(out))), "non-finite output"
    print("KERNEL_OK")
</pallas_src>

<mosaic_0001>
module attributes {stable_mosaic.version = 11 : i64} {
  func.func @_embed_ln_kernel(%arg0: i32, %arg1: memref<1x128x256xf32, #tpu.memory_space<vmem>>, %arg2: memref<128x256xf32, #tpu.memory_space<vmem>>, %arg3: memref<1x256xf32, #tpu.memory_space<vmem>>, %arg4: memref<1x256xf32, #tpu.memory_space<vmem>>, %arg5: memref<1x256xf32, #tpu.memory_space<vmem>>, %arg6: memref<1x128x256xbf16, #tpu.memory_space<vmem>>) attributes {dimension_semantics = [#tpu.dimension_semantics<parallel>], iteration_bounds = array<i64: 2>, scalar_prefetch = 0 : i64, scratch_operands = 0 : i64, tpu.core_type = #tpu.core_type<tc>, window_params = [{transform_indices = @transform_0, window_bounds = array<i64: 1, 128, 256>}, {pipeline_mode = #tpu.pipeline_mode<synchronous>, transform_indices = @transform_1, window_bounds = array<i64: 128, 256>}, {pipeline_mode = #tpu.pipeline_mode<synchronous>, transform_indices = @transform_2, window_bounds = array<i64: 1, 256>}, {pipeline_mode = #tpu.pipeline_mode<synchronous>, transform_indices = @transform_3, window_bounds = array<i64: 1, 256>}, {pipeline_mode = #tpu.pipeline_mode<synchronous>, transform_indices = @transform_4, window_bounds = array<i64: 1, 256>}, {transform_indices = @transform_5, window_bounds = array<i64: 1, 128, 256>}]} {
    %c0 = arith.constant 0 : index
    %c0_0 = arith.constant 0 : index
    %c0_1 = arith.constant 0 : index
    %0 = vector.load %arg1[%c0, %c0_0, %c0_1] : memref<1x128x256xf32, #tpu.memory_space<vmem>>, vector<1x128x256xf32>
    %1 = vector.shape_cast %0 : vector<1x128x256xf32> to vector<128x256xf32>
    %c0_2 = arith.constant 0 : index
    %c0_3 = arith.constant 0 : index
    %2 = vector.load %arg2[%c0_2, %c0_3] : memref<128x256xf32, #tpu.memory_space<vmem>>, vector<128x256xf32>
    %3 = arith.addf %1, %2 : vector<128x256xf32>
    %c0_4 = arith.constant 0 : index
    %c0_5 = arith.constant 0 : index
    %4 = vector.load %arg3[%c0_4, %c0_5] : memref<1x256xf32, #tpu.memory_space<vmem>>, vector<1x256xf32>
    %5 = vector.broadcast %4 : vector<1x256xf32> to vector<128x256xf32>
    %6 = arith.addf %3, %5 : vector<128x256xf32>
    %c0_6 = arith.constant 0 : index
    %c0_7 = arith.constant 0 : index
    %7 = vector.load %arg4[%c0_6, %c0_7] : memref<1x256xf32, #tpu.memory_space<vmem>>, vector<1x256xf32>
    %c0_8 = arith.constant 0 : index
    %c0_9 = arith.constant 0 : index
    %8 = vector.load %arg5[%c0_8, %c0_9] : memref<1x256xf32, #tpu.memory_space<vmem>>, vector<1x256xf32>
    %cst = arith.constant dense<0.000000e+00> : vector<128xf32>
    %9 = vector.multi_reduction <add>, %6, %cst [1] : vector<128x256xf32> to vector<128xf32>
    %10 = vector.shape_cast %9 : vector<128xf32> to vector<128x1xf32>
    %cst_10 = arith.constant 2.560000e+02 : f32
    %11 = vector.broadcast %cst_10 : f32 to vector<128x1xf32>
    %12 = arith.divf %10, %11 : vector<128x1xf32>
    %13 = vector.broadcast %12 : vector<128x1xf32> to vector<128x256xf32>
    %14 = arith.subf %6, %13 : vector<128x256xf32>
    %15 = arith.mulf %14, %14 : vector<128x256xf32>
    %cst_11 = arith.constant dense<0.000000e+00> : vector<128xf32>
    %16 = vector.multi_reduction <add>, %15, %cst_11 [1] : vector<128x256xf32> to vector<128xf32>
    %17 = vector.shape_cast %16 : vector<128xf32> to vector<128x1xf32>
    %cst_12 = arith.constant 2.560000e+02 : f32
    %18 = vector.broadcast %cst_12 : f32 to vector<128x1xf32>
    %19 = arith.divf %17, %18 : vector<128x1xf32>
    %cst_13 = arith.constant 9.99999996E-13 : f32
    %20 = vector.broadcast %cst_13 : f32 to vector<128x1xf32>
    %21 = arith.addf %19, %20 : vector<128x1xf32>
    %22 = math.rsqrt %21 : vector<128x1xf32>
    %23 = vector.broadcast %22 : vector<128x1xf32> to vector<128x256xf32>
    %24 = arith.mulf %14, %23 : vector<128x256xf32>
    %25 = vector.broadcast %7 : vector<1x256xf32> to vector<128x256xf32>
    %26 = arith.mulf %24, %25 : vector<128x256xf32>
    %27 = vector.broadcast %8 : vector<1x256xf32> to vector<128x256xf32>
    %28 = arith.addf %26, %27 : vector<128x256xf32>
    %29 = arith.truncf %28 : vector<128x256xf32> to vector<128x256xbf16>
    %c0_14 = arith.constant 0 : index
    %c0_15 = arith.constant 0 : index
    %c0_16 = arith.constant 0 : index
    %30 = vector.load %arg6[%c0_14, %c0_15, %c0_16] : memref<1x128x256xbf16, #tpu.memory_space<vmem>>, vector<1x128x256xbf16>
    %31 = vector.shape_cast %30 : vector<1x128x256xbf16> to vector<128x256xbf16>
    %32 = vector.shape_cast %29 : vector<128x256xbf16> to vector<1x128x256xbf16>
    tpu.vector_store %arg6[%c0_14, %c0_15, %c0_16], %32 {strides = array<i32>} : memref<1x128x256xbf16, #tpu.memory_space<vmem>>, vector<1x128x256xbf16>,
    return
  }
  func.func @transform_0(%arg0: i32) -> (i32, i32, i32) {
    %c0_i32 = arith.constant 0 : i32
    %c0_i32_0 = arith.constant 0 : i32
    %c0_i32_1 = arith.constant 0 : i32
    return %arg0, %c0_i32, %c0_i32_0 : i32, i32, i32
  }
  func.func @transform_1(%arg0: i32) -> (i32, i32) {
    %c0_i32 = arith.constant 0 : i32
    %c0_i32_0 = arith.constant 0 : i32
    %c0_i32_1 = arith.constant 0 : i32
    return %c0_i32, %c0_i32_0 : i32, i32
  }
  func.func @transform_2(%arg0: i32) -> (i32, i32) {
    %c0_i32 = arith.constant 0 : i32
    %c0_i32_0 = arith.constant 0 : i32
    %c0_i32_1 = arith.constant 0 : i32
    return %c0_i32, %c0_i32_0 : i32, i32
  }
  func.func @transform_3(%arg0: i32) -> (i32, i32) {
    %c0_i32 = arith.constant 0 : i32
    %c0_i32_0 = arith.constant 0 : i32
    %c0_i32_1 = arith.constant 0 : i32
    return %c0_i32, %c0_i32_0 : i32, i32
  }
  func.func @transform_4(%arg0: i32) -> (i32, i32) {
    %c0_i32 = arith.constant 0 : i32
    %c0_i32_0 = arith.constant 0 : i32
    %c0_i32_1 = arith.constant 0 : i32
    return %c0_i32, %c0_i32_0 : i32, i32
  }
  func.func @transform_5(%arg0: i32) -> (i32, i32, i32) {
    %c0_i32 = arith.constant 0 : i32
    %c0_i32_0 = arith.constant 0 : i32
    %c0_i32_1 = arith.constant 0 : i32
    return %arg0, %c0_i32, %c0_i32_0 : i32, i32, i32
  }
}

module attributes {stable_mosaic.version = 11 : i64} {
  func.func @_attn_block_kernel(%arg0: i32, %arg1: memref<1x128x256xbf16, #tpu.memory_space<vmem>>, %arg2: memref<256x768xbf16, #tpu.memory_space<vmem>>, %arg3: memref<1x768xf32, #tpu.memory_space<vmem>>, %arg4: memref<256x256xbf16, #tpu.memory_space<vmem>>, %arg5: memref<1x256xf32, #tpu.memory_space<vmem>>, %arg6: memref<1x256xf32, #tpu.memory_space<vmem>>, %arg7: memref<1x256xf32, #tpu.memory_space<vmem>>, %arg8: memref<1x1x128xf32, #tpu.memory_space<vmem>>, %arg9: memref<1x128x256xbf16, #tpu.memory_space<vmem>>) attributes {dimension_semantics = [#tpu.dimension_semantics<parallel>], iteration_bounds = array<i64: 2>, scalar_prefetch = 0 : i64, scratch_operands = 0 : i64, tpu.core_type = #tpu.core_type<tc>, window_params = [{transform_indices = @transform_0, window_bounds = array<i64: 1, 128, 256>}, {pipeline_mode = #tpu.pipeline_mode<synchronous>, transform_indices = @transform_1, window_bounds = array<i64: 256, 768>}, {pipeline_mode = #tpu.pipeline_mode<synchronous>, transform_indices = @transform_2, window_bounds = array<i64: 1, 768>}, {pipeline_mode = #tpu.pipeline_mode<synchronous>, transform_indices = @transform_3, window_bounds = array<i64: 256, 256>}, {pipeline_mode = #tpu.pipeline_mode<synchronous>, transform_indices = @transform_4, window_bounds = array<i64: 1, 256>}, {pipeline_mode = #tpu.pipeline_mode<synchronous>, transform_indices = @transform_5, window_bounds = array<i64: 1, 256>}, {pipeline_mode = #tpu.pipeline_mode<synchronous>, transform_indices = @transform_6, window_bounds = array<i64: 1, 256>}, {transform_indices = @transform_7, window_bounds = array<i64: 1, 1, 128>}, {transform_indices = @transform_8, window_bounds = array<i64: 1, 128, 256>}]} {
    %c0 = arith.constant 0 : index
    %c0_0 = arith.constant 0 : index
    %c0_1 = arith.constant 0 : index
    %0 = vector.load %arg1[%c0, %c0_0, %c0_1] : memref<1x128x256xbf16, #tpu.memory_space<vmem>>, vector<1x128x256xbf16>
    %1 = vector.shape_cast %0 : vector<1x128x256xbf16> to vector<128x256xbf16>
    %c0_2 = arith.constant 0 : index
    %c0_3 = arith.constant 0 : index
    %c0_4 = arith.constant 0 : index
    %2 = vector.load %arg8[%c0_2, %c0_3, %c0_4] : memref<1x1x128xf32, #tpu.memory_space<vmem>>, vector<1x1x128xf32>
    %3 = vector.shape_cast %2 : vector<1x1x128xf32> to vector<1x128xf32>
    %4 = arith.extf %1 : vector<128x256xbf16> to vector<128x256xf32>
    %c0_5 = arith.constant 0 : index
    %c0_6 = arith.constant 0 : index
    %5 = vector.load %arg5[%c0_5, %c0_6] : memref<1x256xf32, #tpu.memory_space<vmem>>, vector<1x256xf32>
    %6 = vector.broadcast %5 : vector<1x256xf32> to vector<128x256xf32>
    %7 = arith.addf %4, %6 : vector<128x256xf32>
    %c0_7 = arith.constant 0 : index
    %c0_8 = arith.constant 0 : index
    %8 = vector.load %arg2[%c0_7, %c0_8] : memref<256x768xbf16, #tpu.memory_space<vmem>>, vector<256x128xbf16>
    %cst = arith.constant dense<0.000000e+00> : vector<128x128xf32>
    %9 = tpu.matmul %1, %8, %cst {dimension_numbers = #tpu.dot_dimension_numbers<[1], [0], [0], [1], [0, 0, 1, 1], [], []>} : vector<128x256xbf16>, vector<256x128xbf16>, vector<128x128xf32> -> vector<128x128xf32>
    %c0_9 = arith.constant 0 : index
    %c0_10 = arith.constant 0 : index
    %10 = vector.load %arg3[%c0_9, %c0_10] : memref<1x768xf32, #tpu.memory_space<vmem>>, vector<1x128xf32>
    %11 = vector.broadcast %10 : vector<1x128xf32> to vector<128x128xf32>
    %12 = arith.addf %9, %11 : vector<128x128xf32>
    %cst_11 = arith.constant 0.0883883461 : f32
    %13 = vector.broadcast %cst_11 : f32 to vector<128x128xf32>
    %14 = arith.mulf %12, %13 : vector<128x128xf32>
    %c0_12 = arith.constant 0 : index
    %c256 = arith.constant 256 : index
    %15 = vector.load %arg2[%c0_12, %c256] : memref<256x768xbf16, #tpu.memory_space<vmem>>, vector<256x128xbf16>
    %cst_13 = arith.constant dense<0.000000e+00> : vector<128x128xf32>
    %16 = tpu.matmul %1, %15, %cst_13 {dimension_numbers = #tpu.dot_dimension_numbers<[1], [0], [0], [1], [0, 0, 1, 1], [], []>} : vector<128x256xbf16>, vector<256x128xbf16>, vector<128x128xf32> -> vector<128x128xf32>
    %c0_14 = arith.constant 0 : index
    %c256_15 = arith.constant 256 : index
    %17 = vector.load %arg3[%c0_14, %c256_15] : memref<1x768xf32, #tpu.memory_space<vmem>>, vector<1x128xf32>
    %18 = vector.broadcast %17 : vector<1x128xf32> to vector<128x128xf32>
    %19 = arith.addf %16, %18 : vector<128x128xf32>
    %c0_16 = arith.constant 0 : index
    %c512 = arith.constant 512 : index
    %20 = vector.load %arg2[%c0_16, %c512] : memref<256x768xbf16, #tpu.memory_space<vmem>>, vector<256x128xbf16>
    %cst_17 = arith.constant dense<0.000000e+00> : vector<128x128xf32>
    %21 = tpu.matmul %1, %20, %cst_17 {dimension_numbers = #tpu.dot_dimension_numbers<[1], [0], [0], [1], [0, 0, 1, 1], [], []>} : vector<128x256xbf16>, vector<256x128xbf16>, vector<128x128xf32> -> vector<128x128xf32>
    %c0_18 = arith.constant 0 : index
    %c512_19 = arith.constant 512 : index
    %22 = vector.load %arg3[%c0_18, %c512_19] : memref<1x768xf32, #tpu.memory_space<vmem>>, vector<1x128xf32>
    %23 = vector.broadcast %22 : vector<1x128xf32> to vector<128x128xf32>
    %24 = arith.addf %21, %23 : vector<128x128xf32>
    %25 = arith.truncf %14 : vector<128x128xf32> to vector<128x128xbf16>
    %26 = arith.truncf %19 : vector<128x128xf32> to vector<128x128xbf16>
    %cst_20 = arith.constant dense<0.000000e+00> : vector<128x128xf32>
    %27 = tpu.matmul %25, %26, %cst_20 {dimension_numbers = #tpu.dot_dimension_numbers<[1], [1], [0], [0], [0, 0, 1, 0], [], []>} : vector<128x128xbf16>, vector<128x128xbf16>, vector<128x128xf32> -> vector<128x128xf32>
    %28 = vector.broadcast %3 : vector<1x128xf32> to vector<128x128xf32>
    %29 = arith.addf %27, %28 : vector<128x128xf32>
    %cst_21 = arith.constant dense<0xFF800000> : vector<128xf32>
    %30 = vector.multi_reduction <maximumf>, %29, %cst_21 [1] : vector<128x128xf32> to vector<128xf32>
    %31 = vector.shape_cast %30 : vector<128xf32> to vector<128x1xf32>
    %32 = vector.broadcast %31 : vector<128x1xf32> to vector<128x128xf32>
    %33 = arith.subf %29, %32 : vector<128x128xf32>
    %34 = math.exp %33 : vector<128x128xf32>
    %cst_22 = arith.constant dense<0.000000e+00> : vector<128xf32>
    %35 = vector.multi_reduction <add>, %34, %cst_22 [1] : vector<128x128xf32> to vector<128xf32>
    %36 = vector.shape_cast %35 : vector<128xf32> to vector<128x1xf32>
    %37 = vector.broadcast %36 : vector<128x1xf32> to vector<128x128xf32>
    %38 = arith.divf %34, %37 : vector<128x128xf32>
    %39 = arith.truncf %38 : vector<128x128xf32> to vector<128x128xbf16>
    %40 = arith.truncf %24 : vector<128x128xf32> to vector<128x128xbf16>
    %cst_23 = arith.constant dense<0.000000e+00> : vector<128x128xf32>
    %41 = tpu.matmul %39, %40, %cst_23 {dimension_numbers = #tpu.dot_dimension_numbers<[1], [0], [0], [1], [0, 0, 1, 1], [], []>} : vector<128x128xbf16>, vector<128x128xbf16>, vector<128x128xf32> -> vector<128x128xf32>
    %42 = arith.truncf %41 : vector<128x128xf32> to vector<128x128xbf16>
    %c0_24 = arith.constant 0 : index
    %c0_25 = arith.constant 0 : index
    %43 = vector.load %arg4[%c0_24, %c0_25] : memref<256x256xbf16, #tpu.memory_space<vmem>>, vector<128x256xbf16>
    %cst_26 = arith.constant dense<0.000000e+00> : vector<128x256xf32>
    %44 = tpu.matmul %42, %43, %cst_26 {dimension_numbers = #tpu.dot_dimension_numbers<[1], [0], [0], [1], [0, 0, 1, 1], [], []>} : vector<128x128xbf16>, vector<128x256xbf16>, vector<128x256xf32> -> vector<128x256xf32>
    %45 = arith.addf %7, %44 : vector<128x256xf32>
    %c0_27 = arith.constant 0 : index
    %c128 = arith.constant 128 : index
    %46 = vector.load %arg2[%c0_27, %c128] : memref<256x768xbf16, #tpu.memory_space<vmem>>, vector<256x128xbf16>
    %cst_28 = arith.constant dense<0.000000e+00> : vector<128x128xf32>
    %47 = tpu.matmul %1, %46, %cst_28 {dimension_numbers = #tpu.dot_dimension_numbers<[1], [0], [0], [1], [0, 0, 1, 1], [], []>} : vector<128x256xbf16>, vector<256x128xbf16>, vector<128x128xf32> -> vector<128x128xf32>
    %c0_29 = arith.constant 0 : index
    %c128_30 = arith.constant 128 : index
    %48 = vector.load %arg3[%c0_29, %c128_30] : memref<1x768xf32, #tpu.memory_space<vmem>>, vector<1x128xf32>
    %49 = vector.broadcast %48 : vector<1x128xf32> to vector<128x128xf32>
    %50 = arith.addf %47, %49 : vector<128x128xf32>
    %cst_31 = arith.constant 0.0883883461 : f32
    %51 = vector.broadcast %cst_31 : f32 to vector<128x128xf32>
    %52 = arith.mulf %50, %51 : vector<128x128xf32>
    %c0_32 = arith.constant 0 : index
    %c384 = arith.constant 384 : index
    %53 = vector.load %arg2[%c0_32, %c384] : memref<256x768xbf16, #tpu.memory_space<vmem>>, vector<256x128xbf16>
    %cst_33 = arith.constant dense<0.000000e+00> : vector<128x128xf32>
    %54 = tpu.matmul %1, %53, %cst_33 {dimension_numbers = #tpu.dot_dimension_numbers<[1], [0], [0], [1], [0, 0, 1, 1], [], []>} : vector<128x256xbf16>, vector<256x128xbf16>, vector<128x128xf32> -> vector<128x128xf32>
    %c0_34 = arith.constant 0 : index
    %c384_35 = arith.constant 384 : index
    %55 = vector.load %arg3[%c0_34, %c384_35] : memref<1x768xf32, #tpu.memory_space<vmem>>, vector<1x128xf32>
    %56 = vector.broadcast %55 : vector<1x128xf32> to vector<128x128xf32>
    %57 = arith.addf %54, %56 : vector<128x128xf32>
    %c0_36 = arith.constant 0 : index
    %c640 = arith.constant 640 : index
    %58 = vector.load %arg2[%c0_36, %c640] : memref<256x768xbf16, #tpu.memory_space<vmem>>, vector<256x128xbf16>
    %cst_37 = arith.constant dense<0.000000e+00> : vector<128x128xf32>
    %59 = tpu.matmul %1, %58, %cst_37 {dimension_numbers = #tpu.dot_dimension_numbers<[1], [0], [0], [1], [0, 0, 1, 1], [], []>} : vector<128x256xbf16>, vector<256x128xbf16>, vector<128x128xf32> -> vector<128x128xf32>
    %c0_38 = arith.constant 0 : index
    %c640_39 = arith.constant 640 : index
    %60 = vector.load %arg3[%c0_38, %c640_39] : memref<1x768xf32, #tpu.memory_space<vmem>>, vector<1x128xf32>
    %61 = vector.broadcast %60 : vector<1x128xf32> to vector<128x128xf32>
    %62 = arith.addf %59, %61 : vector<128x128xf32>
    %63 = arith.truncf %52 : vector<128x128xf32> to vector<128x128xbf16>
    %64 = arith.truncf %57 : vector<128x128xf32> to vector<128x128xbf16>
    %cst_40 = arith.constant dense<0.000000e+00> : vector<128x128xf32>
    %65 = tpu.matmul %63, %64, %cst_40 {dimension_numbers = #tpu.dot_dimension_numbers<[1], [1], [0], [0], [0, 0, 1, 0], [], []>} : vector<128x128xbf16>, vector<128x128xbf16>, vector<128x128xf32> -> vector<128x128xf32>
    %66 = vector.broadcast %3 : vector<1x128xf32> to vector<128x128xf32>
    %67 = arith.addf %65, %66 : vector<128x128xf32>
    %cst_41 = arith.constant dense<0xFF800000> : vector<128xf32>
    %68 = vector.multi_reduction <maximumf>, %67, %cst_41 [1] : vector<128x128xf32> to vector<128xf32>
    %69 = vector.shape_cast %68 : vector<128xf32> to vector<128x1xf32>
    %70 = vector.broadcast %69 : vector<128x1xf32> to vector<128x128xf32>
    %71 = arith.subf %67, %70 : vector<128x128xf32>
    %72 = math.exp %71 : vector<128x128xf32>
    %cst_42 = arith.constant dense<0.000000e+00> : vector<128xf32>
    %73 = vector.multi_reduction <add>, %72, %cst_42 [1] : vector<128x128xf32> to vector<128xf32>
    %74 = vector.shape_cast %73 : vector<128xf32> to vector<128x1xf32>
    %75 = vector.broadcast %74 : vector<128x1xf32> to vector<128x128xf32>
    %76 = arith.divf %72, %75 : vector<128x128xf32>
    %77 = arith.truncf %76 : vector<128x128xf32> to vector<128x128xbf16>
    %78 = arith.truncf %62 : vector<128x128xf32> to vector<128x128xbf16>
    %cst_43 = arith.constant dense<0.000000e+00> : vector<128x128xf32>
    %79 = tpu.matmul %77, %78, %cst_43 {dimension_numbers = #tpu.dot_dimension_numbers<[1], [0], [0], [1], [0, 0, 1, 1], [], []>} : vector<128x128xbf16>, vector<128x128xbf16>, vector<128x128xf32> -> vector<128x128xf32>
    %80 = arith.truncf %79 : vector<128x128xf32> to vector<128x128xbf16>
    %c128_44 = arith.constant 128 : index
    %c0_45 = arith.constant 0 : index
    %81 = vector.load %arg4[%c128_44, %c0_45] : memref<256x256xbf16, #tpu.memory_space<vmem>>, vector<128x256xbf16>
    %cst_46 = arith.constant dense<0.000000e+00> : vector<128x256xf32>
    %82 = tpu.matmul %80, %81, %cst_46 {dimension_numbers = #tpu.dot_dimension_numbers<[1], [0], [0], [1], [0, 0, 1, 1], [], []>} : vector<128x128xbf16>, vector<128x256xbf16>, vector<128x256xf32> -> vector<128x256xf32>
    %83 = arith.addf %45, %82 : vector<128x256xf32>
    %c0_47 = arith.constant 0 : index
    %c0_48 = arith.constant 0 : index
    %84 = vector.load %arg6[%c0_47, %c0_48] : memref<1x256xf32, #tpu.memory_space<vmem>>, vector<1x256xf32>
    %c0_49 = arith.constant 0 : index
    %c0_50 = arith.constant 0 : index
    %85 = vector.load %arg7[%c0_49, %c0_50] : memref<1x256xf32, #tpu.memory_space<vmem>>, vector<1x256xf32>
    %cst_51 = arith.constant dense<0.000000e+00> : vector<128xf32>
    %86 = vector.multi_reduction <add>, %83, %cst_51 [1] : vector<128x256xf32> to vector<128xf32>
    %87 = vector.shape_cast %86 : vector<128xf32> to vector<128x1xf32>
    %cst_52 = arith.constant 2.560000e+02 : f32
    %88 = vector.broadcast %cst_52 : f32 to vector<128x1xf32>
    %89 = arith.divf %87, %88 : vector<128x1xf32>
    %90 = vector.broadcast %89 : vector<128x1xf32> to vector<128x256xf32>
    %91 = arith.subf %83, %90 : vector<128x256xf32>
    %92 = arith.mulf %91, %91 : vector<128x256xf32>
    %cst_53 = arith.constant dense<0.000000e+00> : vector<128xf32>
    %93 = vector.multi_reduction <add>, %92, %cst_53 [1] : vector<128x256xf32> to vector<128xf32>
    %94 = vector.shape_cast %93 : vector<128xf32> to vector<128x1xf32>
    %cst_54 = arith.constant 2.560000e+02 : f32
    %95 = vector.broadcast %cst_54 : f32 to vector<128x1xf32>
    %96 = arith.divf %94, %95 : vector<128x1xf32>
    %cst_55 = arith.constant 9.99999996E-13 : f32
    %97 = vector.broadcast %cst_55 : f32 to vector<128x1xf32>
    %98 = arith.addf %96, %97 : vector<128x1xf32>
    %99 = math.rsqrt %98 : vector<128x1xf32>
    %100 = vector.broadcast %99 : vector<128x1xf32> to vector<128x256xf32>
    %101 = arith.mulf %91, %100 : vector<128x256xf32>
    %102 = vector.broadcast %84 : vector<1x256xf32> to vector<128x256xf32>
    %103 = arith.mulf %101, %102 : vector<128x256xf32>
    %104 = vector.broadcast %85 : vector<1x256xf32> to vector<128x256xf32>
    %105 = arith.addf %103, %104 : vector<128x256xf32>
    %106 = arith.truncf %105 : vector<128x256xf32> to vector<128x256xbf16>
    %c0_56 = arith.constant 0 : index
    %c0_57 = arith.constant 0 : index
    %c0_58 = arith.constant 0 : index
    %107 = vector.load %arg9[%c0_56, %c0_57, %c0_58] : memref<1x128x256xbf16, #tpu.memory_space<vmem>>, vector<1x128x256xbf16>
    %108 = vector.shape_cast %107 : vector<1x128x256xbf16> to vector<128x256xbf16>
    %109 = vector.shape_cast %106 : vector<128x256xbf16> to vector<1x128x256xbf16>
    tpu.vector_store %arg9[%c0_56, %c0_57, %c0_58], %109 {strides = array<i32>} : memref<1x128x256xbf16, #tpu.memory_space<vmem>>, vector<1x128x256xbf16>,
    return
  }
  func.func @transform_0(%arg0: i32) -> (i32, i32, i32) {
    %c0_i32 = arith.constant 0 : i32
    %c0_i32_0 = arith.constant 0 : i32
    %c0_i32_1 = arith.constant 0 : i32
    return %arg0, %c0_i32, %c0_i32_0 : i32, i32, i32
  }
  func.func @transform_1(%arg0: i32) -> (i32, i32) {
    %c0_i32 = arith.constant 0 : i32
    %c0_i32_0 = arith.constant 0 : i32
    %c0_i32_1 = arith.constant 0 : i32
    return %c0_i32, %c0_i32_0 : i32, i32
  }
  func.func @transform_2(%arg0: i32) -> (i32, i32) {
    %c0_i32 = arith.constant 0 : i32
    %c0_i32_0 = arith.constant 0 : i32
    %c0_i32_1 = arith.constant 0 : i32
    return %c0_i32, %c0_i32_0 : i32, i32
  }
  func.func @transform_3(%arg0: i32) -> (i32, i32) {
    %c0_i32 = arith.constant 0 : i32
    %c0_i32_0 = arith.constant 0 : i32
    %c0_i32_1 = arith.constant 0 : i32
    return %c0_i32, %c0_i32_0 : i32, i32
  }
  func.func @transform_4(%arg0: i32) -> (i32, i32) {
    %c0_i32 = arith.constant 0 : i32
    %c0_i32_0 = arith.constant 0 : i32
    %c0_i32_1 = arith.constant 0 : i32
    return %c0_i32, %c0_i32_0 : i32, i32
  }
  func.func @transform_5(%arg0: i32) -> (i32, i32) {
    %c0_i32 = arith.constant 0 : i32
    %c0_i32_0 = arith.constant 0 : i32
    %c0_i32_1 = arith.constant 0 : i32
    return %c0_i32, %c0_i32_0 : i32, i32
  }
  func.func @transform_6(%arg0: i32) -> (i32, i32) {
    %c0_i32 = arith.constant 0 : i32
    %c0_i32_0 = arith.constant 0 : i32
    %c0_i32_1 = arith.constant 0 : i32
    return %c0_i32, %c0_i32_0 : i32, i32
  }
  func.func @transform_7(%arg0: i32) -> (i32, i32, i32) {
    %c0_i32 = arith.constant 0 : i32
    %c0_i32_0 = arith.constant 0 : i32
    %c0_i32_1 = arith.constant 0 : i32
    return %arg0, %c0_i32, %c0_i32_0 : i32, i32, i32
  }
  func.func @transform_8(%arg0: i32) -> (i32, i32, i32) {
    %c0_i32 = arith.constant 0 : i32
    %c0_i32_0 = arith.constant 0 : i32
    %c0_i32_1 = arith.constant 0 : i32
    return %arg0, %c0_i32, %c0_i32_0 : i32, i32, i32
  }
}

module attributes {stable_mosaic.version = 11 : i64} {
  func.func @_ffn_block_kernel(%arg0: i32, %arg1: memref<1x128x256xbf16, #tpu.memory_space<vmem>>, %arg2: memref<256x1024xbf16, #tpu.memory_space<vmem>>, %arg3: memref<1x1024xf32, #tpu.memory_space<vmem>>, %arg4: memref<1024x256xbf16, #tpu.memory_space<vmem>>, %arg5: memref<1x256xf32, #tpu.memory_space<vmem>>, %arg6: memref<1x256xf32, #tpu.memory_space<vmem>>, %arg7: memref<1x256xf32, #tpu.memory_space<vmem>>, %arg8: memref<1x128x256xbf16, #tpu.memory_space<vmem>>) attributes {dimension_semantics = [#tpu.dimension_semantics<parallel>], iteration_bounds = array<i64: 2>, scalar_prefetch = 0 : i64, scratch_operands = 0 : i64, tpu.core_type = #tpu.core_type<tc>, window_params = [{transform_indices = @transform_0, window_bounds = array<i64: 1, 128, 256>}, {pipeline_mode = #tpu.pipeline_mode<synchronous>, transform_indices = @transform_1, window_bounds = array<i64: 256, 1024>}, {pipeline_mode = #tpu.pipeline_mode<synchronous>, transform_indices = @transform_2, window_bounds = array<i64: 1, 1024>}, {pipeline_mode = #tpu.pipeline_mode<synchronous>, transform_indices = @transform_3, window_bounds = array<i64: 1024, 256>}, {pipeline_mode = #tpu.pipeline_mode<synchronous>, transform_indices = @transform_4, window_bounds = array<i64: 1, 256>}, {pipeline_mode = #tpu.pipeline_mode<synchronous>, transform_indices = @transform_5, window_bounds = array<i64: 1, 256>}, {pipeline_mode = #tpu.pipeline_mode<synchronous>, transform_indices = @transform_6, window_bounds = array<i64: 1, 256>}, {transform_indices = @transform_7, window_bounds = array<i64: 1, 128, 256>}]} {
    %c0 = arith.constant 0 : index
    %c0_0 = arith.constant 0 : index
    %c0_1 = arith.constant 0 : index
    %0 = vector.load %arg1[%c0, %c0_0, %c0_1] : memref<1x128x256xbf16, #tpu.memory_space<vmem>>, vector<1x128x256xbf16>
    %1 = vector.shape_cast %0 : vector<1x128x256xbf16> to vector<128x256xbf16>
    %2 = arith.extf %1 : vector<128x256xbf16> to vector<128x256xf32>
    %c0_2 = arith.constant 0 : index
    %c0_3 = arith.constant 0 : index
    %3 = vector.load %arg5[%c0_2, %c0_3] : memref<1x256xf32, #tpu.memory_space<vmem>>, vector<1x256xf32>
    %4 = vector.broadcast %3 : vector<1x256xf32> to vector<128x256xf32>
    %5 = arith.addf %2, %4 : vector<128x256xf32>
    %c0_4 = arith.constant 0 : index
    %c0_5 = arith.constant 0 : index
    %6 = vector.load %arg2[%c0_4, %c0_5] : memref<256x1024xbf16, #tpu.memory_space<vmem>>, vector<256x256xbf16>
    %cst = arith.constant dense<0.000000e+00> : vector<128x256xf32>
    %7 = tpu.matmul %1, %6, %cst {dimension_numbers = #tpu.dot_dimension_numbers<[1], [0], [0], [1], [0, 0, 1, 1], [], []>} : vector<128x256xbf16>, vector<256x256xbf16>, vector<128x256xf32> -> vector<128x256xf32>
    %c0_6 = arith.constant 0 : index
    %c0_7 = arith.constant 0 : index
    %8 = vector.load %arg3[%c0_6, %c0_7] : memref<1x1024xf32, #tpu.memory_space<vmem>>, vector<1x256xf32>
    %9 = vector.broadcast %8 : vector<1x256xf32> to vector<128x256xf32>
    %10 = arith.addf %7, %9 : vector<128x256xf32>
    %11 = arith.mulf %10, %10 : vector<128x256xf32>
    %12 = arith.mulf %10, %11 : vector<128x256xf32>
    %cst_8 = arith.constant 4.471500e-02 : f32
    %13 = vector.broadcast %cst_8 : f32 to vector<128x256xf32>
    %14 = arith.mulf %13, %12 : vector<128x256xf32>
    %15 = arith.addf %10, %14 : vector<128x256xf32>
    %cst_9 = arith.constant 0.797884583 : f32
    %16 = vector.broadcast %cst_9 : f32 to vector<128x256xf32>
    %17 = arith.mulf %16, %15 : vector<128x256xf32>
    %18 = math.tanh %17 : vector<128x256xf32>
    %cst_10 = arith.constant 1.000000e+00 : f32
    %19 = vector.broadcast %cst_10 : f32 to vector<128x256xf32>
    %20 = arith.addf %19, %18 : vector<128x256xf32>
    %cst_11 = arith.constant 5.000000e-01 : f32
    %21 = vector.broadcast %cst_11 : f32 to vector<128x256xf32>
    %22 = arith.mulf %21, %20 : vector<128x256xf32>
    %23 = arith.mulf %10, %22 : vector<128x256xf32>
    %24 = arith.truncf %23 : vector<128x256xf32> to vector<128x256xbf16>
    %c0_12 = arith.constant 0 : index
    %c0_13 = arith.constant 0 : index
    %25 = vector.load %arg4[%c0_12, %c0_13] : memref<1024x256xbf16, #tpu.memory_space<vmem>>, vector<256x256xbf16>
    %cst_14 = arith.constant dense<0.000000e+00> : vector<128x256xf32>
    %26 = tpu.matmul %24, %25, %cst_14 {dimension_numbers = #tpu.dot_dimension_numbers<[1], [0], [0], [1], [0, 0, 1, 1], [], []>} : vector<128x256xbf16>, vector<256x256xbf16>, vector<128x256xf32> -> vector<128x256xf32>
    %27 = arith.addf %5, %26 : vector<128x256xf32>
    %c0_15 = arith.constant 0 : index
    %c256 = arith.constant 256 : index
    %28 = vector.load %arg2[%c0_15, %c256] : memref<256x1024xbf16, #tpu.memory_space<vmem>>, vector<256x256xbf16>
    %cst_16 = arith.constant dense<0.000000e+00> : vector<128x256xf32>
    %29 = tpu.matmul %1, %28, %cst_16 {dimension_numbers = #tpu.dot_dimension_numbers<[1], [0], [0], [1], [0, 0, 1, 1], [], []>} : vector<128x256xbf16>, vector<256x256xbf16>, vector<128x256xf32> -> vector<128x256xf32>
    %c0_17 = arith.constant 0 : index
    %c256_18 = arith.constant 256 : index
    %30 = vector.load %arg3[%c0_17, %c256_18] : memref<1x1024xf32, #tpu.memory_space<vmem>>, vector<1x256xf32>
    %31 = vector.broadcast %30 : vector<1x256xf32> to vector<128x256xf32>
    %32 = arith.addf %29, %31 : vector<128x256xf32>
    %33 = arith.mulf %32, %32 : vector<128x256xf32>
    %34 = arith.mulf %32, %33 : vector<128x256xf32>
    %cst_19 = arith.constant 4.471500e-02 : f32
    %35 = vector.broadcast %cst_19 : f32 to vector<128x256xf32>
    %36 = arith.mulf %35, %34 : vector<128x256xf32>
    %37 = arith.addf %32, %36 : vector<128x256xf32>
    %cst_20 = arith.constant 0.797884583 : f32
    %38 = vector.broadcast %cst_20 : f32 to vector<128x256xf32>
    %39 = arith.mulf %38, %37 : vector<128x256xf32>
    %40 = math.tanh %39 : vector<128x256xf32>
    %cst_21 = arith.constant 1.000000e+00 : f32
    %41 = vector.broadcast %cst_21 : f32 to vector<128x256xf32>
    %42 = arith.addf %41, %40 : vector<128x256xf32>
    %cst_22 = arith.constant 5.000000e-01 : f32
    %43 = vector.broadcast %cst_22 : f32 to vector<128x256xf32>
    %44 = arith.mulf %43, %42 : vector<128x256xf32>
    %45 = arith.mulf %32, %44 : vector<128x256xf32>
    %46 = arith.truncf %45 : vector<128x256xf32> to vector<128x256xbf16>
    %c256_23 = arith.constant 256 : index
    %c0_24 = arith.constant 0 : index
    %47 = vector.load %arg4[%c256_23, %c0_24] : memref<1024x256xbf16, #tpu.memory_space<vmem>>, vector<256x256xbf16>
    %cst_25 = arith.constant dense<0.000000e+00> : vector<128x256xf32>
    %48 = tpu.matmul %46, %47, %cst_25 {dimension_numbers = #tpu.dot_dimension_numbers<[1], [0], [0], [1], [0, 0, 1, 1], [], []>} : vector<128x256xbf16>, vector<256x256xbf16>, vector<128x256xf32> -> vector<128x256xf32>
    %49 = arith.addf %27, %48 : vector<128x256xf32>
    %c0_26 = arith.constant 0 : index
    %c512 = arith.constant 512 : index
    %50 = vector.load %arg2[%c0_26, %c512] : memref<256x1024xbf16, #tpu.memory_space<vmem>>, vector<256x256xbf16>
    %cst_27 = arith.constant dense<0.000000e+00> : vector<128x256xf32>
    %51 = tpu.matmul %1, %50, %cst_27 {dimension_numbers = #tpu.dot_dimension_numbers<[1], [0], [0], [1], [0, 0, 1, 1], [], []>} : vector<128x256xbf16>, vector<256x256xbf16>, vector<128x256xf32> -> vector<128x256xf32>
    %c0_28 = arith.constant 0 : index
    %c512_29 = arith.constant 512 : index
    %52 = vector.load %arg3[%c0_28, %c512_29] : memref<1x1024xf32, #tpu.memory_space<vmem>>, vector<1x256xf32>
    %53 = vector.broadcast %52 : vector<1x256xf32> to vector<128x256xf32>
    %54 = arith.addf %51, %53 : vector<128x256xf32>
    %55 = arith.mulf %54, %54 : vector<128x256xf32>
    %56 = arith.mulf %54, %55 : vector<128x256xf32>
    %cst_30 = arith.constant 4.471500e-02 : f32
    %57 = vector.broadcast %cst_30 : f32 to vector<128x256xf32>
    %58 = arith.mulf %57, %56 : vector<128x256xf32>
    %59 = arith.addf %54, %58 : vector<128x256xf32>
    %cst_31 = arith.constant 0.797884583 : f32
    %60 = vector.broadcast %cst_31 : f32 to vector<128x256xf32>
    %61 = arith.mulf %60, %59 : vector<128x256xf32>
    %62 = math.tanh %61 : vector<128x256xf32>
    %cst_32 = arith.constant 1.000000e+00 : f32
    %63 = vector.broadcast %cst_32 : f32 to vector<128x256xf32>
    %64 = arith.addf %63, %62 : vector<128x256xf32>
    %cst_33 = arith.constant 5.000000e-01 : f32
    %65 = vector.broadcast %cst_33 : f32 to vector<128x256xf32>
    %66 = arith.mulf %65, %64 : vector<128x256xf32>
    %67 = arith.mulf %54, %66 : vector<128x256xf32>
    %68 = arith.truncf %67 : vector<128x256xf32> to vector<128x256xbf16>
    %c512_34 = arith.constant 512 : index
    %c0_35 = arith.constant 0 : index
    %69 = vector.load %arg4[%c512_34, %c0_35] : memref<1024x256xbf16, #tpu.memory_space<vmem>>, vector<256x256xbf16>
    %cst_36 = arith.constant dense<0.000000e+00> : vector<128x256xf32>
    %70 = tpu.matmul %68, %69, %cst_36 {dimension_numbers = #tpu.dot_dimension_numbers<[1], [0], [0], [1], [0, 0, 1, 1], [], []>} : vector<128x256xbf16>, vector<256x256xbf16>, vector<128x256xf32> -> vector<128x256xf32>
    %71 = arith.addf %49, %70 : vector<128x256xf32>
    %c0_37 = arith.constant 0 : index
    %c768 = arith.constant 768 : index
    %72 = vector.load %arg2[%c0_37, %c768] : memref<256x1024xbf16, #tpu.memory_space<vmem>>, vector<256x256xbf16>
    %cst_38 = arith.constant dense<0.000000e+00> : vector<128x256xf32>
    %73 = tpu.matmul %1, %72, %cst_38 {dimension_numbers = #tpu.dot_dimension_numbers<[1], [0], [0], [1], [0, 0, 1, 1], [], []>} : vector<128x256xbf16>, vector<256x256xbf16>, vector<128x256xf32> -> vector<128x256xf32>
    %c0_39 = arith.constant 0 : index
    %c768_40 = arith.constant 768 : index
    %74 = vector.load %arg3[%c0_39, %c768_40] : memref<1x1024xf32, #tpu.memory_space<vmem>>, vector<1x256xf32>
    %75 = vector.broadcast %74 : vector<1x256xf32> to vector<128x256xf32>
    %76 = arith.addf %73, %75 : vector<128x256xf32>
    %77 = arith.mulf %76, %76 : vector<128x256xf32>
    %78 = arith.mulf %76, %77 : vector<128x256xf32>
    %cst_41 = arith.constant 4.471500e-02 : f32
    %79 = vector.broadcast %cst_41 : f32 to vector<128x256xf32>
    %80 = arith.mulf %79, %78 : vector<128x256xf32>
    %81 = arith.addf %76, %80 : vector<128x256xf32>
    %cst_42 = arith.constant 0.797884583 : f32
    %82 = vector.broadcast %cst_42 : f32 to vector<128x256xf32>
    %83 = arith.mulf %82, %81 : vector<128x256xf32>
    %84 = math.tanh %83 : vector<128x256xf32>
    %cst_43 = arith.constant 1.000000e+00 : f32
    %85 = vector.broadcast %cst_43 : f32 to vector<128x256xf32>
    %86 = arith.addf %85, %84 : vector<128x256xf32>
    %cst_44 = arith.constant 5.000000e-01 : f32
    %87 = vector.broadcast %cst_44 : f32 to vector<128x256xf32>
    %88 = arith.mulf %87, %86 : vector<128x256xf32>
    %89 = arith.mulf %76, %88 : vector<128x256xf32>
    %90 = arith.truncf %89 : vector<128x256xf32> to vector<128x256xbf16>
    %c768_45 = arith.constant 768 : index
    %c0_46 = arith.constant 0 : index
    %91 = vector.load %arg4[%c768_45, %c0_46] : memref<1024x256xbf16, #tpu.memory_space<vmem>>, vector<256x256xbf16>
    %cst_47 = arith.constant dense<0.000000e+00> : vector<128x256xf32>
    %92 = tpu.matmul %90, %91, %cst_47 {dimension_numbers = #tpu.dot_dimension_numbers<[1], [0], [0], [1], [0, 0, 1, 1], [], []>} : vector<128x256xbf16>, vector<256x256xbf16>, vector<128x256xf32> -> vector<128x256xf32>
    %93 = arith.addf %71, %92 : vector<128x256xf32>
    %c0_48 = arith.constant 0 : index
    %c0_49 = arith.constant 0 : index
    %94 = vector.load %arg6[%c0_48, %c0_49] : memref<1x256xf32, #tpu.memory_space<vmem>>, vector<1x256xf32>
    %c0_50 = arith.constant 0 : index
    %c0_51 = arith.constant 0 : index
    %95 = vector.load %arg7[%c0_50, %c0_51] : memref<1x256xf32, #tpu.memory_space<vmem>>, vector<1x256xf32>
    %cst_52 = arith.constant dense<0.000000e+00> : vector<128xf32>
    %96 = vector.multi_reduction <add>, %93, %cst_52 [1] : vector<128x256xf32> to vector<128xf32>
    %97 = vector.shape_cast %96 : vector<128xf32> to vector<128x1xf32>
    %cst_53 = arith.constant 2.560000e+02 : f32
    %98 = vector.broadcast %cst_53 : f32 to vector<128x1xf32>
    %99 = arith.divf %97, %98 : vector<128x1xf32>
    %100 = vector.broadcast %99 : vector<128x1xf32> to vector<128x256xf32>
    %101 = arith.subf %93, %100 : vector<128x256xf32>
    %102 = arith.mulf %101, %101 : vector<128x256xf32>
    %cst_54 = arith.constant dense<0.000000e+00> : vector<128xf32>
    %103 = vector.multi_reduction <add>, %102, %cst_54 [1] : vector<128x256xf32> to vector<128xf32>
    %104 = vector.shape_cast %103 : vector<128xf32> to vector<128x1xf32>
    %cst_55 = arith.constant 2.560000e+02 : f32
    %105 = vector.broadcast %cst_55 : f32 to vector<128x1xf32>
    %106 = arith.divf %104, %105 : vector<128x1xf32>
    %cst_56 = arith.constant 9.99999996E-13 : f32
    %107 = vector.broadcast %cst_56 : f32 to vector<128x1xf32>
    %108 = arith.addf %106, %107 : vector<128x1xf32>
    %109 = math.rsqrt %108 : vector<128x1xf32>
    %110 = vector.broadcast %109 : vector<128x1xf32> to vector<128x256xf32>
    %111 = arith.mulf %101, %110 : vector<128x256xf32>
    %112 = vector.broadcast %94 : vector<1x256xf32> to vector<128x256xf32>
    %113 = arith.mulf %111, %112 : vector<128x256xf32>
    %114 = vector.broadcast %95 : vector<1x256xf32> to vector<128x256xf32>
    %115 = arith.addf %113, %114 : vector<128x256xf32>
    %116 = arith.truncf %115 : vector<128x256xf32> to vector<128x256xbf16>
    %c0_57 = arith.constant 0 : index
    %c0_58 = arith.constant 0 : index
    %c0_59 = arith.constant 0 : index
    %117 = vector.load %arg8[%c0_57, %c0_58, %c0_59] : memref<1x128x256xbf16, #tpu.memory_space<vmem>>, vector<1x128x256xbf16>
    %118 = vector.shape_cast %117 : vector<1x128x256xbf16> to vector<128x256xbf16>
    %119 = vector.shape_cast %116 : vector<128x256xbf16> to vector<1x128x256xbf16>
    tpu.vector_store %arg8[%c0_57, %c0_58, %c0_59], %119 {strides = array<i32>} : memref<1x128x256xbf16, #tpu.memory_space<vmem>>, vector<1x128x256xbf16>,
    return
  }
  func.func @transform_0(%arg0: i32) -> (i32, i32, i32) {
    %c0_i32 = arith.constant 0 : i32
    %c0_i32_0 = arith.constant 0 : i32
    %c0_i32_1 = arith.constant 0 : i32
    return %arg0, %c0_i32, %c0_i32_0 : i32, i32, i32
  }
  func.func @transform_1(%arg0: i32) -> (i32, i32) {
    %c0_i32 = arith.constant 0 : i32
    %c0_i32_0 = arith.constant 0 : i32
    %c0_i32_1 = arith.constant 0 : i32
    return %c0_i32, %c0_i32_0 : i32, i32
  }
  func.func @transform_2(%arg0: i32) -> (i32, i32) {
    %c0_i32 = arith.constant 0 : i32
    %c0_i32_0 = arith.constant 0 : i32
    %c0_i32_1 = arith.constant 0 : i32
    return %c0_i32, %c0_i32_0 : i32, i32
  }
  func.func @transform_3(%arg0: i32) -> (i32, i32) {
    %c0_i32 = arith.constant 0 : i32
    %c0_i32_0 = arith.constant 0 : i32
    %c0_i32_1 = arith.constant 0 : i32
    return %c0_i32, %c0_i32_0 : i32, i32
  }
  func.func @transform_4(%arg0: i32) -> (i32, i32) {
    %c0_i32 = arith.constant 0 : i32
    %c0_i32_0 = arith.constant 0 : i32
    %c0_i32_1 = arith.constant 0 : i32
    return %c0_i32, %c0_i32_0 : i32, i32
  }
  func.func @transform_5(%arg0: i32) -> (i32, i32) {
    %c0_i32 = arith.constant 0 : i32
    %c0_i32_0 = arith.constant 0 : i32
    %c0_i32_1 = arith.constant 0 : i32
    return %c0_i32, %c0_i32_0 : i32, i32
  }
  func.func @transform_6(%arg0: i32) -> (i32, i32) {
    %c0_i32 = arith.constant 0 : i32
    %c0_i32_0 = arith.constant 0 : i32
    %c0_i32_1 = arith.constant 0 : i32
    return %c0_i32, %c0_i32_0 : i32, i32
  }
  func.func @transform_7(%arg0: i32) -> (i32, i32, i32) {
    %c0_i32 = arith.constant 0 : i32
    %c0_i32_0 = arith.constant 0 : i32
    %c0_i32_1 = arith.constant 0 : i32
    return %arg0, %c0_i32, %c0_i32_0 : i32, i32, i32
  }
}

</mosaic_0001>

<llo_original>
// kernel: bert_forward.5
$region0: #{bert_forward.5}
  #allocation0 [shape = 'u32[]', space=smem, size = 0x4, offset = 0x4, fixed_abs, tag = 'smem constant byte address 0x4 - core index']
  #allocation1 [shape = 'u32[144,128]{1,0:T(1,128)}', space=vmem, size = 0x12000, scoped, tag = 'internal scratch']
  %s0 = inlined_call_operand.vmem [shape: f32[2,128,256], index: 0, kind: input, shape index: {}]
  %s1 = inlined_call_operand.vmem [shape: f32[128,256], index: 1, kind: input, shape index: {}]
  %s2 = inlined_call_operand.vmem [shape: f32[1,256], index: 2, kind: input, shape index: {}]
  %s3 = inlined_call_operand.vmem [shape: f32[1,256], index: 3, kind: input, shape index: {}]
  %s4 = inlined_call_operand.vmem [shape: f32[1,256], index: 4, kind: input, shape index: {}]
  %s5 = inlined_call_operand.vmem [shape: bf16[2,128,256], index: 5, kind: output, shape index: {}]
  %s6 = sld [smem:[#allocation0]]
  $region53: #{bert_forward.5} parent=0
    _
  %s8 = ssub.s32 1, %s6
  %s9 = scalar_select 0, %s8, %s6
  loop: start=0, step=1, limit=4
  $region2: #{bert_forward.5} parent=0 // loop_pre_header
    _
  $region3: #{bert_forward.5} parent=0 // loop_header
    %s11 = sphi 0, %s15
    %p12 = scmp.ge.s32.totalorder %s11, 4
    %s21 = sphi 0, %s23
    %s24 = sphi 0, %s21
    %s25 = sphi 0, %s24
    %s41 = sphi 0, %s25
    %s45 = sphi 0, %s45
    %s47 = sphi 0, %s45
    %s48 = sphi 0, %s47
    %s62 = sphi 0, %s48
    %s66 = sphi 0, %s66
    %s68 = sphi 0, %s66
    %s69 = sphi 0, %s68
    %s83 = sphi 0, %s69
    %s87 = sphi 0, %s87
    %s89 = sphi 0, %s87
    %s90 = sphi 0, %s89
    %s104 = sphi 0, %s90
    %s108 = sphi 0, %s108
    %s110 = sphi 0, %s108
    %s111 = sphi 0, %s110
    %s125 = sphi 0, %s111
    %s131 = sphi 0, %s133
    %s134 = sphi 0, %s131
    %s135 = sphi 0, %s134
    %s151 = sphi 0, %s135
  $region4: #{bert_forward.5} parent=0 // loop_header_branch
    %14 = sbr.rel (%p12) target = $region8
  $region5: #{bert_forward.5} parent=0 // loop_body
    %s16 = ssub.s32 %s11, 1
    %s17 = ssub.s32 %s11, 2
    %s18 = sadd.s32 %s11, 1
    %s19 = ssub.s32 %s11, %s18
    %p20 = scmp.eq.s32.totalorder %s19, 0
    %s22 = sadd.s32 %s21, 1
    %s23 = scalar_select %p20, %s21, %s22
    %p26 = pneg %p20
    %p27 = scmp.eq.s32.totalorder %s11, 1
    %p28 = por %p26, %p27
    %p29 = scmp.ne.s32.totalorder %s21, %s24
    %p30 = scmp.eq.s32.totalorder %s11, 0
    %p31 = por %p29, %p30
    %p32 = scmp.ne.s32.totalorder %s21, %s24
    %p33 = scmp.eq.s32.totalorder %s16, 1
    %p34 = por %p32, %p33
    %p35 = scmp.ne.s32.totalorder %s24, %s25
    %p36 = scmp.eq.s32.totalorder %s16, 0
    %p37 = por %p35, %p36
    %p38 = scmp.ne.s32.totalorder %s24, %s25
    %p39 = scmp.eq.s32.totalorder %s17, 1
    %p40 = por %p38, %p39
    %p42 = scmp.ne.s32.totalorder %s25, %s41
    %p43 = scmp.eq.s32.totalorder %s17, 0
    %p44 = por %p42, %p43
    %s46 = sadd.s32 %s45, 1
    %p49 = scmp.eq.s32.totalorder %s11, 1
    %p50 = scmp.ne.s32.totalorder %s45, %s47
    %p51 = scmp.eq.s32.totalorder %s11, 0
    %p52 = por %p50, %p51
    %p53 = scmp.ne.s32.totalorder %s45, %s47
    %p54 = scmp.eq.s32.totalorder %s16, 1
    %p55 = por %p53, %p54
    %p56 = scmp.ne.s32.totalorder %s47, %s48
    %p57 = scmp.eq.s32.totalorder %s16, 0
    %p58 = por %p56, %p57
    %p59 = scmp.ne.s32.totalorder %s47, %s48
    %p60 = scmp.eq.s32.totalorder %s17, 1
    %p61 = por %p59, %p60
    %p63 = scmp.ne.s32.totalorder %s48, %s62
    %p64 = scmp.eq.s32.totalorder %s17, 0
    %p65 = por %p63, %p64
    %s67 = sadd.s32 %s66, 1
    %p70 = scmp.eq.s32.totalorder %s11, 1
    %p71 = scmp.ne.s32.totalorder %s66, %s68
    %p72 = scmp.eq.s32.totalorder %s11, 0
    %p73 = por %p71, %p72
    %p74 = scmp.ne.s32.totalorder %s66, %s68
    %p75 = scmp.eq.s32.totalorder %s16, 1
    %p76 = por %p74, %p75
    %p77 = scmp.ne.s32.totalorder %s68, %s69
    %p78 = scmp.eq.s32.totalorder %s16, 0
    %p79 = por %p77, %p78
    %p80 = scmp.ne.s32.totalorder %s68, %s69
    %p81 = scmp.eq.s32.totalorder %s17, 1
    %p82 = por %p80, %p81
    %p84 = scmp.ne.s32.totalorder %s69, %s83
    %p85 = scmp.eq.s32.totalorder %s17, 0
    %p86 = por %p84, %p85
    %s88 = sadd.s32 %s87, 1
    %p91 = scmp.eq.s32.totalorder %s11, 1
    %p92 = scmp.ne.s32.totalorder %s87, %s89
    %p93 = scmp.eq.s32.totalorder %s11, 0
    %p94 = por %p92, %p93
    %p95 = scmp.ne.s32.totalorder %s87, %s89
    %p96 = scmp.eq.s32.totalorder %s16, 1
    %p97 = por %p95, %p96
    %p98 = scmp.ne.s32.totalorder %s89, %s90
    %p99 = scmp.eq.s32.totalorder %s16, 0
    %p100 = por %p98, %p99
    %p101 = scmp.ne.s32.totalorder %s89, %s90
    %p102 = scmp.eq.s32.totalorder %s17, 1
    %p103 = por %p101, %p102
    %p105 = scmp.ne.s32.totalorder %s90, %s104
    %p106 = scmp.eq.s32.totalorder %s17, 0
    %p107 = por %p105, %p106
    %s109 = sadd.s32 %s108, 1
    %p112 = scmp.eq.s32.totalorder %s11, 1
    %p113 = scmp.ne.s32.totalorder %s108, %s110
    %p114 = scmp.eq.s32.totalorder %s11, 0
    %p115 = por %p113, %p114
    %p116 = scmp.ne.s32.totalorder %s108, %s110
    %p117 = scmp.eq.s32.totalorder %s16, 1
    %p118 = por %p116, %p117
    %p119 = scmp.ne.s32.totalorder %s110, %s111
    %p120 = scmp.eq.s32.totalorder %s16, 0
    %p121 = por %p119, %p120
    %p122 = scmp.ne.s32.totalorder %s110, %s111
    %p123 = scmp.eq.s32.totalorder %s17, 1
    %p124 = por %p122, %p123
    %p126 = scmp.ne.s32.totalorder %s111, %s125
    %p127 = scmp.eq.s32.totalorder %s17, 0
    %p128 = por %p126, %p127
    %s129 = ssub.s32 %s11, %s18
    %p130 = scmp.eq.s32.totalorder %s129, 0
    %s132 = sadd.s32 %s131, 1
    %s133 = scalar_select %p130, %s131, %s132
    %p136 = pneg %p130
    %p137 = scmp.eq.s32.totalorder %s11, 1
    %p138 = por %p136, %p137
    %p139 = scmp.ne.s32.totalorder %s131, %s134
    %p140 = scmp.eq.s32.totalorder %s11, 0
    %p141 = por %p139, %p140
    %p142 = scmp.ne.s32.totalorder %s131, %s134
    %p143 = scmp.eq.s32.totalorder %s16, 1
    %p144 = por %p142, %p143
    %p145 = scmp.ne.s32.totalorder %s134, %s135
    %p146 = scmp.eq.s32.totalorder %s16, 0
    %p147 = por %p145, %p146
    %p148 = scmp.ne.s32.totalorder %s134, %s135
    %p149 = scmp.eq.s32.totalorder %s17, 1
    %p150 = por %p148, %p149
    %p152 = scmp.ne.s32.totalorder %s135, %s151
    %p153 = scmp.eq.s32.totalorder %s17, 0
    %p154 = por %p152, %p153
    %p155 = scmp.le.s32.totalorder 1, %s11
    %p156 = scmp.lt.s32.totalorder %s11, 3
    %p157 = pnand %p155, %p156
    %p158 = pneg %p157
    // Predicated region
    $region9: #{bert_forward.5} parent=5 // pred_check
      _
    $region10: #{bert_forward.5} parent=5 // pred_check_branch
      %160 = sbr.rel (%p157) target = $region12
    $region11: #{bert_forward.5} parent=5 // pred_region
      %s161 = ssub.s32 %s11, 1
      // Predicated region
      $region13: #{bert_forward.5} parent=11 // pred_check
        %p162 = pneg %p58
      $region14: #{bert_forward.5} parent=11 // pred_check_branch
        %164 = sbr.rel (%p162) target = $region16
      $region15: #{bert_forward.5} parent=11 // pred_region
        _
      $region16: #{bert_forward.5} parent=11 // pred_fallthru
        _
      // Predicated region
      $region17: #{bert_forward.5} parent=11 // pred_check
        %p165 = pneg %p79
      $region18: #{bert_forward.5} parent=11 // pred_check_branch
        %167 = sbr.rel (%p165) target = $region20
      $region19: #{bert_forward.5} parent=11 // pred_region
        _
      $region20: #{bert_forward.5} parent=11 // pred_fallthru
        _
      // Predicated region
      $region21: #{bert_forward.5} parent=11 // pred_check
        %p168 = pneg %p100
      $region22: #{bert_forward.5} parent=11 // pred_check_branch
        %170 = sbr.rel (%p168) target = $region24
      $region23: #{bert_forward.5} parent=11 // pred_region
        _
      $region24: #{bert_forward.5} parent=11 // pred_fallthru
        _
      // Predicated region
      $region25: #{bert_forward.5} parent=11 // pred_check
        %p171 = pneg %p121
      $region26: #{bert_forward.5} parent=11 // pred_check_branch
        %173 = sbr.rel (%p171) target = $region28
      $region27: #{bert_forward.5} parent=11 // pred_region
        _
      $region28: #{bert_forward.5} parent=11 // pred_fallthru
        _
    $region12: #{bert_forward.5} parent=5 // pred_fallthru
      _
    %p174 = scmp.lt.s32.totalorder %s11, 2
    // Predicated region
    $region29: #{bert_forward.5} parent=5 // pred_check
      %p175 = pneg %p174
    $region30: #{bert_forward.5} parent=5 // pred_check_branch
      %177 = sbr.rel (%p175) target = $region32
    $region31: #{bert_forward.5} parent=5 // pred_region
      // Predicated region
      $region33: #{bert_forward.5} parent=31 // pred_check
        %p178 = pneg %p31
      $region34: #{bert_forward.5} parent=31 // pred_check_branch
        %180 = sbr.rel (%p178) target = $region36
      $region35: #{bert_forward.5} parent=31 // pred_region
        %p181 = scmp.lt.s32.totalorder %s11, 1
        %s182 = scalar_select %p181, %s11, 1
        %s183 = smul.addr %s182, 32
        %s184 = smul.addr %s183, 8
        %s185 = scalar_lea.vmem %s0, %s184
      $region36: #{bert_forward.5} parent=31 // pred_fallthru
        _
    $region32: #{bert_forward.5} parent=5 // pred_fallthru
      _
    %p186 = scmp.le.s32.totalorder 1, %s11
    %p187 = scmp.lt.s32.totalorder %s11, 3
    %p188 = pnand %p186, %p187
    %p189 = pneg %p188
    // Predicated region
    $region37: #{bert_forward.5} parent=5 // pred_check
      _
    $region38: #{bert_forward.5} parent=5 // pred_check_branch
      %191 = sbr.rel (%p188) target = $region40
    $region39: #{bert_forward.5} parent=5 // pred_region
      %s192 = ssub.s32 %s11, 1
      %p193 = scmp.lt.s32.totalorder %s16, 1
      %s194 = scalar_select %p193, %s16, 1
      %s195 = smul.addr %s194, 32
      %s196 = smul.addr %s195, 8
      %s197 = scalar_lea.vmem %s0, %s196
      %p198 = pneg %p37
      %p199 = pneg %p34
      %p200 = pneg %p58
      %p201 = pneg %p55
      %p202 = pneg %p79
      %p203 = pneg %p76
      %p204 = pneg %p100
      %p205 = pneg %p97
      %p206 = pneg %p121
      %p207 = pneg %p118
      %p208 = pneg %p147
      %p209 = pneg %p144
      %p210 = scmp.lt.s32.totalorder %s16, 1
      %s211 = scalar_select %p210, %s16, 1
      %s212 = smul.addr %s211, 32
      %s213 = smul.addr %s212, 4
      %s214 = scalar_lea.vmem %s5, %s213
      %p215 = scmp.lt.s32.totalorder %s16, 1
      %s216 = scalar_select %p215, %s16, 1
      %s217 = smul.addr %s216, 32
      %s218 = smul.addr %s217, 8
      %s219 = scalar_lea.vmem %s0, %s218
      %p220 = scmp.lt.s32.totalorder %s16, 1
      %s221 = scalar_select %p220, %s16, 1
      %s222 = smul.addr %s221, 32
      %s223 = smul.addr %s222, 4
      %s224 = scalar_lea.vmem %s5, %s223
      %v225 = vld [vmem:[%s219] sm:$0xff]
      %v226 = vld [vmem:[%s219 + $0x8] sm:$0xff]
      %v227 = vld [vmem:[%s219 + $0x10] sm:$0xff]
      %v228 = vld [vmem:[%s219 + $0x18] sm:$0xff]
      %v229 = vld [vmem:[%s219 + $0x20] sm:$0xff]
      %v230 = vld [vmem:[%s219 + $0x28] sm:$0xff]
      %v231 = vld [vmem:[%s219 + $0x30] sm:$0xff]
      %v232 = vld [vmem:[%s219 + $0x38] sm:$0xff]
      %v233 = vld [vmem:[%s219 + $0x40] sm:$0xff]
      %v234 = vld [vmem:[%s219 + $0x48] sm:$0xff]
      %v235 = vld [vmem:[%s219 + $0x50] sm:$0xff]
      %v236 = vld [vmem:[%s219 + $0x58] sm:$0xff]
      %v237 = vld [vmem:[%s219 + $0x60] sm:$0xff]
      %v238 = vld [vmem:[%s219 + $0x68] sm:$0xff]
      %v239 = vld [vmem:[%s219 + $0x70] sm:$0xff]
      %v240 = vld [vmem:[%s219 + $0x78] sm:$0xff]
      %v241 = vld [vmem:[%s219 + $0x80] sm:$0xff]
      %v242 = vld [vmem:[%s219 + $0x88] sm:$0xff]
      %v243 = vld [vmem:[%s219 + $0x90] sm:$0xff]
      %v244 = vld [vmem:[%s219 + $0x98] sm:$0xff]
      %v245 = vld [vmem:[%s219 + $0xa0] sm:$0xff]
      %v246 = vld [vmem:[%s219 + $0xa8] sm:$0xff]
      %v247 = vld [vmem:[%s219 + $0xb0] sm:$0xff]
      %v248 = vld [vmem:[%s219 + $0xb8] sm:$0xff]
      %v249 = vld [vmem:[%s219 + $0xc0] sm:$0xff]
      %v250 = vld [vmem:[%s219 + $0xc8] sm:$0xff]
      %v251 = vld [vmem:[%s219 + $0xd0] sm:$0xff]
      %v252 = vld [vmem:[%s219 + $0xd8] sm:$0xff]
      %v253 = vld [vmem:[%s219 + $0xe0] sm:$0xff]
      %v254 = vld [vmem:[%s219 + $0xe8] sm:$0xff]
      %v255 = vld [vmem:[%s219 + $0xf0] sm:$0xff]
      %v256 = vld [vmem:[%s219 + $0xf8] sm:$0xff]
      %v257 = vld [vmem:[%s1] sm:$0xff]
      %v258 = vld [vmem:[%s1 + $0x8] sm:$0xff]
      %v259 = vld [vmem:[%s1 + $0x10] sm:$0xff]
      %v260 = vld [vmem:[%s1 + $0x18] sm:$0xff]
      %v261 = vld [vmem:[%s1 + $0x20] sm:$0xff]
      %v262 = vld [vmem:[%s1 + $0x28] sm:$0xff]
      %v263 = vld [vmem:[%s1 + $0x30] sm:$0xff]
      %v264 = vld [vmem:[%s1 + $0x38] sm:$0xff]
      %v265 = vld [vmem:[%s1 + $0x40] sm:$0xff]
      %v266 = vld [vmem:[%s1 + $0x48] sm:$0xff]
      %v267 = vld [vmem:[%s1 + $0x50] sm:$0xff]
      %v268 = vld [vmem:[%s1 + $0x58] sm:$0xff]
      %v269 = vld [vmem:[%s1 + $0x60] sm:$0xff]
      %v270 = vld [vmem:[%s1 + $0x68] sm:$0xff]
      %v271 = vld [vmem:[%s1 + $0x70] sm:$0xff]
      %v272 = vld [vmem:[%s1 + $0x78] sm:$0xff]
      %v273 = vld [vmem:[%s1 + $0x80] sm:$0xff]
      %v274 = vld [vmem:[%s1 + $0x88] sm:$0xff]
      %v275 = vld [vmem:[%s1 + $0x90] sm:$0xff]
      %v276 = vld [vmem:[%s1 + $0x98] sm:$0xff]
      %v277 = vld [vmem:[%s1 + $0xa0] sm:$0xff]
      %v278 = vld [vmem:[%s1 + $0xa8] sm:$0xff]
      %v279 = vld [vmem:[%s1 + $0xb0] sm:$0xff]
      %v280 = vld [vmem:[%s1 + $0xb8] sm:$0xff]
      %v281 = vld [vmem:[%s1 + $0xc0] sm:$0xff]
      %v282 = vld [vmem:[%s1 + $0xc8] sm:$0xff]
      %v283 = vld [vmem:[%s1 + $0xd0] sm:$0xff]
      %v284 = vld [vmem:[%s1 + $0xd8] sm:$0xff]
      %v285 = vld [vmem:[%s1 + $0xe0] sm:$0xff]
      %v286 = vld [vmem:[%s1 + $0xe8] sm:$0xff]
      %v287 = vld [vmem:[%s1 + $0xf0] sm:$0xff]
      %v288 = vld [vmem:[%s1 + $0xf8] sm:$0xff]
      %v289 = vadd.f32 %v225, %v257
      %v290 = vadd.f32 %v226, %v258
      %v291 = vadd.f32 %v227, %v259
      %v292 = vadd.f32 %v228, %v260
      %v293 = vadd.f32 %v229, %v261
      %v294 = vadd.f32 %v230, %v262
      %v295 = vadd.f32 %v231, %v263
      %v296 = vadd.f32 %v232, %v264
      %v297 = vadd.f32 %v233, %v265
      %v298 = vadd.f32 %v234, %v266
      %v299 = vadd.f32 %v235, %v267
      %v300 = vadd.f32 %v236, %v268
      %v301 = vadd.f32 %v237, %v269
      %v302 = vadd.f32 %v238, %v270
      %v303 = vadd.f32 %v239, %v271
      %v304 = vadd.f32 %v240, %v272
      %v305 = vadd.f32 %v241, %v273
      %v306 = vadd.f32 %v242, %v274
      %v307 = vadd.f32 %v243, %v275
      %v308 = vadd.f32 %v244, %v276
      %v309 = vadd.f32 %v245, %v277
      %v310 = vadd.f32 %v246, %v278
      %v311 = vadd.f32 %v247, %v279
      %v312 = vadd.f32 %v248, %v280
      %v313 = vadd.f32 %v249, %v281
      %v314 = vadd.f32 %v250, %v282
      %v315 = vadd.f32 %v251, %v283
      %v316 = vadd.f32 %v252, %v284
      %v317 = vadd.f32 %v253, %v285
      %v318 = vadd.f32 %v254, %v286
      %v319 = vadd.f32 %v255, %v287
      %v320 = vadd.f32 %v256, %v288
      %v321 = vld [vmem:[%s2] sm:$0x3]
      %v323 = vlaneseq
      %v324 = vshrl.u32 %v323, 7
      %v325 = vsub.s32 0, %v324
      %v326 = vrot.slane %v321, %v325
      %v327 = vlaneseq
      %v328 = vshrl.u32 %v327, 7
      %v329 = vsub.s32 1, %v328
      %v330 = vrot.slane %v321, %v329
      %v333 = vadd.f32 %v289, %v326
      %v334 = vadd.f32 %v290, %v330
      %v335 = vadd.f32 %v291, %v326
      %v336 = vadd.f32 %v292, %v330
      %v337 = vadd.f32 %v293, %v326
      %v338 = vadd.f32 %v294, %v330
      %v339 = vadd.f32 %v295, %v326
      %v340 = vadd.f32 %v296, %v330
      %v341 = vadd.f32 %v297, %v326
      %v342 = vadd.f32 %v298, %v330
      %v343 = vadd.f32 %v299, %v326
      %v344 = vadd.f32 %v300, %v330
      %v345 = vadd.f32 %v301, %v326
      %v346 = vadd.f32 %v302, %v330
      %v347 = vadd.f32 %v303, %v326
      %v348 = vadd.f32 %v304, %v330
      %v349 = vadd.f32 %v305, %v326
      %v350 = vadd.f32 %v306, %v330
      %v351 = vadd.f32 %v307, %v326
      %v352 = vadd.f32 %v308, %v330
      %v353 = vadd.f32 %v309, %v326
      %v354 = vadd.f32 %v310, %v330
      %v355 = vadd.f32 %v311, %v326
      %v356 = vadd.f32 %v312, %v330
      %v357 = vadd.f32 %v313, %v326
      %v358 = vadd.f32 %v314, %v330
      %v359 = vadd.f32 %v315, %v326
      %v360 = vadd.f32 %v316, %v330
      %v361 = vadd.f32 %v317, %v326
      %v362 = vadd.f32 %v318, %v330
      %v363 = vadd.f32 %v319, %v326
      %v364 = vadd.f32 %v320, %v330
      %v365 = vld [vmem:[%s3] sm:$0x3]
      %v366 = vld [vmem:[%s4] sm:$0x3]
      %v367 = vadd.f32 %v333, %v334
      %368 = vadd.xlane.f32.xlu0 %v367
      %v369 = vpop.xlane.xlu0 %368
      %v370 = vadd.f32 %v335, %v336
      %371 = vadd.xlane.f32.xlu0 %v370
      %v372 = vpop.xlane.xlu0 %371
      %v373 = vadd.f32 %v337, %v338
      %374 = vadd.xlane.f32.xlu0 %v373
      %v375 = vpop.xlane.xlu0 %374
      %v376 = vadd.f32 %v339, %v340
      %377 = vadd.xlane.f32.xlu0 %v376
      %v378 = vpop.xlane.xlu0 %377
      %v379 = vadd.f32 %v341, %v342
      %380 = vadd.xlane.f32.xlu0 %v379
      %v381 = vpop.xlane.xlu0 %380
      %v382 = vadd.f32 %v343, %v344
      %383 = vadd.xlane.f32.xlu0 %v382
      %v384 = vpop.xlane.xlu0 %383
      %v385 = vadd.f32 %v345, %v346
      %386 = vadd.xlane.f32.xlu0 %v385
      %v387 = vpop.xlane.xlu0 %386
      %v388 = vadd.f32 %v347, %v348
      %389 = vadd.xlane.f32.xlu0 %v388
      %v390 = vpop.xlane.xlu0 %389
      %v391 = vadd.f32 %v349, %v350
      %392 = vadd.xlane.f32.xlu0 %v391
      %v393 = vpop.xlane.xlu0 %392
      %v394 = vadd.f32 %v351, %v352
      %395 = vadd.xlane.f32.xlu0 %v394
      %v396 = vpop.xlane.xlu0 %395
      %v397 = vadd.f32 %v353, %v354
      %398 = vadd.xlane.f32.xlu0 %v397
      %v399 = vpop.xlane.xlu0 %398
      %v400 = vadd.f32 %v355, %v356
      %401 = vadd.xlane.f32.xlu0 %v400
      %v402 = vpop.xlane.xlu0 %401
      %v403 = vadd.f32 %v357, %v358
      %404 = vadd.xlane.f32.xlu0 %v403
      %v405 = vpop.xlane.xlu0 %404
      %v406 = vadd.f32 %v359, %v360
      %407 = vadd.xlane.f32.xlu0 %v406
      %v408 = vpop.xlane.xlu0 %407
      %v409 = vadd.f32 %v361, %v362
      %410 = vadd.xlane.f32.xlu0 %v409
      %v411 = vpop.xlane.xlu0 %410
      %v412 = vadd.f32 %v363, %v364
      %413 = vadd.xlane.f32.xlu0 %v412
      %v414 = vpop.xlane.xlu0 %413
      %v415 = vrcp.pop 256.0
      %v416 = vmul.f32 %v369, %v415
      %v417 = vmul.f32 %v372, %v415
      %v418 = vmul.f32 %v375, %v415
      %v419 = vmul.f32 %v378, %v415
      %v420 = vmul.f32 %v381, %v415
      %v421 = vmul.f32 %v384, %v415
      %v422 = vmul.f32 %v387, %v415
      %v423 = vmul.f32 %v390, %v415
      %v424 = vmul.f32 %v393, %v415
      %v425 = vmul.f32 %v396, %v415
      %v426 = vmul.f32 %v399, %v415
      %v427 = vmul.f32 %v402, %v415
      %v428 = vmul.f32 %v405, %v415
      %v429 = vmul.f32 %v408, %v415
      %v430 = vmul.f32 %v411, %v415
      %v431 = vmul.f32 %v414, %v415
      %v432 = vsub.f32 %v333, %v416
      %v433 = vsub.f32 %v334, %v416
      %v434 = vsub.f32 %v335, %v417
      %v435 = vsub.f32 %v336, %v417
      %v436 = vsub.f32 %v337, %v418
      %v437 = vsub.f32 %v338, %v418
      %v438 = vsub.f32 %v339, %v419
      %v439 = vsub.f32 %v340, %v419
      %v440 = vsub.f32 %v341, %v420
      %v441 = vsub.f32 %v342, %v420
      %v442 = vsub.f32 %v343, %v421
      %v443 = vsub.f32 %v344, %v421
      %v444 = vsub.f32 %v345, %v422
      %v445 = vsub.f32 %v346, %v422
      %v446 = vsub.f32 %v347, %v423
      %v447 = vsub.f32 %v348, %v423
      %v448 = vsub.f32 %v349, %v424
      %v449 = vsub.f32 %v350, %v424
      %v450 = vsub.f32 %v351, %v425
      %v451 = vsub.f32 %v352, %v425
      %v452 = vsub.f32 %v353, %v426
      %v453 = vsub.f32 %v354, %v426
      %v454 = vsub.f32 %v355, %v427
      %v455 = vsub.f32 %v356, %v427
      %v456 = vsub.f32 %v357, %v428
      %v457 = vsub.f32 %v358, %v428
      %v458 = vsub.f32 %v359, %v429
      %v459 = vsub.f32 %v360, %v429
      %v460 = vsub.f32 %v361, %v430
      %v461 = vsub.f32 %v362, %v430
      %v462 = vsub.f32 %v363, %v431
      %v463 = vsub.f32 %v364, %v431
      %v464 = vmul.f32 %v432, %v432
      %v465 = vmul.f32 %v433, %v433
      %v466 = vmul.f32 %v434, %v434
      %v467 = vmul.f32 %v435, %v435
      %v468 = vmul.f32 %v436, %v436
      %v469 = vmul.f32 %v437, %v437
      %v470 = vmul.f32 %v438, %v438
      %v471 = vmul.f32 %v439, %v439
      %v472 = vmul.f32 %v440, %v440
      %v473 = vmul.f32 %v441, %v441
      %v474 = vmul.f32 %v442, %v442
      %v475 = vmul.f32 %v443, %v443
      %v476 = vmul.f32 %v444, %v444
      %v477 = vmul.f32 %v445, %v445
      %v478 = vmul.f32 %v446, %v446
      %v479 = vmul.f32 %v447, %v447
      %v480 = vmul.f32 %v448, %v448
      %v481 = vmul.f32 %v449, %v449
      %v482 = vmul.f32 %v450, %v450
      %v483 = vmul.f32 %v451, %v451
      %v484 = vmul.f32 %v452, %v452
      %v485 = vmul.f32 %v453, %v453
      %v486 = vmul.f32 %v454, %v454
      %v487 = vmul.f32 %v455, %v455
      %v488 = vmul.f32 %v456, %v456
      %v489 = vmul.f32 %v457, %v457
      %v490 = vmul.f32 %v458, %v458
      %v491 = vmul.f32 %v459, %v459
      %v492 = vmul.f32 %v460, %v460
      %v493 = vmul.f32 %v461, %v461
      %v494 = vmul.f32 %v462, %v462
      %v495 = vmul.f32 %v463, %v463
      %v496 = vadd.f32 %v464, %v465
      %497 = vadd.xlane.f32.xlu0 %v496
      %v498 = vpop.xlane.xlu0 %497
      %v499 = vadd.f32 %v466, %v467
      %500 = vadd.xlane.f32.xlu0 %v499
      %v501 = vpop.xlane.xlu0 %500
      %v502 = vadd.f32 %v468, %v469
      %503 = vadd.xlane.f32.xlu0 %v502
      %v504 = vpop.xlane.xlu0 %503
      %v505 = vadd.f32 %v470, %v471
      %506 = vadd.xlane.f32.xlu0 %v505
      %v507 = vpop.xlane.xlu0 %506
      %v508 = vadd.f32 %v472, %v473
      %509 = vadd.xlane.f32.xlu0 %v508
      %v510 = vpop.xlane.xlu0 %509
      %v511 = vadd.f32 %v474, %v475
      %512 = vadd.xlane.f32.xlu0 %v511
      %v513 = vpop.xlane.xlu0 %512
      %v514 = vadd.f32 %v476, %v477
      %515 = vadd.xlane.f32.xlu0 %v514
      %v516 = vpop.xlane.xlu0 %515
      %v517 = vadd.f32 %v478, %v479
      %518 = vadd.xlane.f32.xlu0 %v517
      %v519 = vpop.xlane.xlu0 %518
      %v520 = vadd.f32 %v480, %v481
      %521 = vadd.xlane.f32.xlu0 %v520
      %v522 = vpop.xlane.xlu0 %521
      %v523 = vadd.f32 %v482, %v483
      %524 = vadd.xlane.f32.xlu0 %v523
      %v525 = vpop.xlane.xlu0 %524
      %v526 = vadd.f32 %v484, %v485
      %527 = vadd.xlane.f32.xlu0 %v526
      %v528 = vpop.xlane.xlu0 %527
      %v529 = vadd.f32 %v486, %v487
      %530 = vadd.xlane.f32.xlu0 %v529
      %v531 = vpop.xlane.xlu0 %530
      %v532 = vadd.f32 %v488, %v489
      %533 = vadd.xlane.f32.xlu0 %v532
      %v534 = vpop.xlane.xlu0 %533
      %v535 = vadd.f32 %v490, %v491
      %536 = vadd.xlane.f32.xlu0 %v535
      %v537 = vpop.xlane.xlu0 %536
      %v538 = vadd.f32 %v492, %v493
      %539 = vadd.xlane.f32.xlu0 %v538
      %v540 = vpop.xlane.xlu0 %539
      %v541 = vadd.f32 %v494, %v495
      %542 = vadd.xlane.f32.xlu0 %v541
      %v543 = vpop.xlane.xlu0 %542
      %v544 = vmul.f32 %v498, %v415
      %v545 = vmul.f32 %v501, %v415
      %v546 = vmul.f32 %v504, %v415
      %v547 = vmul.f32 %v507, %v415
      %v548 = vmul.f32 %v510, %v415
      %v549 = vmul.f32 %v513, %v415
      %v550 = vmul.f32 %v516, %v415
      %v551 = vmul.f32 %v519, %v415
      %v552 = vmul.f32 %v522, %v415
      %v553 = vmul.f32 %v525, %v415
      %v554 = vmul.f32 %v528, %v415
      %v555 = vmul.f32 %v531, %v415
      %v556 = vmul.f32 %v534, %v415
      %v557 = vmul.f32 %v537, %v415
      %v558 = vmul.f32 %v540, %v415
      %v559 = vmul.f32 %v543, %v415
      %v560 = vadd.f32 %v544, 1e-12
      %v561 = vadd.f32 %v545, 1e-12
      %v562 = vadd.f32 %v546, 1e-12
      %v563 = vadd.f32 %v547, 1e-12
      %v564 = vadd.f32 %v548, 1e-12
      %v565 = vadd.f32 %v549, 1e-12
      %v566 = vadd.f32 %v550, 1e-12
      %v567 = vadd.f32 %v551, 1e-12
      %v568 = vadd.f32 %v552, 1e-12
      %v569 = vadd.f32 %v553, 1e-12
      %v570 = vadd.f32 %v554, 1e-12
      %v571 = vadd.f32 %v555, 1e-12
      %v572 = vadd.f32 %v556, 1e-12
      %v573 = vadd.f32 %v557, 1e-12
      %v574 = vadd.f32 %v558, 1e-12
      %v575 = vadd.f32 %v559, 1e-12
      %v576 = vrsqrt.pop %v560
      %v577 = vrsqrt.pop %v561
      %v578 = vrsqrt.pop %v562
      %v579 = vrsqrt.pop %v563
      %v580 = vrsqrt.pop %v564
      %v581 = vrsqrt.pop %v565
      %v582 = vrsqrt.pop %v566
      %v583 = vrsqrt.pop %v567
      %v584 = vrsqrt.pop %v568
      %v585 = vrsqrt.pop %v569
      %v586 = vrsqrt.pop %v570
      %v587 = vrsqrt.pop %v571
      %v588 = vrsqrt.pop %v572
      %v589 = vrsqrt.pop %v573
      %v590 = vrsqrt.pop %v574
      %v591 = vrsqrt.pop %v575
      %v592 = vmul.f32 %v432, %v576
      %v593 = vmul.f32 %v433, %v576
      %v594 = vmul.f32 %v434, %v577
      %v595 = vmul.f32 %v435, %v577
      %v596 = vmul.f32 %v436, %v578
      %v597 = vmul.f32 %v437, %v578
      %v598 = vmul.f32 %v438, %v579
      %v599 = vmul.f32 %v439, %v579
      %v600 = vmul.f32 %v440, %v580
      %v601 = vmul.f32 %v441, %v580
      %v602 = vmul.f32 %v442, %v581
      %v603 = vmul.f32 %v443, %v581
      %v604 = vmul.f32 %v444, %v582
      %v605 = vmul.f32 %v445, %v582
      %v606 = vmul.f32 %v446, %v583
      %v607 = vmul.f32 %v447, %v583
      %v608 = vmul.f32 %v448, %v584
      %v609 = vmul.f32 %v449, %v584
      %v610 = vmul.f32 %v450, %v585
      %v611 = vmul.f32 %v451, %v585
      %v612 = vmul.f32 %v452, %v586
      %v613 = vmul.f32 %v453, %v586
      %v614 = vmul.f32 %v454, %v587
      %v615 = vmul.f32 %v455, %v587
      %v616 = vmul.f32 %v456, %v588
      %v617 = vmul.f32 %v457, %v588
      %v618 = vmul.f32 %v458, %v589
      %v619 = vmul.f32 %v459, %v589
      %v620 = vmul.f32 %v460, %v590
      %v621 = vmul.f32 %v461, %v590
      %v622 = vmul.f32 %v462, %v591
      %v623 = vmul.f32 %v463, %v591
      %v625 = vlaneseq
      %v626 = vshrl.u32 %v625, 7
      %v627 = vsub.s32 0, %v626
      %v628 = vrot.slane %v365, %v627
      %v629 = vlaneseq
      %v630 = vshrl.u32 %v629, 7
      %v631 = vsub.s32 1, %v630
      %v632 = vrot.slane %v365, %v631
      %v635 = vmul.f32 %v592, %v628
      %v636 = vmul.f32 %v593, %v632
      %v637 = vmul.f32 %v594, %v628
      %v638 = vmul.f32 %v595, %v632
      %v639 = vmul.f32 %v596, %v628
      %v640 = vmul.f32 %v597, %v632
      %v641 = vmul.f32 %v598, %v628
      %v642 = vmul.f32 %v599, %v632
      %v643 = vmul.f32 %v600, %v628
      %v644 = vmul.f32 %v601, %v632
      %v645 = vmul.f32 %v602, %v628
      %v646 = vmul.f32 %v603, %v632
      %v647 = vmul.f32 %v604, %v628
      %v648 = vmul.f32 %v605, %v632
      %v649 = vmul.f32 %v606, %v628
      %v650 = vmul.f32 %v607, %v632
      %v651 = vmul.f32 %v608, %v628
      %v652 = vmul.f32 %v609, %v632
      %v653 = vmul.f32 %v610, %v628
      %v654 = vmul.f32 %v611, %v632
      %v655 = vmul.f32 %v612, %v628
      %v656 = vmul.f32 %v613, %v632
      %v657 = vmul.f32 %v614, %v628
      %v658 = vmul.f32 %v615, %v632
      %v659 = vmul.f32 %v616, %v628
      %v660 = vmul.f32 %v617, %v632
      %v661 = vmul.f32 %v618, %v628
      %v662 = vmul.f32 %v619, %v632
      %v663 = vmul.f32 %v620, %v628
      %v664 = vmul.f32 %v621, %v632
      %v665 = vmul.f32 %v622, %v628
      %v666 = vmul.f32 %v623, %v632
      %v668 = vlaneseq
      %v669 = vshrl.u32 %v668, 7
      %v670 = vsub.s32 0, %v669
      %v671 = vrot.slane %v366, %v670
      %v672 = vlaneseq
      %v673 = vshrl.u32 %v672, 7
      %v674 = vsub.s32 1, %v673
      %v675 = vrot.slane %v366, %v674
      %v678 = vadd.f32 %v635, %v671
      %v679 = vadd.f32 %v636, %v675
      %v680 = vadd.f32 %v637, %v671
      %v681 = vadd.f32 %v638, %v675
      %v682 = vadd.f32 %v639, %v671
      %v683 = vadd.f32 %v640, %v675
      %v684 = vadd.f32 %v641, %v671
      %v685 = vadd.f32 %v642, %v675
      %v686 = vadd.f32 %v643, %v671
      %v687 = vadd.f32 %v644, %v675
      %v688 = vadd.f32 %v645, %v671
      %v689 = vadd.f32 %v646, %v675
      %v690 = vadd.f32 %v647, %v671
      %v691 = vadd.f32 %v648, %v675
      %v692 = vadd.f32 %v649, %v671
      %v693 = vadd.f32 %v650, %v675
      %v694 = vadd.f32 %v651, %v671
      %v695 = vadd.f32 %v652, %v675
      %v696 = vadd.f32 %v653, %v671
      %v697 = vadd.f32 %v654, %v675
      %v698 = vadd.f32 %v655, %v671
      %v699 = vadd.f32 %v656, %v675
      %v700 = vadd.f32 %v657, %v671
      %v701 = vadd.f32 %v658, %v675
      %v702 = vadd.f32 %v659, %v671
      %v703 = vadd.f32 %v660, %v675
      %v704 = vadd.f32 %v661, %v671
      %v705 = vadd.f32 %v662, %v675
      %v706 = vadd.f32 %v663, %v671
      %v707 = vadd.f32 %v664, %v675
      %v708 = vadd.f32 %v665, %v671
      %v709 = vadd.f32 %v666, %v675
      %v710 = vpack.c.bf16 %v680, %v678
      %v711 = vpack.c.bf16 %v681, %v679
      %v712 = vpack.c.bf16 %v684, %v682
      %v713 = vpack.c.bf16 %v685, %v683
      %v714 = vpack.c.bf16 %v688, %v686
      %v715 = vpack.c.bf16 %v689, %v687
      %v716 = vpack.c.bf16 %v692, %v690
      %v717 = vpack.c.bf16 %v693, %v691
      %v718 = vpack.c.bf16 %v696, %v694
      %v719 = vpack.c.bf16 %v697, %v695
      %v720 = vpack.c.bf16 %v700, %v698
      %v721 = vpack.c.bf16 %v701, %v699
      %v722 = vpack.c.bf16 %v704, %v702
      %v723 = vpack.c.bf16 %v705, %v703
      %v724 = vpack.c.bf16 %v708, %v706
      %v725 = vpack.c.bf16 %v709, %v707
      %v742 = vunpack.c.l.b16 %v710
      %v743 = vunpack.c.l.b16 %v711
      %v744 = vunpack.c.h.b16 %v710
      %v745 = vunpack.c.h.b16 %v711
      %v746 = vunpack.c.l.b16 %v712
      %v747 = vunpack.c.l.b16 %v713
      %v748 = vunpack.c.h.b16 %v712
      %v749 = vunpack.c.h.b16 %v713
      %v750 = vunpack.c.l.b16 %v714
      %v751 = vunpack.c.l.b16 %v715
      %v752 = vunpack.c.h.b16 %v714
      %v753 = vunpack.c.h.b16 %v715
      %v754 = vunpack.c.l.b16 %v716
      %v755 = vunpack.c.l.b16 %v717
      %v756 = vunpack.c.h.b16 %v716
      %v757 = vunpack.c.h.b16 %v717
      %v758 = vunpack.c.l.b16 %v718
      %v759 = vunpack.c.l.b16 %v719
      %v760 = vunpack.c.h.b16 %v718
      %v761 = vunpack.c.h.b16 %v719
      %v762 = vunpack.c.l.b16 %v720
      %v763 = vunpack.c.l.b16 %v721
      %v764 = vunpack.c.h.b16 %v720
      %v765 = vunpack.c.h.b16 %v721
      %v766 = vunpack.c.l.b16 %v722
      %v767 = vunpack.c.l.b16 %v723
      %v768 = vunpack.c.h.b16 %v722
      %v769 = vunpack.c.h.b16 %v723
      %v770 = vunpack.c.l.b16 %v724
      %v771 = vunpack.c.l.b16 %v725
      %v772 = vunpack.c.h.b16 %v724
      %v773 = vunpack.c.h.b16 %v725
      %v774 = vpack.c.b16 %v743, %v742
      %v775 = vpack.c.b16 %v745, %v744
      %v776 = vpack.c.b16 %v747, %v746
      %v777 = vpack.c.b16 %v749, %v748
      %v778 = vpack.c.b16 %v751, %v750
      %v779 = vpack.c.b16 %v753, %v752
      %v780 = vpack.c.b16 %v755, %v754
      %v781 = vpack.c.b16 %v757, %v756
      %v782 = vpack.c.b16 %v759, %v758
      %v783 = vpack.c.b16 %v761, %v760
      %v784 = vpack.c.b16 %v763, %v762
      %v785 = vpack.c.b16 %v765, %v764
      %v786 = vpack.c.b16 %v767, %v766
      %v787 = vpack.c.b16 %v769, %v768
      %v788 = vpack.c.b16 %v771, %v770
      %v789 = vpack.c.b16 %v773, %v772
      %806 = vst [vmem:[%s224] sm:$0xff] %v774
      %807 = vst [vmem:[%s224 + $0x8] sm:$0xff] %v775
      %808 = vst [vmem:[%s224 + $0x10] sm:$0xff] %v776
      %809 = vst [vmem:[%s224 + $0x18] sm:$0xff] %v777
      %810 = vst [vmem:[%s224 + $0x20] sm:$0xff] %v778
      %811 = vst [vmem:[%s224 + $0x28] sm:$0xff] %v779
      %812 = vst [vmem:[%s224 + $0x30] sm:$0xff] %v780
      %813 = vst [vmem:[%s224 + $0x38] sm:$0xff] %v781
      %814 = vst [vmem:[%s224 + $0x40] sm:$0xff] %v782
      %815 = vst [vmem:[%s224 + $0x48] sm:$0xff] %v783
      %816 = vst [vmem:[%s224 + $0x50] sm:$0xff] %v784
      %817 = vst [vmem:[%s224 + $0x58] sm:$0xff] %v785
      %818 = vst [vmem:[%s224 + $0x60] sm:$0xff] %v786
      %819 = vst [vmem:[%s224 + $0x68] sm:$0xff] %v787
      %820 = vst [vmem:[%s224 + $0x70] sm:$0xff] %v788
      %821 = vst [vmem:[%s224 + $0x78] sm:$0xff] %v789
      %p822 = scmp.lt.s32.totalorder %s16, 1
      %s823 = scalar_select %p822, %s16, 1
      %s824 = smul.addr %s823, 32
      %s825 = smul.addr %s824, 4
      %s826 = scalar_lea.vmem %s5, %s825
      // Predicated region
      $region41: #{bert_forward.5} parent=39 // pred_check
        %p827 = pneg %p144
      $region42: #{bert_forward.5} parent=39 // pred_check_branch
        %829 = sbr.rel (%p827) target = $region44
      $region43: #{bert_forward.5} parent=39 // pred_region
        _
      $region44: #{bert_forward.5} parent=39 // pred_fallthru
        _
    $region40: #{bert_forward.5} parent=5 // pred_fallthru
      _
    %p830 = scmp.le.s32.totalorder 2, %s11
    // Predicated region
    $region45: #{bert_forward.5} parent=5 // pred_check
      %p831 = pneg %p830
    $region46: #{bert_forward.5} parent=5 // pred_check_branch
      %833 = sbr.rel (%p831) target = $region48
    $region47: #{bert_forward.5} parent=5 // pred_region
      %s834 = ssub.s32 %s11, 2
      // Predicated region
      $region49: #{bert_forward.5} parent=47 // pred_check
        %p835 = pneg %p150
      $region50: #{bert_forward.5} parent=47 // pred_check_branch
        %837 = sbr.rel (%p835) target = $region52
      $region51: #{bert_forward.5} parent=47 // pred_region
        %p838 = scmp.lt.s32.totalorder %s17, 1
        %s839 = scalar_select %p838, %s17, 1
        %s840 = smul.addr %s839, 32
        %s841 = smul.addr %s840, 4
        %s842 = scalar_lea.vmem %s5, %s841
      $region52: #{bert_forward.5} parent=47 // pred_fallthru
        _
    $region48: #{bert_forward.5} parent=5 // pred_fallthru
      _
  $region6: #{bert_forward.5} parent=0 // loop_footer
    %s15 = sadd.s32 1, %s11
  $region7: #{bert_forward.5} parent=0 // loop_footer_branch
    %10 = sbr.rel target = $region3
  $region8: #{bert_forward.5} parent=0 // loop_exit
    _

// kernel: bert_forward.6
$region0: #{bert_forward.6}
  #allocation0 [shape = 'u32[]', space=smem, size = 0x4, offset = 0x4, fixed_abs, tag = 'smem constant byte address 0x4 - core index']
  #allocation1 [shape = 'u32[144,128]{1,0:T(1,128)}', space=vmem, size = 0x12000, scoped, tag = 'internal scratch']
  %s0 = inlined_call_operand.vmem [shape: bf16[2,128,256], index: 0, kind: input, shape index: {}]
  %s1 = inlined_call_operand.vmem [shape: bf16[256,768], index: 1, kind: input, shape index: {}]
  %s2 = inlined_call_operand.vmem [shape: f32[1,768], index: 2, kind: input, shape index: {}]
  %s3 = inlined_call_operand.vmem [shape: bf16[256,256], index: 3, kind: input, shape index: {}]
  %s4 = inlined_call_operand.vmem [shape: f32[1,256], index: 4, kind: input, shape index: {}]
  %s5 = inlined_call_operand.vmem [shape: f32[1,256], index: 5, kind: input, shape index: {}]
  %s6 = inlined_call_operand.vmem [shape: f32[1,256], index: 6, kind: input, shape index: {}]
  %s7 = inlined_call_operand.vmem [shape: f32[2,1,128], index: 7, kind: input, shape index: {}]
  %s8 = inlined_call_operand.vmem [shape: bf16[2,128,256], index: 8, kind: output, shape index: {}]
  %s9 = sld [smem:[#allocation0]]
  $region65: #{bert_forward.6} parent=0
    _
  %s11 = ssub.s32 1, %s9
  %s12 = scalar_select 0, %s11, %s9
  loop: start=0, step=1, limit=4
  $region2: #{bert_forward.6} parent=0 // loop_pre_header
    _
  $region3: #{bert_forward.6} parent=0 // loop_header
    %s14 = sphi 0, %s18
    %p15 = scmp.ge.s32.totalorder %s14, 4
    %s24 = sphi 0, %s26
    %s27 = sphi 0, %s24
    %s28 = sphi 0, %s27
    %s44 = sphi 0, %s28
    %s48 = sphi 0, %s48
    %s50 = sphi 0, %s48
    %s51 = sphi 0, %s50
    %s65 = sphi 0, %s51
    %s69 = sphi 0, %s69
    %s71 = sphi 0, %s69
    %s72 = sphi 0, %s71
    %s86 = sphi 0, %s72
    %s90 = sphi 0, %s90
    %s92 = sphi 0, %s90
    %s93 = sphi 0, %s92
    %s107 = sphi 0, %s93
    %s111 = sphi 0, %s111
    %s113 = sphi 0, %s111
    %s114 = sphi 0, %s113
    %s128 = sphi 0, %s114
    %s132 = sphi 0, %s132
    %s134 = sphi 0, %s132
    %s135 = sphi 0, %s134
    %s149 = sphi 0, %s135
    %s153 = sphi 0, %s153
    %s155 = sphi 0, %s153
    %s156 = sphi 0, %s155
    %s170 = sphi 0, %s156
    %s176 = sphi 0, %s178
    %s179 = sphi 0, %s176
    %s180 = sphi 0, %s179
    %s196 = sphi 0, %s180
    %s202 = sphi 0, %s204
    %s205 = sphi 0, %s202
    %s206 = sphi 0, %s205
    %s222 = sphi 0, %s206
  $region4: #{bert_forward.6} parent=0 // loop_header_branch
    %17 = sbr.rel (%p15) target = $region8
  $region5: #{bert_forward.6} parent=0 // loop_body
    %s19 = ssub.s32 %s14, 1
    %s20 = ssub.s32 %s14, 2
    %s21 = sadd.s32 %s14, 1
    %s22 = ssub.s32 %s14, %s21
    %p23 = scmp.eq.s32.totalorder %s22, 0
    %s25 = sadd.s32 %s24, 1
    %s26 = scalar_select %p23, %s24, %s25
    %p29 = pneg %p23
    %p30 = scmp.eq.s32.totalorder %s14, 1
    %p31 = por %p29, %p30
    %p32 = scmp.ne.s32.totalorder %s24, %s27
    %p33 = scmp.eq.s32.totalorder %s14, 0
    %p34 = por %p32, %p33
    %p35 = scmp.ne.s32.totalorder %s24, %s27
    %p36 = scmp.eq.s32.totalorder %s19, 1
    %p37 = por %p35, %p36
    %p38 = scmp.ne.s32.totalorder %s27, %s28
    %p39 = scmp.eq.s32.totalorder %s19, 0
    %p40 = por %p38, %p39
    %p41 = scmp.ne.s32.totalorder %s27, %s28
    %p42 = scmp.eq.s32.totalorder %s20, 1
    %p43 = por %p41, %p42
    %p45 = scmp.ne.s32.totalorder %s28, %s44
    %p46 = scmp.eq.s32.totalorder %s20, 0
    %p47 = por %p45, %p46
    %s49 = sadd.s32 %s48, 1
    %p52 = scmp.eq.s32.totalorder %s14, 1
    %p53 = scmp.ne.s32.totalorder %s48, %s50
    %p54 = scmp.eq.s32.totalorder %s14, 0
    %p55 = por %p53, %p54
    %p56 = scmp.ne.s32.totalorder %s48, %s50
    %p57 = scmp.eq.s32.totalorder %s19, 1
    %p58 = por %p56, %p57
    %p59 = scmp.ne.s32.totalorder %s50, %s51
    %p60 = scmp.eq.s32.totalorder %s19, 0
    %p61 = por %p59, %p60
    %p62 = scmp.ne.s32.totalorder %s50, %s51
    %p63 = scmp.eq.s32.totalorder %s20, 1
    %p64 = por %p62, %p63
    %p66 = scmp.ne.s32.totalorder %s51, %s65
    %p67 = scmp.eq.s32.totalorder %s20, 0
    %p68 = por %p66, %p67
    %s70 = sadd.s32 %s69, 1
    %p73 = scmp.eq.s32.totalorder %s14, 1
    %p74 = scmp.ne.s32.totalorder %s69, %s71
    %p75 = scmp.eq.s32.totalorder %s14, 0
    %p76 = por %p74, %p75
    %p77 = scmp.ne.s32.totalorder %s69, %s71
    %p78 = scmp.eq.s32.totalorder %s19, 1
    %p79 = por %p77, %p78
    %p80 = scmp.ne.s32.totalorder %s71, %s72
    %p81 = scmp.eq.s32.totalorder %s19, 0
    %p82 = por %p80, %p81
    %p83 = scmp.ne.s32.totalorder %s71, %s72
    %p84 = scmp.eq.s32.totalorder %s20, 1
    %p85 = por %p83, %p84
    %p87 = scmp.ne.s32.totalorder %s72, %s86
    %p88 = scmp.eq.s32.totalorder %s20, 0
    %p89 = por %p87, %p88
    %s91 = sadd.s32 %s90, 1
    %p94 = scmp.eq.s32.totalorder %s14, 1
    %p95 = scmp.ne.s32.totalorder %s90, %s92
    %p96 = scmp.eq.s32.totalorder %s14, 0
    %p97 = por %p95, %p96
    %p98 = scmp.ne.s32.totalorder %s90, %s92
    %p99 = scmp.eq.s32.totalorder %s19, 1
    %p100 = por %p98, %p99
    %p101 = scmp.ne.s32.totalorder %s92, %s93
    %p102 = scmp.eq.s32.totalorder %s19, 0
    %p103 = por %p101, %p102
    %p104 = scmp.ne.s32.totalorder %s92, %s93
    %p105 = scmp.eq.s32.totalorder %s20, 1
    %p106 = por %p104, %p105
    %p108 = scmp.ne.s32.totalorder %s93, %s107
    %p109 = scmp.eq.s32.totalorder %s20, 0
    %p110 = por %p108, %p109
    %s112 = sadd.s32 %s111, 1
    %p115 = scmp.eq.s32.totalorder %s14, 1
    %p116 = scmp.ne.s32.totalorder %s111, %s113
    %p117 = scmp.eq.s32.totalorder %s14, 0
    %p118 = por %p116, %p117
    %p119 = scmp.ne.s32.totalorder %s111, %s113
    %p120 = scmp.eq.s32.totalorder %s19, 1
    %p121 = por %p119, %p120
    %p122 = scmp.ne.s32.totalorder %s113, %s114
    %p123 = scmp.eq.s32.totalorder %s19, 0
    %p124 = por %p122, %p123
    %p125 = scmp.ne.s32.totalorder %s113, %s114
    %p126 = scmp.eq.s32.totalorder %s20, 1
    %p127 = por %p125, %p126
    %p129 = scmp.ne.s32.totalorder %s114, %s128
    %p130 = scmp.eq.s32.totalorder %s20, 0
    %p131 = por %p129, %p130
    %s133 = sadd.s32 %s132, 1
    %p136 = scmp.eq.s32.totalorder %s14, 1
    %p137 = scmp.ne.s32.totalorder %s132, %s134
    %p138 = scmp.eq.s32.totalorder %s14, 0
    %p139 = por %p137, %p138
    %p140 = scmp.ne.s32.totalorder %s132, %s134
    %p141 = scmp.eq.s32.totalorder %s19, 1
    %p142 = por %p140, %p141
    %p143 = scmp.ne.s32.totalorder %s134, %s135
    %p144 = scmp.eq.s32.totalorder %s19, 0
    %p145 = por %p143, %p144
    %p146 = scmp.ne.s32.totalorder %s134, %s135
    %p147 = scmp.eq.s32.totalorder %s20, 1
    %p148 = por %p146, %p147
    %p150 = scmp.ne.s32.totalorder %s135, %s149
    %p151 = scmp.eq.s32.totalorder %s20, 0
    %p152 = por %p150, %p151
    %s154 = sadd.s32 %s153, 1
    %p157 = scmp.eq.s32.totalorder %s14, 1
    %p158 = scmp.ne.s32.totalorder %s153, %s155
    %p159 = scmp.eq.s32.totalorder %s14, 0
    %p160 = por %p158, %p159
    %p161 = scmp.ne.s32.totalorder %s153, %s155
    %p162 = scmp.eq.s32.totalorder %s19, 1
    %p163 = por %p161, %p162
    %p164 = scmp.ne.s32.totalorder %s155, %s156
    %p165 = scmp.eq.s32.totalorder %s19, 0
    %p166 = por %p164, %p165
    %p167 = scmp.ne.s32.totalorder %s155, %s156
    %p168 = scmp.eq.s32.totalorder %s20, 1
    %p169 = por %p167, %p168
    %p171 = scmp.ne.s32.totalorder %s156, %s170
    %p172 = scmp.eq.s32.totalorder %s20, 0
    %p173 = por %p171, %p172
    %s174 = ssub.s32 %s14, %s21
    %p175 = scmp.eq.s32.totalorder %s174, 0
    %s177 = sadd.s32 %s176, 1
    %s178 = scalar_select %p175, %s176, %s177
    %p181 = pneg %p175
    %p182 = scmp.eq.s32.totalorder %s14, 1
    %p183 = por %p181, %p182
    %p184 = scmp.ne.s32.totalorder %s176, %s179
    %p185 = scmp.eq.s32.totalorder %s14, 0
    %p186 = por %p184, %p185
    %p187 = scmp.ne.s32.totalorder %s176, %s179
    %p188 = scmp.eq.s32.totalorder %s19, 1
    %p189 = por %p187, %p188
    %p190 = scmp.ne.s32.totalorder %s179, %s180
    %p191 = scmp.eq.s32.totalorder %s19, 0
    %p192 = por %p190, %p191
    %p193 = scmp.ne.s32.totalorder %s179, %s180
    %p194 = scmp.eq.s32.totalorder %s20, 1
    %p195 = por %p193, %p194
    %p197 = scmp.ne.s32.totalorder %s180, %s196
    %p198 = scmp.eq.s32.totalorder %s20, 0
    %p199 = por %p197, %p198
    %s200 = ssub.s32 %s14, %s21
    %p201 = scmp.eq.s32.totalorder %s200, 0
    %s203 = sadd.s32 %s202, 1
    %s204 = scalar_select %p201, %s202, %s203
    %p207 = pneg %p201
    %p208 = scmp.eq.s32.totalorder %s14, 1
    %p209 = por %p207, %p208
    %p210 = scmp.ne.s32.totalorder %s202, %s205
    %p211 = scmp.eq.s32.totalorder %s14, 0
    %p212 = por %p210, %p211
    %p213 = scmp.ne.s32.totalorder %s202, %s205
    %p214 = scmp.eq.s32.totalorder %s19, 1
    %p215 = por %p213, %p214
    %p216 = scmp.ne.s32.totalorder %s205, %s206
    %p217 = scmp.eq.s32.totalorder %s19, 0
    %p218 = por %p216, %p217
    %p219 = scmp.ne.s32.totalorder %s205, %s206
    %p220 = scmp.eq.s32.totalorder %s20, 1
    %p221 = por %p219, %p220
    %p223 = scmp.ne.s32.totalorder %s206, %s222
    %p224 = scmp.eq.s32.totalorder %s20, 0
    %p225 = por %p223, %p224
    %p226 = scmp.le.s32.totalorder 1, %s14
    %p227 = scmp.lt.s32.totalorder %s14, 3
    %p228 = pnand %p226, %p227
    %p229 = pneg %p228
    // Predicated region
    $region9: #{bert_forward.6} parent=5 // pred_check
      _
    $region10: #{bert_forward.6} parent=5 // pred_check_branch
      %231 = sbr.rel (%p228) target = $region12
    $region11: #{bert_forward.6} parent=5 // pred_region
      %s232 = ssub.s32 %s14, 1
      // Predicated region
      $region13: #{bert_forward.6} parent=11 // pred_check
        %p233 = pneg %p61
      $region14: #{bert_forward.6} parent=11 // pred_check_branch
        %235 = sbr.rel (%p233) target = $region16
      $region15: #{bert_forward.6} parent=11 // pred_region
        _
      $region16: #{bert_forward.6} parent=11 // pred_fallthru
        _
      // Predicated region
      $region17: #{bert_forward.6} parent=11 // pred_check
        %p236 = pneg %p82
      $region18: #{bert_forward.6} parent=11 // pred_check_branch
        %238 = sbr.rel (%p236) target = $region20
      $region19: #{bert_forward.6} parent=11 // pred_region
        _
      $region20: #{bert_forward.6} parent=11 // pred_fallthru
        _
      // Predicated region
      $region21: #{bert_forward.6} parent=11 // pred_check
        %p239 = pneg %p103
      $region22: #{bert_forward.6} parent=11 // pred_check_branch
        %241 = sbr.rel (%p239) target = $region24
      $region23: #{bert_forward.6} parent=11 // pred_region
        _
      $region24: #{bert_forward.6} parent=11 // pred_fallthru
        _
      // Predicated region
      $region25: #{bert_forward.6} parent=11 // pred_check
        %p242 = pneg %p124
      $region26: #{bert_forward.6} parent=11 // pred_check_branch
        %244 = sbr.rel (%p242) target = $region28
      $region27: #{bert_forward.6} parent=11 // pred_region
        _
      $region28: #{bert_forward.6} parent=11 // pred_fallthru
        _
      // Predicated region
      $region29: #{bert_forward.6} parent=11 // pred_check
        %p245 = pneg %p145
      $region30: #{bert_forward.6} parent=11 // pred_check_branch
        %247 = sbr.rel (%p245) target = $region32
      $region31: #{bert_forward.6} parent=11 // pred_region
        _
      $region32: #{bert_forward.6} parent=11 // pred_fallthru
        _
      // Predicated region
      $region33: #{bert_forward.6} parent=11 // pred_check
        %p248 = pneg %p166
      $region34: #{bert_forward.6} parent=11 // pred_check_branch
        %250 = sbr.rel (%p248) target = $region36
      $region35: #{bert_forward.6} parent=11 // pred_region
        _
      $region36: #{bert_forward.6} parent=11 // pred_fallthru
        _
    $region12: #{bert_forward.6} parent=5 // pred_fallthru
      _
    %p251 = scmp.lt.s32.totalorder %s14, 2
    // Predicated region
    $region37: #{bert_forward.6} parent=5 // pred_check
      %p252 = pneg %p251
    $region38: #{bert_forward.6} parent=5 // pred_check_branch
      %254 = sbr.rel (%p252) target = $region40
    $region39: #{bert_forward.6} parent=5 // pred_region
      // Predicated region
      $region41: #{bert_forward.6} parent=39 // pred_check
        %p255 = pneg %p34
      $region42: #{bert_forward.6} parent=39 // pred_check_branch
        %257 = sbr.rel (%p255) target = $region44
      $region43: #{bert_forward.6} parent=39 // pred_region
        %p258 = scmp.lt.s32.totalorder %s14, 1
        %s259 = scalar_select %p258, %s14, 1
        %s260 = smul.addr %s259, 32
        %s261 = smul.addr %s260, 4
        %s262 = scalar_lea.vmem %s0, %s261
      $region44: #{bert_forward.6} parent=39 // pred_fallthru
        _
      // Predicated region
      $region45: #{bert_forward.6} parent=39 // pred_check
        %p263 = pneg %p186
      $region46: #{bert_forward.6} parent=39 // pred_check_branch
        %265 = sbr.rel (%p263) target = $region48
      $region47: #{bert_forward.6} parent=39 // pred_region
        %p266 = scmp.lt.s32.totalorder %s14, 1
        %s267 = scalar_select %p266, %s14, 1
        %s268 = scalar_lea.vmem %s7, %s267
      $region48: #{bert_forward.6} parent=39 // pred_fallthru
        _
    $region40: #{bert_forward.6} parent=5 // pred_fallthru
      _
    %p269 = scmp.le.s32.totalorder 1, %s14
    %p270 = scmp.lt.s32.totalorder %s14, 3
    %p271 = pnand %p269, %p270
    %p272 = pneg %p271
    // Predicated region
    $region49: #{bert_forward.6} parent=5 // pred_check
      _
    $region50: #{bert_forward.6} parent=5 // pred_check_branch
      %274 = sbr.rel (%p271) target = $region52
    $region51: #{bert_forward.6} parent=5 // pred_region
      %s275 = ssub.s32 %s14, 1
      %p276 = scmp.lt.s32.totalorder %s19, 1
      %s277 = scalar_select %p276, %s19, 1
      %s278 = smul.addr %s277, 32
      %s279 = smul.addr %s278, 4
      %s280 = scalar_lea.vmem %s0, %s279
      %p281 = pneg %p40
      %p282 = pneg %p37
      %p283 = pneg %p61
      %p284 = pneg %p58
      %p285 = pneg %p82
      %p286 = pneg %p79
      %p287 = pneg %p103
      %p288 = pneg %p100
      %p289 = pneg %p124
      %p290 = pneg %p121
      %p291 = pneg %p145
      %p292 = pneg %p142
      %p293 = pneg %p166
      %p294 = pneg %p163
      %p295 = scmp.lt.s32.totalorder %s19, 1
      %s296 = scalar_select %p295, %s19, 1
      %s297 = scalar_lea.vmem %s7, %s296
      %p298 = pneg %p192
      %p299 = pneg %p189
      %p300 = pneg %p218
      %p301 = pneg %p215
      %p302 = scmp.lt.s32.totalorder %s19, 1
      %s303 = scalar_select %p302, %s19, 1
      %s304 = smul.addr %s303, 32
      %s305 = smul.addr %s304, 4
      %s306 = scalar_lea.vmem %s8, %s305
      %p307 = scmp.lt.s32.totalorder %s19, 1
      %s308 = scalar_select %p307, %s19, 1
      %s309 = smul.addr %s308, 32
      %s310 = smul.addr %s309, 4
      %s311 = scalar_lea.vmem %s0, %s310
      %p312 = scmp.lt.s32.totalorder %s19, 1
      %s313 = scalar_select %p312, %s19, 1
      %s314 = scalar_lea.vmem %s7, %s313
      %p315 = scmp.lt.s32.totalorder %s19, 1
      %s316 = scalar_select %p315, %s19, 1
      %s317 = smul.addr %s316, 32
      %s318 = smul.addr %s317, 4
      %s319 = scalar_lea.vmem %s8, %s318
      %v321 = vld [vmem:[%s311] sm:$0xff]
      %v322 = vld [vmem:[%s311 + $0x8] sm:$0xff]
      %v323 = vld [vmem:[%s311 + $0x10] sm:$0xff]
      %v324 = vld [vmem:[%s311 + $0x18] sm:$0xff]
      %v325 = vld [vmem:[%s311 + $0x20] sm:$0xff]
      %v326 = vld [vmem:[%s311 + $0x28] sm:$0xff]
      %v327 = vld [vmem:[%s311 + $0x30] sm:$0xff]
      %v328 = vld [vmem:[%s311 + $0x38] sm:$0xff]
      %v329 = vld [vmem:[%s311 + $0x40] sm:$0xff]
      %v330 = vld [vmem:[%s311 + $0x48] sm:$0xff]
      %v331 = vld [vmem:[%s311 + $0x50] sm:$0xff]
      %v332 = vld [vmem:[%s311 + $0x58] sm:$0xff]
      %v333 = vld [vmem:[%s311 + $0x60] sm:$0xff]
      %v334 = vld [vmem:[%s311 + $0x68] sm:$0xff]
      %v335 = vld [vmem:[%s311 + $0x70] sm:$0xff]
      %v336 = vld [vmem:[%s311 + $0x78] sm:$0xff]
      %v337 = vld [vmem:[%s314] sm:$0x1]
      %v338 = vunpack.c.l.bf16 %v321
      %v339 = vunpack.c.h.bf16 %v321
      %v340 = vunpack.c.l.bf16 %v322
      %v341 = vunpack.c.h.bf16 %v322
      %v342 = vunpack.c.l.bf16 %v323
      %v343 = vunpack.c.h.bf16 %v323
      %v344 = vunpack.c.l.bf16 %v324
      %v345 = vunpack.c.h.bf16 %v324
      %v346 = vunpack.c.l.bf16 %v325
      %v347 = vunpack.c.h.bf16 %v325
      %v348 = vunpack.c.l.bf16 %v326
      %v349 = vunpack.c.h.bf16 %v326
      %v350 = vunpack.c.l.bf16 %v327
      %v351 = vunpack.c.h.bf16 %v327
      %v352 = vunpack.c.l.bf16 %v328
      %v353 = vunpack.c.h.bf16 %v328
      %v354 = vunpack.c.l.bf16 %v329
      %v355 = vunpack.c.h.bf16 %v329
      %v356 = vunpack.c.l.bf16 %v330
      %v357 = vunpack.c.h.bf16 %v330
      %v358 = vunpack.c.l.bf16 %v331
      %v359 = vunpack.c.h.bf16 %v331
      %v360 = vunpack.c.l.bf16 %v332
      %v361 = vunpack.c.h.bf16 %v332
      %v362 = vunpack.c.l.bf16 %v333
      %v363 = vunpack.c.h.bf16 %v333
      %v364 = vunpack.c.l.bf16 %v334
      %v365 = vunpack.c.h.bf16 %v334
      %v366 = vunpack.c.l.bf16 %v335
      %v367 = vunpack.c.h.bf16 %v335
      %v368 = vunpack.c.l.bf16 %v336
      %v369 = vunpack.c.h.bf16 %v336
      %v370 = vld [vmem:[%s4] sm:$0x3]
      %v372 = vlaneseq
      %v373 = vshrl.u32 %v372, 7
      %v374 = vsub.s32 0, %v373
      %v375 = vrot.slane %v370, %v374
      %v376 = vlaneseq
      %v377 = vshrl.u32 %v376, 7
      %v378 = vsub.s32 1, %v377
      %v379 = vrot.slane %v370, %v378
      %v382 = vadd.f32 %v338, %v375
      %v383 = vadd.f32 %v339, %v379
      %v384 = vadd.f32 %v340, %v375
      %v385 = vadd.f32 %v341, %v379
      %v386 = vadd.f32 %v342, %v375
      %v387 = vadd.f32 %v343, %v379
      %v388 = vadd.f32 %v344, %v375
      %v389 = vadd.f32 %v345, %v379
      %v390 = vadd.f32 %v346, %v375
      %v391 = vadd.f32 %v347, %v379
      %v392 = vadd.f32 %v348, %v375
      %v393 = vadd.f32 %v349, %v379
      %v394 = vadd.f32 %v350, %v375
      %v395 = vadd.f32 %v351, %v379
      %v396 = vadd.f32 %v352, %v375
      %v397 = vadd.f32 %v353, %v379
      %v398 = vadd.f32 %v354, %v375
      %v399 = vadd.f32 %v355, %v379
      %v400 = vadd.f32 %v356, %v375
      %v401 = vadd.f32 %v357, %v379
      %v402 = vadd.f32 %v358, %v375
      %v403 = vadd.f32 %v359, %v379
      %v404 = vadd.f32 %v360, %v375
      %v405 = vadd.f32 %v361, %v379
      %v406 = vadd.f32 %v362, %v375
      %v407 = vadd.f32 %v363, %v379
      %v408 = vadd.f32 %v364, %v375
      %v409 = vadd.f32 %v365, %v379
      %v410 = vadd.f32 %v366, %v375
      %v411 = vadd.f32 %v367, %v379
      %v412 = vadd.f32 %v368, %v375
      %v413 = vadd.f32 %v369, %v379
      %v414 = vld [vmem:[%s1] sm:$0xf]
      %v415 = vld [vmem:[%s1 + $0x18] sm:$0xf]
      %v416 = vld [vmem:[%s1 + $0x30] sm:$0xf]
      %v417 = vld [vmem:[%s1 + $0x48] sm:$0xf]
      %v418 = vld [vmem:[%s1 + $0x60] sm:$0xf]
      %v419 = vld [vmem:[%s1 + $0x78] sm:$0xf]
      %v420 = vld [vmem:[%s1 + $0x90] sm:$0xf]
      %v421 = vld [vmem:[%s1 + $0xa8] sm:$0xf]
      %v422 = vld [vmem:[%s1 + $0xc0] sm:$0xf]
      %v423 = vld [vmem:[%s1 + $0xd8] sm:$0xf]
      %v424 = vld [vmem:[%s1 + $0xf0] sm:$0xf]
      %v425 = vld [vmem:[%s1 + $0x108] sm:$0xf]
      %v426 = vld [vmem:[%s1 + $0x120] sm:$0xf]
      %v427 = vld [vmem:[%s1 + $0x138] sm:$0xf]
      %v428 = vld [vmem:[%s1 + $0x150] sm:$0xf]
      %v429 = vld [vmem:[%s1 + $0x168] sm:$0xf]
      %v430 = vld [vmem:[%s1 + $0x180] sm:$0xf]
      %v431 = vld [vmem:[%s1 + $0x198] sm:$0xf]
      %v432 = vld [vmem:[%s1 + $0x1b0] sm:$0xf]
      %v433 = vld [vmem:[%s1 + $0x1c8] sm:$0xf]
      %v434 = vld [vmem:[%s1 + $0x1e0] sm:$0xf]
      %v435 = vld [vmem:[%s1 + $0x1f8] sm:$0xf]
      %v436 = vld [vmem:[%s1 + $0x210] sm:$0xf]
      %v437 = vld [vmem:[%s1 + $0x228] sm:$0xf]
      %v438 = vld [vmem:[%s1 + $0x240] sm:$0xf]
      %v439 = vld [vmem:[%s1 + $0x258] sm:$0xf]
      %v440 = vld [vmem:[%s1 + $0x270] sm:$0xf]
      %v441 = vld [vmem:[%s1 + $0x288] sm:$0xf]
      %v442 = vld [vmem:[%s1 + $0x2a0] sm:$0xf]
      %v443 = vld [vmem:[%s1 + $0x2b8] sm:$0xf]
      %v444 = vld [vmem:[%s1 + $0x2d0] sm:$0xf]
      %v445 = vld [vmem:[%s1 + $0x2e8] sm:$0xf]
      %v446 = vld [vmem:[%s2] sm:$0x1]
      %v448 = vlaneseq
      %v449 = vshrl.u32 %v448, 7
      %v450 = vsub.s32 0, %v449
      %v451 = vrot.slane %v446, %v450
      %v469 = vunpack.c.l.b16 %v321
      %v470 = vunpack.c.h.b16 %v321
      %v471 = vunpack.c.l.b16 %v322
      %v472 = vunpack.c.h.b16 %v322
      %v473 = vunpack.c.l.b16 %v323
      %v474 = vunpack.c.h.b16 %v323
      %v475 = vunpack.c.l.b16 %v324
      %v476 = vunpack.c.h.b16 %v324
      %v477 = vunpack.c.l.b16 %v325
      %v478 = vunpack.c.h.b16 %v325
      %v479 = vunpack.c.l.b16 %v326
      %v480 = vunpack.c.h.b16 %v326
      %v481 = vunpack.c.l.b16 %v327
      %v482 = vunpack.c.h.b16 %v327
      %v483 = vunpack.c.l.b16 %v328
      %v484 = vunpack.c.h.b16 %v328
      %v485 = vunpack.c.l.b16 %v329
      %v486 = vunpack.c.h.b16 %v329
      %v487 = vunpack.c.l.b16 %v330
      %v488 = vunpack.c.h.b16 %v330
      %v489 = vunpack.c.l.b16 %v331
      %v490 = vunpack.c.h.b16 %v331
      %v491 = vunpack.c.l.b16 %v332
      %v492 = vunpack.c.h.b16 %v332
      %v493 = vunpack.c.l.b16 %v333
      %v494 = vunpack.c.h.b16 %v333
      %v495 = vunpack.c.l.b16 %v334
      %v496 = vunpack.c.h.b16 %v334
      %v497 = vunpack.c.l.b16 %v335
      %v498 = vunpack.c.h.b16 %v335
      %v499 = vunpack.c.l.b16 %v336
      %v500 = vunpack.c.h.b16 %v336
      %v501 = vpack.c.b16 %v471, %v469
      %v502 = vpack.c.b16 %v472, %v470
      %v503 = vpack.c.b16 %v475, %v473
      %v504 = vpack.c.b16 %v476, %v474
      %v505 = vpack.c.b16 %v479, %v477
      %v506 = vpack.c.b16 %v480, %v478
      %v507 = vpack.c.b16 %v483, %v481
      %v508 = vpack.c.b16 %v484, %v482
      %v509 = vpack.c.b16 %v487, %v485
      %v510 = vpack.c.b16 %v488, %v486
      %v511 = vpack.c.b16 %v491, %v489
      %v512 = vpack.c.b16 %v492, %v490
      %v513 = vpack.c.b16 %v495, %v493
      %v514 = vpack.c.b16 %v496, %v494
      %v515 = vpack.c.b16 %v499, %v497
      %v516 = vpack.c.b16 %v500, %v498
      %v565 = vunpack.c.l.b16 %v414
      %v566 = vunpack.c.l.b16 %v415
      %v567 = vunpack.c.l.b16 %v416
      %v568 = vunpack.c.l.b16 %v417
      %v569 = vunpack.c.l.b16 %v418
      %v570 = vunpack.c.l.b16 %v419
      %v571 = vunpack.c.l.b16 %v420
      %v572 = vunpack.c.l.b16 %v421
      %v573 = vunpack.c.l.b16 %v422
      %v574 = vunpack.c.l.b16 %v423
      %v575 = vunpack.c.l.b16 %v424
      %v576 = vunpack.c.l.b16 %v425
      %v577 = vunpack.c.l.b16 %v426
      %v578 = vunpack.c.l.b16 %v427
      %v579 = vunpack.c.l.b16 %v428
      %v580 = vunpack.c.l.b16 %v429
      %v581 = vunpack.c.l.b16 %v430
      %v582 = vunpack.c.l.b16 %v431
      %v583 = vunpack.c.l.b16 %v432
      %v584 = vunpack.c.l.b16 %v433
      %v585 = vunpack.c.l.b16 %v434
      %v586 = vunpack.c.l.b16 %v435
      %v587 = vunpack.c.l.b16 %v436
      %v588 = vunpack.c.l.b16 %v437
      %v589 = vunpack.c.l.b16 %v438
      %v590 = vunpack.c.l.b16 %v439
      %v591 = vunpack.c.l.b16 %v440
      %v592 = vunpack.c.l.b16 %v441
      %v593 = vunpack.c.l.b16 %v442
      %v594 = vunpack.c.l.b16 %v443
      %v595 = vunpack.c.l.b16 %v444
      %v596 = vunpack.c.l.b16 %v445
      %v597 = vpack.c.b16 %v566, %v565
      %v598 = vpack.c.b16 %v568, %v567
      %v599 = vpack.c.b16 %v570, %v569
      %v600 = vpack.c.b16 %v572, %v571
      %v601 = vpack.c.b16 %v574, %v573
      %v602 = vpack.c.b16 %v576, %v575
      %v603 = vpack.c.b16 %v578, %v577
      %v604 = vpack.c.b16 %v580, %v579
      %v605 = vpack.c.b16 %v582, %v581
      %v606 = vpack.c.b16 %v584, %v583
      %v607 = vpack.c.b16 %v586, %v585
      %v608 = vpack.c.b16 %v588, %v587
      %v609 = vpack.c.b16 %v590, %v589
      %v610 = vpack.c.b16 %v592, %v591
      %v611 = vpack.c.b16 %v594, %v593
      %v612 = vpack.c.b16 %v596, %v595
      %629 = vmatprep.subr.bf16.mxu0 0
      %630 = vmatpush1.bf16.msra.mxu0 %v597
      %631 = vmatprep.subr.bf16.mxu0 0
      %632 = vmatpush1.bf16.msra.mxu0 %v598
      %633 = vmatprep.subr.bf16.mxu0 0
      %634 = vmatpush1.bf16.msra.mxu0 %v599
      %635 = vmatprep.subr.bf16.mxu0 0
      %636 = vmatpush1.bf16.msra.mxu0 %v600
      %637 = vmatprep.subr.bf16.mxu0 0
      %638 = vmatpush1.bf16.msra.mxu0 %v601
      %639 = vmatprep.subr.bf16.mxu0 0
      %640 = vmatpush1.bf16.msra.mxu0 %v602
      %641 = vmatprep.subr.bf16.mxu0 0
      %642 = vmatpush1.bf16.msra.mxu0 %v603
      %643 = vmatprep.subr.bf16.mxu0 0
      %644 = vmatpush1.bf16.msra.mxu0 %v604
      %645 = vmatprep.subr.bf16.mxu0 0
      %646 = vmatpush1.bf16.msra.mxu0 %v605
      %647 = vmatprep.subr.bf16.mxu0 0
      %648 = vmatpush1.bf16.msra.mxu0 %v606
      %649 = vmatprep.subr.bf16.mxu0 0
      %650 = vmatpush1.bf16.msra.mxu0 %v607
      %651 = vmatprep.subr.bf16.mxu0 0
      %652 = vmatpush1.bf16.msra.mxu0 %v608
      %653 = vmatprep.subr.bf16.mxu0 0
      %654 = vmatpush1.bf16.msra.mxu0 %v609
      %655 = vmatprep.subr.bf16.mxu0 0
      %656 = vmatpush1.bf16.msra.mxu0 %v610
      %657 = vmatprep.subr.bf16.mxu0 0
      %658 = vmatpush1.bf16.msra.mxu0 %v611
      %659 = vmatprep.subr.bf16.mxu0 0
      %660 = vmatpush1.bf16.msra.mxu0 %v612
      %661 = vmatprep.mubr.bf16.mxu0 %v502
      %662 = vmatmul.mubr.bf16.gmra.mrb[0].mxu0 %v501
      %v663 = vpop.f32.mrb[0].mxu0
      %v664 = vadd.f32 %v451, %v663
      %v665 = vpop.f32.mrb[0].mxu0
      %v666 = vpop.f32.mrb[0].mxu0
      %v667 = vadd.f32 %v451, %v666
      %v668 = vpop.f32.mrb[0].mxu0
      %669 = vmatprep.mubr.bf16.mxu0 %v504
      %670 = vmatmul.mubr.bf16.gmra.mrb[0].mxu0 %v503
      %v671 = vpop.f32.mrb[0].mxu0
      %v672 = vadd.f32 %v451, %v671
      %v673 = vpop.f32.mrb[0].mxu0
      %v674 = vpop.f32.mrb[0].mxu0
      %v675 = vadd.f32 %v451, %v674
      %v676 = vpop.f32.mrb[0].mxu0
      %677 = vmatprep.mubr.bf16.mxu0 %v506
      %678 = vmatmul.mubr.bf16.gmra.mrb[0].mxu0 %v505
      %v679 = vpop.f32.mrb[0].mxu0
      %v680 = vadd.f32 %v451, %v679
      %v681 = vpop.f32.mrb[0].mxu0
      %v682 = vpop.f32.mrb[0].mxu0
      %v683 = vadd.f32 %v451, %v682
      %v684 = vpop.f32.mrb[0].mxu0
      %685 = vmatprep.mubr.bf16.mxu0 %v508
      %686 = vmatmul.mubr.bf16.gmra.mrb[0].mxu0 %v507
      %v687 = vpop.f32.mrb[0].mxu0
      %v688 = vadd.f32 %v451, %v687
      %v689 = vpop.f32.mrb[0].mxu0
      %v690 = vpop.f32.mrb[0].mxu0
      %v691 = vadd.f32 %v451, %v690
      %v692 = vpop.f32.mrb[0].mxu0
      %693 = vmatprep.mubr.bf16.mxu0 %v510
      %694 = vmatmul.mubr.bf16.gmra.mrb[0].mxu0 %v509
      %v695 = vpop.f32.mrb[0].mxu0
      %v696 = vadd.f32 %v451, %v695
      %v697 = vpop.f32.mrb[0].mxu0
      %v698 = vpop.f32.mrb[0].mxu0
      %v699 = vadd.f32 %v451, %v698
      %v700 = vpop.f32.mrb[0].mxu0
      %701 = vmatprep.mubr.bf16.mxu0 %v512
      %702 = vmatmul.mubr.bf16.gmra.mrb[0].mxu0 %v511
      %v703 = vpop.f32.mrb[0].mxu0
      %v704 = vadd.f32 %v451, %v703
      %v705 = vpop.f32.mrb[0].mxu0
      %v706 = vpop.f32.mrb[0].mxu0
      %v707 = vadd.f32 %v451, %v706
      %v708 = vpop.f32.mrb[0].mxu0
      %709 = vmatprep.mubr.bf16.mxu0 %v514
      %710 = vmatmul.mubr.bf16.gmra.mrb[0].mxu0 %v513
      %v711 = vpop.f32.mrb[0].mxu0
      %v712 = vadd.f32 %v451, %v711
      %v713 = vpop.f32.mrb[0].mxu0
      %v714 = vpop.f32.mrb[0].mxu0
      %v715 = vadd.f32 %v451, %v714
      %v716 = vpop.f32.mrb[0].mxu0
      %717 = vmatprep.mubr.bf16.mxu0 %v516
      %718 = vmatmul.mubr.bf16.gmra.mrb[0].mxu0 %v515
      %v719 = vpop.f32.mrb[0].mxu0
      %v720 = vadd.f32 %v451, %v719
      %v721 = vpop.f32.mrb[0].mxu0
      %v722 = vpop.f32.mrb[0].mxu0
      %v723 = vadd.f32 %v451, %v722
      %v724 = vpop.f32.mrb[0].mxu0
      %725 = vdwg.mxu0
      %v726 = vmul.f32 %v664, 0.088388346
      %v727 = vmul.f32 %v667, 0.088388346
      %v728 = vmul.f32 %v672, 0.088388346
      %v729 = vmul.f32 %v675, 0.088388346
      %v730 = vmul.f32 %v680, 0.088388346
      %v731 = vmul.f32 %v683, 0.088388346
      %v732 = vmul.f32 %v688, 0.088388346
      %v733 = vmul.f32 %v691, 0.088388346
      %v734 = vmul.f32 %v696, 0.088388346
      %v735 = vmul.f32 %v699, 0.088388346
      %v736 = vmul.f32 %v704, 0.088388346
      %v737 = vmul.f32 %v707, 0.088388346
      %v738 = vmul.f32 %v712, 0.088388346
      %v739 = vmul.f32 %v715, 0.088388346
      %v740 = vmul.f32 %v720, 0.088388346
      %v741 = vmul.f32 %v723, 0.088388346
      %v742 = vld [vmem:[%s1 + $0x8] sm:$0xf]
      %v743 = vld [vmem:[%s1 + $0x20] sm:$0xf]
      %v744 = vld [vmem:[%s1 + $0x38] sm:$0xf]
      %v745 = vld [vmem:[%s1 + $0x50] sm:$0xf]
      %v746 = vld [vmem:[%s1 + $0x68] sm:$0xf]
      %v747 = vld [vmem:[%s1 + $0x80] sm:$0xf]
      %v748 = vld [vmem:[%s1 + $0x98] sm:$0xf]
      %v749 = vld [vmem:[%s1 + $0xb0] sm:$0xf]
      %v750 = vld [vmem:[%s1 + $0xc8] sm:$0xf]
      %v751 = vld [vmem:[%s1 + $0xe0] sm:$0xf]
      %v752 = vld [vmem:[%s1 + $0xf8] sm:$0xf]
      %v753 = vld [vmem:[%s1 + $0x110] sm:$0xf]
      %v754 = vld [vmem:[%s1 + $0x128] sm:$0xf]
      %v755 = vld [vmem:[%s1 + $0x140] sm:$0xf]
      %v756 = vld [vmem:[%s1 + $0x158] sm:$0xf]
      %v757 = vld [vmem:[%s1 + $0x170] sm:$0xf]
      %v758 = vld [vmem:[%s1 + $0x188] sm:$0xf]
      %v759 = vld [vmem:[%s1 + $0x1a0] sm:$0xf]
      %v760 = vld [vmem:[%s1 + $0x1b8] sm:$0xf]
      %v761 = vld [vmem:[%s1 + $0x1d0] sm:$0xf]
      %v762 = vld [vmem:[%s1 + $0x1e8] sm:$0xf]
      %v763 = vld [vmem:[%s1 + $0x200] sm:$0xf]
      %v764 = vld [vmem:[%s1 + $0x218] sm:$0xf]
      %v765 = vld [vmem:[%s1 + $0x230] sm:$0xf]
      %v766 = vld [vmem:[%s1 + $0x248] sm:$0xf]
      %v767 = vld [vmem:[%s1 + $0x260] sm:$0xf]
      %v768 = vld [vmem:[%s1 + $0x278] sm:$0xf]
      %v769 = vld [vmem:[%s1 + $0x290] sm:$0xf]
      %v770 = vld [vmem:[%s1 + $0x2a8] sm:$0xf]
      %v771 = vld [vmem:[%s1 + $0x2c0] sm:$0xf]
      %v772 = vld [vmem:[%s1 + $0x2d8] sm:$0xf]
      %v773 = vld [vmem:[%s1 + $0x2f0] sm:$0xf]
      %v774 = vld [vmem:[%s2 + $0x2] sm:$0x1]
      %v776 = vlaneseq
      %v777 = vshrl.u32 %v776, 7
      %v778 = vsub.s32 0, %v777
      %v779 = vrot.slane %v774, %v778
      %v813 = vunpack.c.l.b16 %v742
      %v814 = vunpack.c.l.b16 %v743
      %v815 = vunpack.c.l.b16 %v744
      %v816 = vunpack.c.l.b16 %v745
      %v817 = vunpack.c.l.b16 %v746
      %v818 = vunpack.c.l.b16 %v747
      %v819 = vunpack.c.l.b16 %v748
      %v820 = vunpack.c.l.b16 %v749
      %v821 = vunpack.c.l.b16 %v750
      %v822 = vunpack.c.l.b16 %v751
      %v823 = vunpack.c.l.b16 %v752
      %v824 = vunpack.c.l.b16 %v753
      %v825 = vunpack.c.l.b16 %v754
      %v826 = vunpack.c.l.b16 %v755
      %v827 = vunpack.c.l.b16 %v756
      %v828 = vunpack.c.l.b16 %v757
      %v829 = vunpack.c.l.b16 %v758
      %v830 = vunpack.c.l.b16 %v759
      %v831 = vunpack.c.l.b16 %v760
      %v832 = vunpack.c.l.b16 %v761
      %v833 = vunpack.c.l.b16 %v762
      %v834 = vunpack.c.l.b16 %v763
      %v835 = vunpack.c.l.b16 %v764
      %v836 = vunpack.c.l.b16 %v765
      %v837 = vunpack.c.l.b16 %v766
      %v838 = vunpack.c.l.b16 %v767
      %v839 = vunpack.c.l.b16 %v768
      %v840 = vunpack.c.l.b16 %v769
      %v841 = vunpack.c.l.b16 %v770
      %v842 = vunpack.c.l.b16 %v771
      %v843 = vunpack.c.l.b16 %v772
      %v844 = vunpack.c.l.b16 %v773
      %v845 = vpack.c.b16 %v814, %v813
      %v846 = vpack.c.b16 %v816, %v815
      %v847 = vpack.c.b16 %v818, %v817
      %v848 = vpack.c.b16 %v820, %v819
      %v849 = vpack.c.b16 %v822, %v821
      %v850 = vpack.c.b16 %v824, %v823
      %v851 = vpack.c.b16 %v826, %v825
      %v852 = vpack.c.b16 %v828, %v827
      %v853 = vpack.c.b16 %v830, %v829
      %v854 = vpack.c.b16 %v832, %v831
      %v855 = vpack.c.b16 %v834, %v833
      %v856 = vpack.c.b16 %v836, %v835
      %v857 = vpack.c.b16 %v838, %v837
      %v858 = vpack.c.b16 %v840, %v839
      %v859 = vpack.c.b16 %v842, %v841
      %v860 = vpack.c.b16 %v844, %v843
      %877 = vmatprep.subr.bf16.mxu0 0
      %878 = vmatpush1.bf16.msra.mxu0 %v845
      %879 = vmatprep.subr.bf16.mxu0 0
      %880 = vmatpush1.bf16.msra.mxu0 %v846
      %881 = vmatprep.subr.bf16.mxu0 0
      %882 = vmatpush1.bf16.msra.mxu0 %v847
      %883 = vmatprep.subr.bf16.mxu0 0
      %884 = vmatpush1.bf16.msra.mxu0 %v848
      %885 = vmatprep.subr.bf16.mxu0 0
      %886 = vmatpush1.bf16.msra.mxu0 %v849
      %887 = vmatprep.subr.bf16.mxu0 0
      %888 = vmatpush1.bf16.msra.mxu0 %v850
      %889 = vmatprep.subr.bf16.mxu0 0
      %890 = vmatpush1.bf16.msra.mxu0 %v851
      %891 = vmatprep.subr.bf16.mxu0 0
      %892 = vmatpush1.bf16.msra.mxu0 %v852
      %893 = vmatprep.subr.bf16.mxu0 0
      %894 = vmatpush1.bf16.msra.mxu0 %v853
      %895 = vmatprep.subr.bf16.mxu0 0
      %896 = vmatpush1.bf16.msra.mxu0 %v854
      %897 = vmatprep.subr.bf16.mxu0 0
      %898 = vmatpush1.bf16.msra.mxu0 %v855
      %899 = vmatprep.subr.bf16.mxu0 0
      %900 = vmatpush1.bf16.msra.mxu0 %v856
      %901 = vmatprep.subr.bf16.mxu0 0
      %902 = vmatpush1.bf16.msra.mxu0 %v857
      %903 = vmatprep.subr.bf16.mxu0 0
      %904 = vmatpush1.bf16.msra.mxu0 %v858
      %905 = vmatprep.subr.bf16.mxu0 0
      %906 = vmatpush1.bf16.msra.mxu0 %v859
      %907 = vmatprep.subr.bf16.mxu0 0
      %908 = vmatpush1.bf16.msra.mxu0 %v860
      %909 = vmatprep.mubr.bf16.mxu0 %v502
      %910 = vmatmul.mubr.bf16.gmra.mrb[0].mxu0 %v501
      %v911 = vpop.f32.mrb[0].mxu0
      %v912 = vadd.f32 %v779, %v911
      %v913 = vpop.f32.mrb[0].mxu0
      %v914 = vpop.f32.mrb[0].mxu0
      %v915 = vadd.f32 %v779, %v914
      %v916 = vpop.f32.mrb[0].mxu0
      %917 = vmatprep.mubr.bf16.mxu0 %v504
      %918 = vmatmul.mubr.bf16.gmra.mrb[0].mxu0 %v503
      %v919 = vpop.f32.mrb[0].mxu0
      %v920 = vadd.f32 %v779, %v919
      %v921 = vpop.f32.mrb[0].mxu0
      %v922 = vpop.f32.mrb[0].mxu0
      %v923 = vadd.f32 %v779, %v922
      %v924 = vpop.f32.mrb[0].mxu0
      %925 = vmatprep.mubr.bf16.mxu0 %v506
      %926 = vmatmul.mubr.bf16.gmra.mrb[0].mxu0 %v505
      %v927 = vpop.f32.mrb[0].mxu0
      %v928 = vadd.f32 %v779, %v927
      %v929 = vpop.f32.mrb[0].mxu0
      %v930 = vpop.f32.mrb[0].mxu0
      %v931 = vadd.f32 %v779, %v930
      %v932 = vpop.f32.mrb[0].mxu0
      %933 = vmatprep.mubr.bf16.mxu0 %v508
      %934 = vmatmul.mubr.bf16.gmra.mrb[0].mxu0 %v507
      %v935 = vpop.f32.mrb[0].mxu0
      %v936 = vadd.f32 %v779, %v935
      %v937 = vpop.f32.mrb[0].mxu0
      %v938 = vpop.f32.mrb[0].mxu0
      %v939 = vadd.f32 %v779, %v938
      %v940 = vpop.f32.mrb[0].mxu0
      %941 = vmatprep.mubr.bf16.mxu0 %v510
      %942 = vmatmul.mubr.bf16.gmra.mrb[0].mxu0 %v509
      %v943 = vpop.f32.mrb[0].mxu0
      %v944 = vadd.f32 %v779, %v943
      %v945 = vpop.f32.mrb[0].mxu0
      %v946 = vpop.f32.mrb[0].mxu0
      %v947 = vadd.f32 %v779, %v946
      %v948 = vpop.f32.mrb[0].mxu0
      %949 = vmatprep.mubr.bf16.mxu0 %v512
      %950 = vmatmul.mubr.bf16.gmra.mrb[0].mxu0 %v511
      %v951 = vpop.f32.mrb[0].mxu0
      %v952 = vadd.f32 %v779, %v951
      %v953 = vpop.f32.mrb[0].mxu0
      %v954 = vpop.f32.mrb[0].mxu0
      %v955 = vadd.f32 %v779, %v954
      %v956 = vpop.f32.mrb[0].mxu0
      %957 = vmatprep.mubr.bf16.mxu0 %v514
      %958 = vmatmul.mubr.bf16.gmra.mrb[0].mxu0 %v513
      %v959 = vpop.f32.mrb[0].mxu0
      %v960 = vadd.f32 %v779, %v959
      %v961 = vpop.f32.mrb[0].mxu0
      %v962 = vpop.f32.mrb[0].mxu0
      %v963 = vadd.f32 %v779, %v962
      %v964 = vpop.f32.mrb[0].mxu0
      %965 = vmatprep.mubr.bf16.mxu0 %v516
      %966 = vmatmul.mubr.bf16.gmra.mrb[0].mxu0 %v515
      %v967 = vpop.f32.mrb[0].mxu0
      %v968 = vadd.f32 %v779, %v967
      %v969 = vpop.f32.mrb[0].mxu0
      %v970 = vpop.f32.mrb[0].mxu0
      %v971 = vadd.f32 %v779, %v970
      %v972 = vpop.f32.mrb[0].mxu0
      %973 = vdwg.mxu0
      %v974 = vld [vmem:[%s1 + $0x10] sm:$0xf]
      %v975 = vld [vmem:[%s1 + $0x28] sm:$0xf]
      %v976 = vld [vmem:[%s1 + $0x40] sm:$0xf]
      %v977 = vld [vmem:[%s1 + $0x58] sm:$0xf]
      %v978 = vld [vmem:[%s1 + $0x70] sm:$0xf]
      %v979 = vld [vmem:[%s1 + $0x88] sm:$0xf]
      %v980 = vld [vmem:[%s1 + $0xa0] sm:$0xf]
      %v981 = vld [vmem:[%s1 + $0xb8] sm:$0xf]
      %v982 = vld [vmem:[%s1 + $0xd0] sm:$0xf]
      %v983 = vld [vmem:[%s1 + $0xe8] sm:$0xf]
      %v984 = vld [vmem:[%s1 + $0x100] sm:$0xf]
      %v985 = vld [vmem:[%s1 + $0x118] sm:$0xf]
      %v986 = vld [vmem:[%s1 + $0x130] sm:$0xf]
      %v987 = vld [vmem:[%s1 + $0x148] sm:$0xf]
      %v988 = vld [vmem:[%s1 + $0x160] sm:$0xf]
      %v989 = vld [vmem:[%s1 + $0x178] sm:$0xf]
      %v990 = vld [vmem:[%s1 + $0x190] sm:$0xf]
      %v991 = vld [vmem:[%s1 + $0x1a8] sm:$0xf]
      %v992 = vld [vmem:[%s1 + $0x1c0] sm:$0xf]
      %v993 = vld [vmem:[%s1 + $0x1d8] sm:$0xf]
      %v994 = vld [vmem:[%s1 + $0x1f0] sm:$0xf]
      %v995 = vld [vmem:[%s1 + $0x208] sm:$0xf]
      %v996 = vld [vmem:[%s1 + $0x220] sm:$0xf]
      %v997 = vld [vmem:[%s1 + $0x238] sm:$0xf]
      %v998 = vld [vmem:[%s1 + $0x250] sm:$0xf]
      %v999 = vld [vmem:[%s1 + $0x268] sm:$0xf]
      %v1000 = vld [vmem:[%s1 + $0x280] sm:$0xf]
      %v1001 = vld [vmem:[%s1 + $0x298] sm:$0xf]
      %v1002 = vld [vmem:[%s1 + $0x2b0] sm:$0xf]
      %v1003 = vld [vmem:[%s1 + $0x2c8] sm:$0xf]
      %v1004 = vld [vmem:[%s1 + $0x2e0] sm:$0xf]
      %v1005 = vld [vmem:[%s1 + $0x2f8] sm:$0xf]
      %v1006 = vld [vmem:[%s2 + $0x4] sm:$0x1]
      %v1008 = vlaneseq
      %v1009 = vshrl.u32 %v1008, 7
      %v1010 = vsub.s32 0, %v1009
      %v1011 = vrot.slane %v1006, %v1010
      %v1045 = vunpack.c.l.b16 %v974
      %v1046 = vunpack.c.l.b16 %v975
      %v1047 = vunpack.c.l.b16 %v976
      %v1048 = vunpack.c.l.b16 %v977
      %v1049 = vunpack.c.l.b16 %v978
      %v1050 = vunpack.c.l.b16 %v979
      %v1051 = vunpack.c.l.b16 %v980
      %v1052 = vunpack.c.l.b16 %v981
      %v1053 = vunpack.c.l.b16 %v982
      %v1054 = vunpack.c.l.b16 %v983
      %v1055 = vunpack.c.l.b16 %v984
      %v1056 = vunpack.c.l.b16 %v985
      %v1057 = vunpack.c.l.b16 %v986
      %v1058 = vunpack.c.l.b16 %v987
      %v1059 = vunpack.c.l.b16 %v988
      %v1060 = vunpack.c.l.b16 %v989
      %v1061 = vunpack.c.l.b16 %v990
      %v1062 = vunpack.c.l.b16 %v991
      %v1063 = vunpack.c.l.b16 %v992
      %v1064 = vunpack.c.l.b16 %v993
      %v1065 = vunpack.c.l.b16 %v994
      %v1066 = vunpack.c.l.b16 %v995
      %v1067 = vunpack.c.l.b16 %v996
      %v1068 = vunpack.c.l.b16 %v997
      %v1069 = vunpack.c.l.b16 %v998
      %v1070 = vunpack.c.l.b16 %v999
      %v1071 = vunpack.c.l.b16 %v1000
      %v1072 = vunpack.c.l.b16 %v1001
      %v1073 = vunpack.c.l.b16 %v1002
      %v1074 = vunpack.c.l.b16 %v1003
      %v1075 = vunpack.c.l.b16 %v1004
      %v1076 = vunpack.c.l.b16 %v1005
      %v1077 = vpack.c.b16 %v1046, %v1045
      %v1078 = vpack.c.b16 %v1048, %v1047
      %v1079 = vpack.c.b16 %v1050, %v1049
      %v1080 = vpack.c.b16 %v1052, %v1051
      %v1081 = vpack.c.b16 %v1054, %v1053
      %v1082 = vpack.c.b16 %v1056, %v1055
      %v1083 = vpack.c.b16 %v1058, %v1057
      %v1084 = vpack.c.b16 %v1060, %v1059
      %v1085 = vpack.c.b16 %v1062, %v1061
      %v1086 = vpack.c.b16 %v1064, %v1063
      %v1087 = vpack.c.b16 %v1066, %v1065
      %v1088 = vpack.c.b16 %v1068, %v1067
      %v1089 = vpack.c.b16 %v1070, %v1069
      %v1090 = vpack.c.b16 %v1072, %v1071
      %v1091 = vpack.c.b16 %v1074, %v1073
      %v1092 = vpack.c.b16 %v1076, %v1075
      %1109 = vmatprep.subr.bf16.mxu0 0
      %1110 = vmatpush1.bf16.msra.mxu0 %v1077
      %1111 = vmatprep.subr.bf16.mxu0 0
      %1112 = vmatpush1.bf16.msra.mxu0 %v1078
      %1113 = vmatprep.subr.bf16.mxu0 0
      %1114 = vmatpush1.bf16.msra.mxu0 %v1079
      %1115 = vmatprep.subr.bf16.mxu0 0
      %1116 = vmatpush1.bf16.msra.mxu0 %v1080
      %1117 = vmatprep.subr.bf16.mxu0 0
      %1118 = vmatpush1.bf16.msra.mxu0 %v1081
      %1119 = vmatprep.subr.bf16.mxu0 0
      %1120 = vmatpush1.bf16.msra.mxu0 %v1082
      %1121 = vmatprep.subr.bf16.mxu0 0
      %1122 = vmatpush1.bf16.msra.mxu0 %v1083
      %1123 = vmatprep.subr.bf16.mxu0 0
      %1124 = vmatpush1.bf16.msra.mxu0 %v1084
      %1125 = vmatprep.subr.bf16.mxu0 0
      %1126 = vmatpush1.bf16.msra.mxu0 %v1085
      %1127 = vmatprep.subr.bf16.mxu0 0
      %1128 = vmatpush1.bf16.msra.mxu0 %v1086
      %1129 = vmatprep.subr.bf16.mxu0 0
      %1130 = vmatpush1.bf16.msra.mxu0 %v1087
      %1131 = vmatprep.subr.bf16.mxu0 0
      %1132 = vmatpush1.bf16.msra.mxu0 %v1088
      %1133 = vmatprep.subr.bf16.mxu0 0
      %1134 = vmatpush1.bf16.msra.mxu0 %v1089
      %1135 = vmatprep.subr.bf16.mxu0 0
      %1136 = vmatpush1.bf16.msra.mxu0 %v1090
      %1137 = vmatprep.subr.bf16.mxu0 0
      %1138 = vmatpush1.bf16.msra.mxu0 %v1091
      %1139 = vmatprep.subr.bf16.mxu0 0
      %1140 = vmatpush1.bf16.msra.mxu0 %v1092
      %1141 = vmatprep.mubr.bf16.mxu0 %v502
      %1142 = vmatmul.mubr.bf16.gmra.mrb[0].mxu0 %v501
      %v1143 = vpop.f32.mrb[0].mxu0
      %v1144 = vadd.f32 %v1011, %v1143
      %v1145 = vpop.f32.mrb[0].mxu0
      %v1146 = vpop.f32.mrb[0].mxu0
      %v1147 = vadd.f32 %v1011, %v1146
      %v1148 = vpop.f32.mrb[0].mxu0
      %1149 = vmatprep.mubr.bf16.mxu0 %v504
      %1150 = vmatmul.mubr.bf16.gmra.mrb[0].mxu0 %v503
      %v1151 = vpop.f32.mrb[0].mxu0
      %v1152 = vadd.f32 %v1011, %v1151
      %v1153 = vpop.f32.mrb[0].mxu0
      %v1154 = vpop.f32.mrb[0].mxu0
      %v1155 = vadd.f32 %v1011, %v1154
      %v1156 = vpop.f32.mrb[0].mxu0
      %1157 = vmatprep.mubr.bf16.mxu0 %v506
      %1158 = vmatmul.mubr.bf16.gmra.mrb[0].mxu0 %v505
      %v1159 = vpop.f32.mrb[0].mxu0
      %v1160 = vadd.f32 %v1011, %v1159
      %v1161 = vpop.f32.mrb[0].mxu0
      %v1162 = vpop.f32.mrb[0].mxu0
      %v1163 = vadd.f32 %v1011, %v1162
      %v1164 = vpop.f32.mrb[0].mxu0
      %1165 = vmatprep.mubr.bf16.mxu0 %v508
      %1166 = vmatmul.mubr.bf16.gmra.mrb[0].mxu0 %v507
      %v1167 = vpop.f32.mrb[0].mxu0
      %v1168 = vadd.f32 %v1011, %v1167
      %v1169 = vpop.f32.mrb[0].mxu0
      %v1170 = vpop.f32.mrb[0].mxu0
      %v1171 = vadd.f32 %v1011, %v1170
      %v1172 = vpop.f32.mrb[0].mxu0
      %1173 = vmatprep.mubr.bf16.mxu0 %v510
      %1174 = vmatmul.mubr.bf16.gmra.mrb[0].mxu0 %v509
      %v1175 = vpop.f32.mrb[0].mxu0
      %v1176 = vadd.f32 %v1011, %v1175
      %v1177 = vpop.f32.mrb[0].mxu0
      %v1178 = vpop.f32.mrb[0].mxu0
      %v1179 = vadd.f32 %v1011, %v1178
      %v1180 = vpop.f32.mrb[0].mxu0
      %1181 = vmatprep.mubr.bf16.mxu0 %v512
      %1182 = vmatmul.mubr.bf16.gmra.mrb[0].mxu0 %v511
      %v1183 = vpop.f32.mrb[0].mxu0
      %v1184 = vadd.f32 %v1011, %v1183
      %v1185 = vpop.f32.mrb[0].mxu0
      %v1186 = vpop.f32.mrb[0].mxu0
      %v1187 = vadd.f32 %v1011, %v1186
      %v1188 = vpop.f32.mrb[0].mxu0
      %1189 = vmatprep.mubr.bf16.mxu0 %v514
      %1190 = vmatmul.mubr.bf16.gmra.mrb[0].mxu0 %v513
      %v1191 = vpop.f32.mrb[0].mxu0
      %v1192 = vadd.f32 %v1011, %v1191
      %v1193 = vpop.f32.mrb[0].mxu0
      %v1194 = vpop.f32.mrb[0].mxu0
      %v1195 = vadd.f32 %v1011, %v1194
      %v1196 = vpop.f32.mrb[0].mxu0
      %1197 = vmatprep.mubr.bf16.mxu0 %v516
      %1198 = vmatmul.mubr.bf16.gmra.mrb[0].mxu0 %v515
      %v1199 = vpop.f32.mrb[0].mxu0
      %v1200 = vadd.f32 %v1011, %v1199
      %v1201 = vpop.f32.mrb[0].mxu0
      %v1202 = vpop.f32.mrb[0].mxu0
      %v1203 = vadd.f32 %v1011, %v1202
      %v1204 = vpop.f32.mrb[0].mxu0
      %1205 = vdwg.mxu0
      %v1206 = vpack.c.bf16 %v727, %v726
      %v1207 = vpack.c.bf16 %v729, %v728
      %v1208 = vpack.c.bf16 %v731, %v730
      %v1209 = vpack.c.bf16 %v733, %v732
      %v1210 = vpack.c.bf16 %v735, %v734
      %v1211 = vpack.c.bf16 %v737, %v736
      %v1212 = vpack.c.bf16 %v739, %v738
      %v1213 = vpack.c.bf16 %v741, %v740
      %v1214 = vpack.c.bf16 %v915, %v912
      %v1215 = vpack.c.bf16 %v923, %v920
      %v1216 = vpack.c.bf16 %v931, %v928
      %v1217 = vpack.c.bf16 %v939, %v936
      %v1218 = vpack.c.bf16 %v947, %v944
      %v1219 = vpack.c.bf16 %v955, %v952
      %v1220 = vpack.c.bf16 %v963, %v960
      %v1221 = vpack.c.bf16 %v971, %v968
      %v1223 = vlaneseq
      %v1224 = vshrl.u32 %v1223, 7
      %v1225 = vsub.s32 0, %v1224
      %v1226 = vrot.slane %v337, %v1225
      %1228 = vmatprep.subr.bf16.mxu0 0
      %1229 = vmatpush1.bf16.xpose.msra.mxu0 %v1214
      %1230 = vmatprep.subr.bf16.mxu0 0
      %1231 = vmatpush1.bf16.xpose.msra.mxu0 %v1215
      %1232 = vmatprep.subr.bf16.mxu0 0
      %1233 = vmatpush1.bf16.xpose.msra.mxu0 %v1216
      %1234 = vmatprep.subr.bf16.mxu0 0
      %1235 = vmatpush1.bf16.xpose.msra.mxu0 %v1217
      %1236 = vmatprep.subr.bf16.mxu0 0
      %1237 = vmatpush1.bf16.xpose.msra.mxu0 %v1218
      %1238 = vmatprep.subr.bf16.mxu0 0
      %1239 = vmatpush1.bf16.xpose.msra.mxu0 %v1219
      %1240 = vmatprep.subr.bf16.mxu0 0
      %1241 = vmatpush1.bf16.xpose.msra.mxu0 %v1220
      %1242 = vmatprep.subr.bf16.mxu0 0
      %1243 = vmatpush1.bf16.xpose.msra.mxu0 %v1221
      %1244 = vmatprep.subr.bf16.mxu0 0
      %1245 = vmatpush1.bf16.xpose.msra.mxu0 0
      %1246 = vmatprep.subr.bf16.mxu0 0
      %1247 = vmatpush1.bf16.xpose.msra.mxu0 0
      %1248 = vmatprep.subr.bf16.mxu0 0
      %1249 = vmatpush1.bf16.xpose.msra.mxu0 0
      %1250 = vmatprep.subr.bf16.mxu0 0
      %1251 = vmatpush1.bf16.xpose.msra.mxu0 0
      %1252 = vmatprep.subr.bf16.mxu0 0
      %1253 = vmatpush1.bf16.xpose.msra.mxu0 0
      %1254 = vmatprep.subr.bf16.mxu0 0
      %1255 = vmatpush1.bf16.xpose.msra.mxu0 0
      %1256 = vmatprep.subr.bf16.mxu0 0
      %1257 = vmatpush1.bf16.xpose.msra.mxu0 0
      %1258 = vmatprep.subr.bf16.mxu0 0
      %1259 = vmatpush1.bf16.xpose.msra.mxu0 0
      %1260 = vmatprep.mubr.bf16.mxu0 0
      %1261 = vmatmul.mubr.bf16.gmra.mrb[0].mxu0 %v1206
      %v1262 = vpop.f32.mrb[0].mxu0
      %v1263 = vadd.f32 %v1226, %v1262
      %v1264 = vpop.f32.mrb[0].mxu0
      %v1265 = vpop.f32.mrb[0].mxu0
      %v1266 = vadd.f32 %v1226, %v1265
      %v1267 = vpop.f32.mrb[0].mxu0
      %1268 = vmatprep.mubr.bf16.mxu0 0
      %1269 = vmatmul.mubr.bf16.gmra.mrb[0].mxu0 %v1207
      %v1270 = vpop.f32.mrb[0].mxu0
      %v1271 = vadd.f32 %v1226, %v1270
      %v1272 = vpop.f32.mrb[0].mxu0
      %v1273 = vpop.f32.mrb[0].mxu0
      %v1274 = vadd.f32 %v1226, %v1273
      %v1275 = vpop.f32.mrb[0].mxu0
      %1276 = vmatprep.mubr.bf16.mxu0 0
      %1277 = vmatmul.mubr.bf16.gmra.mrb[0].mxu0 %v1208
      %v1278 = vpop.f32.mrb[0].mxu0
      %v1279 = vadd.f32 %v1226, %v1278
      %v1280 = vpop.f32.mrb[0].mxu0
      %v1281 = vpop.f32.mrb[0].mxu0
      %v1282 = vadd.f32 %v1226, %v1281
      %v1283 = vpop.f32.mrb[0].mxu0
      %1284 = vmatprep.mubr.bf16.mxu0 0
      %1285 = vmatmul.mubr.bf16.gmra.mrb[0].mxu0 %v1209
      %v1286 = vpop.f32.mrb[0].mxu0
      %v1287 = vadd.f32 %v1226, %v1286
      %v1288 = vpop.f32.mrb[0].mxu0
      %v1289 = vpop.f32.mrb[0].mxu0
      %v1290 = vadd.f32 %v1226, %v1289
      %v1291 = vpop.f32.mrb[0].mxu0
      %1292 = vmatprep.mubr.bf16.mxu0 0
      %1293 = vmatmul.mubr.bf16.gmra.mrb[0].mxu0 %v1210
      %v1294 = vpop.f32.mrb[0].mxu0
      %v1295 = vadd.f32 %v1226, %v1294
      %v1296 = vpop.f32.mrb[0].mxu0
      %v1297 = vpop.f32.mrb[0].mxu0
      %v1298 = vadd.f32 %v1226, %v1297
      %v1299 = vpop.f32.mrb[0].mxu0
      %1300 = vmatprep.mubr.bf16.mxu0 0
      %1301 = vmatmul.mubr.bf16.gmra.mrb[0].mxu0 %v1211
      %v1302 = vpop.f32.mrb[0].mxu0
      %v1303 = vadd.f32 %v1226, %v1302
      %v1304 = vpop.f32.mrb[0].mxu0
      %v1305 = vpop.f32.mrb[0].mxu0
      %v1306 = vadd.f32 %v1226, %v1305
      %v1307 = vpop.f32.mrb[0].mxu0
      %1308 = vmatprep.mubr.bf16.mxu0 0
      %1309 = vmatmul.mubr.bf16.gmra.mrb[0].mxu0 %v1212
      %v1310 = vpop.f32.mrb[0].mxu0
      %v1311 = vadd.f32 %v1226, %v1310
      %v1312 = vpop.f32.mrb[0].mxu0
      %v1313 = vpop.f32.mrb[0].mxu0
      %v1314 = vadd.f32 %v1226, %v1313
      %v1315 = vpop.f32.mrb[0].mxu0
      %1316 = vmatprep.mubr.bf16.mxu0 0
      %1317 = vmatmul.mubr.bf16.gmra.mrb[0].mxu0 %v1213
      %v1318 = vpop.f32.mrb[0].mxu0
      %v1319 = vadd.f32 %v1226, %v1318
      %v1320 = vpop.f32.mrb[0].mxu0
      %v1321 = vpop.f32.mrb[0].mxu0
      %v1322 = vadd.f32 %v1226, %v1321
      %v1323 = vpop.f32.mrb[0].mxu0
      %1324 = vdwg.mxu0
      %1325 = vmax.xlane.f32.xlu0 %v1263
      %v1326 = vpop.xlane.xlu0 %1325
      %1327 = vmax.xlane.f32.xlu0 %v1266
      %v1328 = vpop.xlane.xlu0 %1327
      %1329 = vmax.xlane.f32.xlu0 %v1271
      %v1330 = vpop.xlane.xlu0 %1329
      %1331 = vmax.xlane.f32.xlu0 %v1274
      %v1332 = vpop.xlane.xlu0 %1331
      %1333 = vmax.xlane.f32.xlu0 %v1279
      %v1334 = vpop.xlane.xlu0 %1333
      %1335 = vmax.xlane.f32.xlu0 %v1282
      %v1336 = vpop.xlane.xlu0 %1335
      %1337 = vmax.xlane.f32.xlu0 %v1287
      %v1338 = vpop.xlane.xlu0 %1337
      %1339 = vmax.xlane.f32.xlu0 %v1290
      %v1340 = vpop.xlane.xlu0 %1339
      %1341 = vmax.xlane.f32.xlu0 %v1295
      %v1342 = vpop.xlane.xlu0 %1341
      %1343 = vmax.xlane.f32.xlu0 %v1298
      %v1344 = vpop.xlane.xlu0 %1343
      %1345 = vmax.xlane.f32.xlu0 %v1303
      %v1346 = vpop.xlane.xlu0 %1345
      %1347 = vmax.xlane.f32.xlu0 %v1306
      %v1348 = vpop.xlane.xlu0 %1347
      %1349 = vmax.xlane.f32.xlu0 %v1311
      %v1350 = vpop.xlane.xlu0 %1349
      %1351 = vmax.xlane.f32.xlu0 %v1314
      %v1352 = vpop.xlane.xlu0 %1351
      %1353 = vmax.xlane.f32.xlu0 %v1319
      %v1354 = vpop.xlane.xlu0 %1353
      %1355 = vmax.xlane.f32.xlu0 %v1322
      %v1356 = vpop.xlane.xlu0 %1355
      %v1357 = vsub.f32 %v1263, %v1326
      %v1358 = vsub.f32 %v1266, %v1328
      %v1359 = vsub.f32 %v1271, %v1330
      %v1360 = vsub.f32 %v1274, %v1332
      %v1361 = vsub.f32 %v1279, %v1334
      %v1362 = vsub.f32 %v1282, %v1336
      %v1363 = vsub.f32 %v1287, %v1338
      %v1364 = vsub.f32 %v1290, %v1340
      %v1365 = vsub.f32 %v1295, %v1342
      %v1366 = vsub.f32 %v1298, %v1344
      %v1367 = vsub.f32 %v1303, %v1346
      %v1368 = vsub.f32 %v1306, %v1348
      %v1369 = vsub.f32 %v1311, %v1350
      %v1370 = vsub.f32 %v1314, %v1352
      %v1371 = vsub.f32 %v1319, %v1354
      %v1372 = vsub.f32 %v1322, %v1356
      %v1373 = vmul.f32 %v1357, 1.442695
      %v1374 = vpow.pop %v1373
      %v1375 = vmul.f32 %v1358, 1.442695
      %v1376 = vpow.pop %v1375
      %v1377 = vmul.f32 %v1359, 1.442695
      %v1378 = vpow.pop %v1377
      %v1379 = vmul.f32 %v1360, 1.442695
      %v1380 = vpow.pop %v1379
      %v1381 = vmul.f32 %v1361, 1.442695
      %v1382 = vpow.pop %v1381
      %v1383 = vmul.f32 %v1362, 1.442695
      %v1384 = vpow.pop %v1383
      %v1385 = vmul.f32 %v1363, 1.442695
      %v1386 = vpow.pop %v1385
      %v1387 = vmul.f32 %v1364, 1.442695
      %v1388 = vpow.pop %v1387
      %v1389 = vmul.f32 %v1365, 1.442695
      %v1390 = vpow.pop %v1389
      %v1391 = vmul.f32 %v1366, 1.442695
      %v1392 = vpow.pop %v1391
      %v1393 = vmul.f32 %v1367, 1.442695
      %v1394 = vpow.pop %v1393
      %v1395 = vmul.f32 %v1368, 1.442695
      %v1396 = vpow.pop %v1395
      %v1397 = vmul.f32 %v1369, 1.442695
      %v1398 = vpow.pop %v1397
      %v1399 = vmul.f32 %v1370, 1.442695
      %v1400 = vpow.pop %v1399
      %v1401 = vmul.f32 %v1371, 1.442695
      %v1402 = vpow.pop %v1401
      %v1403 = vmul.f32 %v1372, 1.442695
      %v1404 = vpow.pop %v1403
      %1405 = vadd.xlane.f32.xlu0 %v1374
      %v1406 = vpop.xlane.xlu0 %1405
      %1407 = vadd.xlane.f32.xlu0 %v1376
      %v1408 = vpop.xlane.xlu0 %1407
      %1409 = vadd.xlane.f32.xlu0 %v1378
      %v1410 = vpop.xlane.xlu0 %1409
      %1411 = vadd.xlane.f32.xlu0 %v1380
      %v1412 = vpop.xlane.xlu0 %1411
      %1413 = vadd.xlane.f32.xlu0 %v1382
      %v1414 = vpop.xlane.xlu0 %1413
      %1415 = vadd.xlane.f32.xlu0 %v1384
      %v1416 = vpop.xlane.xlu0 %1415
      %1417 = vadd.xlane.f32.xlu0 %v1386
      %v1418 = vpop.xlane.xlu0 %1417
      %1419 = vadd.xlane.f32.xlu0 %v1388
      %v1420 = vpop.xlane.xlu0 %1419
      %1421 = vadd.xlane.f32.xlu0 %v1390
      %v1422 = vpop.xlane.xlu0 %1421
      %1423 = vadd.xlane.f32.xlu0 %v1392
      %v1424 = vpop.xlane.xlu0 %1423
      %1425 = vadd.xlane.f32.xlu0 %v1394
      %v1426 = vpop.xlane.xlu0 %1425
      %1427 = vadd.xlane.f32.xlu0 %v1396
      %v1428 = vpop.xlane.xlu0 %1427
      %1429 = vadd.xlane.f32.xlu0 %v1398
      %v1430 = vpop.xlane.xlu0 %1429
      %1431 = vadd.xlane.f32.xlu0 %v1400
      %v1432 = vpop.xlane.xlu0 %1431
      %1433 = vadd.xlane.f32.xlu0 %v1402
      %v1434 = vpop.xlane.xlu0 %1433
      %1435 = vadd.xlane.f32.xlu0 %v1404
      %v1436 = vpop.xlane.xlu0 %1435
      %v1437 = vrcp.pop %v1406
      %v1438 = vmul.f32 %v1374, %v1437
      %v1439 = vrcp.pop %v1408
      %v1440 = vmul.f32 %v1376, %v1439
      %v1441 = vrcp.pop %v1410
      %v1442 = vmul.f32 %v1378, %v1441
      %v1443 = vrcp.pop %v1412
      %v1444 = vmul.f32 %v1380, %v1443
      %v1445 = vrcp.pop %v1414
      %v1446 = vmul.f32 %v1382, %v1445
      %v1447 = vrcp.pop %v1416
      %v1448 = vmul.f32 %v1384, %v1447
      %v1449 = vrcp.pop %v1418
      %v1450 = vmul.f32 %v1386, %v1449
      %v1451 = vrcp.pop %v1420
      %v1452 = vmul.f32 %v1388, %v1451
      %v1453 = vrcp.pop %v1422
      %v1454 = vmul.f32 %v1390, %v1453
      %v1455 = vrcp.pop %v1424
      %v1456 = vmul.f32 %v1392, %v1455
      %v1457 = vrcp.pop %v1426
      %v1458 = vmul.f32 %v1394, %v1457
      %v1459 = vrcp.pop %v1428
      %v1460 = vmul.f32 %v1396, %v1459
      %v1461 = vrcp.pop %v1430
      %v1462 = vmul.f32 %v1398, %v1461
      %v1463 = vrcp.pop %v1432
      %v1464 = vmul.f32 %v1400, %v1463
      %v1465 = vrcp.pop %v1434
      %v1466 = vmul.f32 %v1402, %v1465
      %v1467 = vrcp.pop %v1436
      %v1468 = vmul.f32 %v1404, %v1467
      %v1469 = vpack.c.bf16 %v1440, %v1438
      %v1470 = vpack.c.bf16 %v1444, %v1442
      %v1471 = vpack.c.bf16 %v1448, %v1446
      %v1472 = vpack.c.bf16 %v1452, %v1450
      %v1473 = vpack.c.bf16 %v1456, %v1454
      %v1474 = vpack.c.bf16 %v1460, %v1458
      %v1475 = vpack.c.bf16 %v1464, %v1462
      %v1476 = vpack.c.bf16 %v1468, %v1466
      %v1477 = vpack.c.bf16 %v1147, %v1144
      %v1478 = vpack.c.bf16 %v1155, %v1152
      %v1479 = vpack.c.bf16 %v1163, %v1160
      %v1480 = vpack.c.bf16 %v1171, %v1168
      %v1481 = vpack.c.bf16 %v1179, %v1176
      %v1482 = vpack.c.bf16 %v1187, %v1184
      %v1483 = vpack.c.bf16 %v1195, %v1192
      %v1484 = vpack.c.bf16 %v1203, %v1200
      %1485 = vmatprep.subr.bf16.mxu0 0
      %1486 = vmatpush1.bf16.msra.mxu0 %v1477
      %1487 = vmatprep.subr.bf16.mxu0 0
      %1488 = vmatpush1.bf16.msra.mxu0 %v1478
      %1489 = vmatprep.subr.bf16.mxu0 0
      %1490 = vmatpush1.bf16.msra.mxu0 %v1479
      %1491 = vmatprep.subr.bf16.mxu0 0
      %1492 = vmatpush1.bf16.msra.mxu0 %v1480
      %1493 = vmatprep.subr.bf16.mxu0 0
      %1494 = vmatpush1.bf16.msra.mxu0 %v1481
      %1495 = vmatprep.subr.bf16.mxu0 0
      %1496 = vmatpush1.bf16.msra.mxu0 %v1482
      %1497 = vmatprep.subr.bf16.mxu0 0
      %1498 = vmatpush1.bf16.msra.mxu0 %v1483
      %1499 = vmatprep.subr.bf16.mxu0 0
      %1500 = vmatpush1.bf16.msra.mxu0 %v1484
      %1501 = vmatprep.subr.bf16.mxu0 0
      %1502 = vmatpush1.bf16.msra.mxu0 0
      %1503 = vmatprep.subr.bf16.mxu0 0
      %1504 = vmatpush1.bf16.msra.mxu0 0
      %1505 = vmatprep.subr.bf16.mxu0 0
      %1506 = vmatpush1.bf16.msra.mxu0 0
      %1507 = vmatprep.subr.bf16.mxu0 0
      %1508 = vmatpush1.bf16.msra.mxu0 0
      %1509 = vmatprep.subr.bf16.mxu0 0
      %1510 = vmatpush1.bf16.msra.mxu0 0
      %1511 = vmatprep.subr.bf16.mxu0 0
      %1512 = vmatpush1.bf16.msra.mxu0 0
      %1513 = vmatprep.subr.bf16.mxu0 0
      %1514 = vmatpush1.bf16.msra.mxu0 0
      %1515 = vmatprep.subr.bf16.mxu0 0
      %1516 = vmatpush1.bf16.msra.mxu0 0
      %1517 = vmatprep.mubr.bf16.mxu0 0
      %1518 = vmatmul.mubr.bf16.gmra.mrb[0].mxu0 %v1469
      %v1519 = vpop.f32.mrb[0].mxu0
      %v1520 = vadd.f32 0.0, %v1519
      %v1521 = vpop.f32.mrb[0].mxu0
      %v1522 = vpop.f32.mrb[0].mxu0
      %v1523 = vadd.f32 0.0, %v1522
      %v1524 = vpop.f32.mrb[0].mxu0
      %1525 = vmatprep.mubr.bf16.mxu0 0
      %1526 = vmatmul.mubr.bf16.gmra.mrb[0].mxu0 %v1470
      %v1527 = vpop.f32.mrb[0].mxu0
      %v1528 = vadd.f32 0.0, %v1527
      %v1529 = vpop.f32.mrb[0].mxu0
      %v1530 = vpop.f32.mrb[0].mxu0
      %v1531 = vadd.f32 0.0, %v1530
      %v1532 = vpop.f32.mrb[0].mxu0
      %1533 = vmatprep.mubr.bf16.mxu0 0
      %1534 = vmatmul.mubr.bf16.gmra.mrb[0].mxu0 %v1471
      %v1535 = vpop.f32.mrb[0].mxu0
      %v1536 = vadd.f32 0.0, %v1535
      %v1537 = vpop.f32.mrb[0].mxu0
      %v1538 = vpop.f32.mrb[0].mxu0
      %v1539 = vadd.f32 0.0, %v1538
      %v1540 = vpop.f32.mrb[0].mxu0
      %1541 = vmatprep.mubr.bf16.mxu0 0
      %1542 = vmatmul.mubr.bf16.gmra.mrb[0].mxu0 %v1472
      %v1543 = vpop.f32.mrb[0].mxu0
      %v1544 = vadd.f32 0.0, %v1543
      %v1545 = vpop.f32.mrb[0].mxu0
      %v1546 = vpop.f32.mrb[0].mxu0
      %v1547 = vadd.f32 0.0, %v1546
      %v1548 = vpop.f32.mrb[0].mxu0
      %1549 = vmatprep.mubr.bf16.mxu0 0
      %1550 = vmatmul.mubr.bf16.gmra.mrb[0].mxu0 %v1473
      %v1551 = vpop.f32.mrb[0].mxu0
      %v1552 = vadd.f32 0.0, %v1551
      %v1553 = vpop.f32.mrb[0].mxu0
      %v1554 = vpop.f32.mrb[0].mxu0
      %v1555 = vadd.f32 0.0, %v1554
      %v1556 = vpop.f32.mrb[0].mxu0
      %1557 = vmatprep.mubr.bf16.mxu0 0
      %1558 = vmatmul.mubr.bf16.gmra.mrb[0].mxu0 %v1474
      %v1559 = vpop.f32.mrb[0].mxu0
      %v1560 = vadd.f32 0.0, %v1559
      %v1561 = vpop.f32.mrb[0].mxu0
      %v1562 = vpop.f32.mrb[0].mxu0
      %v1563 = vadd.f32 0.0, %v1562
      %v1564 = vpop.f32.mrb[0].mxu0
      %1565 = vmatprep.mubr.bf16.mxu0 0
      %1566 = vmatmul.mubr.bf16.gmra.mrb[0].mxu0 %v1475
      %v1567 = vpop.f32.mrb[0].mxu0
      %v1568 = vadd.f32 0.0, %v1567
      %v1569 = vpop.f32.mrb[0].mxu0
      %v1570 = vpop.f32.mrb[0].mxu0
      %v1571 = vadd.f32 0.0, %v1570
      %v1572 = vpop.f32.mrb[0].mxu0
      %1573 = vmatprep.mubr.bf16.mxu0 0
      %1574 = vmatmul.mubr.bf16.gmra.mrb[0].mxu0 %v1476
      %v1575 = vpop.f32.mrb[0].mxu0
      %v1576 = vadd.f32 0.0, %v1575
      %v1577 = vpop.f32.mrb[0].mxu0
      %v1578 = vpop.f32.mrb[0].mxu0
      %v1579 = vadd.f32 0.0, %v1578
      %v1580 = vpop.f32.mrb[0].mxu0
      %1581 = vdwg.mxu0
      %v1582 = vpack.c.bf16 %v1523, %v1520
      %v1583 = vpack.c.bf16 %v1531, %v1528
      %v1584 = vpack.c.bf16 %v1539, %v1536
      %v1585 = vpack.c.bf16 %v1547, %v1544
      %v1586 = vpack.c.bf16 %v1555, %v1552
      %v1587 = vpack.c.bf16 %v1563, %v1560
      %v1588 = vpack.c.bf16 %v1571, %v1568
      %v1589 = vpack.c.bf16 %v1579, %v1576
      %v1590 = vld [vmem:[%s3] sm:$0xff]
      %v1591 = vld [vmem:[%s3 + $0x8] sm:$0xff]
      %v1592 = vld [vmem:[%s3 + $0x10] sm:$0xff]
      %v1593 = vld [vmem:[%s3 + $0x18] sm:$0xff]
      %v1594 = vld [vmem:[%s3 + $0x20] sm:$0xff]
      %v1595 = vld [vmem:[%s3 + $0x28] sm:$0xff]
      %v1596 = vld [vmem:[%s3 + $0x30] sm:$0xff]
      %v1597 = vld [vmem:[%s3 + $0x38] sm:$0xff]
      %v1598 = vld [vmem:[%s3 + $0x40] sm:$0xff]
      %v1599 = vld [vmem:[%s3 + $0x48] sm:$0xff]
      %v1600 = vld [vmem:[%s3 + $0x50] sm:$0xff]
      %v1601 = vld [vmem:[%s3 + $0x58] sm:$0xff]
      %v1602 = vld [vmem:[%s3 + $0x60] sm:$0xff]
      %v1603 = vld [vmem:[%s3 + $0x68] sm:$0xff]
      %v1604 = vld [vmem:[%s3 + $0x70] sm:$0xff]
      %v1605 = vld [vmem:[%s3 + $0x78] sm:$0xff]
      %v1622 = vunpack.c.l.b16 %v1590
      %v1623 = vunpack.c.h.b16 %v1590
      %v1624 = vunpack.c.l.b16 %v1591
      %v1625 = vunpack.c.h.b16 %v1591
      %v1626 = vunpack.c.l.b16 %v1592
      %v1627 = vunpack.c.h.b16 %v1592
      %v1628 = vunpack.c.l.b16 %v1593
      %v1629 = vunpack.c.h.b16 %v1593
      %v1630 = vunpack.c.l.b16 %v1594
      %v1631 = vunpack.c.h.b16 %v1594
      %v1632 = vunpack.c.l.b16 %v1595
      %v1633 = vunpack.c.h.b16 %v1595
      %v1634 = vunpack.c.l.b16 %v1596
      %v1635 = vunpack.c.h.b16 %v1596
      %v1636 = vunpack.c.l.b16 %v1597
      %v1637 = vunpack.c.h.b16 %v1597
      %v1638 = vunpack.c.l.b16 %v1598
      %v1639 = vunpack.c.h.b16 %v1598
      %v1640 = vunpack.c.l.b16 %v1599
      %v1641 = vunpack.c.h.b16 %v1599
      %v1642 = vunpack.c.l.b16 %v1600
      %v1643 = vunpack.c.h.b16 %v1600
      %v1644 = vunpack.c.l.b16 %v1601
      %v1645 = vunpack.c.h.b16 %v1601
      %v1646 = vunpack.c.l.b16 %v1602
      %v1647 = vunpack.c.h.b16 %v1602
      %v1648 = vunpack.c.l.b16 %v1603
      %v1649 = vunpack.c.h.b16 %v1603
      %v1650 = vunpack.c.l.b16 %v1604
      %v1651 = vunpack.c.h.b16 %v1604
      %v1652 = vunpack.c.l.b16 %v1605
      %v1653 = vunpack.c.h.b16 %v1605
      %v1654 = vpack.c.b16 %v1624, %v1622
      %v1655 = vpack.c.b16 %v1625, %v1623
      %v1656 = vpack.c.b16 %v1628, %v1626
      %v1657 = vpack.c.b16 %v1629, %v1627
      %v1658 = vpack.c.b16 %v1632, %v1630
      %v1659 = vpack.c.b16 %v1633, %v1631
      %v1660 = vpack.c.b16 %v1636, %v1634
      %v1661 = vpack.c.b16 %v1637, %v1635
      %v1662 = vpack.c.b16 %v1640, %v1638
      %v1663 = vpack.c.b16 %v1641, %v1639
      %v1664 = vpack.c.b16 %v1644, %v1642
      %v1665 = vpack.c.b16 %v1645, %v1643
      %v1666 = vpack.c.b16 %v1648, %v1646
      %v1667 = vpack.c.b16 %v1649, %v1647
      %v1668 = vpack.c.b16 %v1652, %v1650
      %v1669 = vpack.c.b16 %v1653, %v1651
      %1686 = vmatprep.subr.bf16.mxu0 %v1655
      %1687 = vmatpush1.bf16.msra.mxu0 %v1654
      %1688 = vmatprep.subr.bf16.mxu0 %v1657
      %1689 = vmatpush1.bf16.msra.mxu0 %v1656
      %1690 = vmatprep.subr.bf16.mxu0 %v1659
      %1691 = vmatpush1.bf16.msra.mxu0 %v1658
      %1692 = vmatprep.subr.bf16.mxu0 %v1661
      %1693 = vmatpush1.bf16.msra.mxu0 %v1660
      %1694 = vmatprep.subr.bf16.mxu0 %v1663
      %1695 = vmatpush1.bf16.msra.mxu0 %v1662
      %1696 = vmatprep.subr.bf16.mxu0 %v1665
      %1697 = vmatpush1.bf16.msra.mxu0 %v1664
      %1698 = vmatprep.subr.bf16.mxu0 %v1667
      %1699 = vmatpush1.bf16.msra.mxu0 %v1666
      %1700 = vmatprep.subr.bf16.mxu0 %v1669
      %1701 = vmatpush1.bf16.msra.mxu0 %v1668
      %1702 = vmatprep.subr.bf16.mxu0 0
      %1703 = vmatpush1.bf16.msra.mxu0 0
      %1704 = vmatprep.subr.bf16.mxu0 0
      %1705 = vmatpush1.bf16.msra.mxu0 0
      %1706 = vmatprep.subr.bf16.mxu0 0
      %1707 = vmatpush1.bf16.msra.mxu0 0
      %1708 = vmatprep.subr.bf16.mxu0 0
      %1709 = vmatpush1.bf16.msra.mxu0 0
      %1710 = vmatprep.subr.bf16.mxu0 0
      %1711 = vmatpush1.bf16.msra.mxu0 0
      %1712 = vmatprep.subr.bf16.mxu0 0
      %1713 = vmatpush1.bf16.msra.mxu0 0
      %1714 = vmatprep.subr.bf16.mxu0 0
      %1715 = vmatpush1.bf16.msra.mxu0 0
      %1716 = vmatprep.subr.bf16.mxu0 0
      %1717 = vmatpush1.bf16.msra.mxu0 0
      %1718 = vmatprep.mubr.bf16.mxu0 0
      %1719 = vmatmul.mubr.bf16.gmra.mrb[0].mxu0 %v1582
      %v1720 = vpop.f32.mrb[0].mxu0
      %v1721 = vadd.f32 0.0, %v1720
      %v1722 = vpop.f32.mrb[0].mxu0
      %v1723 = vadd.f32 0.0, %v1722
      %v1724 = vpop.f32.mrb[0].mxu0
      %v1725 = vadd.f32 0.0, %v1724
      %v1726 = vpop.f32.mrb[0].mxu0
      %v1727 = vadd.f32 0.0, %v1726
      %1728 = vmatprep.mubr.bf16.mxu0 0
      %1729 = vmatmul.mubr.bf16.gmra.mrb[0].mxu0 %v1583
      %v1730 = vpop.f32.mrb[0].mxu0
      %v1731 = vadd.f32 0.0, %v1730
      %v1732 = vpop.f32.mrb[0].mxu0
      %v1733 = vadd.f32 0.0, %v1732
      %v1734 = vpop.f32.mrb[0].mxu0
      %v1735 = vadd.f32 0.0, %v1734
      %v1736 = vpop.f32.mrb[0].mxu0
      %v1737 = vadd.f32 0.0, %v1736
      %1738 = vmatprep.mubr.bf16.mxu0 0
      %1739 = vmatmul.mubr.bf16.gmra.mrb[0].mxu0 %v1584
      %v1740 = vpop.f32.mrb[0].mxu0
      %v1741 = vadd.f32 0.0, %v1740
      %v1742 = vpop.f32.mrb[0].mxu0
      %v1743 = vadd.f32 0.0, %v1742
      %v1744 = vpop.f32.mrb[0].mxu0
      %v1745 = vadd.f32 0.0, %v1744
      %v1746 = vpop.f32.mrb[0].mxu0
      %v1747 = vadd.f32 0.0, %v1746
      %1748 = vmatprep.mubr.bf16.mxu0 0
      %1749 = vmatmul.mubr.bf16.gmra.mrb[0].mxu0 %v1585
      %v1750 = vpop.f32.mrb[0].mxu0
      %v1751 = vadd.f32 0.0, %v1750
      %v1752 = vpop.f32.mrb[0].mxu0
      %v1753 = vadd.f32 0.0, %v1752
      %v1754 = vpop.f32.mrb[0].mxu0
      %v1755 = vadd.f32 0.0, %v1754
      %v1756 = vpop.f32.mrb[0].mxu0
      %v1757 = vadd.f32 0.0, %v1756
      %1758 = vmatprep.mubr.bf16.mxu0 0
      %1759 = vmatmul.mubr.bf16.gmra.mrb[0].mxu0 %v1586
      %v1760 = vpop.f32.mrb[0].mxu0
      %v1761 = vadd.f32 0.0, %v1760
      %v1762 = vpop.f32.mrb[0].mxu0
      %v1763 = vadd.f32 0.0, %v1762
      %v1764 = vpop.f32.mrb[0].mxu0
      %v1765 = vadd.f32 0.0, %v1764
      %v1766 = vpop.f32.mrb[0].mxu0
      %v1767 = vadd.f32 0.0, %v1766
      %1768 = vmatprep.mubr.bf16.mxu0 0
      %1769 = vmatmul.mubr.bf16.gmra.mrb[0].mxu0 %v1587
      %v1770 = vpop.f32.mrb[0].mxu0
      %v1771 = vadd.f32 0.0, %v1770
      %v1772 = vpop.f32.mrb[0].mxu0
      %v1773 = vadd.f32 0.0, %v1772
      %v1774 = vpop.f32.mrb[0].mxu0
      %v1775 = vadd.f32 0.0, %v1774
      %v1776 = vpop.f32.mrb[0].mxu0
      %v1777 = vadd.f32 0.0, %v1776
      %1778 = vmatprep.mubr.bf16.mxu0 0
      %1779 = vmatmul.mubr.bf16.gmra.mrb[0].mxu0 %v1588
      %v1780 = vpop.f32.mrb[0].mxu0
      %v1781 = vadd.f32 0.0, %v1780
      %v1782 = vpop.f32.mrb[0].mxu0
      %v1783 = vadd.f32 0.0, %v1782
      %v1784 = vpop.f32.mrb[0].mxu0
      %v1785 = vadd.f32 0.0, %v1784
      %v1786 = vpop.f32.mrb[0].mxu0
      %v1787 = vadd.f32 0.0, %v1786
      %1788 = vmatprep.mubr.bf16.mxu0 0
      %1789 = vmatmul.mubr.bf16.gmra.mrb[0].mxu0 %v1589
      %v1790 = vpop.f32.mrb[0].mxu0
      %v1791 = vadd.f32 0.0, %v1790
      %v1792 = vpop.f32.mrb[0].mxu0
      %v1793 = vadd.f32 0.0, %v1792
      %v1794 = vpop.f32.mrb[0].mxu0
      %v1795 = vadd.f32 0.0, %v1794
      %v1796 = vpop.f32.mrb[0].mxu0
      %v1797 = vadd.f32 0.0, %v1796
      %1798 = vdwg.mxu0
      %v1799 = vadd.f32 %v382, %v1721
      %v1800 = vadd.f32 %v383, %v1723
      %v1801 = vadd.f32 %v384, %v1725
      %v1802 = vadd.f32 %v385, %v1727
      %v1803 = vadd.f32 %v386, %v1731
      %v1804 = vadd.f32 %v387, %v1733
      %v1805 = vadd.f32 %v388, %v1735
      %v1806 = vadd.f32 %v389, %v1737
      %v1807 = vadd.f32 %v390, %v1741
      %v1808 = vadd.f32 %v391, %v1743
      %v1809 = vadd.f32 %v392, %v1745
      %v1810 = vadd.f32 %v393, %v1747
      %v1811 = vadd.f32 %v394, %v1751
      %v1812 = vadd.f32 %v395, %v1753
      %v1813 = vadd.f32 %v396, %v1755
      %v1814 = vadd.f32 %v397, %v1757
      %v1815 = vadd.f32 %v398, %v1761
      %v1816 = vadd.f32 %v399, %v1763
      %v1817 = vadd.f32 %v400, %v1765
      %v1818 = vadd.f32 %v401, %v1767
      %v1819 = vadd.f32 %v402, %v1771
      %v1820 = vadd.f32 %v403, %v1773
      %v1821 = vadd.f32 %v404, %v1775
      %v1822 = vadd.f32 %v405, %v1777
      %v1823 = vadd.f32 %v406, %v1781
      %v1824 = vadd.f32 %v407, %v1783
      %v1825 = vadd.f32 %v408, %v1785
      %v1826 = vadd.f32 %v409, %v1787
      %v1827 = vadd.f32 %v410, %v1791
      %v1828 = vadd.f32 %v411, %v1793
      %v1829 = vadd.f32 %v412, %v1795
      %v1830 = vadd.f32 %v413, %v1797
      %v1831 = vld [vmem:[%s1 + $0x4] sm:$0xf]
      %v1832 = vld [vmem:[%s1 + $0x1c] sm:$0xf]
      %v1833 = vld [vmem:[%s1 + $0x34] sm:$0xf]
      %v1834 = vld [vmem:[%s1 + $0x4c] sm:$0xf]
      %v1835 = vld [vmem:[%s1 + $0x64] sm:$0xf]
      %v1836 = vld [vmem:[%s1 + $0x7c] sm:$0xf]
      %v1837 = vld [vmem:[%s1 + $0x94] sm:$0xf]
      %v1838 = vld [vmem:[%s1 + $0xac] sm:$0xf]
      %v1839 = vld [vmem:[%s1 + $0xc4] sm:$0xf]
      %v1840 = vld [vmem:[%s1 + $0xdc] sm:$0xf]
      %v1841 = vld [vmem:[%s1 + $0xf4] sm:$0xf]
      %v1842 = vld [vmem:[%s1 + $0x10c] sm:$0xf]
      %v1843 = vld [vmem:[%s1 + $0x124] sm:$0xf]
      %v1844 = vld [vmem:[%s1 + $0x13c] sm:$0xf]
      %v1845 = vld [vmem:[%s1 + $0x154] sm:$0xf]
      %v1846 = vld [vmem:[%s1 + $0x16c] sm:$0xf]
      %v1847 = vld [vmem:[%s1 + $0x184] sm:$0xf]
      %v1848 = vld [vmem:[%s1 + $0x19c] sm:$0xf]
      %v1849 = vld [vmem:[%s1 + $0x1b4] sm:$0xf]
      %v1850 = vld [vmem:[%s1 + $0x1cc] sm:$0xf]
      %v1851 = vld [vmem:[%s1 + $0x1e4] sm:$0xf]
      %v1852 = vld [vmem:[%s1 + $0x1fc] sm:$0xf]
      %v1853 = vld [vmem:[%s1 + $0x214] sm:$0xf]
      %v1854 = vld [vmem:[%s1 + $0x22c] sm:$0xf]
      %v1855 = vld [vmem:[%s1 + $0x244] sm:$0xf]
      %v1856 = vld [vmem:[%s1 + $0x25c] sm:$0xf]
      %v1857 = vld [vmem:[%s1 + $0x274] sm:$0xf]
      %v1858 = vld [vmem:[%s1 + $0x28c] sm:$0xf]
      %v1859 = vld [vmem:[%s1 + $0x2a4] sm:$0xf]
      %v1860 = vld [vmem:[%s1 + $0x2bc] sm:$0xf]
      %v1861 = vld [vmem:[%s1 + $0x2d4] sm:$0xf]
      %v1862 = vld [vmem:[%s1 + $0x2ec] sm:$0xf]
      %v1863 = vld [vmem:[%s2 + $0x1] sm:$0x1]
      %v1865 = vlaneseq
      %v1866 = vshrl.u32 %v1865, 7
      %v1867 = vsub.s32 0, %v1866
      %v1868 = vrot.slane %v1863, %v1867
      %v1902 = vunpack.c.l.b16 %v1831
      %v1903 = vunpack.c.l.b16 %v1832
      %v1904 = vunpack.c.l.b16 %v1833
      %v1905 = vunpack.c.l.b16 %v1834
      %v1906 = vunpack.c.l.b16 %v1835
      %v1907 = vunpack.c.l.b16 %v1836
      %v1908 = vunpack.c.l.b16 %v1837
      %v1909 = vunpack.c.l.b16 %v1838
      %v1910 = vunpack.c.l.b16 %v1839
      %v1911 = vunpack.c.l.b16 %v1840
      %v1912 = vunpack.c.l.b16 %v1841
      %v1913 = vunpack.c.l.b16 %v1842
      %v1914 = vunpack.c.l.b16 %v1843
      %v1915 = vunpack.c.l.b16 %v1844
      %v1916 = vunpack.c.l.b16 %v1845
      %v1917 = vunpack.c.l.b16 %v1846
      %v1918 = vunpack.c.l.b16 %v1847
      %v1919 = vunpack.c.l.b16 %v1848
      %v1920 = vunpack.c.l.b16 %v1849
      %v1921 = vunpack.c.l.b16 %v1850
      %v1922 = vunpack.c.l.b16 %v1851
      %v1923 = vunpack.c.l.b16 %v1852
      %v1924 = vunpack.c.l.b16 %v1853
      %v1925 = vunpack.c.l.b16 %v1854
      %v1926 = vunpack.c.l.b16 %v1855
      %v1927 = vunpack.c.l.b16 %v1856
      %v1928 = vunpack.c.l.b16 %v1857
      %v1929 = vunpack.c.l.b16 %v1858
      %v1930 = vunpack.c.l.b16 %v1859
      %v1931 = vunpack.c.l.b16 %v1860
      %v1932 = vunpack.c.l.b16 %v1861
      %v1933 = vunpack.c.l.b16 %v1862
      %v1934 = vpack.c.b16 %v1903, %v1902
      %v1935 = vpack.c.b16 %v1905, %v1904
      %v1936 = vpack.c.b16 %v1907, %v1906
      %v1937 = vpack.c.b16 %v1909, %v1908
      %v1938 = vpack.c.b16 %v1911, %v1910
      %v1939 = vpack.c.b16 %v1913, %v1912
      %v1940 = vpack.c.b16 %v1915, %v1914
      %v1941 = vpack.c.b16 %v1917, %v1916
      %v1942 = vpack.c.b16 %v1919, %v1918
      %v1943 = vpack.c.b16 %v1921, %v1920
      %v1944 = vpack.c.b16 %v1923, %v1922
      %v1945 = vpack.c.b16 %v1925, %v1924
      %v1946 = vpack.c.b16 %v1927, %v1926
      %v1947 = vpack.c.b16 %v1929, %v1928
      %v1948 = vpack.c.b16 %v1931, %v1930
      %v1949 = vpack.c.b16 %v1933, %v1932
      %1966 = vmatprep.subr.bf16.mxu0 0
      %1967 = vmatpush1.bf16.msra.mxu0 %v1934
      %1968 = vmatprep.subr.bf16.mxu0 0
      %1969 = vmatpush1.bf16.msra.mxu0 %v1935
      %1970 = vmatprep.subr.bf16.mxu0 0
      %1971 = vmatpush1.bf16.msra.mxu0 %v1936
      %1972 = vmatprep.subr.bf16.mxu0 0
      %1973 = vmatpush1.bf16.msra.mxu0 %v1937
      %1974 = vmatprep.subr.bf16.mxu0 0
      %1975 = vmatpush1.bf16.msra.mxu0 %v1938
      %1976 = vmatprep.subr.bf16.mxu0 0
      %1977 = vmatpush1.bf16.msra.mxu0 %v1939
      %1978 = vmatprep.subr.bf16.mxu0 0
      %1979 = vmatpush1.bf16.msra.mxu0 %v1940
      %1980 = vmatprep.subr.bf16.mxu0 0
      %1981 = vmatpush1.bf16.msra.mxu0 %v1941
      %1982 = vmatprep.subr.bf16.mxu0 0
      %1983 = vmatpush1.bf16.msra.mxu0 %v1942
      %1984 = vmatprep.subr.bf16.mxu0 0
      %1985 = vmatpush1.bf16.msra.mxu0 %v1943
      %1986 = vmatprep.subr.bf16.mxu0 0
      %1987 = vmatpush1.bf16.msra.mxu0 %v1944
      %1988 = vmatprep.subr.bf16.mxu0 0
      %1989 = vmatpush1.bf16.msra.mxu0 %v1945
      %1990 = vmatprep.subr.bf16.mxu0 0
      %1991 = vmatpush1.bf16.msra.mxu0 %v1946
      %1992 = vmatprep.subr.bf16.mxu0 0
      %1993 = vmatpush1.bf16.msra.mxu0 %v1947
      %1994 = vmatprep.subr.bf16.mxu0 0
      %1995 = vmatpush1.bf16.msra.mxu0 %v1948
      %1996 = vmatprep.subr.bf16.mxu0 0
      %1997 = vmatpush1.bf16.msra.mxu0 %v1949
      %1998 = vmatprep.mubr.bf16.mxu0 %v502
      %1999 = vmatmul.mubr.bf16.gmra.mrb[0].mxu0 %v501
      %v2000 = vpop.f32.mrb[0].mxu0
      %v2001 = vadd.f32 %v1868, %v2000
      %v2002 = vpop.f32.mrb[0].mxu0
      %v2003 = vpop.f32.mrb[0].mxu0
      %v2004 = vadd.f32 %v1868, %v2003
      %v2005 = vpop.f32.mrb[0].mxu0
      %2006 = vmatprep.mubr.bf16.mxu0 %v504
      %2007 = vmatmul.mubr.bf16.gmra.mrb[0].mxu0 %v503
      %v2008 = vpop.f32.mrb[0].mxu0
      %v2009 = vadd.f32 %v1868, %v2008
      %v2010 = vpop.f32.mrb[0].mxu0
      %v2011 = vpop.f32.mrb[0].mxu0
      %v2012 = vadd.f32 %v1868, %v2011
      %v2013 = vpop.f32.mrb[0].mxu0
      %2014 = vmatprep.mubr.bf16.mxu0 %v506
      %2015 = vmatmul.mubr.bf16.gmra.mrb[0].mxu0 %v505
      %v2016 = vpop.f32.mrb[0].mxu0
      %v2017 = vadd.f32 %v1868, %v2016
      %v2018 = vpop.f32.mrb[0].mxu0
      %v2019 = vpop.f32.mrb[0].mxu0
      %v2020 = vadd.f32 %v1868, %v2019
      %v2021 = vpop.f32.mrb[0].mxu0
      %2022 = vmatprep.mubr.bf16.mxu0 %v508
      %2023 = vmatmul.mubr.bf16.gmra.mrb[0].mxu0 %v507
      %v2024 = vpop.f32.mrb[0].mxu0
      %v2025 = vadd.f32 %v1868, %v2024
      %v2026 = vpop.f32.mrb[0].mxu0
      %v2027 = vpop.f32.mrb[0].mxu0
      %v2028 = vadd.f32 %v1868, %v2027
      %v2029 = vpop.f32.mrb[0].mxu0
      %2030 = vmatprep.mubr.bf16.mxu0 %v510
      %2031 = vmatmul.mubr.bf16.gmra.mrb[0].mxu0 %v509
      %v2032 = vpop.f32.mrb[0].mxu0
      %v2033 = vadd.f32 %v1868, %v2032
      %v2034 = vpop.f32.mrb[0].mxu0
      %v2035 = vpop.f32.mrb[0].mxu0
      %v2036 = vadd.f32 %v1868, %v2035
      %v2037 = vpop.f32.mrb[0].mxu0
      %2038 = vmatprep.mubr.bf16.mxu0 %v512
      %2039 = vmatmul.mubr.bf16.gmra.mrb[0].mxu0 %v511
      %v2040 = vpop.f32.mrb[0].mxu0
      %v2041 = vadd.f32 %v1868, %v2040
      %v2042 = vpop.f32.mrb[0].mxu0
      %v2043 = vpop.f32.mrb[0].mxu0
      %v2044 = vadd.f32 %v1868, %v2043
      %v2045 = vpop.f32.mrb[0].mxu0
      %2046 = vmatprep.mubr.bf16.mxu0 %v514
      %2047 = vmatmul.mubr.bf16.gmra.mrb[0].mxu0 %v513
      %v2048 = vpop.f32.mrb[0].mxu0
      %v2049 = vadd.f32 %v1868, %v2048
      %v2050 = vpop.f32.mrb[0].mxu0
      %v2051 = vpop.f32.mrb[0].mxu0
      %v2052 = vadd.f32 %v1868, %v2051
      %v2053 = vpop.f32.mrb[0].mxu0
      %2054 = vmatprep.mubr.bf16.mxu0 %v516
      %2055 = vmatmul.mubr.bf16.gmra.mrb[0].mxu0 %v515
      %v2056 = vpop.f32.mrb[0].mxu0
      %v2057 = vadd.f32 %v1868, %v2056
      %v2058 = vpop.f32.mrb[0].mxu0
      %v2059 = vpop.f32.mrb[0].mxu0
      %v2060 = vadd.f32 %v1868, %v2059
      %v2061 = vpop.f32.mrb[0].mxu0
      %2062 = vdwg.mxu0
      %v2063 = vmul.f32 %v2001, 0.088388346
      %v2064 = vmul.f32 %v2004, 0.088388346
      %v2065 = vmul.f32 %v2009, 0.088388346
      %v2066 = vmul.f32 %v2012, 0.088388346
      %v2067 = vmul.f32 %v2017, 0.088388346
      %v2068 = vmul.f32 %v2020, 0.088388346
      %v2069 = vmul.f32 %v2025, 0.088388346
      %v2070 = vmul.f32 %v2028, 0.088388346
      %v2071 = vmul.f32 %v2033, 0.088388346
      %v2072 = vmul.f32 %v2036, 0.088388346
      %v2073 = vmul.f32 %v2041, 0.088388346
      %v2074 = vmul.f32 %v2044, 0.088388346
      %v2075 = vmul.f32 %v2049, 0.088388346
      %v2076 = vmul.f32 %v2052, 0.088388346
      %v2077 = vmul.f32 %v2057, 0.088388346
      %v2078 = vmul.f32 %v2060, 0.088388346
      %v2079 = vld [vmem:[%s1 + $0xc] sm:$0xf]
      %v2080 = vld [vmem:[%s1 + $0x24] sm:$0xf]
      %v2081 = vld [vmem:[%s1 + $0x3c] sm:$0xf]
      %v2082 = vld [vmem:[%s1 + $0x54] sm:$0xf]
      %v2083 = vld [vmem:[%s1 + $0x6c] sm:$0xf]
      %v2084 = vld [vmem:[%s1 + $0x84] sm:$0xf]
      %v2085 = vld [vmem:[%s1 + $0x9c] sm:$0xf]
      %v2086 = vld [vmem:[%s1 + $0xb4] sm:$0xf]
      %v2087 = vld [vmem:[%s1 + $0xcc] sm:$0xf]
      %v2088 = vld [vmem:[%s1 + $0xe4] sm:$0xf]
      %v2089 = vld [vmem:[%s1 + $0xfc] sm:$0xf]
      %v2090 = vld [vmem:[%s1 + $0x114] sm:$0xf]
      %v2091 = vld [vmem:[%s1 + $0x12c] sm:$0xf]
      %v2092 = vld [vmem:[%s1 + $0x144] sm:$0xf]
      %v2093 = vld [vmem:[%s1 + $0x15c] sm:$0xf]
      %v2094 = vld [vmem:[%s1 + $0x174] sm:$0xf]
      %v2095 = vld [vmem:[%s1 + $0x18c] sm:$0xf]
      %v2096 = vld [vmem:[%s1 + $0x1a4] sm:$0xf]
      %v2097 = vld [vmem:[%s1 + $0x1bc] sm:$0xf]
      %v2098 = vld [vmem:[%s1 + $0x1d4] sm:$0xf]
      %v2099 = vld [vmem:[%s1 + $0x1ec] sm:$0xf]
      %v2100 = vld [vmem:[%s1 + $0x204] sm:$0xf]
      %v2101 = vld [vmem:[%s1 + $0x21c] sm:$0xf]
      %v2102 = vld [vmem:[%s1 + $0x234] sm:$0xf]
      %v2103 = vld [vmem:[%s1 + $0x24c] sm:$0xf]
      %v2104 = vld [vmem:[%s1 + $0x264] sm:$0xf]
      %v2105 = vld [vmem:[%s1 + $0x27c] sm:$0xf]
      %v2106 = vld [vmem:[%s1 + $0x294] sm:$0xf]
      %v2107 = vld [vmem:[%s1 + $0x2ac] sm:$0xf]
      %v2108 = vld [vmem:[%s1 + $0x2c4] sm:$0xf]
      %v2109 = vld [vmem:[%s1 + $0x2dc] sm:$0xf]
      %v2110 = vld [vmem:[%s1 + $0x2f4] sm:$0xf]
      %v2111 = vld [vmem:[%s2 + $0x3] sm:$0x1]
      %v2113 = vlaneseq
      %v2114 = vshrl.u32 %v2113, 7
      %v2115 = vsub.s32 0, %v2114
      %v2116 = vrot.slane %v2111, %v2115
      %v2150 = vunpack.c.l.b16 %v2079
      %v2151 = vunpack.c.l.b16 %v2080
      %v2152 = vunpack.c.l.b16 %v2081
      %v2153 = vunpack.c.l.b16 %v2082
      %v2154 = vunpack.c.l.b16 %v2083
      %v2155 = vunpack.c.l.b16 %v2084
      %v2156 = vunpack.c.l.b16 %v2085
      %v2157 = vunpack.c.l.b16 %v2086
      %v2158 = vunpack.c.l.b16 %v2087
      %v2159 = vunpack.c.l.b16 %v2088
      %v2160 = vunpack.c.l.b16 %v2089
      %v2161 = vunpack.c.l.b16 %v2090
      %v2162 = vunpack.c.l.b16 %v2091
      %v2163 = vunpack.c.l.b16 %v2092
      %v2164 = vunpack.c.l.b16 %v2093
      %v2165 = vunpack.c.l.b16 %v2094
      %v2166 = vunpack.c.l.b16 %v2095
      %v2167 = vunpack.c.l.b16 %v2096
      %v2168 = vunpack.c.l.b16 %v2097
      %v2169 = vunpack.c.l.b16 %v2098
      %v2170 = vunpack.c.l.b16 %v2099
      %v2171 = vunpack.c.l.b16 %v2100
      %v2172 = vunpack.c.l.b16 %v2101
      %v2173 = vunpack.c.l.b16 %v2102
      %v2174 = vunpack.c.l.b16 %v2103
      %v2175 = vunpack.c.l.b16 %v2104
      %v2176 = vunpack.c.l.b16 %v2105
      %v2177 = vunpack.c.l.b16 %v2106
      %v2178 = vunpack.c.l.b16 %v2107
      %v2179 = vunpack.c.l.b16 %v2108
      %v2180 = vunpack.c.l.b16 %v2109
      %v2181 = vunpack.c.l.b16 %v2110
      %v2182 = vpack.c.b16 %v2151, %v2150
      %v2183 = vpack.c.b16 %v2153, %v2152
      %v2184 = vpack.c.b16 %v2155, %v2154
      %v2185 = vpack.c.b16 %v2157, %v2156
      %v2186 = vpack.c.b16 %v2159, %v2158
      %v2187 = vpack.c.b16 %v2161, %v2160
      %v2188 = vpack.c.b16 %v2163, %v2162
      %v2189 = vpack.c.b16 %v2165, %v2164
      %v2190 = vpack.c.b16 %v2167, %v2166
      %v2191 = vpack.c.b16 %v2169, %v2168
      %v2192 = vpack.c.b16 %v2171, %v2170
      %v2193 = vpack.c.b16 %v2173, %v2172
      %v2194 = vpack.c.b16 %v2175, %v2174
      %v2195 = vpack.c.b16 %v2177, %v2176
      %v2196 = vpack.c.b16 %v2179, %v2178
      %v2197 = vpack.c.b16 %v2181, %v2180
      %2214 = vmatprep.subr.bf16.mxu0 0
      %2215 = vmatpush1.bf16.msra.mxu0 %v2182
      %2216 = vmatprep.subr.bf16.mxu0 0
      %2217 = vmatpush1.bf16.msra.mxu0 %v2183
      %2218 = vmatprep.subr.bf16.mxu0 0
      %2219 = vmatpush1.bf16.msra.mxu0 %v2184
      %2220 = vmatprep.subr.bf16.mxu0 0
      %2221 = vmatpush1.bf16.msra.mxu0 %v2185
      %2222 = vmatprep.subr.bf16.mxu0 0
      %2223 = vmatpush1.bf16.msra.mxu0 %v2186
      %2224 = vmatprep.subr.bf16.mxu0 0
      %2225 = vmatpush1.bf16.msra.mxu0 %v2187
      %2226 = vmatprep.subr.bf16.mxu0 0
      %2227 = vmatpush1.bf16.msra.mxu0 %v2188
      %2228 = vmatprep.subr.bf16.mxu0 0
      %2229 = vmatpush1.bf16.msra.mxu0 %v2189
      %2230 = vmatprep.subr.bf16.mxu0 0
      %2231 = vmatpush1.bf16.msra.mxu0 %v2190
      %2232 = vmatprep.subr.bf16.mxu0 0
      %2233 = vmatpush1.bf16.msra.mxu0 %v2191
      %2234 = vmatprep.subr.bf16.mxu0 0
      %2235 = vmatpush1.bf16.msra.mxu0 %v2192
      %2236 = vmatprep.subr.bf16.mxu0 0
      %2237 = vmatpush1.bf16.msra.mxu0 %v2193
      %2238 = vmatprep.subr.bf16.mxu0 0
      %2239 = vmatpush1.bf16.msra.mxu0 %v2194
      %2240 = vmatprep.subr.bf16.mxu0 0
      %2241 = vmatpush1.bf16.msra.mxu0 %v2195
      %2242 = vmatprep.subr.bf16.mxu0 0
      %2243 = vmatpush1.bf16.msra.mxu0 %v2196
      %2244 = vmatprep.subr.bf16.mxu0 0
      %2245 = vmatpush1.bf16.msra.mxu0 %v2197
      %2246 = vmatprep.mubr.bf16.mxu0 %v502
      %2247 = vmatmul.mubr.bf16.gmra.mrb[0].mxu0 %v501
      %v2248 = vpop.f32.mrb[0].mxu0
      %v2249 = vadd.f32 %v2116, %v2248
      %v2250 = vpop.f32.mrb[0].mxu0
      %v2251 = vpop.f32.mrb[0].mxu0
      %v2252 = vadd.f32 %v2116, %v2251
      %v2253 = vpop.f32.mrb[0].mxu0
      %2254 = vmatprep.mubr.bf16.mxu0 %v504
      %2255 = vmatmul.mubr.bf16.gmra.mrb[0].mxu0 %v503
      %v2256 = vpop.f32.mrb[0].mxu0
      %v2257 = vadd.f32 %v2116, %v2256
      %v2258 = vpop.f32.mrb[0].mxu0
      %v2259 = vpop.f32.mrb[0].mxu0
      %v2260 = vadd.f32 %v2116, %v2259
      %v2261 = vpop.f32.mrb[0].mxu0
      %2262 = vmatprep.mubr.bf16.mxu0 %v506
      %2263 = vmatmul.mubr.bf16.gmra.mrb[0].mxu0 %v505
      %v2264 = vpop.f32.mrb[0].mxu0
      %v2265 = vadd.f32 %v2116, %v2264
      %v2266 = vpop.f32.mrb[0].mxu0
      %v2267 = vpop.f32.mrb[0].mxu0
      %v2268 = vadd.f32 %v2116, %v2267
      %v2269 = vpop.f32.mrb[0].mxu0
      %2270 = vmatprep.mubr.bf16.mxu0 %v508
      %2271 = vmatmul.mubr.bf16.gmra.mrb[0].mxu0 %v507
      %v2272 = vpop.f32.mrb[0].mxu0
      %v2273 = vadd.f32 %v2116, %v2272
      %v2274 = vpop.f32.mrb[0].mxu0
      %v2275 = vpop.f32.mrb[0].mxu0
      %v2276 = vadd.f32 %v2116, %v2275
      %v2277 = vpop.f32.mrb[0].mxu0
      %2278 = vmatprep.mubr.bf16.mxu0 %v510
      %2279 = vmatmul.mubr.bf16.gmra.mrb[0].mxu0 %v509
      %v2280 = vpop.f32.mrb[0].mxu0
      %v2281 = vadd.f32 %v2116, %v2280
      %v2282 = vpop.f32.mrb[0].mxu0
      %v2283 = vpop.f32.mrb[0].mxu0
      %v2284 = vadd.f32 %v2116, %v2283
      %v2285 = vpop.f32.mrb[0].mxu0
      %2286 = vmatprep.mubr.bf16.mxu0 %v512
      %2287 = vmatmul.mubr.bf16.gmra.mrb[0].mxu0 %v511
      %v2288 = vpop.f32.mrb[0].mxu0
      %v2289 = vadd.f32 %v2116, %v2288
      %v2290 = vpop.f32.mrb[0].mxu0
      %v2291 = vpop.f32.mrb[0].mxu0
      %v2292 = vadd.f32 %v2116, %v2291
      %v2293 = vpop.f32.mrb[0].mxu0
      %2294 = vmatprep.mubr.bf16.mxu0 %v514
      %2295 = vmatmul.mubr.bf16.gmra.mrb[0].mxu0 %v513
      %v2296 = vpop.f32.mrb[0].mxu0
      %v2297 = vadd.f32 %v2116, %v2296
      %v2298 = vpop.f32.mrb[0].mxu0
      %v2299 = vpop.f32.mrb[0].mxu0
      %v2300 = vadd.f32 %v2116, %v2299
      %v2301 = vpop.f32.mrb[0].mxu0
      %2302 = vmatprep.mubr.bf16.mxu0 %v516
      %2303 = vmatmul.mubr.bf16.gmra.mrb[0].mxu0 %v515
      %v2304 = vpop.f32.mrb[0].mxu0
      %v2305 = vadd.f32 %v2116, %v2304
      %v2306 = vpop.f32.mrb[0].mxu0
      %v2307 = vpop.f32.mrb[0].mxu0
      %v2308 = vadd.f32 %v2116, %v2307
      %v2309 = vpop.f32.mrb[0].mxu0
      %2310 = vdwg.mxu0
      %v2311 = vld [vmem:[%s1 + $0x14] sm:$0xf]
      %v2312 = vld [vmem:[%s1 + $0x2c] sm:$0xf]
      %v2313 = vld [vmem:[%s1 + $0x44] sm:$0xf]
      %v2314 = vld [vmem:[%s1 + $0x5c] sm:$0xf]
      %v2315 = vld [vmem:[%s1 + $0x74] sm:$0xf]
      %v2316 = vld [vmem:[%s1 + $0x8c] sm:$0xf]
      %v2317 = vld [vmem:[%s1 + $0xa4] sm:$0xf]
      %v2318 = vld [vmem:[%s1 + $0xbc] sm:$0xf]
      %v2319 = vld [vmem:[%s1 + $0xd4] sm:$0xf]
      %v2320 = vld [vmem:[%s1 + $0xec] sm:$0xf]
      %v2321 = vld [vmem:[%s1 + $0x104] sm:$0xf]
      %v2322 = vld [vmem:[%s1 + $0x11c] sm:$0xf]
      %v2323 = vld [vmem:[%s1 + $0x134] sm:$0xf]
      %v2324 = vld [vmem:[%s1 + $0x14c] sm:$0xf]
      %v2325 = vld [vmem:[%s1 + $0x164] sm:$0xf]
      %v2326 = vld [vmem:[%s1 + $0x17c] sm:$0xf]
      %v2327 = vld [vmem:[%s1 + $0x194] sm:$0xf]
      %v2328 = vld [vmem:[%s1 + $0x1ac] sm:$0xf]
      %v2329 = vld [vmem:[%s1 + $0x1c4] sm:$0xf]
      %v2330 = vld [vmem:[%s1 + $0x1dc] sm:$0xf]
      %v2331 = vld [vmem:[%s1 + $0x1f4] sm:$0xf]
      %v2332 = vld [vmem:[%s1 + $0x20c] sm:$0xf]
      %v2333 = vld [vmem:[%s1 + $0x224] sm:$0xf]
      %v2334 = vld [vmem:[%s1 + $0x23c] sm:$0xf]
      %v2335 = vld [vmem:[%s1 + $0x254] sm:$0xf]
      %v2336 = vld [vmem:[%s1 + $0x26c] sm:$0xf]
      %v2337 = vld [vmem:[%s1 + $0x284] sm:$0xf]
      %v2338 = vld [vmem:[%s1 + $0x29c] sm:$0xf]
      %v2339 = vld [vmem:[%s1 + $0x2b4] sm:$0xf]
      %v2340 = vld [vmem:[%s1 + $0x2cc] sm:$0xf]
      %v2341 = vld [vmem:[%s1 + $0x2e4] sm:$0xf]
      %v2342 = vld [vmem:[%s1 + $0x2fc] sm:$0xf]
      %v2343 = vld [vmem:[%s2 + $0x5] sm:$0x1]
      %v2345 = vlaneseq
      %v2346 = vshrl.u32 %v2345, 7
      %v2347 = vsub.s32 0, %v2346
      %v2348 = vrot.slane %v2343, %v2347
      %v2382 = vunpack.c.l.b16 %v2311
      %v2383 = vunpack.c.l.b16 %v2312
      %v2384 = vunpack.c.l.b16 %v2313
      %v2385 = vunpack.c.l.b16 %v2314
      %v2386 = vunpack.c.l.b16 %v2315
      %v2387 = vunpack.c.l.b16 %v2316
      %v2388 = vunpack.c.l.b16 %v2317
      %v2389 = vunpack.c.l.b16 %v2318
      %v2390 = vunpack.c.l.b16 %v2319
      %v2391 = vunpack.c.l.b16 %v2320
      %v2392 = vunpack.c.l.b16 %v2321
      %v2393 = vunpack.c.l.b16 %v2322
      %v2394 = vunpack.c.l.b16 %v2323
      %v2395 = vunpack.c.l.b16 %v2324
      %v2396 = vunpack.c.l.b16 %v2325
      %v2397 = vunpack.c.l.b16 %v2326
      %v2398 = vunpack.c.l.b16 %v2327
      %v2399 = vunpack.c.l.b16 %v2328
      %v2400 = vunpack.c.l.b16 %v2329
      %v2401 = vunpack.c.l.b16 %v2330
      %v2402 = vunpack.c.l.b16 %v2331
      %v2403 = vunpack.c.l.b16 %v2332
      %v2404 = vunpack.c.l.b16 %v2333
      %v2405 = vunpack.c.l.b16 %v2334
      %v2406 = vunpack.c.l.b16 %v2335
      %v2407 = vunpack.c.l.b16 %v2336
      %v2408 = vunpack.c.l.b16 %v2337
      %v2409 = vunpack.c.l.b16 %v2338
      %v2410 = vunpack.c.l.b16 %v2339
      %v2411 = vunpack.c.l.b16 %v2340
      %v2412 = vunpack.c.l.b16 %v2341
      %v2413 = vunpack.c.l.b16 %v2342
      %v2414 = vpack.c.b16 %v2383, %v2382
      %v2415 = vpack.c.b16 %v2385, %v2384
      %v2416 = vpack.c.b16 %v2387, %v2386
      %v2417 = vpack.c.b16 %v2389, %v2388
      %v2418 = vpack.c.b16 %v2391, %v2390
      %v2419 = vpack.c.b16 %v2393, %v2392
      %v2420 = vpack.c.b16 %v2395, %v2394
      %v2421 = vpack.c.b16 %v2397, %v2396
      %v2422 = vpack.c.b16 %v2399, %v2398
      %v2423 = vpack.c.b16 %v2401, %v2400
      %v2424 = vpack.c.b16 %v2403, %v2402
      %v2425 = vpack.c.b16 %v2405, %v2404
      %v2426 = vpack.c.b16 %v2407, %v2406
      %v2427 = vpack.c.b16 %v2409, %v2408
      %v2428 = vpack.c.b16 %v2411, %v2410
      %v2429 = vpack.c.b16 %v2413, %v2412
      %2446 = vmatprep.subr.bf16.mxu0 0
      %2447 = vmatpush1.bf16.msra.mxu0 %v2414
      %2448 = vmatprep.subr.bf16.mxu0 0
      %2449 = vmatpush1.bf16.msra.mxu0 %v2415
      %2450 = vmatprep.subr.bf16.mxu0 0
      %2451 = vmatpush1.bf16.msra.mxu0 %v2416
      %2452 = vmatprep.subr.bf16.mxu0 0
      %2453 = vmatpush1.bf16.msra.mxu0 %v2417
      %2454 = vmatprep.subr.bf16.mxu0 0
      %2455 = vmatpush1.bf16.msra.mxu0 %v2418
      %2456 = vmatprep.subr.bf16.mxu0 0
      %2457 = vmatpush1.bf16.msra.mxu0 %v2419
      %2458 = vmatprep.subr.bf16.mxu0 0
      %2459 = vmatpush1.bf16.msra.mxu0 %v2420
      %2460 = vmatprep.subr.bf16.mxu0 0
      %2461 = vmatpush1.bf16.msra.mxu0 %v2421
      %2462 = vmatprep.subr.bf16.mxu0 0
      %2463 = vmatpush1.bf16.msra.mxu0 %v2422
      %2464 = vmatprep.subr.bf16.mxu0 0
      %2465 = vmatpush1.bf16.msra.mxu0 %v2423
      %2466 = vmatprep.subr.bf16.mxu0 0
      %2467 = vmatpush1.bf16.msra.mxu0 %v2424
      %2468 = vmatprep.subr.bf16.mxu0 0
      %2469 = vmatpush1.bf16.msra.mxu0 %v2425
      %2470 = vmatprep.subr.bf16.mxu0 0
      %2471 = vmatpush1.bf16.msra.mxu0 %v2426
      %2472 = vmatprep.subr.bf16.mxu0 0
      %2473 = vmatpush1.bf16.msra.mxu0 %v2427
      %2474 = vmatprep.subr.bf16.mxu0 0
      %2475 = vmatpush1.bf16.msra.mxu0 %v2428
      %2476 = vmatprep.subr.bf16.mxu0 0
      %2477 = vmatpush1.bf16.msra.mxu0 %v2429
      %2478 = vmatprep.mubr.bf16.mxu0 %v502
      %2479 = vmatmul.mubr.bf16.gmra.mrb[0].mxu0 %v501
      %v2480 = vpop.f32.mrb[0].mxu0
      %v2481 = vadd.f32 %v2348, %v2480
      %v2482 = vpop.f32.mrb[0].mxu0
      %v2483 = vpop.f32.mrb[0].mxu0
      %v2484 = vadd.f32 %v2348, %v2483
      %v2485 = vpop.f32.mrb[0].mxu0
      %2486 = vmatprep.mubr.bf16.mxu0 %v504
      %2487 = vmatmul.mubr.bf16.gmra.mrb[0].mxu0 %v503
      %v2488 = vpop.f32.mrb[0].mxu0
      %v2489 = vadd.f32 %v2348, %v2488
      %v2490 = vpop.f32.mrb[0].mxu0
      %v2491 = vpop.f32.mrb[0].mxu0
      %v2492 = vadd.f32 %v2348, %v2491
      %v2493 = vpop.f32.mrb[0].mxu0
      %2494 = vmatprep.mubr.bf16.mxu0 %v506
      %2495 = vmatmul.mubr.bf16.gmra.mrb[0].mxu0 %v505
      %v2496 = vpop.f32.mrb[0].mxu0
      %v2497 = vadd.f32 %v2348, %v2496
      %v2498 = vpop.f32.mrb[0].mxu0
      %v2499 = vpop.f32.mrb[0].mxu0
      %v2500 = vadd.f32 %v2348, %v2499
      %v2501 = vpop.f32.mrb[0].mxu0
      %2502 = vmatprep.mubr.bf16.mxu0 %v508
      %2503 = vmatmul.mubr.bf16.gmra.mrb[0].mxu0 %v507
      %v2504 = vpop.f32.mrb[0].mxu0
      %v2505 = vadd.f32 %v2348, %v2504
      %v2506 = vpop.f32.mrb[0].mxu0
      %v2507 = vpop.f32.mrb[0].mxu0
      %v2508 = vadd.f32 %v2348, %v2507
      %v2509 = vpop.f32.mrb[0].mxu0
      %2510 = vmatprep.mubr.bf16.mxu0 %v510
      %2511 = vmatmul.mubr.bf16.gmra.mrb[0].mxu0 %v509
      %v2512 = vpop.f32.mrb[0].mxu0
      %v2513 = vadd.f32 %v2348, %v2512
      %v2514 = vpop.f32.mrb[0].mxu0
      %v2515 = vpop.f32.mrb[0].mxu0
      %v2516 = vadd.f32 %v2348, %v2515
      %v2517 = vpop.f32.mrb[0].mxu0
      %2518 = vmatprep.mubr.bf16.mxu0 %v512
      %2519 = vmatmul.mubr.bf16.gmra.mrb[0].mxu0 %v511
      %v2520 = vpop.f32.mrb[0].mxu0
      %v2521 = vadd.f32 %v2348, %v2520
      %v2522 = vpop.f32.mrb[0].mxu0
      %v2523 = vpop.f32.mrb[0].mxu0
      %v2524 = vadd.f32 %v2348, %v2523
      %v2525 = vpop.f32.mrb[0].mxu0
      %2526 = vmatprep.mubr.bf16.mxu0 %v514
      %2527 = vmatmul.mubr.bf16.gmra.mrb[0].mxu0 %v513
      %v2528 = vpop.f32.mrb[0].mxu0
      %v2529 = vadd.f32 %v2348, %v2528
      %v2530 = vpop.f32.mrb[0].mxu0
      %v2531 = vpop.f32.mrb[0].mxu0
      %v2532 = vadd.f32 %v2348, %v2531
      %v2533 = vpop.f32.mrb[0].mxu0
      %2534 = vmatprep.mubr.bf16.mxu0 %v516
      %2535 = vmatmul.mubr.bf16.gmra.mrb[0].mxu0 %v515
      %v2536 = vpop.f32.mrb[0].mxu0
      %v2537 = vadd.f32 %v2348, %v2536
      %v2538 = vpop.f32.mrb[0].mxu0
      %v2539 = vpop.f32.mrb[0].mxu0
      %v2540 = vadd.f32 %v2348, %v2539
      %v2541 = vpop.f32.mrb[0].mxu0
      %2542 = vdwg.mxu0
      %v2543 = vpack.c.bf16 %v2064, %v2063
      %v2544 = vpack.c.bf16 %v2066, %v2065
      %v2545 = vpack.c.bf16 %v2068, %v2067
      %v2546 = vpack.c.bf16 %v2070, %v2069
      %v2547 = vpack.c.bf16 %v2072, %v2071
      %v2548 = vpack.c.bf16 %v2074, %v2073
      %v2549 = vpack.c.bf16 %v2076, %v2075
      %v2550 = vpack.c.bf16 %v2078, %v2077
      %v2551 = vpack.c.bf16 %v2252, %v2249
      %v2552 = vpack.c.bf16 %v2260, %v2257
      %v2553 = vpack.c.bf16 %v2268, %v2265
      %v2554 = vpack.c.bf16 %v2276, %v2273
      %v2555 = vpack.c.bf16 %v2284, %v2281
      %v2556 = vpack.c.bf16 %v2292, %v2289
      %v2557 = vpack.c.bf16 %v2300, %v2297
      %v2558 = vpack.c.bf16 %v2308, %v2305
      %2559 = vmatprep.subr.bf16.mxu0 0
      %2560 = vmatpush1.bf16.xpose.msra.mxu0 %v2551
      %2561 = vmatprep.subr.bf16.mxu0 0
      %2562 = vmatpush1.bf16.xpose.msra.mxu0 %v2552
      %2563 = vmatprep.subr.bf16.mxu0 0
      %2564 = vmatpush1.bf16.xpose.msra.mxu0 %v2553
      %2565 = vmatprep.subr.bf16.mxu0 0
      %2566 = vmatpush1.bf16.xpose.msra.mxu0 %v2554
      %2567 = vmatprep.subr.bf16.mxu0 0
      %2568 = vmatpush1.bf16.xpose.msra.mxu0 %v2555
      %2569 = vmatprep.subr.bf16.mxu0 0
      %2570 = vmatpush1.bf16.xpose.msra.mxu0 %v2556
      %2571 = vmatprep.subr.bf16.mxu0 0
      %2572 = vmatpush1.bf16.xpose.msra.mxu0 %v2557
      %2573 = vmatprep.subr.bf16.mxu0 0
      %2574 = vmatpush1.bf16.xpose.msra.mxu0 %v2558
      %2575 = vmatprep.subr.bf16.mxu0 0
      %2576 = vmatpush1.bf16.xpose.msra.mxu0 0
      %2577 = vmatprep.subr.bf16.mxu0 0
      %2578 = vmatpush1.bf16.xpose.msra.mxu0 0
      %2579 = vmatprep.subr.bf16.mxu0 0
      %2580 = vmatpush1.bf16.xpose.msra.mxu0 0
      %2581 = vmatprep.subr.bf16.mxu0 0
      %2582 = vmatpush1.bf16.xpose.msra.mxu0 0
      %2583 = vmatprep.subr.bf16.mxu0 0
      %2584 = vmatpush1.bf16.xpose.msra.mxu0 0
      %2585 = vmatprep.subr.bf16.mxu0 0
      %2586 = vmatpush1.bf16.xpose.msra.mxu0 0
      %2587 = vmatprep.subr.bf16.mxu0 0
      %2588 = vmatpush1.bf16.xpose.msra.mxu0 0
      %2589 = vmatprep.subr.bf16.mxu0 0
      %2590 = vmatpush1.bf16.xpose.msra.mxu0 0
      %2591 = vmatprep.mubr.bf16.mxu0 0
      %2592 = vmatmul.mubr.bf16.gmra.mrb[0].mxu0 %v2543
      %v2593 = vpop.f32.mrb[0].mxu0
      %v2594 = vadd.f32 %v1226, %v2593
      %v2595 = vpop.f32.mrb[0].mxu0
      %v2596 = vpop.f32.mrb[0].mxu0
      %v2597 = vadd.f32 %v1226, %v2596
      %v2598 = vpop.f32.mrb[0].mxu0
      %2599 = vmatprep.mubr.bf16.mxu0 0
      %2600 = vmatmul.mubr.bf16.gmra.mrb[0].mxu0 %v2544
      %v2601 = vpop.f32.mrb[0].mxu0
      %v2602 = vadd.f32 %v1226, %v2601
      %v2603 = vpop.f32.mrb[0].mxu0
      %v2604 = vpop.f32.mrb[0].mxu0
      %v2605 = vadd.f32 %v1226, %v2604
      %v2606 = vpop.f32.mrb[0].mxu0
      %2607 = vmatprep.mubr.bf16.mxu0 0
      %2608 = vmatmul.mubr.bf16.gmra.mrb[0].mxu0 %v2545
      %v2609 = vpop.f32.mrb[0].mxu0
      %v2610 = vadd.f32 %v1226, %v2609
      %v2611 = vpop.f32.mrb[0].mxu0
      %v2612 = vpop.f32.mrb[0].mxu0
      %v2613 = vadd.f32 %v1226, %v2612
      %v2614 = vpop.f32.mrb[0].mxu0
      %2615 = vmatprep.mubr.bf16.mxu0 0
      %2616 = vmatmul.mubr.bf16.gmra.mrb[0].mxu0 %v2546
      %v2617 = vpop.f32.mrb[0].mxu0
      %v2618 = vadd.f32 %v1226, %v2617
      %v2619 = vpop.f32.mrb[0].mxu0
      %v2620 = vpop.f32.mrb[0].mxu0
      %v2621 = vadd.f32 %v1226, %v2620
      %v2622 = vpop.f32.mrb[0].mxu0
      %2623 = vmatprep.mubr.bf16.mxu0 0
      %2624 = vmatmul.mubr.bf16.gmra.mrb[0].mxu0 %v2547
      %v2625 = vpop.f32.mrb[0].mxu0
      %v2626 = vadd.f32 %v1226, %v2625
      %v2627 = vpop.f32.mrb[0].mxu0
      %v2628 = vpop.f32.mrb[0].mxu0
      %v2629 = vadd.f32 %v1226, %v2628
      %v2630 = vpop.f32.mrb[0].mxu0
      %2631 = vmatprep.mubr.bf16.mxu0 0
      %2632 = vmatmul.mubr.bf16.gmra.mrb[0].mxu0 %v2548
      %v2633 = vpop.f32.mrb[0].mxu0
      %v2634 = vadd.f32 %v1226, %v2633
      %v2635 = vpop.f32.mrb[0].mxu0
      %v2636 = vpop.f32.mrb[0].mxu0
      %v2637 = vadd.f32 %v1226, %v2636
      %v2638 = vpop.f32.mrb[0].mxu0
      %2639 = vmatprep.mubr.bf16.mxu0 0
      %2640 = vmatmul.mubr.bf16.gmra.mrb[0].mxu0 %v2549
      %v2641 = vpop.f32.mrb[0].mxu0
      %v2642 = vadd.f32 %v1226, %v2641
      %v2643 = vpop.f32.mrb[0].mxu0
      %v2644 = vpop.f32.mrb[0].mxu0
      %v2645 = vadd.f32 %v1226, %v2644
      %v2646 = vpop.f32.mrb[0].mxu0
      %2647 = vmatprep.mubr.bf16.mxu0 0
      %2648 = vmatmul.mubr.bf16.gmra.mrb[0].mxu0 %v2550
      %v2649 = vpop.f32.mrb[0].mxu0
      %v2650 = vadd.f32 %v1226, %v2649
      %v2651 = vpop.f32.mrb[0].mxu0
      %v2652 = vpop.f32.mrb[0].mxu0
      %v2653 = vadd.f32 %v1226, %v2652
      %v2654 = vpop.f32.mrb[0].mxu0
      %2655 = vdwg.mxu0
      %2656 = vmax.xlane.f32.xlu0 %v2594
      %v2657 = vpop.xlane.xlu0 %2656
      %2658 = vmax.xlane.f32.xlu0 %v2597
      %v2659 = vpop.xlane.xlu0 %2658
      %2660 = vmax.xlane.f32.xlu0 %v2602
      %v2661 = vpop.xlane.xlu0 %2660
      %2662 = vmax.xlane.f32.xlu0 %v2605
      %v2663 = vpop.xlane.xlu0 %2662
      %2664 = vmax.xlane.f32.xlu0 %v2610
      %v2665 = vpop.xlane.xlu0 %2664
      %2666 = vmax.xlane.f32.xlu0 %v2613
      %v2667 = vpop.xlane.xlu0 %2666
      %2668 = vmax.xlane.f32.xlu0 %v2618
      %v2669 = vpop.xlane.xlu0 %2668
      %2670 = vmax.xlane.f32.xlu0 %v2621
      %v2671 = vpop.xlane.xlu0 %2670
      %2672 = vmax.xlane.f32.xlu0 %v2626
      %v2673 = vpop.xlane.xlu0 %2672
      %2674 = vmax.xlane.f32.xlu0 %v2629
      %v2675 = vpop.xlane.xlu0 %2674
      %2676 = vmax.xlane.f32.xlu0 %v2634
      %v2677 = vpop.xlane.xlu0 %2676
      %2678 = vmax.xlane.f32.xlu0 %v2637
      %v2679 = vpop.xlane.xlu0 %2678
      %2680 = vmax.xlane.f32.xlu0 %v2642
      %v2681 = vpop.xlane.xlu0 %2680
      %2682 = vmax.xlane.f32.xlu0 %v2645
      %v2683 = vpop.xlane.xlu0 %2682
      %2684 = vmax.xlane.f32.xlu0 %v2650
      %v2685 = vpop.xlane.xlu0 %2684
      %2686 = vmax.xlane.f32.xlu0 %v2653
      %v2687 = vpop.xlane.xlu0 %2686
      %v2688 = vsub.f32 %v2594, %v2657
      %v2689 = vsub.f32 %v2597, %v2659
      %v2690 = vsub.f32 %v2602, %v2661
      %v2691 = vsub.f32 %v2605, %v2663
      %v2692 = vsub.f32 %v2610, %v2665
      %v2693 = vsub.f32 %v2613, %v2667
      %v2694 = vsub.f32 %v2618, %v2669
      %v2695 = vsub.f32 %v2621, %v2671
      %v2696 = vsub.f32 %v2626, %v2673
      %v2697 = vsub.f32 %v2629, %v2675
      %v2698 = vsub.f32 %v2634, %v2677
      %v2699 = vsub.f32 %v2637, %v2679
      %v2700 = vsub.f32 %v2642, %v2681
      %v2701 = vsub.f32 %v2645, %v2683
      %v2702 = vsub.f32 %v2650, %v2685
      %v2703 = vsub.f32 %v2653, %v2687
      %v2704 = vmul.f32 %v2688, 1.442695
      %v2705 = vpow.pop %v2704
      %v2706 = vmul.f32 %v2689, 1.442695
      %v2707 = vpow.pop %v2706
      %v2708 = vmul.f32 %v2690, 1.442695
      %v2709 = vpow.pop %v2708
      %v2710 = vmul.f32 %v2691, 1.442695
      %v2711 = vpow.pop %v2710
      %v2712 = vmul.f32 %v2692, 1.442695
      %v2713 = vpow.pop %v2712
      %v2714 = vmul.f32 %v2693, 1.442695
      %v2715 = vpow.pop %v2714
      %v2716 = vmul.f32 %v2694, 1.442695
      %v2717 = vpow.pop %v2716
      %v2718 = vmul.f32 %v2695, 1.442695
      %v2719 = vpow.pop %v2718
      %v2720 = vmul.f32 %v2696, 1.442695
      %v2721 = vpow.pop %v2720
      %v2722 = vmul.f32 %v2697, 1.442695
      %v2723 = vpow.pop %v2722
      %v2724 = vmul.f32 %v2698, 1.442695
      %v2725 = vpow.pop %v2724
      %v2726 = vmul.f32 %v2699, 1.442695
      %v2727 = vpow.pop %v2726
      %v2728 = vmul.f32 %v2700, 1.442695
      %v2729 = vpow.pop %v2728
      %v2730 = vmul.f32 %v2701, 1.442695
      %v2731 = vpow.pop %v2730
      %v2732 = vmul.f32 %v2702, 1.442695
      %v2733 = vpow.pop %v2732
      %v2734 = vmul.f32 %v2703, 1.442695
      %v2735 = vpow.pop %v2734
      %2736 = vadd.xlane.f32.xlu0 %v2705
      %v2737 = vpop.xlane.xlu0 %2736
      %2738 = vadd.xlane.f32.xlu0 %v2707
      %v2739 = vpop.xlane.xlu0 %2738
      %2740 = vadd.xlane.f32.xlu0 %v2709
      %v2741 = vpop.xlane.xlu0 %2740
      %2742 = vadd.xlane.f32.xlu0 %v2711
      %v2743 = vpop.xlane.xlu0 %2742
      %2744 = vadd.xlane.f32.xlu0 %v2713
      %v2745 = vpop.xlane.xlu0 %2744
      %2746 = vadd.xlane.f32.xlu0 %v2715
      %v2747 = vpop.xlane.xlu0 %2746
      %2748 = vadd.xlane.f32.xlu0 %v2717
      %v2749 = vpop.xlane.xlu0 %2748
      %2750 = vadd.xlane.f32.xlu0 %v2719
      %v2751 = vpop.xlane.xlu0 %2750
      %2752 = vadd.xlane.f32.xlu0 %v2721
      %v2753 = vpop.xlane.xlu0 %2752
      %2754 = vadd.xlane.f32.xlu0 %v2723
      %v2755 = vpop.xlane.xlu0 %2754
      %2756 = vadd.xlane.f32.xlu0 %v2725
      %v2757 = vpop.xlane.xlu0 %2756
      %2758 = vadd.xlane.f32.xlu0 %v2727
      %v2759 = vpop.xlane.xlu0 %2758
      %2760 = vadd.xlane.f32.xlu0 %v2729
      %v2761 = vpop.xlane.xlu0 %2760
      %2762 = vadd.xlane.f32.xlu0 %v2731
      %v2763 = vpop.xlane.xlu0 %2762
      %2764 = vadd.xlane.f32.xlu0 %v2733
      %v2765 = vpop.xlane.xlu0 %2764
      %2766 = vadd.xlane.f32.xlu0 %v2735
      %v2767 = vpop.xlane.xlu0 %2766
      %v2768 = vrcp.pop %v2737
      %v2769 = vmul.f32 %v2705, %v2768
      %v2770 = vrcp.pop %v2739
      %v2771 = vmul.f32 %v2707, %v2770
      %v2772 = vrcp.pop %v2741
      %v2773 = vmul.f32 %v2709, %v2772
      %v2774 = vrcp.pop %v2743
      %v2775 = vmul.f32 %v2711, %v2774
      %v2776 = vrcp.pop %v2745
      %v2777 = vmul.f32 %v2713, %v2776
      %v2778 = vrcp.pop %v2747
      %v2779 = vmul.f32 %v2715, %v2778
      %v2780 = vrcp.pop %v2749
      %v2781 = vmul.f32 %v2717, %v2780
      %v2782 = vrcp.pop %v2751
      %v2783 = vmul.f32 %v2719, %v2782
      %v2784 = vrcp.pop %v2753
      %v2785 = vmul.f32 %v2721, %v2784
      %v2786 = vrcp.pop %v2755
      %v2787 = vmul.f32 %v2723, %v2786
      %v2788 = vrcp.pop %v2757
      %v2789 = vmul.f32 %v2725, %v2788
      %v2790 = vrcp.pop %v2759
      %v2791 = vmul.f32 %v2727, %v2790
      %v2792 = vrcp.pop %v2761
      %v2793 = vmul.f32 %v2729, %v2792
      %v2794 = vrcp.pop %v2763
      %v2795 = vmul.f32 %v2731, %v2794
      %v2796 = vrcp.pop %v2765
      %v2797 = vmul.f32 %v2733, %v2796
      %v2798 = vrcp.pop %v2767
      %v2799 = vmul.f32 %v2735, %v2798
      %v2800 = vpack.c.bf16 %v2771, %v2769
      %v2801 = vpack.c.bf16 %v2775, %v2773
      %v2802 = vpack.c.bf16 %v2779, %v2777
      %v2803 = vpack.c.bf16 %v2783, %v2781
      %v2804 = vpack.c.bf16 %v2787, %v2785
      %v2805 = vpack.c.bf16 %v2791, %v2789
      %v2806 = vpack.c.bf16 %v2795, %v2793
      %v2807 = vpack.c.bf16 %v2799, %v2797
      %v2808 = vpack.c.bf16 %v2484, %v2481
      %v2809 = vpack.c.bf16 %v2492, %v2489
      %v2810 = vpack.c.bf16 %v2500, %v2497
      %v2811 = vpack.c.bf16 %v2508, %v2505
      %v2812 = vpack.c.bf16 %v2516, %v2513
      %v2813 = vpack.c.bf16 %v2524, %v2521
      %v2814 = vpack.c.bf16 %v2532, %v2529
      %v2815 = vpack.c.bf16 %v2540, %v2537
      %2816 = vmatprep.subr.bf16.mxu0 0
      %2817 = vmatpush1.bf16.msra.mxu0 %v2808
      %2818 = vmatprep.subr.bf16.mxu0 0
      %2819 = vmatpush1.bf16.msra.mxu0 %v2809
      %2820 = vmatprep.subr.bf16.mxu0 0
      %2821 = vmatpush1.bf16.msra.mxu0 %v2810
      %2822 = vmatprep.subr.bf16.mxu0 0
      %2823 = vmatpush1.bf16.msra.mxu0 %v2811
      %2824 = vmatprep.subr.bf16.mxu0 0
      %2825 = vmatpush1.bf16.msra.mxu0 %v2812
      %2826 = vmatprep.subr.bf16.mxu0 0
      %2827 = vmatpush1.bf16.msra.mxu0 %v2813
      %2828 = vmatprep.subr.bf16.mxu0 0
      %2829 = vmatpush1.bf16.msra.mxu0 %v2814
      %2830 = vmatprep.subr.bf16.mxu0 0
      %2831 = vmatpush1.bf16.msra.mxu0 %v2815
      %2832 = vmatprep.subr.bf16.mxu0 0
      %2833 = vmatpush1.bf16.msra.mxu0 0
      %2834 = vmatprep.subr.bf16.mxu0 0
      %2835 = vmatpush1.bf16.msra.mxu0 0
      %2836 = vmatprep.subr.bf16.mxu0 0
      %2837 = vmatpush1.bf16.msra.mxu0 0
      %2838 = vmatprep.subr.bf16.mxu0 0
      %2839 = vmatpush1.bf16.msra.mxu0 0
      %2840 = vmatprep.subr.bf16.mxu0 0
      %2841 = vmatpush1.bf16.msra.mxu0 0
      %2842 = vmatprep.subr.bf16.mxu0 0
      %2843 = vmatpush1.bf16.msra.mxu0 0
      %2844 = vmatprep.subr.bf16.mxu0 0
      %2845 = vmatpush1.bf16.msra.mxu0 0
      %2846 = vmatprep.subr.bf16.mxu0 0
      %2847 = vmatpush1.bf16.msra.mxu0 0
      %2848 = vmatprep.mubr.bf16.mxu0 0
      %2849 = vmatmul.mubr.bf16.gmra.mrb[0].mxu0 %v2800
      %v2850 = vpop.f32.mrb[0].mxu0
      %v2851 = vadd.f32 0.0, %v2850
      %v2852 = vpop.f32.mrb[0].mxu0
      %v2853 = vpop.f32.mrb[0].mxu0
      %v2854 = vadd.f32 0.0, %v2853
      %v2855 = vpop.f32.mrb[0].mxu0
      %2856 = vmatprep.mubr.bf16.mxu0 0
      %2857 = vmatmul.mubr.bf16.gmra.mrb[0].mxu0 %v2801
      %v2858 = vpop.f32.mrb[0].mxu0
      %v2859 = vadd.f32 0.0, %v2858
      %v2860 = vpop.f32.mrb[0].mxu0
      %v2861 = vpop.f32.mrb[0].mxu0
      %v2862 = vadd.f32 0.0, %v2861
      %v2863 = vpop.f32.mrb[0].mxu0
      %2864 = vmatprep.mubr.bf16.mxu0 0
      %2865 = vmatmul.mubr.bf16.gmra.mrb[0].mxu0 %v2802
      %v2866 = vpop.f32.mrb[0].mxu0
      %v2867 = vadd.f32 0.0, %v2866
      %v2868 = vpop.f32.mrb[0].mxu0
      %v2869 = vpop.f32.mrb[0].mxu0
      %v2870 = vadd.f32 0.0, %v2869
      %v2871 = vpop.f32.mrb[0].mxu0
      %2872 = vmatprep.mubr.bf16.mxu0 0
      %2873 = vmatmul.mubr.bf16.gmra.mrb[0].mxu0 %v2803
      %v2874 = vpop.f32.mrb[0].mxu0
      %v2875 = vadd.f32 0.0, %v2874
      %v2876 = vpop.f32.mrb[0].mxu0
      %v2877 = vpop.f32.mrb[0].mxu0
      %v2878 = vadd.f32 0.0, %v2877
      %v2879 = vpop.f32.mrb[0].mxu0
      %2880 = vmatprep.mubr.bf16.mxu0 0
      %2881 = vmatmul.mubr.bf16.gmra.mrb[0].mxu0 %v2804
      %v2882 = vpop.f32.mrb[0].mxu0
      %v2883 = vadd.f32 0.0, %v2882
      %v2884 = vpop.f32.mrb[0].mxu0
      %v2885 = vpop.f32.mrb[0].mxu0
      %v2886 = vadd.f32 0.0, %v2885
      %v2887 = vpop.f32.mrb[0].mxu0
      %2888 = vmatprep.mubr.bf16.mxu0 0
      %2889 = vmatmul.mubr.bf16.gmra.mrb[0].mxu0 %v2805
      %v2890 = vpop.f32.mrb[0].mxu0
      %v2891 = vadd.f32 0.0, %v2890
      %v2892 = vpop.f32.mrb[0].mxu0
      %v2893 = vpop.f32.mrb[0].mxu0
      %v2894 = vadd.f32 0.0, %v2893
      %v2895 = vpop.f32.mrb[0].mxu0
      %2896 = vmatprep.mubr.bf16.mxu0 0
      %2897 = vmatmul.mubr.bf16.gmra.mrb[0].mxu0 %v2806
      %v2898 = vpop.f32.mrb[0].mxu0
      %v2899 = vadd.f32 0.0, %v2898
      %v2900 = vpop.f32.mrb[0].mxu0
      %v2901 = vpop.f32.mrb[0].mxu0
      %v2902 = vadd.f32 0.0, %v2901
      %v2903 = vpop.f32.mrb[0].mxu0
      %2904 = vmatprep.mubr.bf16.mxu0 0
      %2905 = vmatmul.mubr.bf16.gmra.mrb[0].mxu0 %v2807
      %v2906 = vpop.f32.mrb[0].mxu0
      %v2907 = vadd.f32 0.0, %v2906
      %v2908 = vpop.f32.mrb[0].mxu0
      %v2909 = vpop.f32.mrb[0].mxu0
      %v2910 = vadd.f32 0.0, %v2909
      %v2911 = vpop.f32.mrb[0].mxu0
      %2912 = vdwg.mxu0
      %v2913 = vpack.c.bf16 %v2854, %v2851
      %v2914 = vpack.c.bf16 %v2862, %v2859
      %v2915 = vpack.c.bf16 %v2870, %v2867
      %v2916 = vpack.c.bf16 %v2878, %v2875
      %v2917 = vpack.c.bf16 %v2886, %v2883
      %v2918 = vpack.c.bf16 %v2894, %v2891
      %v2919 = vpack.c.bf16 %v2902, %v2899
      %v2920 = vpack.c.bf16 %v2910, %v2907
      %v2921 = vld [vmem:[%s3 + $0x80] sm:$0xff]
      %v2922 = vld [vmem:[%s3 + $0x88] sm:$0xff]
      %v2923 = vld [vmem:[%s3 + $0x90] sm:$0xff]
      %v2924 = vld [vmem:[%s3 + $0x98] sm:$0xff]
      %v2925 = vld [vmem:[%s3 + $0xa0] sm:$0xff]
      %v2926 = vld [vmem:[%s3 + $0xa8] sm:$0xff]
      %v2927 = vld [vmem:[%s3 + $0xb0] sm:$0xff]
      %v2928 = vld [vmem:[%s3 + $0xb8] sm:$0xff]
      %v2929 = vld [vmem:[%s3 + $0xc0] sm:$0xff]
      %v2930 = vld [vmem:[%s3 + $0xc8] sm:$0xff]
      %v2931 = vld [vmem:[%s3 + $0xd0] sm:$0xff]
      %v2932 = vld [vmem:[%s3 + $0xd8] sm:$0xff]
      %v2933 = vld [vmem:[%s3 + $0xe0] sm:$0xff]
      %v2934 = vld [vmem:[%s3 + $0xe8] sm:$0xff]
      %v2935 = vld [vmem:[%s3 + $0xf0] sm:$0xff]
      %v2936 = vld [vmem:[%s3 + $0xf8] sm:$0xff]
      %v2953 = vunpack.c.l.b16 %v2921
      %v2954 = vunpack.c.h.b16 %v2921
      %v2955 = vunpack.c.l.b16 %v2922
      %v2956 = vunpack.c.h.b16 %v2922
      %v2957 = vunpack.c.l.b16 %v2923
      %v2958 = vunpack.c.h.b16 %v2923
      %v2959 = vunpack.c.l.b16 %v2924
      %v2960 = vunpack.c.h.b16 %v2924
      %v2961 = vunpack.c.l.b16 %v2925
      %v2962 = vunpack.c.h.b16 %v2925
      %v2963 = vunpack.c.l.b16 %v2926
      %v2964 = vunpack.c.h.b16 %v2926
      %v2965 = vunpack.c.l.b16 %v2927
      %v2966 = vunpack.c.h.b16 %v2927
      %v2967 = vunpack.c.l.b16 %v2928
      %v2968 = vunpack.c.h.b16 %v2928
      %v2969 = vunpack.c.l.b16 %v2929
      %v2970 = vunpack.c.h.b16 %v2929
      %v2971 = vunpack.c.l.b16 %v2930
      %v2972 = vunpack.c.h.b16 %v2930
      %v2973 = vunpack.c.l.b16 %v2931
      %v2974 = vunpack.c.h.b16 %v2931
      %v2975 = vunpack.c.l.b16 %v2932
      %v2976 = vunpack.c.h.b16 %v2932
      %v2977 = vunpack.c.l.b16 %v2933
      %v2978 = vunpack.c.h.b16 %v2933
      %v2979 = vunpack.c.l.b16 %v2934
      %v2980 = vunpack.c.h.b16 %v2934
      %v2981 = vunpack.c.l.b16 %v2935
      %v2982 = vunpack.c.h.b16 %v2935
      %v2983 = vunpack.c.l.b16 %v2936
      %v2984 = vunpack.c.h.b16 %v2936
      %v2985 = vpack.c.b16 %v2955, %v2953
      %v2986 = vpack.c.b16 %v2956, %v2954
      %v2987 = vpack.c.b16 %v2959, %v2957
      %v2988 = vpack.c.b16 %v2960, %v2958
      %v2989 = vpack.c.b16 %v2963, %v2961
      %v2990 = vpack.c.b16 %v2964, %v2962
      %v2991 = vpack.c.b16 %v2967, %v2965
      %v2992 = vpack.c.b16 %v2968, %v2966
      %v2993 = vpack.c.b16 %v2971, %v2969
      %v2994 = vpack.c.b16 %v2972, %v2970
      %v2995 = vpack.c.b16 %v2975, %v2973
      %v2996 = vpack.c.b16 %v2976, %v2974
      %v2997 = vpack.c.b16 %v2979, %v2977
      %v2998 = vpack.c.b16 %v2980, %v2978
      %v2999 = vpack.c.b16 %v2983, %v2981
      %v3000 = vpack.c.b16 %v2984, %v2982
      %3017 = vmatprep.subr.bf16.mxu0 %v2986
      %3018 = vmatpush1.bf16.msra.mxu0 %v2985
      %3019 = vmatprep.subr.bf16.mxu0 %v2988
      %3020 = vmatpush1.bf16.msra.mxu0 %v2987
      %3021 = vmatprep.subr.bf16.mxu0 %v2990
      %3022 = vmatpush1.bf16.msra.mxu0 %v2989
      %3023 = vmatprep.subr.bf16.mxu0 %v2992
      %3024 = vmatpush1.bf16.msra.mxu0 %v2991
      %3025 = vmatprep.subr.bf16.mxu0 %v2994
      %3026 = vmatpush1.bf16.msra.mxu0 %v2993
      %3027 = vmatprep.subr.bf16.mxu0 %v2996
      %3028 = vmatpush1.bf16.msra.mxu0 %v2995
      %3029 = vmatprep.subr.bf16.mxu0 %v2998
      %3030 = vmatpush1.bf16.msra.mxu0 %v2997
      %3031 = vmatprep.subr.bf16.mxu0 %v3000
      %3032 = vmatpush1.bf16.msra.mxu0 %v2999
      %3033 = vmatprep.subr.bf16.mxu0 0
      %3034 = vmatpush1.bf16.msra.mxu0 0
      %3035 = vmatprep.subr.bf16.mxu0 0
      %3036 = vmatpush1.bf16.msra.mxu0 0
      %3037 = vmatprep.subr.bf16.mxu0 0
      %3038 = vmatpush1.bf16.msra.mxu0 0
      %3039 = vmatprep.subr.bf16.mxu0 0
      %3040 = vmatpush1.bf16.msra.mxu0 0
      %3041 = vmatprep.subr.bf16.mxu0 0
      %3042 = vmatpush1.bf16.msra.mxu0 0
      %3043 = vmatprep.subr.bf16.mxu0 0
      %3044 = vmatpush1.bf16.msra.mxu0 0
      %3045 = vmatprep.subr.bf16.mxu0 0
      %3046 = vmatpush1.bf16.msra.mxu0 0
      %3047 = vmatprep.subr.bf16.mxu0 0
      %3048 = vmatpush1.bf16.msra.mxu0 0
      %3049 = vmatprep.mubr.bf16.mxu0 0
      %3050 = vmatmul.mubr.bf16.gmra.mrb[0].mxu0 %v2913
      %v3051 = vpop.f32.mrb[0].mxu0
      %v3052 = vadd.f32 0.0, %v3051
      %v3053 = vpop.f32.mrb[0].mxu0
      %v3054 = vadd.f32 0.0, %v3053
      %v3055 = vpop.f32.mrb[0].mxu0
      %v3056 = vadd.f32 0.0, %v3055
      %v3057 = vpop.f32.mrb[0].mxu0
      %v3058 = vadd.f32 0.0, %v3057
      %3059 = vmatprep.mubr.bf16.mxu0 0
      %3060 = vmatmul.mubr.bf16.gmra.mrb[0].mxu0 %v2914
      %v3061 = vpop.f32.mrb[0].mxu0
      %v3062 = vadd.f32 0.0, %v3061
      %v3063 = vpop.f32.mrb[0].mxu0
      %v3064 = vadd.f32 0.0, %v3063
      %v3065 = vpop.f32.mrb[0].mxu0
      %v3066 = vadd.f32 0.0, %v3065
      %v3067 = vpop.f32.mrb[0].mxu0
      %v3068 = vadd.f32 0.0, %v3067
      %3069 = vmatprep.mubr.bf16.mxu0 0
      %3070 = vmatmul.mubr.bf16.gmra.mrb[0].mxu0 %v2915
      %v3071 = vpop.f32.mrb[0].mxu0
      %v3072 = vadd.f32 0.0, %v3071
      %v3073 = vpop.f32.mrb[0].mxu0
      %v3074 = vadd.f32 0.0, %v3073
      %v3075 = vpop.f32.mrb[0].mxu0
      %v3076 = vadd.f32 0.0, %v3075
      %v3077 = vpop.f32.mrb[0].mxu0
      %v3078 = vadd.f32 0.0, %v3077
      %3079 = vmatprep.mubr.bf16.mxu0 0
      %3080 = vmatmul.mubr.bf16.gmra.mrb[0].mxu0 %v2916
      %v3081 = vpop.f32.mrb[0].mxu0
      %v3082 = vadd.f32 0.0, %v3081
      %v3083 = vpop.f32.mrb[0].mxu0
      %v3084 = vadd.f32 0.0, %v3083
      %v3085 = vpop.f32.mrb[0].mxu0
      %v3086 = vadd.f32 0.0, %v3085
      %v3087 = vpop.f32.mrb[0].mxu0
      %v3088 = vadd.f32 0.0, %v3087
      %3089 = vmatprep.mubr.bf16.mxu0 0
      %3090 = vmatmul.mubr.bf16.gmra.mrb[0].mxu0 %v2917
      %v3091 = vpop.f32.mrb[0].mxu0
      %v3092 = vadd.f32 0.0, %v3091
      %v3093 = vpop.f32.mrb[0].mxu0
      %v3094 = vadd.f32 0.0, %v3093
      %v3095 = vpop.f32.mrb[0].mxu0
      %v3096 = vadd.f32 0.0, %v3095
      %v3097 = vpop.f32.mrb[0].mxu0
      %v3098 = vadd.f32 0.0, %v3097
      %3099 = vmatprep.mubr.bf16.mxu0 0
      %3100 = vmatmul.mubr.bf16.gmra.mrb[0].mxu0 %v2918
      %v3101 = vpop.f32.mrb[0].mxu0
      %v3102 = vadd.f32 0.0, %v3101
      %v3103 = vpop.f32.mrb[0].mxu0
      %v3104 = vadd.f32 0.0, %v3103
      %v3105 = vpop.f32.mrb[0].mxu0
      %v3106 = vadd.f32 0.0, %v3105
      %v3107 = vpop.f32.mrb[0].mxu0
      %v3108 = vadd.f32 0.0, %v3107
      %3109 = vmatprep.mubr.bf16.mxu0 0
      %3110 = vmatmul.mubr.bf16.gmra.mrb[0].mxu0 %v2919
      %v3111 = vpop.f32.mrb[0].mxu0
      %v3112 = vadd.f32 0.0, %v3111
      %v3113 = vpop.f32.mrb[0].mxu0
      %v3114 = vadd.f32 0.0, %v3113
      %v3115 = vpop.f32.mrb[0].mxu0
      %v3116 = vadd.f32 0.0, %v3115
      %v3117 = vpop.f32.mrb[0].mxu0
      %v3118 = vadd.f32 0.0, %v3117
      %3119 = vmatprep.mubr.bf16.mxu0 0
      %3120 = vmatmul.mubr.bf16.gmra.mrb[0].mxu0 %v2920
      %v3121 = vpop.f32.mrb[0].mxu0
      %v3122 = vadd.f32 0.0, %v3121
      %v3123 = vpop.f32.mrb[0].mxu0
      %v3124 = vadd.f32 0.0, %v3123
      %v3125 = vpop.f32.mrb[0].mxu0
      %v3126 = vadd.f32 0.0, %v3125
      %v3127 = vpop.f32.mrb[0].mxu0
      %v3128 = vadd.f32 0.0, %v3127
      %3129 = vdwg.mxu0
      %v3130 = vadd.f32 %v1799, %v3052
      %v3131 = vadd.f32 %v1800, %v3054
      %v3132 = vadd.f32 %v1801, %v3056
      %v3133 = vadd.f32 %v1802, %v3058
      %v3134 = vadd.f32 %v1803, %v3062
      %v3135 = vadd.f32 %v1804, %v3064
      %v3136 = vadd.f32 %v1805, %v3066
      %v3137 = vadd.f32 %v1806, %v3068
      %v3138 = vadd.f32 %v1807, %v3072
      %v3139 = vadd.f32 %v1808, %v3074
      %v3140 = vadd.f32 %v1809, %v3076
      %v3141 = vadd.f32 %v1810, %v3078
      %v3142 = vadd.f32 %v1811, %v3082
      %v3143 = vadd.f32 %v1812, %v3084
      %v3144 = vadd.f32 %v1813, %v3086
      %v3145 = vadd.f32 %v1814, %v3088
      %v3146 = vadd.f32 %v1815, %v3092
      %v3147 = vadd.f32 %v1816, %v3094
      %v3148 = vadd.f32 %v1817, %v3096
      %v3149 = vadd.f32 %v1818, %v3098
      %v3150 = vadd.f32 %v1819, %v3102
      %v3151 = vadd.f32 %v1820, %v3104
      %v3152 = vadd.f32 %v1821, %v3106
      %v3153 = vadd.f32 %v1822, %v3108
      %v3154 = vadd.f32 %v1823, %v3112
      %v3155 = vadd.f32 %v1824, %v3114
      %v3156 = vadd.f32 %v1825, %v3116
      %v3157 = vadd.f32 %v1826, %v3118
      %v3158 = vadd.f32 %v1827, %v3122
      %v3159 = vadd.f32 %v1828, %v3124
      %v3160 = vadd.f32 %v1829, %v3126
      %v3161 = vadd.f32 %v1830, %v3128
      %v3162 = vld [vmem:[%s5] sm:$0x3]
      %v3163 = vld [vmem:[%s6] sm:$0x3]
      %v3164 = vadd.f32 %v3130, %v3131
      %3165 = vadd.xlane.f32.xlu0 %v3164
      %v3166 = vpop.xlane.xlu0 %3165
      %v3167 = vadd.f32 %v3132, %v3133
      %3168 = vadd.xlane.f32.xlu0 %v3167
      %v3169 = vpop.xlane.xlu0 %3168
      %v3170 = vadd.f32 %v3134, %v3135
      %3171 = vadd.xlane.f32.xlu0 %v3170
      %v3172 = vpop.xlane.xlu0 %3171
      %v3173 = vadd.f32 %v3136, %v3137
      %3174 = vadd.xlane.f32.xlu0 %v3173
      %v3175 = vpop.xlane.xlu0 %3174
      %v3176 = vadd.f32 %v3138, %v3139
      %3177 = vadd.xlane.f32.xlu0 %v3176
      %v3178 = vpop.xlane.xlu0 %3177
      %v3179 = vadd.f32 %v3140, %v3141
      %3180 = vadd.xlane.f32.xlu0 %v3179
      %v3181 = vpop.xlane.xlu0 %3180
      %v3182 = vadd.f32 %v3142, %v3143
      %3183 = vadd.xlane.f32.xlu0 %v3182
      %v3184 = vpop.xlane.xlu0 %3183
      %v3185 = vadd.f32 %v3144, %v3145
      %3186 = vadd.xlane.f32.xlu0 %v3185
      %v3187 = vpop.xlane.xlu0 %3186
      %v3188 = vadd.f32 %v3146, %v3147
      %3189 = vadd.xlane.f32.xlu0 %v3188
      %v3190 = vpop.xlane.xlu0 %3189
      %v3191 = vadd.f32 %v3148, %v3149
      %3192 = vadd.xlane.f32.xlu0 %v3191
      %v3193 = vpop.xlane.xlu0 %3192
      %v3194 = vadd.f32 %v3150, %v3151
      %3195 = vadd.xlane.f32.xlu0 %v3194
      %v3196 = vpop.xlane.xlu0 %3195
      %v3197 = vadd.f32 %v3152, %v3153
      %3198 = vadd.xlane.f32.xlu0 %v3197
      %v3199 = vpop.xlane.xlu0 %3198
      %v3200 = vadd.f32 %v3154, %v3155
      %3201 = vadd.xlane.f32.xlu0 %v3200
      %v3202 = vpop.xlane.xlu0 %3201
      %v3203 = vadd.f32 %v3156, %v3157
      %3204 = vadd.xlane.f32.xlu0 %v3203
      %v3205 = vpop.xlane.xlu0 %3204
      %v3206 = vadd.f32 %v3158, %v3159
      %3207 = vadd.xlane.f32.xlu0 %v3206
      %v3208 = vpop.xlane.xlu0 %3207
      %v3209 = vadd.f32 %v3160, %v3161
      %3210 = vadd.xlane.f32.xlu0 %v3209
      %v3211 = vpop.xlane.xlu0 %3210
      %v3212 = vrcp.pop 256.0
      %v3213 = vmul.f32 %v3166, %v3212
      %v3214 = vmul.f32 %v3169, %v3212
      %v3215 = vmul.f32 %v3172, %v3212
      %v3216 = vmul.f32 %v3175, %v3212
      %v3217 = vmul.f32 %v3178, %v3212
      %v3218 = vmul.f32 %v3181, %v3212
      %v3219 = vmul.f32 %v3184, %v3212
      %v3220 = vmul.f32 %v3187, %v3212
      %v3221 = vmul.f32 %v3190, %v3212
      %v3222 = vmul.f32 %v3193, %v3212
      %v3223 = vmul.f32 %v3196, %v3212
      %v3224 = vmul.f32 %v3199, %v3212
      %v3225 = vmul.f32 %v3202, %v3212
      %v3226 = vmul.f32 %v3205, %v3212
      %v3227 = vmul.f32 %v3208, %v3212
      %v3228 = vmul.f32 %v3211, %v3212
      %v3229 = vsub.f32 %v3130, %v3213
      %v3230 = vsub.f32 %v3131, %v3213
      %v3231 = vsub.f32 %v3132, %v3214
      %v3232 = vsub.f32 %v3133, %v3214
      %v3233 = vsub.f32 %v3134, %v3215
      %v3234 = vsub.f32 %v3135, %v3215
      %v3235 = vsub.f32 %v3136, %v3216
      %v3236 = vsub.f32 %v3137, %v3216
      %v3237 = vsub.f32 %v3138, %v3217
      %v3238 = vsub.f32 %v3139, %v3217
      %v3239 = vsub.f32 %v3140, %v3218
      %v3240 = vsub.f32 %v3141, %v3218
      %v3241 = vsub.f32 %v3142, %v3219
      %v3242 = vsub.f32 %v3143, %v3219
      %v3243 = vsub.f32 %v3144, %v3220
      %v3244 = vsub.f32 %v3145, %v3220
      %v3245 = vsub.f32 %v3146, %v3221
      %v3246 = vsub.f32 %v3147, %v3221
      %v3247 = vsub.f32 %v3148, %v3222
      %v3248 = vsub.f32 %v3149, %v3222
      %v3249 = vsub.f32 %v3150, %v3223
      %v3250 = vsub.f32 %v3151, %v3223
      %v3251 = vsub.f32 %v3152, %v3224
      %v3252 = vsub.f32 %v3153, %v3224
      %v3253 = vsub.f32 %v3154, %v3225
      %v3254 = vsub.f32 %v3155, %v3225
      %v3255 = vsub.f32 %v3156, %v3226
      %v3256 = vsub.f32 %v3157, %v3226
      %v3257 = vsub.f32 %v3158, %v3227
      %v3258 = vsub.f32 %v3159, %v3227
      %v3259 = vsub.f32 %v3160, %v3228
      %v3260 = vsub.f32 %v3161, %v3228
      %v3261 = vmul.f32 %v3229, %v3229
      %v3262 = vmul.f32 %v3230, %v3230
      %v3263 = vmul.f32 %v3231, %v3231
      %v3264 = vmul.f32 %v3232, %v3232
      %v3265 = vmul.f32 %v3233, %v3233
      %v3266 = vmul.f32 %v3234, %v3234
      %v3267 = vmul.f32 %v3235, %v3235
      %v3268 = vmul.f32 %v3236, %v3236
      %v3269 = vmul.f32 %v3237, %v3237
      %v3270 = vmul.f32 %v3238, %v3238
      %v3271 = vmul.f32 %v3239, %v3239
      %v3272 = vmul.f32 %v3240, %v3240
      %v3273 = vmul.f32 %v3241, %v3241
      %v3274 = vmul.f32 %v3242, %v3242
      %v3275 = vmul.f32 %v3243, %v3243
      %v3276 = vmul.f32 %v3244, %v3244
      %v3277 = vmul.f32 %v3245, %v3245
      %v3278 = vmul.f32 %v3246, %v3246
      %v3279 = vmul.f32 %v3247, %v3247
      %v3280 = vmul.f32 %v3248, %v3248
      %v3281 = vmul.f32 %v3249, %v3249
      %v3282 = vmul.f32 %v3250, %v3250
      %v3283 = vmul.f32 %v3251, %v3251
      %v3284 = vmul.f32 %v3252, %v3252
      %v3285 = vmul.f32 %v3253, %v3253
      %v3286 = vmul.f32 %v3254, %v3254
      %v3287 = vmul.f32 %v3255, %v3255
      %v3288 = vmul.f32 %v3256, %v3256
      %v3289 = vmul.f32 %v3257, %v3257
      %v3290 = vmul.f32 %v3258, %v3258
      %v3291 = vmul.f32 %v3259, %v3259
      %v3292 = vmul.f32 %v3260, %v3260
      %v3293 = vadd.f32 %v3261, %v3262
      %3294 = vadd.xlane.f32.xlu0 %v3293
      %v3295 = vpop.xlane.xlu0 %3294
      %v3296 = vadd.f32 %v3263, %v3264
      %3297 = vadd.xlane.f32.xlu0 %v3296
      %v3298 = vpop.xlane.xlu0 %3297
      %v3299 = vadd.f32 %v3265, %v3266
      %3300 = vadd.xlane.f32.xlu0 %v3299
      %v3301 = vpop.xlane.xlu0 %3300
      %v3302 = vadd.f32 %v3267, %v3268
      %3303 = vadd.xlane.f32.xlu0 %v3302
      %v3304 = vpop.xlane.xlu0 %3303
      %v3305 = vadd.f32 %v3269, %v3270
      %3306 = vadd.xlane.f32.xlu0 %v3305
      %v3307 = vpop.xlane.xlu0 %3306
      %v3308 = vadd.f32 %v3271, %v3272
      %3309 = vadd.xlane.f32.xlu0 %v3308
      %v3310 = vpop.xlane.xlu0 %3309
      %v3311 = vadd.f32 %v3273, %v3274
      %3312 = vadd.xlane.f32.xlu0 %v3311
      %v3313 = vpop.xlane.xlu0 %3312
      %v3314 = vadd.f32 %v3275, %v3276
      %3315 = vadd.xlane.f32.xlu0 %v3314
      %v3316 = vpop.xlane.xlu0 %3315
      %v3317 = vadd.f32 %v3277, %v3278
      %3318 = vadd.xlane.f32.xlu0 %v3317
      %v3319 = vpop.xlane.xlu0 %3318
      %v3320 = vadd.f32 %v3279, %v3280
      %3321 = vadd.xlane.f32.xlu0 %v3320
      %v3322 = vpop.xlane.xlu0 %3321
      %v3323 = vadd.f32 %v3281, %v3282
      %3324 = vadd.xlane.f32.xlu0 %v3323
      %v3325 = vpop.xlane.xlu0 %3324
      %v3326 = vadd.f32 %v3283, %v3284
      %3327 = vadd.xlane.f32.xlu0 %v3326
      %v3328 = vpop.xlane.xlu0 %3327
      %v3329 = vadd.f32 %v3285, %v3286
      %3330 = vadd.xlane.f32.xlu0 %v3329
      %v3331 = vpop.xlane.xlu0 %3330
      %v3332 = vadd.f32 %v3287, %v3288
      %3333 = vadd.xlane.f32.xlu0 %v3332
      %v3334 = vpop.xlane.xlu0 %3333
      %v3335 = vadd.f32 %v3289, %v3290
      %3336 = vadd.xlane.f32.xlu0 %v3335
      %v3337 = vpop.xlane.xlu0 %3336
      %v3338 = vadd.f32 %v3291, %v3292
      %3339 = vadd.xlane.f32.xlu0 %v3338
      %v3340 = vpop.xlane.xlu0 %3339
      %v3341 = vmul.f32 %v3295, %v3212
      %v3342 = vmul.f32 %v3298, %v3212
      %v3343 = vmul.f32 %v3301, %v3212
      %v3344 = vmul.f32 %v3304, %v3212
      %v3345 = vmul.f32 %v3307, %v3212
      %v3346 = vmul.f32 %v3310, %v3212
      %v3347 = vmul.f32 %v3313, %v3212
      %v3348 = vmul.f32 %v3316, %v3212
      %v3349 = vmul.f32 %v3319, %v3212
      %v3350 = vmul.f32 %v3322, %v3212
      %v3351 = vmul.f32 %v3325, %v3212
      %v3352 = vmul.f32 %v3328, %v3212
      %v3353 = vmul.f32 %v3331, %v3212
      %v3354 = vmul.f32 %v3334, %v3212
      %v3355 = vmul.f32 %v3337, %v3212
      %v3356 = vmul.f32 %v3340, %v3212
      %v3357 = vadd.f32 %v3341, 1e-12
      %v3358 = vadd.f32 %v3342, 1e-12
      %v3359 = vadd.f32 %v3343, 1e-12
      %v3360 = vadd.f32 %v3344, 1e-12
      %v3361 = vadd.f32 %v3345, 1e-12
      %v3362 = vadd.f32 %v3346, 1e-12
      %v3363 = vadd.f32 %v3347, 1e-12
      %v3364 = vadd.f32 %v3348, 1e-12
      %v3365 = vadd.f32 %v3349, 1e-12
      %v3366 = vadd.f32 %v3350, 1e-12
      %v3367 = vadd.f32 %v3351, 1e-12
      %v3368 = vadd.f32 %v3352, 1e-12
      %v3369 = vadd.f32 %v3353, 1e-12
      %v3370 = vadd.f32 %v3354, 1e-12
      %v3371 = vadd.f32 %v3355, 1e-12
      %v3372 = vadd.f32 %v3356, 1e-12
      %v3373 = vrsqrt.pop %v3357
      %v3374 = vrsqrt.pop %v3358
      %v3375 = vrsqrt.pop %v3359
      %v3376 = vrsqrt.pop %v3360
      %v3377 = vrsqrt.pop %v3361
      %v3378 = vrsqrt.pop %v3362
      %v3379 = vrsqrt.pop %v3363
      %v3380 = vrsqrt.pop %v3364
      %v3381 = vrsqrt.pop %v3365
      %v3382 = vrsqrt.pop %v3366
      %v3383 = vrsqrt.pop %v3367
      %v3384 = vrsqrt.pop %v3368
      %v3385 = vrsqrt.pop %v3369
      %v3386 = vrsqrt.pop %v3370
      %v3387 = vrsqrt.pop %v3371
      %v3388 = vrsqrt.pop %v3372
      %v3389 = vmul.f32 %v3229, %v3373
      %v3390 = vmul.f32 %v3230, %v3373
      %v3391 = vmul.f32 %v3231, %v3374
      %v3392 = vmul.f32 %v3232, %v3374
      %v3393 = vmul.f32 %v3233, %v3375
      %v3394 = vmul.f32 %v3234, %v3375
      %v3395 = vmul.f32 %v3235, %v3376
      %v3396 = vmul.f32 %v3236, %v3376
      %v3397 = vmul.f32 %v3237, %v3377
      %v3398 = vmul.f32 %v3238, %v3377
      %v3399 = vmul.f32 %v3239, %v3378
      %v3400 = vmul.f32 %v3240, %v3378
      %v3401 = vmul.f32 %v3241, %v3379
      %v3402 = vmul.f32 %v3242, %v3379
      %v3403 = vmul.f32 %v3243, %v3380
      %v3404 = vmul.f32 %v3244, %v3380
      %v3405 = vmul.f32 %v3245, %v3381
      %v3406 = vmul.f32 %v3246, %v3381
      %v3407 = vmul.f32 %v3247, %v3382
      %v3408 = vmul.f32 %v3248, %v3382
      %v3409 = vmul.f32 %v3249, %v3383
      %v3410 = vmul.f32 %v3250, %v3383
      %v3411 = vmul.f32 %v3251, %v3384
      %v3412 = vmul.f32 %v3252, %v3384
      %v3413 = vmul.f32 %v3253, %v3385
      %v3414 = vmul.f32 %v3254, %v3385
      %v3415 = vmul.f32 %v3255, %v3386
      %v3416 = vmul.f32 %v3256, %v3386
      %v3417 = vmul.f32 %v3257, %v3387
      %v3418 = vmul.f32 %v3258, %v3387
      %v3419 = vmul.f32 %v3259, %v3388
      %v3420 = vmul.f32 %v3260, %v3388
      %v3422 = vlaneseq
      %v3423 = vshrl.u32 %v3422, 7
      %v3424 = vsub.s32 0, %v3423
      %v3425 = vrot.slane %v3162, %v3424
      %v3426 = vlaneseq
      %v3427 = vshrl.u32 %v3426, 7
      %v3428 = vsub.s32 1, %v3427
      %v3429 = vrot.slane %v3162, %v3428
      %v3432 = vmul.f32 %v3389, %v3425
      %v3433 = vmul.f32 %v3390, %v3429
      %v3434 = vmul.f32 %v3391, %v3425
      %v3435 = vmul.f32 %v3392, %v3429
      %v3436 = vmul.f32 %v3393, %v3425
      %v3437 = vmul.f32 %v3394, %v3429
      %v3438 = vmul.f32 %v3395, %v3425
      %v3439 = vmul.f32 %v3396, %v3429
      %v3440 = vmul.f32 %v3397, %v3425
      %v3441 = vmul.f32 %v3398, %v3429
      %v3442 = vmul.f32 %v3399, %v3425
      %v3443 = vmul.f32 %v3400, %v3429
      %v3444 = vmul.f32 %v3401, %v3425
      %v3445 = vmul.f32 %v3402, %v3429
      %v3446 = vmul.f32 %v3403, %v3425
      %v3447 = vmul.f32 %v3404, %v3429
      %v3448 = vmul.f32 %v3405, %v3425
      %v3449 = vmul.f32 %v3406, %v3429
      %v3450 = vmul.f32 %v3407, %v3425
      %v3451 = vmul.f32 %v3408, %v3429
      %v3452 = vmul.f32 %v3409, %v3425
      %v3453 = vmul.f32 %v3410, %v3429
      %v3454 = vmul.f32 %v3411, %v3425
      %v3455 = vmul.f32 %v3412, %v3429
      %v3456 = vmul.f32 %v3413, %v3425
      %v3457 = vmul.f32 %v3414, %v3429
      %v3458 = vmul.f32 %v3415, %v3425
      %v3459 = vmul.f32 %v3416, %v3429
      %v3460 = vmul.f32 %v3417, %v3425
      %v3461 = vmul.f32 %v3418, %v3429
      %v3462 = vmul.f32 %v3419, %v3425
      %v3463 = vmul.f32 %v3420, %v3429
      %v3465 = vlaneseq
      %v3466 = vshrl.u32 %v3465, 7
      %v3467 = vsub.s32 0, %v3466
      %v3468 = vrot.slane %v3163, %v3467
      %v3469 = vlaneseq
      %v3470 = vshrl.u32 %v3469, 7
      %v3471 = vsub.s32 1, %v3470
      %v3472 = vrot.slane %v3163, %v3471
      %v3475 = vadd.f32 %v3432, %v3468
      %v3476 = vadd.f32 %v3433, %v3472
      %v3477 = vadd.f32 %v3434, %v3468
      %v3478 = vadd.f32 %v3435, %v3472
      %v3479 = vadd.f32 %v3436, %v3468
      %v3480 = vadd.f32 %v3437, %v3472
      %v3481 = vadd.f32 %v3438, %v3468
      %v3482 = vadd.f32 %v3439, %v3472
      %v3483 = vadd.f32 %v3440, %v3468
      %v3484 = vadd.f32 %v3441, %v3472
      %v3485 = vadd.f32 %v3442, %v3468
      %v3486 = vadd.f32 %v3443, %v3472
      %v3487 = vadd.f32 %v3444, %v3468
      %v3488 = vadd.f32 %v3445, %v3472
      %v3489 = vadd.f32 %v3446, %v3468
      %v3490 = vadd.f32 %v3447, %v3472
      %v3491 = vadd.f32 %v3448, %v3468
      %v3492 = vadd.f32 %v3449, %v3472
      %v3493 = vadd.f32 %v3450, %v3468
      %v3494 = vadd.f32 %v3451, %v3472
      %v3495 = vadd.f32 %v3452, %v3468
      %v3496 = vadd.f32 %v3453, %v3472
      %v3497 = vadd.f32 %v3454, %v3468
      %v3498 = vadd.f32 %v3455, %v3472
      %v3499 = vadd.f32 %v3456, %v3468
      %v3500 = vadd.f32 %v3457, %v3472
      %v3501 = vadd.f32 %v3458, %v3468
      %v3502 = vadd.f32 %v3459, %v3472
      %v3503 = vadd.f32 %v3460, %v3468
      %v3504 = vadd.f32 %v3461, %v3472
      %v3505 = vadd.f32 %v3462, %v3468
      %v3506 = vadd.f32 %v3463, %v3472
      %v3507 = vpack.c.bf16 %v3477, %v3475
      %v3508 = vpack.c.bf16 %v3478, %v3476
      %v3509 = vpack.c.bf16 %v3481, %v3479
      %v3510 = vpack.c.bf16 %v3482, %v3480
      %v3511 = vpack.c.bf16 %v3485, %v3483
      %v3512 = vpack.c.bf16 %v3486, %v3484
      %v3513 = vpack.c.bf16 %v3489, %v3487
      %v3514 = vpack.c.bf16 %v3490, %v3488
      %v3515 = vpack.c.bf16 %v3493, %v3491
      %v3516 = vpack.c.bf16 %v3494, %v3492
      %v3517 = vpack.c.bf16 %v3497, %v3495
      %v3518 = vpack.c.bf16 %v3498, %v3496
      %v3519 = vpack.c.bf16 %v3501, %v3499
      %v3520 = vpack.c.bf16 %v3502, %v3500
      %v3521 = vpack.c.bf16 %v3505, %v3503
      %v3522 = vpack.c.bf16 %v3506, %v3504
      %v3539 = vunpack.c.l.b16 %v3507
      %v3540 = vunpack.c.l.b16 %v3508
      %v3541 = vunpack.c.h.b16 %v3507
      %v3542 = vunpack.c.h.b16 %v3508
      %v3543 = vunpack.c.l.b16 %v3509
      %v3544 = vunpack.c.l.b16 %v3510
      %v3545 = vunpack.c.h.b16 %v3509
      %v3546 = vunpack.c.h.b16 %v3510
      %v3547 = vunpack.c.l.b16 %v3511
      %v3548 = vunpack.c.l.b16 %v3512
      %v3549 = vunpack.c.h.b16 %v3511
      %v3550 = vunpack.c.h.b16 %v3512
      %v3551 = vunpack.c.l.b16 %v3513
      %v3552 = vunpack.c.l.b16 %v3514
      %v3553 = vunpack.c.h.b16 %v3513
      %v3554 = vunpack.c.h.b16 %v3514
      %v3555 = vunpack.c.l.b16 %v3515
      %v3556 = vunpack.c.l.b16 %v3516
      %v3557 = vunpack.c.h.b16 %v3515
      %v3558 = vunpack.c.h.b16 %v3516
      %v3559 = vunpack.c.l.b16 %v3517
      %v3560 = vunpack.c.l.b16 %v3518
      %v3561 = vunpack.c.h.b16 %v3517
      %v3562 = vunpack.c.h.b16 %v3518
      %v3563 = vunpack.c.l.b16 %v3519
      %v3564 = vunpack.c.l.b16 %v3520
      %v3565 = vunpack.c.h.b16 %v3519
      %v3566 = vunpack.c.h.b16 %v3520
      %v3567 = vunpack.c.l.b16 %v3521
      %v3568 = vunpack.c.l.b16 %v3522
      %v3569 = vunpack.c.h.b16 %v3521
      %v3570 = vunpack.c.h.b16 %v3522
      %v3571 = vpack.c.b16 %v3540, %v3539
      %v3572 = vpack.c.b16 %v3542, %v3541
      %v3573 = vpack.c.b16 %v3544, %v3543
      %v3574 = vpack.c.b16 %v3546, %v3545
      %v3575 = vpack.c.b16 %v3548, %v3547
      %v3576 = vpack.c.b16 %v3550, %v3549
      %v3577 = vpack.c.b16 %v3552, %v3551
      %v3578 = vpack.c.b16 %v3554, %v3553
      %v3579 = vpack.c.b16 %v3556, %v3555
      %v3580 = vpack.c.b16 %v3558, %v3557
      %v3581 = vpack.c.b16 %v3560, %v3559
      %v3582 = vpack.c.b16 %v3562, %v3561
      %v3583 = vpack.c.b16 %v3564, %v3563
      %v3584 = vpack.c.b16 %v3566, %v3565
      %v3585 = vpack.c.b16 %v3568, %v3567
      %v3586 = vpack.c.b16 %v3570, %v3569
      %3603 = vst [vmem:[%s319] sm:$0xff] %v3571
      %3604 = vst [vmem:[%s319 + $0x8] sm:$0xff] %v3572
      %3605 = vst [vmem:[%s319 + $0x10] sm:$0xff] %v3573
      %3606 = vst [vmem:[%s319 + $0x18] sm:$0xff] %v3574
      %3607 = vst [vmem:[%s319 + $0x20] sm:$0xff] %v3575
      %3608 = vst [vmem:[%s319 + $0x28] sm:$0xff] %v3576
      %3609 = vst [vmem:[%s319 + $0x30] sm:$0xff] %v3577
      %3610 = vst [vmem:[%s319 + $0x38] sm:$0xff] %v3578
      %3611 = vst [vmem:[%s319 + $0x40] sm:$0xff] %v3579
      %3612 = vst [vmem:[%s319 + $0x48] sm:$0xff] %v3580
      %3613 = vst [vmem:[%s319 + $0x50] sm:$0xff] %v3581
      %3614 = vst [vmem:[%s319 + $0x58] sm:$0xff] %v3582
      %3615 = vst [vmem:[%s319 + $0x60] sm:$0xff] %v3583
      %3616 = vst [vmem:[%s319 + $0x68] sm:$0xff] %v3584
      %3617 = vst [vmem:[%s319 + $0x70] sm:$0xff] %v3585
      %3618 = vst [vmem:[%s319 + $0x78] sm:$0xff] %v3586
      %p3619 = scmp.lt.s32.totalorder %s19, 1
      %s3620 = scalar_select %p3619, %s19, 1
      %s3621 = smul.addr %s3620, 32
      %s3622 = smul.addr %s3621, 4
      %s3623 = scalar_lea.vmem %s8, %s3622
      // Predicated region
      $region53: #{bert_forward.6} parent=51 // pred_check
        %p3624 = pneg %p215
      $region54: #{bert_forward.6} parent=51 // pred_check_branch
        %3626 = sbr.rel (%p3624) target = $region56
      $region55: #{bert_forward.6} parent=51 // pred_region
        _
      $region56: #{bert_forward.6} parent=51 // pred_fallthru
        _
    $region52: #{bert_forward.6} parent=5 // pred_fallthru
      _
    %p3627 = scmp.le.s32.totalorder 2, %s14
    // Predicated region
    $region57: #{bert_forward.6} parent=5 // pred_check
      %p3628 = pneg %p3627
    $region58: #{bert_forward.6} parent=5 // pred_check_branch
      %3630 = sbr.rel (%p3628) target = $region60
    $region59: #{bert_forward.6} parent=5 // pred_region
      %s3631 = ssub.s32 %s14, 2
      // Predicated region
      $region61: #{bert_forward.6} parent=59 // pred_check
        %p3632 = pneg %p221
      $region62: #{bert_forward.6} parent=59 // pred_check_branch
        %3634 = sbr.rel (%p3632) target = $region64
      $region63: #{bert_forward.6} parent=59 // pred_region
        %p3635 = scmp.lt.s32.totalorder %s20, 1
        %s3636 = scalar_select %p3635, %s20, 1
        %s3637 = smul.addr %s3636, 32
        %s3638 = smul.addr %s3637, 4
        %s3639 = scalar_lea.vmem %s8, %s3638
      $region64: #{bert_forward.6} parent=59 // pred_fallthru
        _
    $region60: #{bert_forward.6} parent=5 // pred_fallthru
      _
  $region6: #{bert_forward.6} parent=0 // loop_footer
    %s18 = sadd.s32 1, %s14
  $region7: #{bert_forward.6} parent=0 // loop_footer_branch
    %13 = sbr.rel target = $region3
  $region8: #{bert_forward.6} parent=0 // loop_exit
    _

// kernel: bert_forward.7
$region0: #{bert_forward.7}
  #allocation0 [shape = 'u32[]', space=smem, size = 0x4, offset = 0x4, fixed_abs, tag = 'smem constant byte address 0x4 - core index']
  #allocation1 [shape = 'u32[144,128]{1,0:T(1,128)}', space=vmem, size = 0x12000, scoped, tag = 'internal scratch']
  %s0 = inlined_call_operand.vmem [shape: bf16[2,128,256], index: 0, kind: input, shape index: {}]
  %s1 = inlined_call_operand.vmem [shape: bf16[256,1024], index: 1, kind: input, shape index: {}]
  %s2 = inlined_call_operand.vmem [shape: f32[1,1024], index: 2, kind: input, shape index: {}]
  %s3 = inlined_call_operand.vmem [shape: bf16[1024,256], index: 3, kind: input, shape index: {}]
  %s4 = inlined_call_operand.vmem [shape: f32[1,256], index: 4, kind: input, shape index: {}]
  %s5 = inlined_call_operand.vmem [shape: f32[1,256], index: 5, kind: input, shape index: {}]
  %s6 = inlined_call_operand.vmem [shape: f32[1,256], index: 6, kind: input, shape index: {}]
  %s7 = inlined_call_operand.vmem [shape: bf16[2,128,256], index: 7, kind: output, shape index: {}]
  %s8 = sld [smem:[#allocation0]]
  $region61: #{bert_forward.7} parent=0
    _
  %s10 = ssub.s32 1, %s8
  %s11 = scalar_select 0, %s10, %s8
  loop: start=0, step=1, limit=4
  $region2: #{bert_forward.7} parent=0 // loop_pre_header
    _
  $region3: #{bert_forward.7} parent=0 // loop_header
    %s13 = sphi 0, %s17
    %p14 = scmp.ge.s32.totalorder %s13, 4
    %s23 = sphi 0, %s25
    %s26 = sphi 0, %s23
    %s27 = sphi 0, %s26
    %s43 = sphi 0, %s27
    %s47 = sphi 0, %s47
    %s49 = sphi 0, %s47
    %s50 = sphi 0, %s49
    %s64 = sphi 0, %s50
    %s68 = sphi 0, %s68
    %s70 = sphi 0, %s68
    %s71 = sphi 0, %s70
    %s85 = sphi 0, %s71
    %s89 = sphi 0, %s89
    %s91 = sphi 0, %s89
    %s92 = sphi 0, %s91
    %s106 = sphi 0, %s92
    %s110 = sphi 0, %s110
    %s112 = sphi 0, %s110
    %s113 = sphi 0, %s112
    %s127 = sphi 0, %s113
    %s131 = sphi 0, %s131
    %s133 = sphi 0, %s131
    %s134 = sphi 0, %s133
    %s148 = sphi 0, %s134
    %s152 = sphi 0, %s152
    %s154 = sphi 0, %s152
    %s155 = sphi 0, %s154
    %s169 = sphi 0, %s155
    %s175 = sphi 0, %s177
    %s178 = sphi 0, %s175
    %s179 = sphi 0, %s178
    %s195 = sphi 0, %s179
  $region4: #{bert_forward.7} parent=0 // loop_header_branch
    %16 = sbr.rel (%p14) target = $region8
  $region5: #{bert_forward.7} parent=0 // loop_body
    %s18 = ssub.s32 %s13, 1
    %s19 = ssub.s32 %s13, 2
    %s20 = sadd.s32 %s13, 1
    %s21 = ssub.s32 %s13, %s20
    %p22 = scmp.eq.s32.totalorder %s21, 0
    %s24 = sadd.s32 %s23, 1
    %s25 = scalar_select %p22, %s23, %s24
    %p28 = pneg %p22
    %p29 = scmp.eq.s32.totalorder %s13, 1
    %p30 = por %p28, %p29
    %p31 = scmp.ne.s32.totalorder %s23, %s26
    %p32 = scmp.eq.s32.totalorder %s13, 0
    %p33 = por %p31, %p32
    %p34 = scmp.ne.s32.totalorder %s23, %s26
    %p35 = scmp.eq.s32.totalorder %s18, 1
    %p36 = por %p34, %p35
    %p37 = scmp.ne.s32.totalorder %s26, %s27
    %p38 = scmp.eq.s32.totalorder %s18, 0
    %p39 = por %p37, %p38
    %p40 = scmp.ne.s32.totalorder %s26, %s27
    %p41 = scmp.eq.s32.totalorder %s19, 1
    %p42 = por %p40, %p41
    %p44 = scmp.ne.s32.totalorder %s27, %s43
    %p45 = scmp.eq.s32.totalorder %s19, 0
    %p46 = por %p44, %p45
    %s48 = sadd.s32 %s47, 1
    %p51 = scmp.eq.s32.totalorder %s13, 1
    %p52 = scmp.ne.s32.totalorder %s47, %s49
    %p53 = scmp.eq.s32.totalorder %s13, 0
    %p54 = por %p52, %p53
    %p55 = scmp.ne.s32.totalorder %s47, %s49
    %p56 = scmp.eq.s32.totalorder %s18, 1
    %p57 = por %p55, %p56
    %p58 = scmp.ne.s32.totalorder %s49, %s50
    %p59 = scmp.eq.s32.totalorder %s18, 0
    %p60 = por %p58, %p59
    %p61 = scmp.ne.s32.totalorder %s49, %s50
    %p62 = scmp.eq.s32.totalorder %s19, 1
    %p63 = por %p61, %p62
    %p65 = scmp.ne.s32.totalorder %s50, %s64
    %p66 = scmp.eq.s32.totalorder %s19, 0
    %p67 = por %p65, %p66
    %s69 = sadd.s32 %s68, 1
    %p72 = scmp.eq.s32.totalorder %s13, 1
    %p73 = scmp.ne.s32.totalorder %s68, %s70
    %p74 = scmp.eq.s32.totalorder %s13, 0
    %p75 = por %p73, %p74
    %p76 = scmp.ne.s32.totalorder %s68, %s70
    %p77 = scmp.eq.s32.totalorder %s18, 1
    %p78 = por %p76, %p77
    %p79 = scmp.ne.s32.totalorder %s70, %s71
    %p80 = scmp.eq.s32.totalorder %s18, 0
    %p81 = por %p79, %p80
    %p82 = scmp.ne.s32.totalorder %s70, %s71
    %p83 = scmp.eq.s32.totalorder %s19, 1
    %p84 = por %p82, %p83
    %p86 = scmp.ne.s32.totalorder %s71, %s85
    %p87 = scmp.eq.s32.totalorder %s19, 0
    %p88 = por %p86, %p87
    %s90 = sadd.s32 %s89, 1
    %p93 = scmp.eq.s32.totalorder %s13, 1
    %p94 = scmp.ne.s32.totalorder %s89, %s91
    %p95 = scmp.eq.s32.totalorder %s13, 0
    %p96 = por %p94, %p95
    %p97 = scmp.ne.s32.totalorder %s89, %s91
    %p98 = scmp.eq.s32.totalorder %s18, 1
    %p99 = por %p97, %p98
    %p100 = scmp.ne.s32.totalorder %s91, %s92
    %p101 = scmp.eq.s32.totalorder %s18, 0
    %p102 = por %p100, %p101
    %p103 = scmp.ne.s32.totalorder %s91, %s92
    %p104 = scmp.eq.s32.totalorder %s19, 1
    %p105 = por %p103, %p104
    %p107 = scmp.ne.s32.totalorder %s92, %s106
    %p108 = scmp.eq.s32.totalorder %s19, 0
    %p109 = por %p107, %p108
    %s111 = sadd.s32 %s110, 1
    %p114 = scmp.eq.s32.totalorder %s13, 1
    %p115 = scmp.ne.s32.totalorder %s110, %s112
    %p116 = scmp.eq.s32.totalorder %s13, 0
    %p117 = por %p115, %p116
    %p118 = scmp.ne.s32.totalorder %s110, %s112
    %p119 = scmp.eq.s32.totalorder %s18, 1
    %p120 = por %p118, %p119
    %p121 = scmp.ne.s32.totalorder %s112, %s113
    %p122 = scmp.eq.s32.totalorder %s18, 0
    %p123 = por %p121, %p122
    %p124 = scmp.ne.s32.totalorder %s112, %s113
    %p125 = scmp.eq.s32.totalorder %s19, 1
    %p126 = por %p124, %p125
    %p128 = scmp.ne.s32.totalorder %s113, %s127
    %p129 = scmp.eq.s32.totalorder %s19, 0
    %p130 = por %p128, %p129
    %s132 = sadd.s32 %s131, 1
    %p135 = scmp.eq.s32.totalorder %s13, 1
    %p136 = scmp.ne.s32.totalorder %s131, %s133
    %p137 = scmp.eq.s32.totalorder %s13, 0
    %p138 = por %p136, %p137
    %p139 = scmp.ne.s32.totalorder %s131, %s133
    %p140 = scmp.eq.s32.totalorder %s18, 1
    %p141 = por %p139, %p140
    %p142 = scmp.ne.s32.totalorder %s133, %s134
    %p143 = scmp.eq.s32.totalorder %s18, 0
    %p144 = por %p142, %p143
    %p145 = scmp.ne.s32.totalorder %s133, %s134
    %p146 = scmp.eq.s32.totalorder %s19, 1
    %p147 = por %p145, %p146
    %p149 = scmp.ne.s32.totalorder %s134, %s148
    %p150 = scmp.eq.s32.totalorder %s19, 0
    %p151 = por %p149, %p150
    %s153 = sadd.s32 %s152, 1
    %p156 = scmp.eq.s32.totalorder %s13, 1
    %p157 = scmp.ne.s32.totalorder %s152, %s154
    %p158 = scmp.eq.s32.totalorder %s13, 0
    %p159 = por %p157, %p158
    %p160 = scmp.ne.s32.totalorder %s152, %s154
    %p161 = scmp.eq.s32.totalorder %s18, 1
    %p162 = por %p160, %p161
    %p163 = scmp.ne.s32.totalorder %s154, %s155
    %p164 = scmp.eq.s32.totalorder %s18, 0
    %p165 = por %p163, %p164
    %p166 = scmp.ne.s32.totalorder %s154, %s155
    %p167 = scmp.eq.s32.totalorder %s19, 1
    %p168 = por %p166, %p167
    %p170 = scmp.ne.s32.totalorder %s155, %s169
    %p171 = scmp.eq.s32.totalorder %s19, 0
    %p172 = por %p170, %p171
    %s173 = ssub.s32 %s13, %s20
    %p174 = scmp.eq.s32.totalorder %s173, 0
    %s176 = sadd.s32 %s175, 1
    %s177 = scalar_select %p174, %s175, %s176
    %p180 = pneg %p174
    %p181 = scmp.eq.s32.totalorder %s13, 1
    %p182 = por %p180, %p181
    %p183 = scmp.ne.s32.totalorder %s175, %s178
    %p184 = scmp.eq.s32.totalorder %s13, 0
    %p185 = por %p183, %p184
    %p186 = scmp.ne.s32.totalorder %s175, %s178
    %p187 = scmp.eq.s32.totalorder %s18, 1
    %p188 = por %p186, %p187
    %p189 = scmp.ne.s32.totalorder %s178, %s179
    %p190 = scmp.eq.s32.totalorder %s18, 0
    %p191 = por %p189, %p190
    %p192 = scmp.ne.s32.totalorder %s178, %s179
    %p193 = scmp.eq.s32.totalorder %s19, 1
    %p194 = por %p192, %p193
    %p196 = scmp.ne.s32.totalorder %s179, %s195
    %p197 = scmp.eq.s32.totalorder %s19, 0
    %p198 = por %p196, %p197
    %p199 = scmp.le.s32.totalorder 1, %s13
    %p200 = scmp.lt.s32.totalorder %s13, 3
    %p201 = pnand %p199, %p200
    %p202 = pneg %p201
    // Predicated region
    $region9: #{bert_forward.7} parent=5 // pred_check
      _
    $region10: #{bert_forward.7} parent=5 // pred_check_branch
      %204 = sbr.rel (%p201) target = $region12
    $region11: #{bert_forward.7} parent=5 // pred_region
      %s205 = ssub.s32 %s13, 1
      // Predicated region
      $region13: #{bert_forward.7} parent=11 // pred_check
        %p206 = pneg %p60
      $region14: #{bert_forward.7} parent=11 // pred_check_branch
        %208 = sbr.rel (%p206) target = $region16
      $region15: #{bert_forward.7} parent=11 // pred_region
        _
      $region16: #{bert_forward.7} parent=11 // pred_fallthru
        _
      // Predicated region
      $region17: #{bert_forward.7} parent=11 // pred_check
        %p209 = pneg %p81
      $region18: #{bert_forward.7} parent=11 // pred_check_branch
        %211 = sbr.rel (%p209) target = $region20
      $region19: #{bert_forward.7} parent=11 // pred_region
        _
      $region20: #{bert_forward.7} parent=11 // pred_fallthru
        _
      // Predicated region
      $region21: #{bert_forward.7} parent=11 // pred_check
        %p212 = pneg %p102
      $region22: #{bert_forward.7} parent=11 // pred_check_branch
        %214 = sbr.rel (%p212) target = $region24
      $region23: #{bert_forward.7} parent=11 // pred_region
        _
      $region24: #{bert_forward.7} parent=11 // pred_fallthru
        _
      // Predicated region
      $region25: #{bert_forward.7} parent=11 // pred_check
        %p215 = pneg %p123
      $region26: #{bert_forward.7} parent=11 // pred_check_branch
        %217 = sbr.rel (%p215) target = $region28
      $region27: #{bert_forward.7} parent=11 // pred_region
        _
      $region28: #{bert_forward.7} parent=11 // pred_fallthru
        _
      // Predicated region
      $region29: #{bert_forward.7} parent=11 // pred_check
        %p218 = pneg %p144
      $region30: #{bert_forward.7} parent=11 // pred_check_branch
        %220 = sbr.rel (%p218) target = $region32
      $region31: #{bert_forward.7} parent=11 // pred_region
        _
      $region32: #{bert_forward.7} parent=11 // pred_fallthru
        _
      // Predicated region
      $region33: #{bert_forward.7} parent=11 // pred_check
        %p221 = pneg %p165
      $region34: #{bert_forward.7} parent=11 // pred_check_branch
        %223 = sbr.rel (%p221) target = $region36
      $region35: #{bert_forward.7} parent=11 // pred_region
        _
      $region36: #{bert_forward.7} parent=11 // pred_fallthru
        _
    $region12: #{bert_forward.7} parent=5 // pred_fallthru
      _
    %p224 = scmp.lt.s32.totalorder %s13, 2
    // Predicated region
    $region37: #{bert_forward.7} parent=5 // pred_check
      %p225 = pneg %p224
    $region38: #{bert_forward.7} parent=5 // pred_check_branch
      %227 = sbr.rel (%p225) target = $region40
    $region39: #{bert_forward.7} parent=5 // pred_region
      // Predicated region
      $region41: #{bert_forward.7} parent=39 // pred_check
        %p228 = pneg %p33
      $region42: #{bert_forward.7} parent=39 // pred_check_branch
        %230 = sbr.rel (%p228) target = $region44
      $region43: #{bert_forward.7} parent=39 // pred_region
        %p231 = scmp.lt.s32.totalorder %s13, 1
        %s232 = scalar_select %p231, %s13, 1
        %s233 = smul.addr %s232, 32
        %s234 = smul.addr %s233, 4
        %s235 = scalar_lea.vmem %s0, %s234
      $region44: #{bert_forward.7} parent=39 // pred_fallthru
        _
    $region40: #{bert_forward.7} parent=5 // pred_fallthru
      _
    %p236 = scmp.le.s32.totalorder 1, %s13
    %p237 = scmp.lt.s32.totalorder %s13, 3
    %p238 = pnand %p236, %p237
    %p239 = pneg %p238
    // Predicated region
    $region45: #{bert_forward.7} parent=5 // pred_check
      _
    $region46: #{bert_forward.7} parent=5 // pred_check_branch
      %241 = sbr.rel (%p238) target = $region48
    $region47: #{bert_forward.7} parent=5 // pred_region
      %s242 = ssub.s32 %s13, 1
      %p243 = scmp.lt.s32.totalorder %s18, 1
      %s244 = scalar_select %p243, %s18, 1
      %s245 = smul.addr %s244, 32
      %s246 = smul.addr %s245, 4
      %s247 = scalar_lea.vmem %s0, %s246
      %p248 = pneg %p39
      %p249 = pneg %p36
      %p250 = pneg %p60
      %p251 = pneg %p57
      %p252 = pneg %p81
      %p253 = pneg %p78
      %p254 = pneg %p102
      %p255 = pneg %p99
      %p256 = pneg %p123
      %p257 = pneg %p120
      %p258 = pneg %p144
      %p259 = pneg %p141
      %p260 = pneg %p165
      %p261 = pneg %p162
      %p262 = pneg %p191
      %p263 = pneg %p188
      %p264 = scmp.lt.s32.totalorder %s18, 1
      %s265 = scalar_select %p264, %s18, 1
      %s266 = smul.addr %s265, 32
      %s267 = smul.addr %s266, 4
      %s268 = scalar_lea.vmem %s7, %s267
      %p269 = scmp.lt.s32.totalorder %s18, 1
      %s270 = scalar_select %p269, %s18, 1
      %s271 = smul.addr %s270, 32
      %s272 = smul.addr %s271, 4
      %s273 = scalar_lea.vmem %s0, %s272
      %p274 = scmp.lt.s32.totalorder %s18, 1
      %s275 = scalar_select %p274, %s18, 1
      %s276 = smul.addr %s275, 32
      %s277 = smul.addr %s276, 4
      %s278 = scalar_lea.vmem %s7, %s277
      %v279 = vld [vmem:[%s273] sm:$0xff]
      %v280 = vld [vmem:[%s273 + $0x8] sm:$0xff]
      %v281 = vld [vmem:[%s273 + $0x10] sm:$0xff]
      %v282 = vld [vmem:[%s273 + $0x18] sm:$0xff]
      %v283 = vld [vmem:[%s273 + $0x20] sm:$0xff]
      %v284 = vld [vmem:[%s273 + $0x28] sm:$0xff]
      %v285 = vld [vmem:[%s273 + $0x30] sm:$0xff]
      %v286 = vld [vmem:[%s273 + $0x38] sm:$0xff]
      %v287 = vld [vmem:[%s273 + $0x40] sm:$0xff]
      %v288 = vld [vmem:[%s273 + $0x48] sm:$0xff]
      %v289 = vld [vmem:[%s273 + $0x50] sm:$0xff]
      %v290 = vld [vmem:[%s273 + $0x58] sm:$0xff]
      %v291 = vld [vmem:[%s273 + $0x60] sm:$0xff]
      %v292 = vld [vmem:[%s273 + $0x68] sm:$0xff]
      %v293 = vld [vmem:[%s273 + $0x70] sm:$0xff]
      %v294 = vld [vmem:[%s273 + $0x78] sm:$0xff]
      %v295 = vunpack.c.l.bf16 %v279
      %v296 = vunpack.c.h.bf16 %v279
      %v297 = vunpack.c.l.bf16 %v280
      %v298 = vunpack.c.h.bf16 %v280
      %v299 = vunpack.c.l.bf16 %v281
      %v300 = vunpack.c.h.bf16 %v281
      %v301 = vunpack.c.l.bf16 %v282
      %v302 = vunpack.c.h.bf16 %v282
      %v303 = vunpack.c.l.bf16 %v283
      %v304 = vunpack.c.h.bf16 %v283
      %v305 = vunpack.c.l.bf16 %v284
      %v306 = vunpack.c.h.bf16 %v284
      %v307 = vunpack.c.l.bf16 %v285
      %v308 = vunpack.c.h.bf16 %v285
      %v309 = vunpack.c.l.bf16 %v286
      %v310 = vunpack.c.h.bf16 %v286
      %v311 = vunpack.c.l.bf16 %v287
      %v312 = vunpack.c.h.bf16 %v287
      %v313 = vunpack.c.l.bf16 %v288
      %v314 = vunpack.c.h.bf16 %v288
      %v315 = vunpack.c.l.bf16 %v289
      %v316 = vunpack.c.h.bf16 %v289
      %v317 = vunpack.c.l.bf16 %v290
      %v318 = vunpack.c.h.bf16 %v290
      %v319 = vunpack.c.l.bf16 %v291
      %v320 = vunpack.c.h.bf16 %v291
      %v321 = vunpack.c.l.bf16 %v292
      %v322 = vunpack.c.h.bf16 %v292
      %v323 = vunpack.c.l.bf16 %v293
      %v324 = vunpack.c.h.bf16 %v293
      %v325 = vunpack.c.l.bf16 %v294
      %v326 = vunpack.c.h.bf16 %v294
      %v327 = vld [vmem:[%s4] sm:$0x3]
      %v329 = vlaneseq
      %v330 = vshrl.u32 %v329, 7
      %v331 = vsub.s32 0, %v330
      %v332 = vrot.slane %v327, %v331
      %v333 = vlaneseq
      %v334 = vshrl.u32 %v333, 7
      %v335 = vsub.s32 1, %v334
      %v336 = vrot.slane %v327, %v335
      %v339 = vadd.f32 %v295, %v332
      %v340 = vadd.f32 %v296, %v336
      %v341 = vadd.f32 %v297, %v332
      %v342 = vadd.f32 %v298, %v336
      %v343 = vadd.f32 %v299, %v332
      %v344 = vadd.f32 %v300, %v336
      %v345 = vadd.f32 %v301, %v332
      %v346 = vadd.f32 %v302, %v336
      %v347 = vadd.f32 %v303, %v332
      %v348 = vadd.f32 %v304, %v336
      %v349 = vadd.f32 %v305, %v332
      %v350 = vadd.f32 %v306, %v336
      %v351 = vadd.f32 %v307, %v332
      %v352 = vadd.f32 %v308, %v336
      %v353 = vadd.f32 %v309, %v332
      %v354 = vadd.f32 %v310, %v336
      %v355 = vadd.f32 %v311, %v332
      %v356 = vadd.f32 %v312, %v336
      %v357 = vadd.f32 %v313, %v332
      %v358 = vadd.f32 %v314, %v336
      %v359 = vadd.f32 %v315, %v332
      %v360 = vadd.f32 %v316, %v336
      %v361 = vadd.f32 %v317, %v332
      %v362 = vadd.f32 %v318, %v336
      %v363 = vadd.f32 %v319, %v332
      %v364 = vadd.f32 %v320, %v336
      %v365 = vadd.f32 %v321, %v332
      %v366 = vadd.f32 %v322, %v336
      %v367 = vadd.f32 %v323, %v332
      %v368 = vadd.f32 %v324, %v336
      %v369 = vadd.f32 %v325, %v332
      %v370 = vadd.f32 %v326, %v336
      %v371 = vld [vmem:[%s1] sm:$0xff]
      %v372 = vld [vmem:[%s1 + $0x20] sm:$0xff]
      %v373 = vld [vmem:[%s1 + $0x40] sm:$0xff]
      %v374 = vld [vmem:[%s1 + $0x60] sm:$0xff]
      %v375 = vld [vmem:[%s1 + $0x80] sm:$0xff]
      %v376 = vld [vmem:[%s1 + $0xa0] sm:$0xff]
      %v377 = vld [vmem:[%s1 + $0xc0] sm:$0xff]
      %v378 = vld [vmem:[%s1 + $0xe0] sm:$0xff]
      %v379 = vld [vmem:[%s1 + $0x100] sm:$0xff]
      %v380 = vld [vmem:[%s1 + $0x120] sm:$0xff]
      %v381 = vld [vmem:[%s1 + $0x140] sm:$0xff]
      %v382 = vld [vmem:[%s1 + $0x160] sm:$0xff]
      %v383 = vld [vmem:[%s1 + $0x180] sm:$0xff]
      %v384 = vld [vmem:[%s1 + $0x1a0] sm:$0xff]
      %v385 = vld [vmem:[%s1 + $0x1c0] sm:$0xff]
      %v386 = vld [vmem:[%s1 + $0x1e0] sm:$0xff]
      %v387 = vld [vmem:[%s1 + $0x200] sm:$0xff]
      %v388 = vld [vmem:[%s1 + $0x220] sm:$0xff]
      %v389 = vld [vmem:[%s1 + $0x240] sm:$0xff]
      %v390 = vld [vmem:[%s1 + $0x260] sm:$0xff]
      %v391 = vld [vmem:[%s1 + $0x280] sm:$0xff]
      %v392 = vld [vmem:[%s1 + $0x2a0] sm:$0xff]
      %v393 = vld [vmem:[%s1 + $0x2c0] sm:$0xff]
      %v394 = vld [vmem:[%s1 + $0x2e0] sm:$0xff]
      %v395 = vld [vmem:[%s1 + $0x300] sm:$0xff]
      %v396 = vld [vmem:[%s1 + $0x320] sm:$0xff]
      %v397 = vld [vmem:[%s1 + $0x340] sm:$0xff]
      %v398 = vld [vmem:[%s1 + $0x360] sm:$0xff]
      %v399 = vld [vmem:[%s1 + $0x380] sm:$0xff]
      %v400 = vld [vmem:[%s1 + $0x3a0] sm:$0xff]
      %v401 = vld [vmem:[%s1 + $0x3c0] sm:$0xff]
      %v402 = vld [vmem:[%s1 + $0x3e0] sm:$0xff]
      %v403 = vld [vmem:[%s2] sm:$0x3]
      %v405 = vlaneseq
      %v406 = vshrl.u32 %v405, 7
      %v407 = vsub.s32 0, %v406
      %v408 = vrot.slane %v403, %v407
      %v409 = vlaneseq
      %v410 = vshrl.u32 %v409, 7
      %v411 = vsub.s32 1, %v410
      %v412 = vrot.slane %v403, %v411
      %v431 = vunpack.c.l.b16 %v279
      %v432 = vunpack.c.h.b16 %v279
      %v433 = vunpack.c.l.b16 %v280
      %v434 = vunpack.c.h.b16 %v280
      %v435 = vunpack.c.l.b16 %v281
      %v436 = vunpack.c.h.b16 %v281
      %v437 = vunpack.c.l.b16 %v282
      %v438 = vunpack.c.h.b16 %v282
      %v439 = vunpack.c.l.b16 %v283
      %v440 = vunpack.c.h.b16 %v283
      %v441 = vunpack.c.l.b16 %v284
      %v442 = vunpack.c.h.b16 %v284
      %v443 = vunpack.c.l.b16 %v285
      %v444 = vunpack.c.h.b16 %v285
      %v445 = vunpack.c.l.b16 %v286
      %v446 = vunpack.c.h.b16 %v286
      %v447 = vunpack.c.l.b16 %v287
      %v448 = vunpack.c.h.b16 %v287
      %v449 = vunpack.c.l.b16 %v288
      %v450 = vunpack.c.h.b16 %v288
      %v451 = vunpack.c.l.b16 %v289
      %v452 = vunpack.c.h.b16 %v289
      %v453 = vunpack.c.l.b16 %v290
      %v454 = vunpack.c.h.b16 %v290
      %v455 = vunpack.c.l.b16 %v291
      %v456 = vunpack.c.h.b16 %v291
      %v457 = vunpack.c.l.b16 %v292
      %v458 = vunpack.c.h.b16 %v292
      %v459 = vunpack.c.l.b16 %v293
      %v460 = vunpack.c.h.b16 %v293
      %v461 = vunpack.c.l.b16 %v294
      %v462 = vunpack.c.h.b16 %v294
      %v463 = vpack.c.b16 %v433, %v431
      %v464 = vpack.c.b16 %v434, %v432
      %v465 = vpack.c.b16 %v437, %v435
      %v466 = vpack.c.b16 %v438, %v436
      %v467 = vpack.c.b16 %v441, %v439
      %v468 = vpack.c.b16 %v442, %v440
      %v469 = vpack.c.b16 %v445, %v443
      %v470 = vpack.c.b16 %v446, %v444
      %v471 = vpack.c.b16 %v449, %v447
      %v472 = vpack.c.b16 %v450, %v448
      %v473 = vpack.c.b16 %v453, %v451
      %v474 = vpack.c.b16 %v454, %v452
      %v475 = vpack.c.b16 %v457, %v455
      %v476 = vpack.c.b16 %v458, %v456
      %v477 = vpack.c.b16 %v461, %v459
      %v478 = vpack.c.b16 %v462, %v460
      %v527 = vunpack.c.l.b16 %v371
      %v528 = vunpack.c.h.b16 %v371
      %v529 = vunpack.c.l.b16 %v372
      %v530 = vunpack.c.h.b16 %v372
      %v531 = vunpack.c.l.b16 %v373
      %v532 = vunpack.c.h.b16 %v373
      %v533 = vunpack.c.l.b16 %v374
      %v534 = vunpack.c.h.b16 %v374
      %v535 = vunpack.c.l.b16 %v375
      %v536 = vunpack.c.h.b16 %v375
      %v537 = vunpack.c.l.b16 %v376
      %v538 = vunpack.c.h.b16 %v376
      %v539 = vunpack.c.l.b16 %v377
      %v540 = vunpack.c.h.b16 %v377
      %v541 = vunpack.c.l.b16 %v378
      %v542 = vunpack.c.h.b16 %v378
      %v543 = vunpack.c.l.b16 %v379
      %v544 = vunpack.c.h.b16 %v379
      %v545 = vunpack.c.l.b16 %v380
      %v546 = vunpack.c.h.b16 %v380
      %v547 = vunpack.c.l.b16 %v381
      %v548 = vunpack.c.h.b16 %v381
      %v549 = vunpack.c.l.b16 %v382
      %v550 = vunpack.c.h.b16 %v382
      %v551 = vunpack.c.l.b16 %v383
      %v552 = vunpack.c.h.b16 %v383
      %v553 = vunpack.c.l.b16 %v384
      %v554 = vunpack.c.h.b16 %v384
      %v555 = vunpack.c.l.b16 %v385
      %v556 = vunpack.c.h.b16 %v385
      %v557 = vunpack.c.l.b16 %v386
      %v558 = vunpack.c.h.b16 %v386
      %v559 = vunpack.c.l.b16 %v387
      %v560 = vunpack.c.h.b16 %v387
      %v561 = vunpack.c.l.b16 %v388
      %v562 = vunpack.c.h.b16 %v388
      %v563 = vunpack.c.l.b16 %v389
      %v564 = vunpack.c.h.b16 %v389
      %v565 = vunpack.c.l.b16 %v390
      %v566 = vunpack.c.h.b16 %v390
      %v567 = vunpack.c.l.b16 %v391
      %v568 = vunpack.c.h.b16 %v391
      %v569 = vunpack.c.l.b16 %v392
      %v570 = vunpack.c.h.b16 %v392
      %v571 = vunpack.c.l.b16 %v393
      %v572 = vunpack.c.h.b16 %v393
      %v573 = vunpack.c.l.b16 %v394
      %v574 = vunpack.c.h.b16 %v394
      %v575 = vunpack.c.l.b16 %v395
      %v576 = vunpack.c.h.b16 %v395
      %v577 = vunpack.c.l.b16 %v396
      %v578 = vunpack.c.h.b16 %v396
      %v579 = vunpack.c.l.b16 %v397
      %v580 = vunpack.c.h.b16 %v397
      %v581 = vunpack.c.l.b16 %v398
      %v582 = vunpack.c.h.b16 %v398
      %v583 = vunpack.c.l.b16 %v399
      %v584 = vunpack.c.h.b16 %v399
      %v585 = vunpack.c.l.b16 %v400
      %v586 = vunpack.c.h.b16 %v400
      %v587 = vunpack.c.l.b16 %v401
      %v588 = vunpack.c.h.b16 %v401
      %v589 = vunpack.c.l.b16 %v402
      %v590 = vunpack.c.h.b16 %v402
      %v591 = vpack.c.b16 %v529, %v527
      %v592 = vpack.c.b16 %v530, %v528
      %v593 = vpack.c.b16 %v533, %v531
      %v594 = vpack.c.b16 %v534, %v532
      %v595 = vpack.c.b16 %v537, %v535
      %v596 = vpack.c.b16 %v538, %v536
      %v597 = vpack.c.b16 %v541, %v539
      %v598 = vpack.c.b16 %v542, %v540
      %v599 = vpack.c.b16 %v545, %v543
      %v600 = vpack.c.b16 %v546, %v544
      %v601 = vpack.c.b16 %v549, %v547
      %v602 = vpack.c.b16 %v550, %v548
      %v603 = vpack.c.b16 %v553, %v551
      %v604 = vpack.c.b16 %v554, %v552
      %v605 = vpack.c.b16 %v557, %v555
      %v606 = vpack.c.b16 %v558, %v556
      %v607 = vpack.c.b16 %v561, %v559
      %v608 = vpack.c.b16 %v562, %v560
      %v609 = vpack.c.b16 %v565, %v563
      %v610 = vpack.c.b16 %v566, %v564
      %v611 = vpack.c.b16 %v569, %v567
      %v612 = vpack.c.b16 %v570, %v568
      %v613 = vpack.c.b16 %v573, %v571
      %v614 = vpack.c.b16 %v574, %v572
      %v615 = vpack.c.b16 %v577, %v575
      %v616 = vpack.c.b16 %v578, %v576
      %v617 = vpack.c.b16 %v581, %v579
      %v618 = vpack.c.b16 %v582, %v580
      %v619 = vpack.c.b16 %v585, %v583
      %v620 = vpack.c.b16 %v586, %v584
      %v621 = vpack.c.b16 %v589, %v587
      %v622 = vpack.c.b16 %v590, %v588
      %655 = vmatprep.subr.bf16.mxu0 %v592
      %656 = vmatpush1.bf16.msra.mxu0 %v591
      %657 = vmatprep.subr.bf16.mxu0 %v594
      %658 = vmatpush1.bf16.msra.mxu0 %v593
      %659 = vmatprep.subr.bf16.mxu0 %v596
      %660 = vmatpush1.bf16.msra.mxu0 %v595
      %661 = vmatprep.subr.bf16.mxu0 %v598
      %662 = vmatpush1.bf16.msra.mxu0 %v597
      %663 = vmatprep.subr.bf16.mxu0 %v600
      %664 = vmatpush1.bf16.msra.mxu0 %v599
      %665 = vmatprep.subr.bf16.mxu0 %v602
      %666 = vmatpush1.bf16.msra.mxu0 %v601
      %667 = vmatprep.subr.bf16.mxu0 %v604
      %668 = vmatpush1.bf16.msra.mxu0 %v603
      %669 = vmatprep.subr.bf16.mxu0 %v606
      %670 = vmatpush1.bf16.msra.mxu0 %v605
      %671 = vmatprep.subr.bf16.mxu0 %v608
      %672 = vmatpush1.bf16.msra.mxu0 %v607
      %673 = vmatprep.subr.bf16.mxu0 %v610
      %674 = vmatpush1.bf16.msra.mxu0 %v609
      %675 = vmatprep.subr.bf16.mxu0 %v612
      %676 = vmatpush1.bf16.msra.mxu0 %v611
      %677 = vmatprep.subr.bf16.mxu0 %v614
      %678 = vmatpush1.bf16.msra.mxu0 %v613
      %679 = vmatprep.subr.bf16.mxu0 %v616
      %680 = vmatpush1.bf16.msra.mxu0 %v615
      %681 = vmatprep.subr.bf16.mxu0 %v618
      %682 = vmatpush1.bf16.msra.mxu0 %v617
      %683 = vmatprep.subr.bf16.mxu0 %v620
      %684 = vmatpush1.bf16.msra.mxu0 %v619
      %685 = vmatprep.subr.bf16.mxu0 %v622
      %686 = vmatpush1.bf16.msra.mxu0 %v621
      %687 = vmatprep.mubr.bf16.mxu0 %v464
      %688 = vmatmul.mubr.bf16.gmra.mrb[0].mxu0 %v463
      %v689 = vpop.f32.mrb[0].mxu0
      %v690 = vadd.f32 %v408, %v689
      %v691 = vpop.f32.mrb[0].mxu0
      %v692 = vadd.f32 %v412, %v691
      %v693 = vpop.f32.mrb[0].mxu0
      %v694 = vadd.f32 %v408, %v693
      %v695 = vpop.f32.mrb[0].mxu0
      %v696 = vadd.f32 %v412, %v695
      %697 = vmatprep.mubr.bf16.mxu0 %v466
      %698 = vmatmul.mubr.bf16.gmra.mrb[0].mxu0 %v465
      %v699 = vpop.f32.mrb[0].mxu0
      %v700 = vadd.f32 %v408, %v699
      %v701 = vpop.f32.mrb[0].mxu0
      %v702 = vadd.f32 %v412, %v701
      %v703 = vpop.f32.mrb[0].mxu0
      %v704 = vadd.f32 %v408, %v703
      %v705 = vpop.f32.mrb[0].mxu0
      %v706 = vadd.f32 %v412, %v705
      %707 = vmatprep.mubr.bf16.mxu0 %v468
      %708 = vmatmul.mubr.bf16.gmra.mrb[0].mxu0 %v467
      %v709 = vpop.f32.mrb[0].mxu0
      %v710 = vadd.f32 %v408, %v709
      %v711 = vpop.f32.mrb[0].mxu0
      %v712 = vadd.f32 %v412, %v711
      %v713 = vpop.f32.mrb[0].mxu0
      %v714 = vadd.f32 %v408, %v713
      %v715 = vpop.f32.mrb[0].mxu0
      %v716 = vadd.f32 %v412, %v715
      %717 = vmatprep.mubr.bf16.mxu0 %v470
      %718 = vmatmul.mubr.bf16.gmra.mrb[0].mxu0 %v469
      %v719 = vpop.f32.mrb[0].mxu0
      %v720 = vadd.f32 %v408, %v719
      %v721 = vpop.f32.mrb[0].mxu0
      %v722 = vadd.f32 %v412, %v721
      %v723 = vpop.f32.mrb[0].mxu0
      %v724 = vadd.f32 %v408, %v723
      %v725 = vpop.f32.mrb[0].mxu0
      %v726 = vadd.f32 %v412, %v725
      %727 = vmatprep.mubr.bf16.mxu0 %v472
      %728 = vmatmul.mubr.bf16.gmra.mrb[0].mxu0 %v471
      %v729 = vpop.f32.mrb[0].mxu0
      %v730 = vadd.f32 %v408, %v729
      %v731 = vpop.f32.mrb[0].mxu0
      %v732 = vadd.f32 %v412, %v731
      %v733 = vpop.f32.mrb[0].mxu0
      %v734 = vadd.f32 %v408, %v733
      %v735 = vpop.f32.mrb[0].mxu0
      %v736 = vadd.f32 %v412, %v735
      %737 = vmatprep.mubr.bf16.mxu0 %v474
      %738 = vmatmul.mubr.bf16.gmra.mrb[0].mxu0 %v473
      %v739 = vpop.f32.mrb[0].mxu0
      %v740 = vadd.f32 %v408, %v739
      %v741 = vpop.f32.mrb[0].mxu0
      %v742 = vadd.f32 %v412, %v741
      %v743 = vpop.f32.mrb[0].mxu0
      %v744 = vadd.f32 %v408, %v743
      %v745 = vpop.f32.mrb[0].mxu0
      %v746 = vadd.f32 %v412, %v745
      %747 = vmatprep.mubr.bf16.mxu0 %v476
      %748 = vmatmul.mubr.bf16.gmra.mrb[0].mxu0 %v475
      %v749 = vpop.f32.mrb[0].mxu0
      %v750 = vadd.f32 %v408, %v749
      %v751 = vpop.f32.mrb[0].mxu0
      %v752 = vadd.f32 %v412, %v751
      %v753 = vpop.f32.mrb[0].mxu0
      %v754 = vadd.f32 %v408, %v753
      %v755 = vpop.f32.mrb[0].mxu0
      %v756 = vadd.f32 %v412, %v755
      %757 = vmatprep.mubr.bf16.mxu0 %v478
      %758 = vmatmul.mubr.bf16.gmra.mrb[0].mxu0 %v477
      %v759 = vpop.f32.mrb[0].mxu0
      %v760 = vadd.f32 %v408, %v759
      %v761 = vpop.f32.mrb[0].mxu0
      %v762 = vadd.f32 %v412, %v761
      %v763 = vpop.f32.mrb[0].mxu0
      %v764 = vadd.f32 %v408, %v763
      %v765 = vpop.f32.mrb[0].mxu0
      %v766 = vadd.f32 %v412, %v765
      %767 = vdwg.mxu0
      %v768 = vmul.f32 %v690, %v690
      %v769 = vmul.f32 %v692, %v692
      %v770 = vmul.f32 %v694, %v694
      %v771 = vmul.f32 %v696, %v696
      %v772 = vmul.f32 %v700, %v700
      %v773 = vmul.f32 %v702, %v702
      %v774 = vmul.f32 %v704, %v704
      %v775 = vmul.f32 %v706, %v706
      %v776 = vmul.f32 %v710, %v710
      %v777 = vmul.f32 %v712, %v712
      %v778 = vmul.f32 %v714, %v714
      %v779 = vmul.f32 %v716, %v716
      %v780 = vmul.f32 %v720, %v720
      %v781 = vmul.f32 %v722, %v722
      %v782 = vmul.f32 %v724, %v724
      %v783 = vmul.f32 %v726, %v726
      %v784 = vmul.f32 %v730, %v730
      %v785 = vmul.f32 %v732, %v732
      %v786 = vmul.f32 %v734, %v734
      %v787 = vmul.f32 %v736, %v736
      %v788 = vmul.f32 %v740, %v740
      %v789 = vmul.f32 %v742, %v742
      %v790 = vmul.f32 %v744, %v744
      %v791 = vmul.f32 %v746, %v746
      %v792 = vmul.f32 %v750, %v750
      %v793 = vmul.f32 %v752, %v752
      %v794 = vmul.f32 %v754, %v754
      %v795 = vmul.f32 %v756, %v756
      %v796 = vmul.f32 %v760, %v760
      %v797 = vmul.f32 %v762, %v762
      %v798 = vmul.f32 %v764, %v764
      %v799 = vmul.f32 %v766, %v766
      %v800 = vmul.f32 %v690, %v768
      %v801 = vmul.f32 %v692, %v769
      %v802 = vmul.f32 %v694, %v770
      %v803 = vmul.f32 %v696, %v771
      %v804 = vmul.f32 %v700, %v772
      %v805 = vmul.f32 %v702, %v773
      %v806 = vmul.f32 %v704, %v774
      %v807 = vmul.f32 %v706, %v775
      %v808 = vmul.f32 %v710, %v776
      %v809 = vmul.f32 %v712, %v777
      %v810 = vmul.f32 %v714, %v778
      %v811 = vmul.f32 %v716, %v779
      %v812 = vmul.f32 %v720, %v780
      %v813 = vmul.f32 %v722, %v781
      %v814 = vmul.f32 %v724, %v782
      %v815 = vmul.f32 %v726, %v783
      %v816 = vmul.f32 %v730, %v784
      %v817 = vmul.f32 %v732, %v785
      %v818 = vmul.f32 %v734, %v786
      %v819 = vmul.f32 %v736, %v787
      %v820 = vmul.f32 %v740, %v788
      %v821 = vmul.f32 %v742, %v789
      %v822 = vmul.f32 %v744, %v790
      %v823 = vmul.f32 %v746, %v791
      %v824 = vmul.f32 %v750, %v792
      %v825 = vmul.f32 %v752, %v793
      %v826 = vmul.f32 %v754, %v794
      %v827 = vmul.f32 %v756, %v795
      %v828 = vmul.f32 %v760, %v796
      %v829 = vmul.f32 %v762, %v797
      %v830 = vmul.f32 %v764, %v798
      %v831 = vmul.f32 %v766, %v799
      %v832 = vmul.f32 %v800, 0.044715
      %v833 = vmul.f32 %v801, 0.044715
      %v834 = vmul.f32 %v802, 0.044715
      %v835 = vmul.f32 %v803, 0.044715
      %v836 = vmul.f32 %v804, 0.044715
      %v837 = vmul.f32 %v805, 0.044715
      %v838 = vmul.f32 %v806, 0.044715
      %v839 = vmul.f32 %v807, 0.044715
      %v840 = vmul.f32 %v808, 0.044715
      %v841 = vmul.f32 %v809, 0.044715
      %v842 = vmul.f32 %v810, 0.044715
      %v843 = vmul.f32 %v811, 0.044715
      %v844 = vmul.f32 %v812, 0.044715
      %v845 = vmul.f32 %v813, 0.044715
      %v846 = vmul.f32 %v814, 0.044715
      %v847 = vmul.f32 %v815, 0.044715
      %v848 = vmul.f32 %v816, 0.044715
      %v849 = vmul.f32 %v817, 0.044715
      %v850 = vmul.f32 %v818, 0.044715
      %v851 = vmul.f32 %v819, 0.044715
      %v852 = vmul.f32 %v820, 0.044715
      %v853 = vmul.f32 %v821, 0.044715
      %v854 = vmul.f32 %v822, 0.044715
      %v855 = vmul.f32 %v823, 0.044715
      %v856 = vmul.f32 %v824, 0.044715
      %v857 = vmul.f32 %v825, 0.044715
      %v858 = vmul.f32 %v826, 0.044715
      %v859 = vmul.f32 %v827, 0.044715
      %v860 = vmul.f32 %v828, 0.044715
      %v861 = vmul.f32 %v829, 0.044715
      %v862 = vmul.f32 %v830, 0.044715
      %v863 = vmul.f32 %v831, 0.044715
      %v864 = vadd.f32 %v690, %v832
      %v865 = vadd.f32 %v692, %v833
      %v866 = vadd.f32 %v694, %v834
      %v867 = vadd.f32 %v696, %v835
      %v868 = vadd.f32 %v700, %v836
      %v869 = vadd.f32 %v702, %v837
      %v870 = vadd.f32 %v704, %v838
      %v871 = vadd.f32 %v706, %v839
      %v872 = vadd.f32 %v710, %v840
      %v873 = vadd.f32 %v712, %v841
      %v874 = vadd.f32 %v714, %v842
      %v875 = vadd.f32 %v716, %v843
      %v876 = vadd.f32 %v720, %v844
      %v877 = vadd.f32 %v722, %v845
      %v878 = vadd.f32 %v724, %v846
      %v879 = vadd.f32 %v726, %v847
      %v880 = vadd.f32 %v730, %v848
      %v881 = vadd.f32 %v732, %v849
      %v882 = vadd.f32 %v734, %v850
      %v883 = vadd.f32 %v736, %v851
      %v884 = vadd.f32 %v740, %v852
      %v885 = vadd.f32 %v742, %v853
      %v886 = vadd.f32 %v744, %v854
      %v887 = vadd.f32 %v746, %v855
      %v888 = vadd.f32 %v750, %v856
      %v889 = vadd.f32 %v752, %v857
      %v890 = vadd.f32 %v754, %v858
      %v891 = vadd.f32 %v756, %v859
      %v892 = vadd.f32 %v760, %v860
      %v893 = vadd.f32 %v762, %v861
      %v894 = vadd.f32 %v764, %v862
      %v895 = vadd.f32 %v766, %v863
      %v896 = vmul.f32 %v864, 0.7978846
      %v897 = vmul.f32 %v865, 0.7978846
      %v898 = vmul.f32 %v866, 0.7978846
      %v899 = vmul.f32 %v867, 0.7978846
      %v900 = vmul.f32 %v868, 0.7978846
      %v901 = vmul.f32 %v869, 0.7978846
      %v902 = vmul.f32 %v870, 0.7978846
      %v903 = vmul.f32 %v871, 0.7978846
      %v904 = vmul.f32 %v872, 0.7978846
      %v905 = vmul.f32 %v873, 0.7978846
      %v906 = vmul.f32 %v874, 0.7978846
      %v907 = vmul.f32 %v875, 0.7978846
      %v908 = vmul.f32 %v876, 0.7978846
      %v909 = vmul.f32 %v877, 0.7978846
      %v910 = vmul.f32 %v878, 0.7978846
      %v911 = vmul.f32 %v879, 0.7978846
      %v912 = vmul.f32 %v880, 0.7978846
      %v913 = vmul.f32 %v881, 0.7978846
      %v914 = vmul.f32 %v882, 0.7978846
      %v915 = vmul.f32 %v883, 0.7978846
      %v916 = vmul.f32 %v884, 0.7978846
      %v917 = vmul.f32 %v885, 0.7978846
      %v918 = vmul.f32 %v886, 0.7978846
      %v919 = vmul.f32 %v887, 0.7978846
      %v920 = vmul.f32 %v888, 0.7978846
      %v921 = vmul.f32 %v889, 0.7978846
      %v922 = vmul.f32 %v890, 0.7978846
      %v923 = vmul.f32 %v891, 0.7978846
      %v924 = vmul.f32 %v892, 0.7978846
      %v925 = vmul.f32 %v893, 0.7978846
      %v926 = vmul.f32 %v894, 0.7978846
      %v927 = vmul.f32 %v895, 0.7978846
      %v928 = vtanh.pop %v896
      %v929 = vtanh.pop %v897
      %v930 = vtanh.pop %v898
      %v931 = vtanh.pop %v899
      %v932 = vtanh.pop %v900
      %v933 = vtanh.pop %v901
      %v934 = vtanh.pop %v902
      %v935 = vtanh.pop %v903
      %v936 = vtanh.pop %v904
      %v937 = vtanh.pop %v905
      %v938 = vtanh.pop %v906
      %v939 = vtanh.pop %v907
      %v940 = vtanh.pop %v908
      %v941 = vtanh.pop %v909
      %v942 = vtanh.pop %v910
      %v943 = vtanh.pop %v911
      %v944 = vtanh.pop %v912
      %v945 = vtanh.pop %v913
      %v946 = vtanh.pop %v914
      %v947 = vtanh.pop %v915
      %v948 = vtanh.pop %v916
      %v949 = vtanh.pop %v917
      %v950 = vtanh.pop %v918
      %v951 = vtanh.pop %v919
      %v952 = vtanh.pop %v920
      %v953 = vtanh.pop %v921
      %v954 = vtanh.pop %v922
      %v955 = vtanh.pop %v923
      %v956 = vtanh.pop %v924
      %v957 = vtanh.pop %v925
      %v958 = vtanh.pop %v926
      %v959 = vtanh.pop %v927
      %v960 = vadd.f32 %v928, 1.0
      %v961 = vadd.f32 %v929, 1.0
      %v962 = vadd.f32 %v930, 1.0
      %v963 = vadd.f32 %v931, 1.0
      %v964 = vadd.f32 %v932, 1.0
      %v965 = vadd.f32 %v933, 1.0
      %v966 = vadd.f32 %v934, 1.0
      %v967 = vadd.f32 %v935, 1.0
      %v968 = vadd.f32 %v936, 1.0
      %v969 = vadd.f32 %v937, 1.0
      %v970 = vadd.f32 %v938, 1.0
      %v971 = vadd.f32 %v939, 1.0
      %v972 = vadd.f32 %v940, 1.0
      %v973 = vadd.f32 %v941, 1.0
      %v974 = vadd.f32 %v942, 1.0
      %v975 = vadd.f32 %v943, 1.0
      %v976 = vadd.f32 %v944, 1.0
      %v977 = vadd.f32 %v945, 1.0
      %v978 = vadd.f32 %v946, 1.0
      %v979 = vadd.f32 %v947, 1.0
      %v980 = vadd.f32 %v948, 1.0
      %v981 = vadd.f32 %v949, 1.0
      %v982 = vadd.f32 %v950, 1.0
      %v983 = vadd.f32 %v951, 1.0
      %v984 = vadd.f32 %v952, 1.0
      %v985 = vadd.f32 %v953, 1.0
      %v986 = vadd.f32 %v954, 1.0
      %v987 = vadd.f32 %v955, 1.0
      %v988 = vadd.f32 %v956, 1.0
      %v989 = vadd.f32 %v957, 1.0
      %v990 = vadd.f32 %v958, 1.0
      %v991 = vadd.f32 %v959, 1.0
      %v992 = vmul.f32 %v960, 0.5
      %v993 = vmul.f32 %v961, 0.5
      %v994 = vmul.f32 %v962, 0.5
      %v995 = vmul.f32 %v963, 0.5
      %v996 = vmul.f32 %v964, 0.5
      %v997 = vmul.f32 %v965, 0.5
      %v998 = vmul.f32 %v966, 0.5
      %v999 = vmul.f32 %v967, 0.5
      %v1000 = vmul.f32 %v968, 0.5
      %v1001 = vmul.f32 %v969, 0.5
      %v1002 = vmul.f32 %v970, 0.5
      %v1003 = vmul.f32 %v971, 0.5
      %v1004 = vmul.f32 %v972, 0.5
      %v1005 = vmul.f32 %v973, 0.5
      %v1006 = vmul.f32 %v974, 0.5
      %v1007 = vmul.f32 %v975, 0.5
      %v1008 = vmul.f32 %v976, 0.5
      %v1009 = vmul.f32 %v977, 0.5
      %v1010 = vmul.f32 %v978, 0.5
      %v1011 = vmul.f32 %v979, 0.5
      %v1012 = vmul.f32 %v980, 0.5
      %v1013 = vmul.f32 %v981, 0.5
      %v1014 = vmul.f32 %v982, 0.5
      %v1015 = vmul.f32 %v983, 0.5
      %v1016 = vmul.f32 %v984, 0.5
      %v1017 = vmul.f32 %v985, 0.5
      %v1018 = vmul.f32 %v986, 0.5
      %v1019 = vmul.f32 %v987, 0.5
      %v1020 = vmul.f32 %v988, 0.5
      %v1021 = vmul.f32 %v989, 0.5
      %v1022 = vmul.f32 %v990, 0.5
      %v1023 = vmul.f32 %v991, 0.5
      %v1024 = vmul.f32 %v690, %v992
      %v1025 = vmul.f32 %v692, %v993
      %v1026 = vmul.f32 %v694, %v994
      %v1027 = vmul.f32 %v696, %v995
      %v1028 = vmul.f32 %v700, %v996
      %v1029 = vmul.f32 %v702, %v997
      %v1030 = vmul.f32 %v704, %v998
      %v1031 = vmul.f32 %v706, %v999
      %v1032 = vmul.f32 %v710, %v1000
      %v1033 = vmul.f32 %v712, %v1001
      %v1034 = vmul.f32 %v714, %v1002
      %v1035 = vmul.f32 %v716, %v1003
      %v1036 = vmul.f32 %v720, %v1004
      %v1037 = vmul.f32 %v722, %v1005
      %v1038 = vmul.f32 %v724, %v1006
      %v1039 = vmul.f32 %v726, %v1007
      %v1040 = vmul.f32 %v730, %v1008
      %v1041 = vmul.f32 %v732, %v1009
      %v1042 = vmul.f32 %v734, %v1010
      %v1043 = vmul.f32 %v736, %v1011
      %v1044 = vmul.f32 %v740, %v1012
      %v1045 = vmul.f32 %v742, %v1013
      %v1046 = vmul.f32 %v744, %v1014
      %v1047 = vmul.f32 %v746, %v1015
      %v1048 = vmul.f32 %v750, %v1016
      %v1049 = vmul.f32 %v752, %v1017
      %v1050 = vmul.f32 %v754, %v1018
      %v1051 = vmul.f32 %v756, %v1019
      %v1052 = vmul.f32 %v760, %v1020
      %v1053 = vmul.f32 %v762, %v1021
      %v1054 = vmul.f32 %v764, %v1022
      %v1055 = vmul.f32 %v766, %v1023
      %v1056 = vpack.c.bf16 %v1026, %v1024
      %v1057 = vpack.c.bf16 %v1027, %v1025
      %v1058 = vpack.c.bf16 %v1030, %v1028
      %v1059 = vpack.c.bf16 %v1031, %v1029
      %v1060 = vpack.c.bf16 %v1034, %v1032
      %v1061 = vpack.c.bf16 %v1035, %v1033
      %v1062 = vpack.c.bf16 %v1038, %v1036
      %v1063 = vpack.c.bf16 %v1039, %v1037
      %v1064 = vpack.c.bf16 %v1042, %v1040
      %v1065 = vpack.c.bf16 %v1043, %v1041
      %v1066 = vpack.c.bf16 %v1046, %v1044
      %v1067 = vpack.c.bf16 %v1047, %v1045
      %v1068 = vpack.c.bf16 %v1050, %v1048
      %v1069 = vpack.c.bf16 %v1051, %v1049
      %v1070 = vpack.c.bf16 %v1054, %v1052
      %v1071 = vpack.c.bf16 %v1055, %v1053
      %v1072 = vld [vmem:[%s3] sm:$0xff]
      %v1073 = vld [vmem:[%s3 + $0x8] sm:$0xff]
      %v1074 = vld [vmem:[%s3 + $0x10] sm:$0xff]
      %v1075 = vld [vmem:[%s3 + $0x18] sm:$0xff]
      %v1076 = vld [vmem:[%s3 + $0x20] sm:$0xff]
      %v1077 = vld [vmem:[%s3 + $0x28] sm:$0xff]
      %v1078 = vld [vmem:[%s3 + $0x30] sm:$0xff]
      %v1079 = vld [vmem:[%s3 + $0x38] sm:$0xff]
      %v1080 = vld [vmem:[%s3 + $0x40] sm:$0xff]
      %v1081 = vld [vmem:[%s3 + $0x48] sm:$0xff]
      %v1082 = vld [vmem:[%s3 + $0x50] sm:$0xff]
      %v1083 = vld [vmem:[%s3 + $0x58] sm:$0xff]
      %v1084 = vld [vmem:[%s3 + $0x60] sm:$0xff]
      %v1085 = vld [vmem:[%s3 + $0x68] sm:$0xff]
      %v1086 = vld [vmem:[%s3 + $0x70] sm:$0xff]
      %v1087 = vld [vmem:[%s3 + $0x78] sm:$0xff]
      %v1088 = vld [vmem:[%s3 + $0x80] sm:$0xff]
      %v1089 = vld [vmem:[%s3 + $0x88] sm:$0xff]
      %v1090 = vld [vmem:[%s3 + $0x90] sm:$0xff]
      %v1091 = vld [vmem:[%s3 + $0x98] sm:$0xff]
      %v1092 = vld [vmem:[%s3 + $0xa0] sm:$0xff]
      %v1093 = vld [vmem:[%s3 + $0xa8] sm:$0xff]
      %v1094 = vld [vmem:[%s3 + $0xb0] sm:$0xff]
      %v1095 = vld [vmem:[%s3 + $0xb8] sm:$0xff]
      %v1096 = vld [vmem:[%s3 + $0xc0] sm:$0xff]
      %v1097 = vld [vmem:[%s3 + $0xc8] sm:$0xff]
      %v1098 = vld [vmem:[%s3 + $0xd0] sm:$0xff]
      %v1099 = vld [vmem:[%s3 + $0xd8] sm:$0xff]
      %v1100 = vld [vmem:[%s3 + $0xe0] sm:$0xff]
      %v1101 = vld [vmem:[%s3 + $0xe8] sm:$0xff]
      %v1102 = vld [vmem:[%s3 + $0xf0] sm:$0xff]
      %v1103 = vld [vmem:[%s3 + $0xf8] sm:$0xff]
      %v1136 = vunpack.c.l.b16 %v1072
      %v1137 = vunpack.c.h.b16 %v1072
      %v1138 = vunpack.c.l.b16 %v1073
      %v1139 = vunpack.c.h.b16 %v1073
      %v1140 = vunpack.c.l.b16 %v1074
      %v1141 = vunpack.c.h.b16 %v1074
      %v1142 = vunpack.c.l.b16 %v1075
      %v1143 = vunpack.c.h.b16 %v1075
      %v1144 = vunpack.c.l.b16 %v1076
      %v1145 = vunpack.c.h.b16 %v1076
      %v1146 = vunpack.c.l.b16 %v1077
      %v1147 = vunpack.c.h.b16 %v1077
      %v1148 = vunpack.c.l.b16 %v1078
      %v1149 = vunpack.c.h.b16 %v1078
      %v1150 = vunpack.c.l.b16 %v1079
      %v1151 = vunpack.c.h.b16 %v1079
      %v1152 = vunpack.c.l.b16 %v1080
      %v1153 = vunpack.c.h.b16 %v1080
      %v1154 = vunpack.c.l.b16 %v1081
      %v1155 = vunpack.c.h.b16 %v1081
      %v1156 = vunpack.c.l.b16 %v1082
      %v1157 = vunpack.c.h.b16 %v1082
      %v1158 = vunpack.c.l.b16 %v1083
      %v1159 = vunpack.c.h.b16 %v1083
      %v1160 = vunpack.c.l.b16 %v1084
      %v1161 = vunpack.c.h.b16 %v1084
      %v1162 = vunpack.c.l.b16 %v1085
      %v1163 = vunpack.c.h.b16 %v1085
      %v1164 = vunpack.c.l.b16 %v1086
      %v1165 = vunpack.c.h.b16 %v1086
      %v1166 = vunpack.c.l.b16 %v1087
      %v1167 = vunpack.c.h.b16 %v1087
      %v1168 = vunpack.c.l.b16 %v1088
      %v1169 = vunpack.c.h.b16 %v1088
      %v1170 = vunpack.c.l.b16 %v1089
      %v1171 = vunpack.c.h.b16 %v1089
      %v1172 = vunpack.c.l.b16 %v1090
      %v1173 = vunpack.c.h.b16 %v1090
      %v1174 = vunpack.c.l.b16 %v1091
      %v1175 = vunpack.c.h.b16 %v1091
      %v1176 = vunpack.c.l.b16 %v1092
      %v1177 = vunpack.c.h.b16 %v1092
      %v1178 = vunpack.c.l.b16 %v1093
      %v1179 = vunpack.c.h.b16 %v1093
      %v1180 = vunpack.c.l.b16 %v1094
      %v1181 = vunpack.c.h.b16 %v1094
      %v1182 = vunpack.c.l.b16 %v1095
      %v1183 = vunpack.c.h.b16 %v1095
      %v1184 = vunpack.c.l.b16 %v1096
      %v1185 = vunpack.c.h.b16 %v1096
      %v1186 = vunpack.c.l.b16 %v1097
      %v1187 = vunpack.c.h.b16 %v1097
      %v1188 = vunpack.c.l.b16 %v1098
      %v1189 = vunpack.c.h.b16 %v1098
      %v1190 = vunpack.c.l.b16 %v1099
      %v1191 = vunpack.c.h.b16 %v1099
      %v1192 = vunpack.c.l.b16 %v1100
      %v1193 = vunpack.c.h.b16 %v1100
      %v1194 = vunpack.c.l.b16 %v1101
      %v1195 = vunpack.c.h.b16 %v1101
      %v1196 = vunpack.c.l.b16 %v1102
      %v1197 = vunpack.c.h.b16 %v1102
      %v1198 = vunpack.c.l.b16 %v1103
      %v1199 = vunpack.c.h.b16 %v1103
      %v1200 = vpack.c.b16 %v1138, %v1136
      %v1201 = vpack.c.b16 %v1139, %v1137
      %v1202 = vpack.c.b16 %v1142, %v1140
      %v1203 = vpack.c.b16 %v1143, %v1141
      %v1204 = vpack.c.b16 %v1146, %v1144
      %v1205 = vpack.c.b16 %v1147, %v1145
      %v1206 = vpack.c.b16 %v1150, %v1148
      %v1207 = vpack.c.b16 %v1151, %v1149
      %v1208 = vpack.c.b16 %v1154, %v1152
      %v1209 = vpack.c.b16 %v1155, %v1153
      %v1210 = vpack.c.b16 %v1158, %v1156
      %v1211 = vpack.c.b16 %v1159, %v1157
      %v1212 = vpack.c.b16 %v1162, %v1160
      %v1213 = vpack.c.b16 %v1163, %v1161
      %v1214 = vpack.c.b16 %v1166, %v1164
      %v1215 = vpack.c.b16 %v1167, %v1165
      %v1216 = vpack.c.b16 %v1170, %v1168
      %v1217 = vpack.c.b16 %v1171, %v1169
      %v1218 = vpack.c.b16 %v1174, %v1172
      %v1219 = vpack.c.b16 %v1175, %v1173
      %v1220 = vpack.c.b16 %v1178, %v1176
      %v1221 = vpack.c.b16 %v1179, %v1177
      %v1222 = vpack.c.b16 %v1182, %v1180
      %v1223 = vpack.c.b16 %v1183, %v1181
      %v1224 = vpack.c.b16 %v1186, %v1184
      %v1225 = vpack.c.b16 %v1187, %v1185
      %v1226 = vpack.c.b16 %v1190, %v1188
      %v1227 = vpack.c.b16 %v1191, %v1189
      %v1228 = vpack.c.b16 %v1194, %v1192
      %v1229 = vpack.c.b16 %v1195, %v1193
      %v1230 = vpack.c.b16 %v1198, %v1196
      %v1231 = vpack.c.b16 %v1199, %v1197
      %1264 = vmatprep.subr.bf16.mxu0 %v1201
      %1265 = vmatpush1.bf16.msra.mxu0 %v1200
      %1266 = vmatprep.subr.bf16.mxu0 %v1203
      %1267 = vmatpush1.bf16.msra.mxu0 %v1202
      %1268 = vmatprep.subr.bf16.mxu0 %v1205
      %1269 = vmatpush1.bf16.msra.mxu0 %v1204
      %1270 = vmatprep.subr.bf16.mxu0 %v1207
      %1271 = vmatpush1.bf16.msra.mxu0 %v1206
      %1272 = vmatprep.subr.bf16.mxu0 %v1209
      %1273 = vmatpush1.bf16.msra.mxu0 %v1208
      %1274 = vmatprep.subr.bf16.mxu0 %v1211
      %1275 = vmatpush1.bf16.msra.mxu0 %v1210
      %1276 = vmatprep.subr.bf16.mxu0 %v1213
      %1277 = vmatpush1.bf16.msra.mxu0 %v1212
      %1278 = vmatprep.subr.bf16.mxu0 %v1215
      %1279 = vmatpush1.bf16.msra.mxu0 %v1214
      %1280 = vmatprep.subr.bf16.mxu0 %v1217
      %1281 = vmatpush1.bf16.msra.mxu0 %v1216
      %1282 = vmatprep.subr.bf16.mxu0 %v1219
      %1283 = vmatpush1.bf16.msra.mxu0 %v1218
      %1284 = vmatprep.subr.bf16.mxu0 %v1221
      %1285 = vmatpush1.bf16.msra.mxu0 %v1220
      %1286 = vmatprep.subr.bf16.mxu0 %v1223
      %1287 = vmatpush1.bf16.msra.mxu0 %v1222
      %1288 = vmatprep.subr.bf16.mxu0 %v1225
      %1289 = vmatpush1.bf16.msra.mxu0 %v1224
      %1290 = vmatprep.subr.bf16.mxu0 %v1227
      %1291 = vmatpush1.bf16.msra.mxu0 %v1226
      %1292 = vmatprep.subr.bf16.mxu0 %v1229
      %1293 = vmatpush1.bf16.msra.mxu0 %v1228
      %1294 = vmatprep.subr.bf16.mxu0 %v1231
      %1295 = vmatpush1.bf16.msra.mxu0 %v1230
      %1296 = vmatprep.mubr.bf16.mxu0 %v1057
      %1297 = vmatmul.mubr.bf16.gmra.mrb[0].mxu0 %v1056
      %v1298 = vpop.f32.mrb[0].mxu0
      %v1299 = vadd.f32 0.0, %v1298
      %v1300 = vpop.f32.mrb[0].mxu0
      %v1301 = vadd.f32 0.0, %v1300
      %v1302 = vpop.f32.mrb[0].mxu0
      %v1303 = vadd.f32 0.0, %v1302
      %v1304 = vpop.f32.mrb[0].mxu0
      %v1305 = vadd.f32 0.0, %v1304
      %1306 = vmatprep.mubr.bf16.mxu0 %v1059
      %1307 = vmatmul.mubr.bf16.gmra.mrb[0].mxu0 %v1058
      %v1308 = vpop.f32.mrb[0].mxu0
      %v1309 = vadd.f32 0.0, %v1308
      %v1310 = vpop.f32.mrb[0].mxu0
      %v1311 = vadd.f32 0.0, %v1310
      %v1312 = vpop.f32.mrb[0].mxu0
      %v1313 = vadd.f32 0.0, %v1312
      %v1314 = vpop.f32.mrb[0].mxu0
      %v1315 = vadd.f32 0.0, %v1314
      %1316 = vmatprep.mubr.bf16.mxu0 %v1061
      %1317 = vmatmul.mubr.bf16.gmra.mrb[0].mxu0 %v1060
      %v1318 = vpop.f32.mrb[0].mxu0
      %v1319 = vadd.f32 0.0, %v1318
      %v1320 = vpop.f32.mrb[0].mxu0
      %v1321 = vadd.f32 0.0, %v1320
      %v1322 = vpop.f32.mrb[0].mxu0
      %v1323 = vadd.f32 0.0, %v1322
      %v1324 = vpop.f32.mrb[0].mxu0
      %v1325 = vadd.f32 0.0, %v1324
      %1326 = vmatprep.mubr.bf16.mxu0 %v1063
      %1327 = vmatmul.mubr.bf16.gmra.mrb[0].mxu0 %v1062
      %v1328 = vpop.f32.mrb[0].mxu0
      %v1329 = vadd.f32 0.0, %v1328
      %v1330 = vpop.f32.mrb[0].mxu0
      %v1331 = vadd.f32 0.0, %v1330
      %v1332 = vpop.f32.mrb[0].mxu0
      %v1333 = vadd.f32 0.0, %v1332
      %v1334 = vpop.f32.mrb[0].mxu0
      %v1335 = vadd.f32 0.0, %v1334
      %1336 = vmatprep.mubr.bf16.mxu0 %v1065
      %1337 = vmatmul.mubr.bf16.gmra.mrb[0].mxu0 %v1064
      %v1338 = vpop.f32.mrb[0].mxu0
      %v1339 = vadd.f32 0.0, %v1338
      %v1340 = vpop.f32.mrb[0].mxu0
      %v1341 = vadd.f32 0.0, %v1340
      %v1342 = vpop.f32.mrb[0].mxu0
      %v1343 = vadd.f32 0.0, %v1342
      %v1344 = vpop.f32.mrb[0].mxu0
      %v1345 = vadd.f32 0.0, %v1344
      %1346 = vmatprep.mubr.bf16.mxu0 %v1067
      %1347 = vmatmul.mubr.bf16.gmra.mrb[0].mxu0 %v1066
      %v1348 = vpop.f32.mrb[0].mxu0
      %v1349 = vadd.f32 0.0, %v1348
      %v1350 = vpop.f32.mrb[0].mxu0
      %v1351 = vadd.f32 0.0, %v1350
      %v1352 = vpop.f32.mrb[0].mxu0
      %v1353 = vadd.f32 0.0, %v1352
      %v1354 = vpop.f32.mrb[0].mxu0
      %v1355 = vadd.f32 0.0, %v1354
      %1356 = vmatprep.mubr.bf16.mxu0 %v1069
      %1357 = vmatmul.mubr.bf16.gmra.mrb[0].mxu0 %v1068
      %v1358 = vpop.f32.mrb[0].mxu0
      %v1359 = vadd.f32 0.0, %v1358
      %v1360 = vpop.f32.mrb[0].mxu0
      %v1361 = vadd.f32 0.0, %v1360
      %v1362 = vpop.f32.mrb[0].mxu0
      %v1363 = vadd.f32 0.0, %v1362
      %v1364 = vpop.f32.mrb[0].mxu0
      %v1365 = vadd.f32 0.0, %v1364
      %1366 = vmatprep.mubr.bf16.mxu0 %v1071
      %1367 = vmatmul.mubr.bf16.gmra.mrb[0].mxu0 %v1070
      %v1368 = vpop.f32.mrb[0].mxu0
      %v1369 = vadd.f32 0.0, %v1368
      %v1370 = vpop.f32.mrb[0].mxu0
      %v1371 = vadd.f32 0.0, %v1370
      %v1372 = vpop.f32.mrb[0].mxu0
      %v1373 = vadd.f32 0.0, %v1372
      %v1374 = vpop.f32.mrb[0].mxu0
      %v1375 = vadd.f32 0.0, %v1374
      %1376 = vdwg.mxu0
      %v1377 = vadd.f32 %v339, %v1299
      %v1378 = vadd.f32 %v340, %v1301
      %v1379 = vadd.f32 %v341, %v1303
      %v1380 = vadd.f32 %v342, %v1305
      %v1381 = vadd.f32 %v343, %v1309
      %v1382 = vadd.f32 %v344, %v1311
      %v1383 = vadd.f32 %v345, %v1313
      %v1384 = vadd.f32 %v346, %v1315
      %v1385 = vadd.f32 %v347, %v1319
      %v1386 = vadd.f32 %v348, %v1321
      %v1387 = vadd.f32 %v349, %v1323
      %v1388 = vadd.f32 %v350, %v1325
      %v1389 = vadd.f32 %v351, %v1329
      %v1390 = vadd.f32 %v352, %v1331
      %v1391 = vadd.f32 %v353, %v1333
      %v1392 = vadd.f32 %v354, %v1335
      %v1393 = vadd.f32 %v355, %v1339
      %v1394 = vadd.f32 %v356, %v1341
      %v1395 = vadd.f32 %v357, %v1343
      %v1396 = vadd.f32 %v358, %v1345
      %v1397 = vadd.f32 %v359, %v1349
      %v1398 = vadd.f32 %v360, %v1351
      %v1399 = vadd.f32 %v361, %v1353
      %v1400 = vadd.f32 %v362, %v1355
      %v1401 = vadd.f32 %v363, %v1359
      %v1402 = vadd.f32 %v364, %v1361
      %v1403 = vadd.f32 %v365, %v1363
      %v1404 = vadd.f32 %v366, %v1365
      %v1405 = vadd.f32 %v367, %v1369
      %v1406 = vadd.f32 %v368, %v1371
      %v1407 = vadd.f32 %v369, %v1373
      %v1408 = vadd.f32 %v370, %v1375
      %v1409 = vld [vmem:[%s1 + $0x8] sm:$0xff]
      %v1410 = vld [vmem:[%s1 + $0x28] sm:$0xff]
      %v1411 = vld [vmem:[%s1 + $0x48] sm:$0xff]
      %v1412 = vld [vmem:[%s1 + $0x68] sm:$0xff]
      %v1413 = vld [vmem:[%s1 + $0x88] sm:$0xff]
      %v1414 = vld [vmem:[%s1 + $0xa8] sm:$0xff]
      %v1415 = vld [vmem:[%s1 + $0xc8] sm:$0xff]
      %v1416 = vld [vmem:[%s1 + $0xe8] sm:$0xff]
      %v1417 = vld [vmem:[%s1 + $0x108] sm:$0xff]
      %v1418 = vld [vmem:[%s1 + $0x128] sm:$0xff]
      %v1419 = vld [vmem:[%s1 + $0x148] sm:$0xff]
      %v1420 = vld [vmem:[%s1 + $0x168] sm:$0xff]
      %v1421 = vld [vmem:[%s1 + $0x188] sm:$0xff]
      %v1422 = vld [vmem:[%s1 + $0x1a8] sm:$0xff]
      %v1423 = vld [vmem:[%s1 + $0x1c8] sm:$0xff]
      %v1424 = vld [vmem:[%s1 + $0x1e8] sm:$0xff]
      %v1425 = vld [vmem:[%s1 + $0x208] sm:$0xff]
      %v1426 = vld [vmem:[%s1 + $0x228] sm:$0xff]
      %v1427 = vld [vmem:[%s1 + $0x248] sm:$0xff]
      %v1428 = vld [vmem:[%s1 + $0x268] sm:$0xff]
      %v1429 = vld [vmem:[%s1 + $0x288] sm:$0xff]
      %v1430 = vld [vmem:[%s1 + $0x2a8] sm:$0xff]
      %v1431 = vld [vmem:[%s1 + $0x2c8] sm:$0xff]
      %v1432 = vld [vmem:[%s1 + $0x2e8] sm:$0xff]
      %v1433 = vld [vmem:[%s1 + $0x308] sm:$0xff]
      %v1434 = vld [vmem:[%s1 + $0x328] sm:$0xff]
      %v1435 = vld [vmem:[%s1 + $0x348] sm:$0xff]
      %v1436 = vld [vmem:[%s1 + $0x368] sm:$0xff]
      %v1437 = vld [vmem:[%s1 + $0x388] sm:$0xff]
      %v1438 = vld [vmem:[%s1 + $0x3a8] sm:$0xff]
      %v1439 = vld [vmem:[%s1 + $0x3c8] sm:$0xff]
      %v1440 = vld [vmem:[%s1 + $0x3e8] sm:$0xff]
      %v1441 = vld [vmem:[%s2 + $0x2] sm:$0x3]
      %v1443 = vlaneseq
      %v1444 = vshrl.u32 %v1443, 7
      %v1445 = vsub.s32 0, %v1444
      %v1446 = vrot.slane %v1441, %v1445
      %v1447 = vlaneseq
      %v1448 = vshrl.u32 %v1447, 7
      %v1449 = vsub.s32 1, %v1448
      %v1450 = vrot.slane %v1441, %v1449
      %v1485 = vunpack.c.l.b16 %v1409
      %v1486 = vunpack.c.h.b16 %v1409
      %v1487 = vunpack.c.l.b16 %v1410
      %v1488 = vunpack.c.h.b16 %v1410
      %v1489 = vunpack.c.l.b16 %v1411
      %v1490 = vunpack.c.h.b16 %v1411
      %v1491 = vunpack.c.l.b16 %v1412
      %v1492 = vunpack.c.h.b16 %v1412
      %v1493 = vunpack.c.l.b16 %v1413
      %v1494 = vunpack.c.h.b16 %v1413
      %v1495 = vunpack.c.l.b16 %v1414
      %v1496 = vunpack.c.h.b16 %v1414
      %v1497 = vunpack.c.l.b16 %v1415
      %v1498 = vunpack.c.h.b16 %v1415
      %v1499 = vunpack.c.l.b16 %v1416
      %v1500 = vunpack.c.h.b16 %v1416
      %v1501 = vunpack.c.l.b16 %v1417
      %v1502 = vunpack.c.h.b16 %v1417
      %v1503 = vunpack.c.l.b16 %v1418
      %v1504 = vunpack.c.h.b16 %v1418
      %v1505 = vunpack.c.l.b16 %v1419
      %v1506 = vunpack.c.h.b16 %v1419
      %v1507 = vunpack.c.l.b16 %v1420
      %v1508 = vunpack.c.h.b16 %v1420
      %v1509 = vunpack.c.l.b16 %v1421
      %v1510 = vunpack.c.h.b16 %v1421
      %v1511 = vunpack.c.l.b16 %v1422
      %v1512 = vunpack.c.h.b16 %v1422
      %v1513 = vunpack.c.l.b16 %v1423
      %v1514 = vunpack.c.h.b16 %v1423
      %v1515 = vunpack.c.l.b16 %v1424
      %v1516 = vunpack.c.h.b16 %v1424
      %v1517 = vunpack.c.l.b16 %v1425
      %v1518 = vunpack.c.h.b16 %v1425
      %v1519 = vunpack.c.l.b16 %v1426
      %v1520 = vunpack.c.h.b16 %v1426
      %v1521 = vunpack.c.l.b16 %v1427
      %v1522 = vunpack.c.h.b16 %v1427
      %v1523 = vunpack.c.l.b16 %v1428
      %v1524 = vunpack.c.h.b16 %v1428
      %v1525 = vunpack.c.l.b16 %v1429
      %v1526 = vunpack.c.h.b16 %v1429
      %v1527 = vunpack.c.l.b16 %v1430
      %v1528 = vunpack.c.h.b16 %v1430
      %v1529 = vunpack.c.l.b16 %v1431
      %v1530 = vunpack.c.h.b16 %v1431
      %v1531 = vunpack.c.l.b16 %v1432
      %v1532 = vunpack.c.h.b16 %v1432
      %v1533 = vunpack.c.l.b16 %v1433
      %v1534 = vunpack.c.h.b16 %v1433
      %v1535 = vunpack.c.l.b16 %v1434
      %v1536 = vunpack.c.h.b16 %v1434
      %v1537 = vunpack.c.l.b16 %v1435
      %v1538 = vunpack.c.h.b16 %v1435
      %v1539 = vunpack.c.l.b16 %v1436
      %v1540 = vunpack.c.h.b16 %v1436
      %v1541 = vunpack.c.l.b16 %v1437
      %v1542 = vunpack.c.h.b16 %v1437
      %v1543 = vunpack.c.l.b16 %v1438
      %v1544 = vunpack.c.h.b16 %v1438
      %v1545 = vunpack.c.l.b16 %v1439
      %v1546 = vunpack.c.h.b16 %v1439
      %v1547 = vunpack.c.l.b16 %v1440
      %v1548 = vunpack.c.h.b16 %v1440
      %v1549 = vpack.c.b16 %v1487, %v1485
      %v1550 = vpack.c.b16 %v1488, %v1486
      %v1551 = vpack.c.b16 %v1491, %v1489
      %v1552 = vpack.c.b16 %v1492, %v1490
      %v1553 = vpack.c.b16 %v1495, %v1493
      %v1554 = vpack.c.b16 %v1496, %v1494
      %v1555 = vpack.c.b16 %v1499, %v1497
      %v1556 = vpack.c.b16 %v1500, %v1498
      %v1557 = vpack.c.b16 %v1503, %v1501
      %v1558 = vpack.c.b16 %v1504, %v1502
      %v1559 = vpack.c.b16 %v1507, %v1505
      %v1560 = vpack.c.b16 %v1508, %v1506
      %v1561 = vpack.c.b16 %v1511, %v1509
      %v1562 = vpack.c.b16 %v1512, %v1510
      %v1563 = vpack.c.b16 %v1515, %v1513
      %v1564 = vpack.c.b16 %v1516, %v1514
      %v1565 = vpack.c.b16 %v1519, %v1517
      %v1566 = vpack.c.b16 %v1520, %v1518
      %v1567 = vpack.c.b16 %v1523, %v1521
      %v1568 = vpack.c.b16 %v1524, %v1522
      %v1569 = vpack.c.b16 %v1527, %v1525
      %v1570 = vpack.c.b16 %v1528, %v1526
      %v1571 = vpack.c.b16 %v1531, %v1529
      %v1572 = vpack.c.b16 %v1532, %v1530
      %v1573 = vpack.c.b16 %v1535, %v1533
      %v1574 = vpack.c.b16 %v1536, %v1534
      %v1575 = vpack.c.b16 %v1539, %v1537
      %v1576 = vpack.c.b16 %v1540, %v1538
      %v1577 = vpack.c.b16 %v1543, %v1541
      %v1578 = vpack.c.b16 %v1544, %v1542
      %v1579 = vpack.c.b16 %v1547, %v1545
      %v1580 = vpack.c.b16 %v1548, %v1546
      %1613 = vmatprep.subr.bf16.mxu0 %v1550
      %1614 = vmatpush1.bf16.msra.mxu0 %v1549
      %1615 = vmatprep.subr.bf16.mxu0 %v1552
      %1616 = vmatpush1.bf16.msra.mxu0 %v1551
      %1617 = vmatprep.subr.bf16.mxu0 %v1554
      %1618 = vmatpush1.bf16.msra.mxu0 %v1553
      %1619 = vmatprep.subr.bf16.mxu0 %v1556
      %1620 = vmatpush1.bf16.msra.mxu0 %v1555
      %1621 = vmatprep.subr.bf16.mxu0 %v1558
      %1622 = vmatpush1.bf16.msra.mxu0 %v1557
      %1623 = vmatprep.subr.bf16.mxu0 %v1560
      %1624 = vmatpush1.bf16.msra.mxu0 %v1559
      %1625 = vmatprep.subr.bf16.mxu0 %v1562
      %1626 = vmatpush1.bf16.msra.mxu0 %v1561
      %1627 = vmatprep.subr.bf16.mxu0 %v1564
      %1628 = vmatpush1.bf16.msra.mxu0 %v1563
      %1629 = vmatprep.subr.bf16.mxu0 %v1566
      %1630 = vmatpush1.bf16.msra.mxu0 %v1565
      %1631 = vmatprep.subr.bf16.mxu0 %v1568
      %1632 = vmatpush1.bf16.msra.mxu0 %v1567
      %1633 = vmatprep.subr.bf16.mxu0 %v1570
      %1634 = vmatpush1.bf16.msra.mxu0 %v1569
      %1635 = vmatprep.subr.bf16.mxu0 %v1572
      %1636 = vmatpush1.bf16.msra.mxu0 %v1571
      %1637 = vmatprep.subr.bf16.mxu0 %v1574
      %1638 = vmatpush1.bf16.msra.mxu0 %v1573
      %1639 = vmatprep.subr.bf16.mxu0 %v1576
      %1640 = vmatpush1.bf16.msra.mxu0 %v1575
      %1641 = vmatprep.subr.bf16.mxu0 %v1578
      %1642 = vmatpush1.bf16.msra.mxu0 %v1577
      %1643 = vmatprep.subr.bf16.mxu0 %v1580
      %1644 = vmatpush1.bf16.msra.mxu0 %v1579
      %1645 = vmatprep.mubr.bf16.mxu0 %v464
      %1646 = vmatmul.mubr.bf16.gmra.mrb[0].mxu0 %v463
      %v1647 = vpop.f32.mrb[0].mxu0
      %v1648 = vadd.f32 %v1446, %v1647
      %v1649 = vpop.f32.mrb[0].mxu0
      %v1650 = vadd.f32 %v1450, %v1649
      %v1651 = vpop.f32.mrb[0].mxu0
      %v1652 = vadd.f32 %v1446, %v1651
      %v1653 = vpop.f32.mrb[0].mxu0
      %v1654 = vadd.f32 %v1450, %v1653
      %1655 = vmatprep.mubr.bf16.mxu0 %v466
      %1656 = vmatmul.mubr.bf16.gmra.mrb[0].mxu0 %v465
      %v1657 = vpop.f32.mrb[0].mxu0
      %v1658 = vadd.f32 %v1446, %v1657
      %v1659 = vpop.f32.mrb[0].mxu0
      %v1660 = vadd.f32 %v1450, %v1659
      %v1661 = vpop.f32.mrb[0].mxu0
      %v1662 = vadd.f32 %v1446, %v1661
      %v1663 = vpop.f32.mrb[0].mxu0
      %v1664 = vadd.f32 %v1450, %v1663
      %1665 = vmatprep.mubr.bf16.mxu0 %v468
      %1666 = vmatmul.mubr.bf16.gmra.mrb[0].mxu0 %v467
      %v1667 = vpop.f32.mrb[0].mxu0
      %v1668 = vadd.f32 %v1446, %v1667
      %v1669 = vpop.f32.mrb[0].mxu0
      %v1670 = vadd.f32 %v1450, %v1669
      %v1671 = vpop.f32.mrb[0].mxu0
      %v1672 = vadd.f32 %v1446, %v1671
      %v1673 = vpop.f32.mrb[0].mxu0
      %v1674 = vadd.f32 %v1450, %v1673
      %1675 = vmatprep.mubr.bf16.mxu0 %v470
      %1676 = vmatmul.mubr.bf16.gmra.mrb[0].mxu0 %v469
      %v1677 = vpop.f32.mrb[0].mxu0
      %v1678 = vadd.f32 %v1446, %v1677
      %v1679 = vpop.f32.mrb[0].mxu0
      %v1680 = vadd.f32 %v1450, %v1679
      %v1681 = vpop.f32.mrb[0].mxu0
      %v1682 = vadd.f32 %v1446, %v1681
      %v1683 = vpop.f32.mrb[0].mxu0
      %v1684 = vadd.f32 %v1450, %v1683
      %1685 = vmatprep.mubr.bf16.mxu0 %v472
      %1686 = vmatmul.mubr.bf16.gmra.mrb[0].mxu0 %v471
      %v1687 = vpop.f32.mrb[0].mxu0
      %v1688 = vadd.f32 %v1446, %v1687
      %v1689 = vpop.f32.mrb[0].mxu0
      %v1690 = vadd.f32 %v1450, %v1689
      %v1691 = vpop.f32.mrb[0].mxu0
      %v1692 = vadd.f32 %v1446, %v1691
      %v1693 = vpop.f32.mrb[0].mxu0
      %v1694 = vadd.f32 %v1450, %v1693
      %1695 = vmatprep.mubr.bf16.mxu0 %v474
      %1696 = vmatmul.mubr.bf16.gmra.mrb[0].mxu0 %v473
      %v1697 = vpop.f32.mrb[0].mxu0
      %v1698 = vadd.f32 %v1446, %v1697
      %v1699 = vpop.f32.mrb[0].mxu0
      %v1700 = vadd.f32 %v1450, %v1699
      %v1701 = vpop.f32.mrb[0].mxu0
      %v1702 = vadd.f32 %v1446, %v1701
      %v1703 = vpop.f32.mrb[0].mxu0
      %v1704 = vadd.f32 %v1450, %v1703
      %1705 = vmatprep.mubr.bf16.mxu0 %v476
      %1706 = vmatmul.mubr.bf16.gmra.mrb[0].mxu0 %v475
      %v1707 = vpop.f32.mrb[0].mxu0
      %v1708 = vadd.f32 %v1446, %v1707
      %v1709 = vpop.f32.mrb[0].mxu0
      %v1710 = vadd.f32 %v1450, %v1709
      %v1711 = vpop.f32.mrb[0].mxu0
      %v1712 = vadd.f32 %v1446, %v1711
      %v1713 = vpop.f32.mrb[0].mxu0
      %v1714 = vadd.f32 %v1450, %v1713
      %1715 = vmatprep.mubr.bf16.mxu0 %v478
      %1716 = vmatmul.mubr.bf16.gmra.mrb[0].mxu0 %v477
      %v1717 = vpop.f32.mrb[0].mxu0
      %v1718 = vadd.f32 %v1446, %v1717
      %v1719 = vpop.f32.mrb[0].mxu0
      %v1720 = vadd.f32 %v1450, %v1719
      %v1721 = vpop.f32.mrb[0].mxu0
      %v1722 = vadd.f32 %v1446, %v1721
      %v1723 = vpop.f32.mrb[0].mxu0
      %v1724 = vadd.f32 %v1450, %v1723
      %1725 = vdwg.mxu0
      %v1726 = vmul.f32 %v1648, %v1648
      %v1727 = vmul.f32 %v1650, %v1650
      %v1728 = vmul.f32 %v1652, %v1652
      %v1729 = vmul.f32 %v1654, %v1654
      %v1730 = vmul.f32 %v1658, %v1658
      %v1731 = vmul.f32 %v1660, %v1660
      %v1732 = vmul.f32 %v1662, %v1662
      %v1733 = vmul.f32 %v1664, %v1664
      %v1734 = vmul.f32 %v1668, %v1668
      %v1735 = vmul.f32 %v1670, %v1670
      %v1736 = vmul.f32 %v1672, %v1672
      %v1737 = vmul.f32 %v1674, %v1674
      %v1738 = vmul.f32 %v1678, %v1678
      %v1739 = vmul.f32 %v1680, %v1680
      %v1740 = vmul.f32 %v1682, %v1682
      %v1741 = vmul.f32 %v1684, %v1684
      %v1742 = vmul.f32 %v1688, %v1688
      %v1743 = vmul.f32 %v1690, %v1690
      %v1744 = vmul.f32 %v1692, %v1692
      %v1745 = vmul.f32 %v1694, %v1694
      %v1746 = vmul.f32 %v1698, %v1698
      %v1747 = vmul.f32 %v1700, %v1700
      %v1748 = vmul.f32 %v1702, %v1702
      %v1749 = vmul.f32 %v1704, %v1704
      %v1750 = vmul.f32 %v1708, %v1708
      %v1751 = vmul.f32 %v1710, %v1710
      %v1752 = vmul.f32 %v1712, %v1712
      %v1753 = vmul.f32 %v1714, %v1714
      %v1754 = vmul.f32 %v1718, %v1718
      %v1755 = vmul.f32 %v1720, %v1720
      %v1756 = vmul.f32 %v1722, %v1722
      %v1757 = vmul.f32 %v1724, %v1724
      %v1758 = vmul.f32 %v1648, %v1726
      %v1759 = vmul.f32 %v1650, %v1727
      %v1760 = vmul.f32 %v1652, %v1728
      %v1761 = vmul.f32 %v1654, %v1729
      %v1762 = vmul.f32 %v1658, %v1730
      %v1763 = vmul.f32 %v1660, %v1731
      %v1764 = vmul.f32 %v1662, %v1732
      %v1765 = vmul.f32 %v1664, %v1733
      %v1766 = vmul.f32 %v1668, %v1734
      %v1767 = vmul.f32 %v1670, %v1735
      %v1768 = vmul.f32 %v1672, %v1736
      %v1769 = vmul.f32 %v1674, %v1737
      %v1770 = vmul.f32 %v1678, %v1738
      %v1771 = vmul.f32 %v1680, %v1739
      %v1772 = vmul.f32 %v1682, %v1740
      %v1773 = vmul.f32 %v1684, %v1741
      %v1774 = vmul.f32 %v1688, %v1742
      %v1775 = vmul.f32 %v1690, %v1743
      %v1776 = vmul.f32 %v1692, %v1744
      %v1777 = vmul.f32 %v1694, %v1745
      %v1778 = vmul.f32 %v1698, %v1746
      %v1779 = vmul.f32 %v1700, %v1747
      %v1780 = vmul.f32 %v1702, %v1748
      %v1781 = vmul.f32 %v1704, %v1749
      %v1782 = vmul.f32 %v1708, %v1750
      %v1783 = vmul.f32 %v1710, %v1751
      %v1784 = vmul.f32 %v1712, %v1752
      %v1785 = vmul.f32 %v1714, %v1753
      %v1786 = vmul.f32 %v1718, %v1754
      %v1787 = vmul.f32 %v1720, %v1755
      %v1788 = vmul.f32 %v1722, %v1756
      %v1789 = vmul.f32 %v1724, %v1757
      %v1790 = vmul.f32 %v1758, 0.044715
      %v1791 = vmul.f32 %v1759, 0.044715
      %v1792 = vmul.f32 %v1760, 0.044715
      %v1793 = vmul.f32 %v1761, 0.044715
      %v1794 = vmul.f32 %v1762, 0.044715
      %v1795 = vmul.f32 %v1763, 0.044715
      %v1796 = vmul.f32 %v1764, 0.044715
      %v1797 = vmul.f32 %v1765, 0.044715
      %v1798 = vmul.f32 %v1766, 0.044715
      %v1799 = vmul.f32 %v1767, 0.044715
      %v1800 = vmul.f32 %v1768, 0.044715
      %v1801 = vmul.f32 %v1769, 0.044715
      %v1802 = vmul.f32 %v1770, 0.044715
      %v1803 = vmul.f32 %v1771, 0.044715
      %v1804 = vmul.f32 %v1772, 0.044715
      %v1805 = vmul.f32 %v1773, 0.044715
      %v1806 = vmul.f32 %v1774, 0.044715
      %v1807 = vmul.f32 %v1775, 0.044715
      %v1808 = vmul.f32 %v1776, 0.044715
      %v1809 = vmul.f32 %v1777, 0.044715
      %v1810 = vmul.f32 %v1778, 0.044715
      %v1811 = vmul.f32 %v1779, 0.044715
      %v1812 = vmul.f32 %v1780, 0.044715
      %v1813 = vmul.f32 %v1781, 0.044715
      %v1814 = vmul.f32 %v1782, 0.044715
      %v1815 = vmul.f32 %v1783, 0.044715
      %v1816 = vmul.f32 %v1784, 0.044715
      %v1817 = vmul.f32 %v1785, 0.044715
      %v1818 = vmul.f32 %v1786, 0.044715
      %v1819 = vmul.f32 %v1787, 0.044715
      %v1820 = vmul.f32 %v1788, 0.044715
      %v1821 = vmul.f32 %v1789, 0.044715
      %v1822 = vadd.f32 %v1648, %v1790
      %v1823 = vadd.f32 %v1650, %v1791
      %v1824 = vadd.f32 %v1652, %v1792
      %v1825 = vadd.f32 %v1654, %v1793
      %v1826 = vadd.f32 %v1658, %v1794
      %v1827 = vadd.f32 %v1660, %v1795
      %v1828 = vadd.f32 %v1662, %v1796
      %v1829 = vadd.f32 %v1664, %v1797
      %v1830 = vadd.f32 %v1668, %v1798
      %v1831 = vadd.f32 %v1670, %v1799
      %v1832 = vadd.f32 %v1672, %v1800
      %v1833 = vadd.f32 %v1674, %v1801
      %v1834 = vadd.f32 %v1678, %v1802
      %v1835 = vadd.f32 %v1680, %v1803
      %v1836 = vadd.f32 %v1682, %v1804
      %v1837 = vadd.f32 %v1684, %v1805
      %v1838 = vadd.f32 %v1688, %v1806
      %v1839 = vadd.f32 %v1690, %v1807
      %v1840 = vadd.f32 %v1692, %v1808
      %v1841 = vadd.f32 %v1694, %v1809
      %v1842 = vadd.f32 %v1698, %v1810
      %v1843 = vadd.f32 %v1700, %v1811
      %v1844 = vadd.f32 %v1702, %v1812
      %v1845 = vadd.f32 %v1704, %v1813
      %v1846 = vadd.f32 %v1708, %v1814
      %v1847 = vadd.f32 %v1710, %v1815
      %v1848 = vadd.f32 %v1712, %v1816
      %v1849 = vadd.f32 %v1714, %v1817
      %v1850 = vadd.f32 %v1718, %v1818
      %v1851 = vadd.f32 %v1720, %v1819
      %v1852 = vadd.f32 %v1722, %v1820
      %v1853 = vadd.f32 %v1724, %v1821
      %v1854 = vmul.f32 %v1822, 0.7978846
      %v1855 = vmul.f32 %v1823, 0.7978846
      %v1856 = vmul.f32 %v1824, 0.7978846
      %v1857 = vmul.f32 %v1825, 0.7978846
      %v1858 = vmul.f32 %v1826, 0.7978846
      %v1859 = vmul.f32 %v1827, 0.7978846
      %v1860 = vmul.f32 %v1828, 0.7978846
      %v1861 = vmul.f32 %v1829, 0.7978846
      %v1862 = vmul.f32 %v1830, 0.7978846
      %v1863 = vmul.f32 %v1831, 0.7978846
      %v1864 = vmul.f32 %v1832, 0.7978846
      %v1865 = vmul.f32 %v1833, 0.7978846
      %v1866 = vmul.f32 %v1834, 0.7978846
      %v1867 = vmul.f32 %v1835, 0.7978846
      %v1868 = vmul.f32 %v1836, 0.7978846
      %v1869 = vmul.f32 %v1837, 0.7978846
      %v1870 = vmul.f32 %v1838, 0.7978846
      %v1871 = vmul.f32 %v1839, 0.7978846
      %v1872 = vmul.f32 %v1840, 0.7978846
      %v1873 = vmul.f32 %v1841, 0.7978846
      %v1874 = vmul.f32 %v1842, 0.7978846
      %v1875 = vmul.f32 %v1843, 0.7978846
      %v1876 = vmul.f32 %v1844, 0.7978846
      %v1877 = vmul.f32 %v1845, 0.7978846
      %v1878 = vmul.f32 %v1846, 0.7978846
      %v1879 = vmul.f32 %v1847, 0.7978846
      %v1880 = vmul.f32 %v1848, 0.7978846
      %v1881 = vmul.f32 %v1849, 0.7978846
      %v1882 = vmul.f32 %v1850, 0.7978846
      %v1883 = vmul.f32 %v1851, 0.7978846
      %v1884 = vmul.f32 %v1852, 0.7978846
      %v1885 = vmul.f32 %v1853, 0.7978846
      %v1886 = vtanh.pop %v1854
      %v1887 = vtanh.pop %v1855
      %v1888 = vtanh.pop %v1856
      %v1889 = vtanh.pop %v1857
      %v1890 = vtanh.pop %v1858
      %v1891 = vtanh.pop %v1859
      %v1892 = vtanh.pop %v1860
      %v1893 = vtanh.pop %v1861
      %v1894 = vtanh.pop %v1862
      %v1895 = vtanh.pop %v1863
      %v1896 = vtanh.pop %v1864
      %v1897 = vtanh.pop %v1865
      %v1898 = vtanh.pop %v1866
      %v1899 = vtanh.pop %v1867
      %v1900 = vtanh.pop %v1868
      %v1901 = vtanh.pop %v1869
      %v1902 = vtanh.pop %v1870
      %v1903 = vtanh.pop %v1871
      %v1904 = vtanh.pop %v1872
      %v1905 = vtanh.pop %v1873
      %v1906 = vtanh.pop %v1874
      %v1907 = vtanh.pop %v1875
      %v1908 = vtanh.pop %v1876
      %v1909 = vtanh.pop %v1877
      %v1910 = vtanh.pop %v1878
      %v1911 = vtanh.pop %v1879
      %v1912 = vtanh.pop %v1880
      %v1913 = vtanh.pop %v1881
      %v1914 = vtanh.pop %v1882
      %v1915 = vtanh.pop %v1883
      %v1916 = vtanh.pop %v1884
      %v1917 = vtanh.pop %v1885
      %v1918 = vadd.f32 %v1886, 1.0
      %v1919 = vadd.f32 %v1887, 1.0
      %v1920 = vadd.f32 %v1888, 1.0
      %v1921 = vadd.f32 %v1889, 1.0
      %v1922 = vadd.f32 %v1890, 1.0
      %v1923 = vadd.f32 %v1891, 1.0
      %v1924 = vadd.f32 %v1892, 1.0
      %v1925 = vadd.f32 %v1893, 1.0
      %v1926 = vadd.f32 %v1894, 1.0
      %v1927 = vadd.f32 %v1895, 1.0
      %v1928 = vadd.f32 %v1896, 1.0
      %v1929 = vadd.f32 %v1897, 1.0
      %v1930 = vadd.f32 %v1898, 1.0
      %v1931 = vadd.f32 %v1899, 1.0
      %v1932 = vadd.f32 %v1900, 1.0
      %v1933 = vadd.f32 %v1901, 1.0
      %v1934 = vadd.f32 %v1902, 1.0
      %v1935 = vadd.f32 %v1903, 1.0
      %v1936 = vadd.f32 %v1904, 1.0
      %v1937 = vadd.f32 %v1905, 1.0
      %v1938 = vadd.f32 %v1906, 1.0
      %v1939 = vadd.f32 %v1907, 1.0
      %v1940 = vadd.f32 %v1908, 1.0
      %v1941 = vadd.f32 %v1909, 1.0
      %v1942 = vadd.f32 %v1910, 1.0
      %v1943 = vadd.f32 %v1911, 1.0
      %v1944 = vadd.f32 %v1912, 1.0
      %v1945 = vadd.f32 %v1913, 1.0
      %v1946 = vadd.f32 %v1914, 1.0
      %v1947 = vadd.f32 %v1915, 1.0
      %v1948 = vadd.f32 %v1916, 1.0
      %v1949 = vadd.f32 %v1917, 1.0
      %v1950 = vmul.f32 %v1918, 0.5
      %v1951 = vmul.f32 %v1919, 0.5
      %v1952 = vmul.f32 %v1920, 0.5
      %v1953 = vmul.f32 %v1921, 0.5
      %v1954 = vmul.f32 %v1922, 0.5
      %v1955 = vmul.f32 %v1923, 0.5
      %v1956 = vmul.f32 %v1924, 0.5
      %v1957 = vmul.f32 %v1925, 0.5
      %v1958 = vmul.f32 %v1926, 0.5
      %v1959 = vmul.f32 %v1927, 0.5
      %v1960 = vmul.f32 %v1928, 0.5
      %v1961 = vmul.f32 %v1929, 0.5
      %v1962 = vmul.f32 %v1930, 0.5
      %v1963 = vmul.f32 %v1931, 0.5
      %v1964 = vmul.f32 %v1932, 0.5
      %v1965 = vmul.f32 %v1933, 0.5
      %v1966 = vmul.f32 %v1934, 0.5
      %v1967 = vmul.f32 %v1935, 0.5
      %v1968 = vmul.f32 %v1936, 0.5
      %v1969 = vmul.f32 %v1937, 0.5
      %v1970 = vmul.f32 %v1938, 0.5
      %v1971 = vmul.f32 %v1939, 0.5
      %v1972 = vmul.f32 %v1940, 0.5
      %v1973 = vmul.f32 %v1941, 0.5
      %v1974 = vmul.f32 %v1942, 0.5
      %v1975 = vmul.f32 %v1943, 0.5
      %v1976 = vmul.f32 %v1944, 0.5
      %v1977 = vmul.f32 %v1945, 0.5
      %v1978 = vmul.f32 %v1946, 0.5
      %v1979 = vmul.f32 %v1947, 0.5
      %v1980 = vmul.f32 %v1948, 0.5
      %v1981 = vmul.f32 %v1949, 0.5
      %v1982 = vmul.f32 %v1648, %v1950
      %v1983 = vmul.f32 %v1650, %v1951
      %v1984 = vmul.f32 %v1652, %v1952
      %v1985 = vmul.f32 %v1654, %v1953
      %v1986 = vmul.f32 %v1658, %v1954
      %v1987 = vmul.f32 %v1660, %v1955
      %v1988 = vmul.f32 %v1662, %v1956
      %v1989 = vmul.f32 %v1664, %v1957
      %v1990 = vmul.f32 %v1668, %v1958
      %v1991 = vmul.f32 %v1670, %v1959
      %v1992 = vmul.f32 %v1672, %v1960
      %v1993 = vmul.f32 %v1674, %v1961
      %v1994 = vmul.f32 %v1678, %v1962
      %v1995 = vmul.f32 %v1680, %v1963
      %v1996 = vmul.f32 %v1682, %v1964
      %v1997 = vmul.f32 %v1684, %v1965
      %v1998 = vmul.f32 %v1688, %v1966
      %v1999 = vmul.f32 %v1690, %v1967
      %v2000 = vmul.f32 %v1692, %v1968
      %v2001 = vmul.f32 %v1694, %v1969
      %v2002 = vmul.f32 %v1698, %v1970
      %v2003 = vmul.f32 %v1700, %v1971
      %v2004 = vmul.f32 %v1702, %v1972
      %v2005 = vmul.f32 %v1704, %v1973
      %v2006 = vmul.f32 %v1708, %v1974
      %v2007 = vmul.f32 %v1710, %v1975
      %v2008 = vmul.f32 %v1712, %v1976
      %v2009 = vmul.f32 %v1714, %v1977
      %v2010 = vmul.f32 %v1718, %v1978
      %v2011 = vmul.f32 %v1720, %v1979
      %v2012 = vmul.f32 %v1722, %v1980
      %v2013 = vmul.f32 %v1724, %v1981
      %v2014 = vpack.c.bf16 %v1984, %v1982
      %v2015 = vpack.c.bf16 %v1985, %v1983
      %v2016 = vpack.c.bf16 %v1988, %v1986
      %v2017 = vpack.c.bf16 %v1989, %v1987
      %v2018 = vpack.c.bf16 %v1992, %v1990
      %v2019 = vpack.c.bf16 %v1993, %v1991
      %v2020 = vpack.c.bf16 %v1996, %v1994
      %v2021 = vpack.c.bf16 %v1997, %v1995
      %v2022 = vpack.c.bf16 %v2000, %v1998
      %v2023 = vpack.c.bf16 %v2001, %v1999
      %v2024 = vpack.c.bf16 %v2004, %v2002
      %v2025 = vpack.c.bf16 %v2005, %v2003
      %v2026 = vpack.c.bf16 %v2008, %v2006
      %v2027 = vpack.c.bf16 %v2009, %v2007
      %v2028 = vpack.c.bf16 %v2012, %v2010
      %v2029 = vpack.c.bf16 %v2013, %v2011
      %v2030 = vld [vmem:[%s3 + $0x100] sm:$0xff]
      %v2031 = vld [vmem:[%s3 + $0x108] sm:$0xff]
      %v2032 = vld [vmem:[%s3 + $0x110] sm:$0xff]
      %v2033 = vld [vmem:[%s3 + $0x118] sm:$0xff]
      %v2034 = vld [vmem:[%s3 + $0x120] sm:$0xff]
      %v2035 = vld [vmem:[%s3 + $0x128] sm:$0xff]
      %v2036 = vld [vmem:[%s3 + $0x130] sm:$0xff]
      %v2037 = vld [vmem:[%s3 + $0x138] sm:$0xff]
      %v2038 = vld [vmem:[%s3 + $0x140] sm:$0xff]
      %v2039 = vld [vmem:[%s3 + $0x148] sm:$0xff]
      %v2040 = vld [vmem:[%s3 + $0x150] sm:$0xff]
      %v2041 = vld [vmem:[%s3 + $0x158] sm:$0xff]
      %v2042 = vld [vmem:[%s3 + $0x160] sm:$0xff]
      %v2043 = vld [vmem:[%s3 + $0x168] sm:$0xff]
      %v2044 = vld [vmem:[%s3 + $0x170] sm:$0xff]
      %v2045 = vld [vmem:[%s3 + $0x178] sm:$0xff]
      %v2046 = vld [vmem:[%s3 + $0x180] sm:$0xff]
      %v2047 = vld [vmem:[%s3 + $0x188] sm:$0xff]
      %v2048 = vld [vmem:[%s3 + $0x190] sm:$0xff]
      %v2049 = vld [vmem:[%s3 + $0x198] sm:$0xff]
      %v2050 = vld [vmem:[%s3 + $0x1a0] sm:$0xff]
      %v2051 = vld [vmem:[%s3 + $0x1a8] sm:$0xff]
      %v2052 = vld [vmem:[%s3 + $0x1b0] sm:$0xff]
      %v2053 = vld [vmem:[%s3 + $0x1b8] sm:$0xff]
      %v2054 = vld [vmem:[%s3 + $0x1c0] sm:$0xff]
      %v2055 = vld [vmem:[%s3 + $0x1c8] sm:$0xff]
      %v2056 = vld [vmem:[%s3 + $0x1d0] sm:$0xff]
      %v2057 = vld [vmem:[%s3 + $0x1d8] sm:$0xff]
      %v2058 = vld [vmem:[%s3 + $0x1e0] sm:$0xff]
      %v2059 = vld [vmem:[%s3 + $0x1e8] sm:$0xff]
      %v2060 = vld [vmem:[%s3 + $0x1f0] sm:$0xff]
      %v2061 = vld [vmem:[%s3 + $0x1f8] sm:$0xff]
      %v2094 = vunpack.c.l.b16 %v2030
      %v2095 = vunpack.c.h.b16 %v2030
      %v2096 = vunpack.c.l.b16 %v2031
      %v2097 = vunpack.c.h.b16 %v2031
      %v2098 = vunpack.c.l.b16 %v2032
      %v2099 = vunpack.c.h.b16 %v2032
      %v2100 = vunpack.c.l.b16 %v2033
      %v2101 = vunpack.c.h.b16 %v2033
      %v2102 = vunpack.c.l.b16 %v2034
      %v2103 = vunpack.c.h.b16 %v2034
      %v2104 = vunpack.c.l.b16 %v2035
      %v2105 = vunpack.c.h.b16 %v2035
      %v2106 = vunpack.c.l.b16 %v2036
      %v2107 = vunpack.c.h.b16 %v2036
      %v2108 = vunpack.c.l.b16 %v2037
      %v2109 = vunpack.c.h.b16 %v2037
      %v2110 = vunpack.c.l.b16 %v2038
      %v2111 = vunpack.c.h.b16 %v2038
      %v2112 = vunpack.c.l.b16 %v2039
      %v2113 = vunpack.c.h.b16 %v2039
      %v2114 = vunpack.c.l.b16 %v2040
      %v2115 = vunpack.c.h.b16 %v2040
      %v2116 = vunpack.c.l.b16 %v2041
      %v2117 = vunpack.c.h.b16 %v2041
      %v2118 = vunpack.c.l.b16 %v2042
      %v2119 = vunpack.c.h.b16 %v2042
      %v2120 = vunpack.c.l.b16 %v2043
      %v2121 = vunpack.c.h.b16 %v2043
      %v2122 = vunpack.c.l.b16 %v2044
      %v2123 = vunpack.c.h.b16 %v2044
      %v2124 = vunpack.c.l.b16 %v2045
      %v2125 = vunpack.c.h.b16 %v2045
      %v2126 = vunpack.c.l.b16 %v2046
      %v2127 = vunpack.c.h.b16 %v2046
      %v2128 = vunpack.c.l.b16 %v2047
      %v2129 = vunpack.c.h.b16 %v2047
      %v2130 = vunpack.c.l.b16 %v2048
      %v2131 = vunpack.c.h.b16 %v2048
      %v2132 = vunpack.c.l.b16 %v2049
      %v2133 = vunpack.c.h.b16 %v2049
      %v2134 = vunpack.c.l.b16 %v2050
      %v2135 = vunpack.c.h.b16 %v2050
      %v2136 = vunpack.c.l.b16 %v2051
      %v2137 = vunpack.c.h.b16 %v2051
      %v2138 = vunpack.c.l.b16 %v2052
      %v2139 = vunpack.c.h.b16 %v2052
      %v2140 = vunpack.c.l.b16 %v2053
      %v2141 = vunpack.c.h.b16 %v2053
      %v2142 = vunpack.c.l.b16 %v2054
      %v2143 = vunpack.c.h.b16 %v2054
      %v2144 = vunpack.c.l.b16 %v2055
      %v2145 = vunpack.c.h.b16 %v2055
      %v2146 = vunpack.c.l.b16 %v2056
      %v2147 = vunpack.c.h.b16 %v2056
      %v2148 = vunpack.c.l.b16 %v2057
      %v2149 = vunpack.c.h.b16 %v2057
      %v2150 = vunpack.c.l.b16 %v2058
      %v2151 = vunpack.c.h.b16 %v2058
      %v2152 = vunpack.c.l.b16 %v2059
      %v2153 = vunpack.c.h.b16 %v2059
      %v2154 = vunpack.c.l.b16 %v2060
      %v2155 = vunpack.c.h.b16 %v2060
      %v2156 = vunpack.c.l.b16 %v2061
      %v2157 = vunpack.c.h.b16 %v2061
      %v2158 = vpack.c.b16 %v2096, %v2094
      %v2159 = vpack.c.b16 %v2097, %v2095
      %v2160 = vpack.c.b16 %v2100, %v2098
      %v2161 = vpack.c.b16 %v2101, %v2099
      %v2162 = vpack.c.b16 %v2104, %v2102
      %v2163 = vpack.c.b16 %v2105, %v2103
      %v2164 = vpack.c.b16 %v2108, %v2106
      %v2165 = vpack.c.b16 %v2109, %v2107
      %v2166 = vpack.c.b16 %v2112, %v2110
      %v2167 = vpack.c.b16 %v2113, %v2111
      %v2168 = vpack.c.b16 %v2116, %v2114
      %v2169 = vpack.c.b16 %v2117, %v2115
      %v2170 = vpack.c.b16 %v2120, %v2118
      %v2171 = vpack.c.b16 %v2121, %v2119
      %v2172 = vpack.c.b16 %v2124, %v2122
      %v2173 = vpack.c.b16 %v2125, %v2123
      %v2174 = vpack.c.b16 %v2128, %v2126
      %v2175 = vpack.c.b16 %v2129, %v2127
      %v2176 = vpack.c.b16 %v2132, %v2130
      %v2177 = vpack.c.b16 %v2133, %v2131
      %v2178 = vpack.c.b16 %v2136, %v2134
      %v2179 = vpack.c.b16 %v2137, %v2135
      %v2180 = vpack.c.b16 %v2140, %v2138
      %v2181 = vpack.c.b16 %v2141, %v2139
      %v2182 = vpack.c.b16 %v2144, %v2142
      %v2183 = vpack.c.b16 %v2145, %v2143
      %v2184 = vpack.c.b16 %v2148, %v2146
      %v2185 = vpack.c.b16 %v2149, %v2147
      %v2186 = vpack.c.b16 %v2152, %v2150
      %v2187 = vpack.c.b16 %v2153, %v2151
      %v2188 = vpack.c.b16 %v2156, %v2154
      %v2189 = vpack.c.b16 %v2157, %v2155
      %2222 = vmatprep.subr.bf16.mxu0 %v2159
      %2223 = vmatpush1.bf16.msra.mxu0 %v2158
      %2224 = vmatprep.subr.bf16.mxu0 %v2161
      %2225 = vmatpush1.bf16.msra.mxu0 %v2160
      %2226 = vmatprep.subr.bf16.mxu0 %v2163
      %2227 = vmatpush1.bf16.msra.mxu0 %v2162
      %2228 = vmatprep.subr.bf16.mxu0 %v2165
      %2229 = vmatpush1.bf16.msra.mxu0 %v2164
      %2230 = vmatprep.subr.bf16.mxu0 %v2167
      %2231 = vmatpush1.bf16.msra.mxu0 %v2166
      %2232 = vmatprep.subr.bf16.mxu0 %v2169
      %2233 = vmatpush1.bf16.msra.mxu0 %v2168
      %2234 = vmatprep.subr.bf16.mxu0 %v2171
      %2235 = vmatpush1.bf16.msra.mxu0 %v2170
      %2236 = vmatprep.subr.bf16.mxu0 %v2173
      %2237 = vmatpush1.bf16.msra.mxu0 %v2172
      %2238 = vmatprep.subr.bf16.mxu0 %v2175
      %2239 = vmatpush1.bf16.msra.mxu0 %v2174
      %2240 = vmatprep.subr.bf16.mxu0 %v2177
      %2241 = vmatpush1.bf16.msra.mxu0 %v2176
      %2242 = vmatprep.subr.bf16.mxu0 %v2179
      %2243 = vmatpush1.bf16.msra.mxu0 %v2178
      %2244 = vmatprep.subr.bf16.mxu0 %v2181
      %2245 = vmatpush1.bf16.msra.mxu0 %v2180
      %2246 = vmatprep.subr.bf16.mxu0 %v2183
      %2247 = vmatpush1.bf16.msra.mxu0 %v2182
      %2248 = vmatprep.subr.bf16.mxu0 %v2185
      %2249 = vmatpush1.bf16.msra.mxu0 %v2184
      %2250 = vmatprep.subr.bf16.mxu0 %v2187
      %2251 = vmatpush1.bf16.msra.mxu0 %v2186
      %2252 = vmatprep.subr.bf16.mxu0 %v2189
      %2253 = vmatpush1.bf16.msra.mxu0 %v2188
      %2254 = vmatprep.mubr.bf16.mxu0 %v2015
      %2255 = vmatmul.mubr.bf16.gmra.mrb[0].mxu0 %v2014
      %v2256 = vpop.f32.mrb[0].mxu0
      %v2257 = vadd.f32 0.0, %v2256
      %v2258 = vpop.f32.mrb[0].mxu0
      %v2259 = vadd.f32 0.0, %v2258
      %v2260 = vpop.f32.mrb[0].mxu0
      %v2261 = vadd.f32 0.0, %v2260
      %v2262 = vpop.f32.mrb[0].mxu0
      %v2263 = vadd.f32 0.0, %v2262
      %2264 = vmatprep.mubr.bf16.mxu0 %v2017
      %2265 = vmatmul.mubr.bf16.gmra.mrb[0].mxu0 %v2016
      %v2266 = vpop.f32.mrb[0].mxu0
      %v2267 = vadd.f32 0.0, %v2266
      %v2268 = vpop.f32.mrb[0].mxu0
      %v2269 = vadd.f32 0.0, %v2268
      %v2270 = vpop.f32.mrb[0].mxu0
      %v2271 = vadd.f32 0.0, %v2270
      %v2272 = vpop.f32.mrb[0].mxu0
      %v2273 = vadd.f32 0.0, %v2272
      %2274 = vmatprep.mubr.bf16.mxu0 %v2019
      %2275 = vmatmul.mubr.bf16.gmra.mrb[0].mxu0 %v2018
      %v2276 = vpop.f32.mrb[0].mxu0
      %v2277 = vadd.f32 0.0, %v2276
      %v2278 = vpop.f32.mrb[0].mxu0
      %v2279 = vadd.f32 0.0, %v2278
      %v2280 = vpop.f32.mrb[0].mxu0
      %v2281 = vadd.f32 0.0, %v2280
      %v2282 = vpop.f32.mrb[0].mxu0
      %v2283 = vadd.f32 0.0, %v2282
      %2284 = vmatprep.mubr.bf16.mxu0 %v2021
      %2285 = vmatmul.mubr.bf16.gmra.mrb[0].mxu0 %v2020
      %v2286 = vpop.f32.mrb[0].mxu0
      %v2287 = vadd.f32 0.0, %v2286
      %v2288 = vpop.f32.mrb[0].mxu0
      %v2289 = vadd.f32 0.0, %v2288
      %v2290 = vpop.f32.mrb[0].mxu0
      %v2291 = vadd.f32 0.0, %v2290
      %v2292 = vpop.f32.mrb[0].mxu0
      %v2293 = vadd.f32 0.0, %v2292
      %2294 = vmatprep.mubr.bf16.mxu0 %v2023
      %2295 = vmatmul.mubr.bf16.gmra.mrb[0].mxu0 %v2022
      %v2296 = vpop.f32.mrb[0].mxu0
      %v2297 = vadd.f32 0.0, %v2296
      %v2298 = vpop.f32.mrb[0].mxu0
      %v2299 = vadd.f32 0.0, %v2298
      %v2300 = vpop.f32.mrb[0].mxu0
      %v2301 = vadd.f32 0.0, %v2300
      %v2302 = vpop.f32.mrb[0].mxu0
      %v2303 = vadd.f32 0.0, %v2302
      %2304 = vmatprep.mubr.bf16.mxu0 %v2025
      %2305 = vmatmul.mubr.bf16.gmra.mrb[0].mxu0 %v2024
      %v2306 = vpop.f32.mrb[0].mxu0
      %v2307 = vadd.f32 0.0, %v2306
      %v2308 = vpop.f32.mrb[0].mxu0
      %v2309 = vadd.f32 0.0, %v2308
      %v2310 = vpop.f32.mrb[0].mxu0
      %v2311 = vadd.f32 0.0, %v2310
      %v2312 = vpop.f32.mrb[0].mxu0
      %v2313 = vadd.f32 0.0, %v2312
      %2314 = vmatprep.mubr.bf16.mxu0 %v2027
      %2315 = vmatmul.mubr.bf16.gmra.mrb[0].mxu0 %v2026
      %v2316 = vpop.f32.mrb[0].mxu0
      %v2317 = vadd.f32 0.0, %v2316
      %v2318 = vpop.f32.mrb[0].mxu0
      %v2319 = vadd.f32 0.0, %v2318
      %v2320 = vpop.f32.mrb[0].mxu0
      %v2321 = vadd.f32 0.0, %v2320
      %v2322 = vpop.f32.mrb[0].mxu0
      %v2323 = vadd.f32 0.0, %v2322
      %2324 = vmatprep.mubr.bf16.mxu0 %v2029
      %2325 = vmatmul.mubr.bf16.gmra.mrb[0].mxu0 %v2028
      %v2326 = vpop.f32.mrb[0].mxu0
      %v2327 = vadd.f32 0.0, %v2326
      %v2328 = vpop.f32.mrb[0].mxu0
      %v2329 = vadd.f32 0.0, %v2328
      %v2330 = vpop.f32.mrb[0].mxu0
      %v2331 = vadd.f32 0.0, %v2330
      %v2332 = vpop.f32.mrb[0].mxu0
      %v2333 = vadd.f32 0.0, %v2332
      %2334 = vdwg.mxu0
      %v2335 = vadd.f32 %v1377, %v2257
      %v2336 = vadd.f32 %v1378, %v2259
      %v2337 = vadd.f32 %v1379, %v2261
      %v2338 = vadd.f32 %v1380, %v2263
      %v2339 = vadd.f32 %v1381, %v2267
      %v2340 = vadd.f32 %v1382, %v2269
      %v2341 = vadd.f32 %v1383, %v2271
      %v2342 = vadd.f32 %v1384, %v2273
      %v2343 = vadd.f32 %v1385, %v2277
      %v2344 = vadd.f32 %v1386, %v2279
      %v2345 = vadd.f32 %v1387, %v2281
      %v2346 = vadd.f32 %v1388, %v2283
      %v2347 = vadd.f32 %v1389, %v2287
      %v2348 = vadd.f32 %v1390, %v2289
      %v2349 = vadd.f32 %v1391, %v2291
      %v2350 = vadd.f32 %v1392, %v2293
      %v2351 = vadd.f32 %v1393, %v2297
      %v2352 = vadd.f32 %v1394, %v2299
      %v2353 = vadd.f32 %v1395, %v2301
      %v2354 = vadd.f32 %v1396, %v2303
      %v2355 = vadd.f32 %v1397, %v2307
      %v2356 = vadd.f32 %v1398, %v2309
      %v2357 = vadd.f32 %v1399, %v2311
      %v2358 = vadd.f32 %v1400, %v2313
      %v2359 = vadd.f32 %v1401, %v2317
      %v2360 = vadd.f32 %v1402, %v2319
      %v2361 = vadd.f32 %v1403, %v2321
      %v2362 = vadd.f32 %v1404, %v2323
      %v2363 = vadd.f32 %v1405, %v2327
      %v2364 = vadd.f32 %v1406, %v2329
      %v2365 = vadd.f32 %v1407, %v2331
      %v2366 = vadd.f32 %v1408, %v2333
      %v2367 = vld [vmem:[%s1 + $0x10] sm:$0xff]
      %v2368 = vld [vmem:[%s1 + $0x30] sm:$0xff]
      %v2369 = vld [vmem:[%s1 + $0x50] sm:$0xff]
      %v2370 = vld [vmem:[%s1 + $0x70] sm:$0xff]
      %v2371 = vld [vmem:[%s1 + $0x90] sm:$0xff]
      %v2372 = vld [vmem:[%s1 + $0xb0] sm:$0xff]
      %v2373 = vld [vmem:[%s1 + $0xd0] sm:$0xff]
      %v2374 = vld [vmem:[%s1 + $0xf0] sm:$0xff]
      %v2375 = vld [vmem:[%s1 + $0x110] sm:$0xff]
      %v2376 = vld [vmem:[%s1 + $0x130] sm:$0xff]
      %v2377 = vld [vmem:[%s1 + $0x150] sm:$0xff]
      %v2378 = vld [vmem:[%s1 + $0x170] sm:$0xff]
      %v2379 = vld [vmem:[%s1 + $0x190] sm:$0xff]
      %v2380 = vld [vmem:[%s1 + $0x1b0] sm:$0xff]
      %v2381 = vld [vmem:[%s1 + $0x1d0] sm:$0xff]
      %v2382 = vld [vmem:[%s1 + $0x1f0] sm:$0xff]
      %v2383 = vld [vmem:[%s1 + $0x210] sm:$0xff]
      %v2384 = vld [vmem:[%s1 + $0x230] sm:$0xff]
      %v2385 = vld [vmem:[%s1 + $0x250] sm:$0xff]
      %v2386 = vld [vmem:[%s1 + $0x270] sm:$0xff]
      %v2387 = vld [vmem:[%s1 + $0x290] sm:$0xff]
      %v2388 = vld [vmem:[%s1 + $0x2b0] sm:$0xff]
      %v2389 = vld [vmem:[%s1 + $0x2d0] sm:$0xff]
      %v2390 = vld [vmem:[%s1 + $0x2f0] sm:$0xff]
      %v2391 = vld [vmem:[%s1 + $0x310] sm:$0xff]
      %v2392 = vld [vmem:[%s1 + $0x330] sm:$0xff]
      %v2393 = vld [vmem:[%s1 + $0x350] sm:$0xff]
      %v2394 = vld [vmem:[%s1 + $0x370] sm:$0xff]
      %v2395 = vld [vmem:[%s1 + $0x390] sm:$0xff]
      %v2396 = vld [vmem:[%s1 + $0x3b0] sm:$0xff]
      %v2397 = vld [vmem:[%s1 + $0x3d0] sm:$0xff]
      %v2398 = vld [vmem:[%s1 + $0x3f0] sm:$0xff]
      %v2399 = vld [vmem:[%s2 + $0x4] sm:$0x3]
      %v2401 = vlaneseq
      %v2402 = vshrl.u32 %v2401, 7
      %v2403 = vsub.s32 0, %v2402
      %v2404 = vrot.slane %v2399, %v2403
      %v2405 = vlaneseq
      %v2406 = vshrl.u32 %v2405, 7
      %v2407 = vsub.s32 1, %v2406
      %v2408 = vrot.slane %v2399, %v2407
      %v2443 = vunpack.c.l.b16 %v2367
      %v2444 = vunpack.c.h.b16 %v2367
      %v2445 = vunpack.c.l.b16 %v2368
      %v2446 = vunpack.c.h.b16 %v2368
      %v2447 = vunpack.c.l.b16 %v2369
      %v2448 = vunpack.c.h.b16 %v2369
      %v2449 = vunpack.c.l.b16 %v2370
      %v2450 = vunpack.c.h.b16 %v2370
      %v2451 = vunpack.c.l.b16 %v2371
      %v2452 = vunpack.c.h.b16 %v2371
      %v2453 = vunpack.c.l.b16 %v2372
      %v2454 = vunpack.c.h.b16 %v2372
      %v2455 = vunpack.c.l.b16 %v2373
      %v2456 = vunpack.c.h.b16 %v2373
      %v2457 = vunpack.c.l.b16 %v2374
      %v2458 = vunpack.c.h.b16 %v2374
      %v2459 = vunpack.c.l.b16 %v2375
      %v2460 = vunpack.c.h.b16 %v2375
      %v2461 = vunpack.c.l.b16 %v2376
      %v2462 = vunpack.c.h.b16 %v2376
      %v2463 = vunpack.c.l.b16 %v2377
      %v2464 = vunpack.c.h.b16 %v2377
      %v2465 = vunpack.c.l.b16 %v2378
      %v2466 = vunpack.c.h.b16 %v2378
      %v2467 = vunpack.c.l.b16 %v2379
      %v2468 = vunpack.c.h.b16 %v2379
      %v2469 = vunpack.c.l.b16 %v2380
      %v2470 = vunpack.c.h.b16 %v2380
      %v2471 = vunpack.c.l.b16 %v2381
      %v2472 = vunpack.c.h.b16 %v2381
      %v2473 = vunpack.c.l.b16 %v2382
      %v2474 = vunpack.c.h.b16 %v2382
      %v2475 = vunpack.c.l.b16 %v2383
      %v2476 = vunpack.c.h.b16 %v2383
      %v2477 = vunpack.c.l.b16 %v2384
      %v2478 = vunpack.c.h.b16 %v2384
      %v2479 = vunpack.c.l.b16 %v2385
      %v2480 = vunpack.c.h.b16 %v2385
      %v2481 = vunpack.c.l.b16 %v2386
      %v2482 = vunpack.c.h.b16 %v2386
      %v2483 = vunpack.c.l.b16 %v2387
      %v2484 = vunpack.c.h.b16 %v2387
      %v2485 = vunpack.c.l.b16 %v2388
      %v2486 = vunpack.c.h.b16 %v2388
      %v2487 = vunpack.c.l.b16 %v2389
      %v2488 = vunpack.c.h.b16 %v2389
      %v2489 = vunpack.c.l.b16 %v2390
      %v2490 = vunpack.c.h.b16 %v2390
      %v2491 = vunpack.c.l.b16 %v2391
      %v2492 = vunpack.c.h.b16 %v2391
      %v2493 = vunpack.c.l.b16 %v2392
      %v2494 = vunpack.c.h.b16 %v2392
      %v2495 = vunpack.c.l.b16 %v2393
      %v2496 = vunpack.c.h.b16 %v2393
      %v2497 = vunpack.c.l.b16 %v2394
      %v2498 = vunpack.c.h.b16 %v2394
      %v2499 = vunpack.c.l.b16 %v2395
      %v2500 = vunpack.c.h.b16 %v2395
      %v2501 = vunpack.c.l.b16 %v2396
      %v2502 = vunpack.c.h.b16 %v2396
      %v2503 = vunpack.c.l.b16 %v2397
      %v2504 = vunpack.c.h.b16 %v2397
      %v2505 = vunpack.c.l.b16 %v2398
      %v2506 = vunpack.c.h.b16 %v2398
      %v2507 = vpack.c.b16 %v2445, %v2443
      %v2508 = vpack.c.b16 %v2446, %v2444
      %v2509 = vpack.c.b16 %v2449, %v2447
      %v2510 = vpack.c.b16 %v2450, %v2448
      %v2511 = vpack.c.b16 %v2453, %v2451
      %v2512 = vpack.c.b16 %v2454, %v2452
      %v2513 = vpack.c.b16 %v2457, %v2455
      %v2514 = vpack.c.b16 %v2458, %v2456
      %v2515 = vpack.c.b16 %v2461, %v2459
      %v2516 = vpack.c.b16 %v2462, %v2460
      %v2517 = vpack.c.b16 %v2465, %v2463
      %v2518 = vpack.c.b16 %v2466, %v2464
      %v2519 = vpack.c.b16 %v2469, %v2467
      %v2520 = vpack.c.b16 %v2470, %v2468
      %v2521 = vpack.c.b16 %v2473, %v2471
      %v2522 = vpack.c.b16 %v2474, %v2472
      %v2523 = vpack.c.b16 %v2477, %v2475
      %v2524 = vpack.c.b16 %v2478, %v2476
      %v2525 = vpack.c.b16 %v2481, %v2479
      %v2526 = vpack.c.b16 %v2482, %v2480
      %v2527 = vpack.c.b16 %v2485, %v2483
      %v2528 = vpack.c.b16 %v2486, %v2484
      %v2529 = vpack.c.b16 %v2489, %v2487
      %v2530 = vpack.c.b16 %v2490, %v2488
      %v2531 = vpack.c.b16 %v2493, %v2491
      %v2532 = vpack.c.b16 %v2494, %v2492
      %v2533 = vpack.c.b16 %v2497, %v2495
      %v2534 = vpack.c.b16 %v2498, %v2496
      %v2535 = vpack.c.b16 %v2501, %v2499
      %v2536 = vpack.c.b16 %v2502, %v2500
      %v2537 = vpack.c.b16 %v2505, %v2503
      %v2538 = vpack.c.b16 %v2506, %v2504
      %2571 = vmatprep.subr.bf16.mxu0 %v2508
      %2572 = vmatpush1.bf16.msra.mxu0 %v2507
      %2573 = vmatprep.subr.bf16.mxu0 %v2510
      %2574 = vmatpush1.bf16.msra.mxu0 %v2509
      %2575 = vmatprep.subr.bf16.mxu0 %v2512
      %2576 = vmatpush1.bf16.msra.mxu0 %v2511
      %2577 = vmatprep.subr.bf16.mxu0 %v2514
      %2578 = vmatpush1.bf16.msra.mxu0 %v2513
      %2579 = vmatprep.subr.bf16.mxu0 %v2516
      %2580 = vmatpush1.bf16.msra.mxu0 %v2515
      %2581 = vmatprep.subr.bf16.mxu0 %v2518
      %2582 = vmatpush1.bf16.msra.mxu0 %v2517
      %2583 = vmatprep.subr.bf16.mxu0 %v2520
      %2584 = vmatpush1.bf16.msra.mxu0 %v2519
      %2585 = vmatprep.subr.bf16.mxu0 %v2522
      %2586 = vmatpush1.bf16.msra.mxu0 %v2521
      %2587 = vmatprep.subr.bf16.mxu0 %v2524
      %2588 = vmatpush1.bf16.msra.mxu0 %v2523
      %2589 = vmatprep.subr.bf16.mxu0 %v2526
      %2590 = vmatpush1.bf16.msra.mxu0 %v2525
      %2591 = vmatprep.subr.bf16.mxu0 %v2528
      %2592 = vmatpush1.bf16.msra.mxu0 %v2527
      %2593 = vmatprep.subr.bf16.mxu0 %v2530
      %2594 = vmatpush1.bf16.msra.mxu0 %v2529
      %2595 = vmatprep.subr.bf16.mxu0 %v2532
      %2596 = vmatpush1.bf16.msra.mxu0 %v2531
      %2597 = vmatprep.subr.bf16.mxu0 %v2534
      %2598 = vmatpush1.bf16.msra.mxu0 %v2533
      %2599 = vmatprep.subr.bf16.mxu0 %v2536
      %2600 = vmatpush1.bf16.msra.mxu0 %v2535
      %2601 = vmatprep.subr.bf16.mxu0 %v2538
      %2602 = vmatpush1.bf16.msra.mxu0 %v2537
      %2603 = vmatprep.mubr.bf16.mxu0 %v464
      %2604 = vmatmul.mubr.bf16.gmra.mrb[0].mxu0 %v463
      %v2605 = vpop.f32.mrb[0].mxu0
      %v2606 = vadd.f32 %v2404, %v2605
      %v2607 = vpop.f32.mrb[0].mxu0
      %v2608 = vadd.f32 %v2408, %v2607
      %v2609 = vpop.f32.mrb[0].mxu0
      %v2610 = vadd.f32 %v2404, %v2609
      %v2611 = vpop.f32.mrb[0].mxu0
      %v2612 = vadd.f32 %v2408, %v2611
      %2613 = vmatprep.mubr.bf16.mxu0 %v466
      %2614 = vmatmul.mubr.bf16.gmra.mrb[0].mxu0 %v465
      %v2615 = vpop.f32.mrb[0].mxu0
      %v2616 = vadd.f32 %v2404, %v2615
      %v2617 = vpop.f32.mrb[0].mxu0
      %v2618 = vadd.f32 %v2408, %v2617
      %v2619 = vpop.f32.mrb[0].mxu0
      %v2620 = vadd.f32 %v2404, %v2619
      %v2621 = vpop.f32.mrb[0].mxu0
      %v2622 = vadd.f32 %v2408, %v2621
      %2623 = vmatprep.mubr.bf16.mxu0 %v468
      %2624 = vmatmul.mubr.bf16.gmra.mrb[0].mxu0 %v467
      %v2625 = vpop.f32.mrb[0].mxu0
      %v2626 = vadd.f32 %v2404, %v2625
      %v2627 = vpop.f32.mrb[0].mxu0
      %v2628 = vadd.f32 %v2408, %v2627
      %v2629 = vpop.f32.mrb[0].mxu0
      %v2630 = vadd.f32 %v2404, %v2629
      %v2631 = vpop.f32.mrb[0].mxu0
      %v2632 = vadd.f32 %v2408, %v2631
      %2633 = vmatprep.mubr.bf16.mxu0 %v470
      %2634 = vmatmul.mubr.bf16.gmra.mrb[0].mxu0 %v469
      %v2635 = vpop.f32.mrb[0].mxu0
      %v2636 = vadd.f32 %v2404, %v2635
      %v2637 = vpop.f32.mrb[0].mxu0
      %v2638 = vadd.f32 %v2408, %v2637
      %v2639 = vpop.f32.mrb[0].mxu0
      %v2640 = vadd.f32 %v2404, %v2639
      %v2641 = vpop.f32.mrb[0].mxu0
      %v2642 = vadd.f32 %v2408, %v2641
      %2643 = vmatprep.mubr.bf16.mxu0 %v472
      %2644 = vmatmul.mubr.bf16.gmra.mrb[0].mxu0 %v471
      %v2645 = vpop.f32.mrb[0].mxu0
      %v2646 = vadd.f32 %v2404, %v2645
      %v2647 = vpop.f32.mrb[0].mxu0
      %v2648 = vadd.f32 %v2408, %v2647
      %v2649 = vpop.f32.mrb[0].mxu0
      %v2650 = vadd.f32 %v2404, %v2649
      %v2651 = vpop.f32.mrb[0].mxu0
      %v2652 = vadd.f32 %v2408, %v2651
      %2653 = vmatprep.mubr.bf16.mxu0 %v474
      %2654 = vmatmul.mubr.bf16.gmra.mrb[0].mxu0 %v473
      %v2655 = vpop.f32.mrb[0].mxu0
      %v2656 = vadd.f32 %v2404, %v2655
      %v2657 = vpop.f32.mrb[0].mxu0
      %v2658 = vadd.f32 %v2408, %v2657
      %v2659 = vpop.f32.mrb[0].mxu0
      %v2660 = vadd.f32 %v2404, %v2659
      %v2661 = vpop.f32.mrb[0].mxu0
      %v2662 = vadd.f32 %v2408, %v2661
      %2663 = vmatprep.mubr.bf16.mxu0 %v476
      %2664 = vmatmul.mubr.bf16.gmra.mrb[0].mxu0 %v475
      %v2665 = vpop.f32.mrb[0].mxu0
      %v2666 = vadd.f32 %v2404, %v2665
      %v2667 = vpop.f32.mrb[0].mxu0
      %v2668 = vadd.f32 %v2408, %v2667
      %v2669 = vpop.f32.mrb[0].mxu0
      %v2670 = vadd.f32 %v2404, %v2669
      %v2671 = vpop.f32.mrb[0].mxu0
      %v2672 = vadd.f32 %v2408, %v2671
      %2673 = vmatprep.mubr.bf16.mxu0 %v478
      %2674 = vmatmul.mubr.bf16.gmra.mrb[0].mxu0 %v477
      %v2675 = vpop.f32.mrb[0].mxu0
      %v2676 = vadd.f32 %v2404, %v2675
      %v2677 = vpop.f32.mrb[0].mxu0
      %v2678 = vadd.f32 %v2408, %v2677
      %v2679 = vpop.f32.mrb[0].mxu0
      %v2680 = vadd.f32 %v2404, %v2679
      %v2681 = vpop.f32.mrb[0].mxu0
      %v2682 = vadd.f32 %v2408, %v2681
      %2683 = vdwg.mxu0
      %v2684 = vmul.f32 %v2606, %v2606
      %v2685 = vmul.f32 %v2608, %v2608
      %v2686 = vmul.f32 %v2610, %v2610
      %v2687 = vmul.f32 %v2612, %v2612
      %v2688 = vmul.f32 %v2616, %v2616
      %v2689 = vmul.f32 %v2618, %v2618
      %v2690 = vmul.f32 %v2620, %v2620
      %v2691 = vmul.f32 %v2622, %v2622
      %v2692 = vmul.f32 %v2626, %v2626
      %v2693 = vmul.f32 %v2628, %v2628
      %v2694 = vmul.f32 %v2630, %v2630
      %v2695 = vmul.f32 %v2632, %v2632
      %v2696 = vmul.f32 %v2636, %v2636
      %v2697 = vmul.f32 %v2638, %v2638
      %v2698 = vmul.f32 %v2640, %v2640
      %v2699 = vmul.f32 %v2642, %v2642
      %v2700 = vmul.f32 %v2646, %v2646
      %v2701 = vmul.f32 %v2648, %v2648
      %v2702 = vmul.f32 %v2650, %v2650
      %v2703 = vmul.f32 %v2652, %v2652
      %v2704 = vmul.f32 %v2656, %v2656
      %v2705 = vmul.f32 %v2658, %v2658
      %v2706 = vmul.f32 %v2660, %v2660
      %v2707 = vmul.f32 %v2662, %v2662
      %v2708 = vmul.f32 %v2666, %v2666
      %v2709 = vmul.f32 %v2668, %v2668
      %v2710 = vmul.f32 %v2670, %v2670
      %v2711 = vmul.f32 %v2672, %v2672
      %v2712 = vmul.f32 %v2676, %v2676
      %v2713 = vmul.f32 %v2678, %v2678
      %v2714 = vmul.f32 %v2680, %v2680
      %v2715 = vmul.f32 %v2682, %v2682
      %v2716 = vmul.f32 %v2606, %v2684
      %v2717 = vmul.f32 %v2608, %v2685
      %v2718 = vmul.f32 %v2610, %v2686
      %v2719 = vmul.f32 %v2612, %v2687
      %v2720 = vmul.f32 %v2616, %v2688
      %v2721 = vmul.f32 %v2618, %v2689
      %v2722 = vmul.f32 %v2620, %v2690
      %v2723 = vmul.f32 %v2622, %v2691
      %v2724 = vmul.f32 %v2626, %v2692
      %v2725 = vmul.f32 %v2628, %v2693
      %v2726 = vmul.f32 %v2630, %v2694
      %v2727 = vmul.f32 %v2632, %v2695
      %v2728 = vmul.f32 %v2636, %v2696
      %v2729 = vmul.f32 %v2638, %v2697
      %v2730 = vmul.f32 %v2640, %v2698
      %v2731 = vmul.f32 %v2642, %v2699
      %v2732 = vmul.f32 %v2646, %v2700
      %v2733 = vmul.f32 %v2648, %v2701
      %v2734 = vmul.f32 %v2650, %v2702
      %v2735 = vmul.f32 %v2652, %v2703
      %v2736 = vmul.f32 %v2656, %v2704
      %v2737 = vmul.f32 %v2658, %v2705
      %v2738 = vmul.f32 %v2660, %v2706
      %v2739 = vmul.f32 %v2662, %v2707
      %v2740 = vmul.f32 %v2666, %v2708
      %v2741 = vmul.f32 %v2668, %v2709
      %v2742 = vmul.f32 %v2670, %v2710
      %v2743 = vmul.f32 %v2672, %v2711
      %v2744 = vmul.f32 %v2676, %v2712
      %v2745 = vmul.f32 %v2678, %v2713
      %v2746 = vmul.f32 %v2680, %v2714
      %v2747 = vmul.f32 %v2682, %v2715
      %v2748 = vmul.f32 %v2716, 0.044715
      %v2749 = vmul.f32 %v2717, 0.044715
      %v2750 = vmul.f32 %v2718, 0.044715
      %v2751 = vmul.f32 %v2719, 0.044715
      %v2752 = vmul.f32 %v2720, 0.044715
      %v2753 = vmul.f32 %v2721, 0.044715
      %v2754 = vmul.f32 %v2722, 0.044715
      %v2755 = vmul.f32 %v2723, 0.044715
      %v2756 = vmul.f32 %v2724, 0.044715
      %v2757 = vmul.f32 %v2725, 0.044715
      %v2758 = vmul.f32 %v2726, 0.044715
      %v2759 = vmul.f32 %v2727, 0.044715
      %v2760 = vmul.f32 %v2728, 0.044715
      %v2761 = vmul.f32 %v2729, 0.044715
      %v2762 = vmul.f32 %v2730, 0.044715
      %v2763 = vmul.f32 %v2731, 0.044715
      %v2764 = vmul.f32 %v2732, 0.044715
      %v2765 = vmul.f32 %v2733, 0.044715
      %v2766 = vmul.f32 %v2734, 0.044715
      %v2767 = vmul.f32 %v2735, 0.044715
      %v2768 = vmul.f32 %v2736, 0.044715
      %v2769 = vmul.f32 %v2737, 0.044715
      %v2770 = vmul.f32 %v2738, 0.044715
      %v2771 = vmul.f32 %v2739, 0.044715
      %v2772 = vmul.f32 %v2740, 0.044715
      %v2773 = vmul.f32 %v2741, 0.044715
      %v2774 = vmul.f32 %v2742, 0.044715
      %v2775 = vmul.f32 %v2743, 0.044715
      %v2776 = vmul.f32 %v2744, 0.044715
      %v2777 = vmul.f32 %v2745, 0.044715
      %v2778 = vmul.f32 %v2746, 0.044715
      %v2779 = vmul.f32 %v2747, 0.044715
      %v2780 = vadd.f32 %v2606, %v2748
      %v2781 = vadd.f32 %v2608, %v2749
      %v2782 = vadd.f32 %v2610, %v2750
      %v2783 = vadd.f32 %v2612, %v2751
      %v2784 = vadd.f32 %v2616, %v2752
      %v2785 = vadd.f32 %v2618, %v2753
      %v2786 = vadd.f32 %v2620, %v2754
      %v2787 = vadd.f32 %v2622, %v2755
      %v2788 = vadd.f32 %v2626, %v2756
      %v2789 = vadd.f32 %v2628, %v2757
      %v2790 = vadd.f32 %v2630, %v2758
      %v2791 = vadd.f32 %v2632, %v2759
      %v2792 = vadd.f32 %v2636, %v2760
      %v2793 = vadd.f32 %v2638, %v2761
      %v2794 = vadd.f32 %v2640, %v2762
      %v2795 = vadd.f32 %v2642, %v2763
      %v2796 = vadd.f32 %v2646, %v2764
      %v2797 = vadd.f32 %v2648, %v2765
      %v2798 = vadd.f32 %v2650, %v2766
      %v2799 = vadd.f32 %v2652, %v2767
      %v2800 = vadd.f32 %v2656, %v2768
      %v2801 = vadd.f32 %v2658, %v2769
      %v2802 = vadd.f32 %v2660, %v2770
      %v2803 = vadd.f32 %v2662, %v2771
      %v2804 = vadd.f32 %v2666, %v2772
      %v2805 = vadd.f32 %v2668, %v2773
      %v2806 = vadd.f32 %v2670, %v2774
      %v2807 = vadd.f32 %v2672, %v2775
      %v2808 = vadd.f32 %v2676, %v2776
      %v2809 = vadd.f32 %v2678, %v2777
      %v2810 = vadd.f32 %v2680, %v2778
      %v2811 = vadd.f32 %v2682, %v2779
      %v2812 = vmul.f32 %v2780, 0.7978846
      %v2813 = vmul.f32 %v2781, 0.7978846
      %v2814 = vmul.f32 %v2782, 0.7978846
      %v2815 = vmul.f32 %v2783, 0.7978846
      %v2816 = vmul.f32 %v2784, 0.7978846
      %v2817 = vmul.f32 %v2785, 0.7978846
      %v2818 = vmul.f32 %v2786, 0.7978846
      %v2819 = vmul.f32 %v2787, 0.7978846
      %v2820 = vmul.f32 %v2788, 0.7978846
      %v2821 = vmul.f32 %v2789, 0.7978846
      %v2822 = vmul.f32 %v2790, 0.7978846
      %v2823 = vmul.f32 %v2791, 0.7978846
      %v2824 = vmul.f32 %v2792, 0.7978846
      %v2825 = vmul.f32 %v2793, 0.7978846
      %v2826 = vmul.f32 %v2794, 0.7978846
      %v2827 = vmul.f32 %v2795, 0.7978846
      %v2828 = vmul.f32 %v2796, 0.7978846
      %v2829 = vmul.f32 %v2797, 0.7978846
      %v2830 = vmul.f32 %v2798, 0.7978846
      %v2831 = vmul.f32 %v2799, 0.7978846
      %v2832 = vmul.f32 %v2800, 0.7978846
      %v2833 = vmul.f32 %v2801, 0.7978846
      %v2834 = vmul.f32 %v2802, 0.7978846
      %v2835 = vmul.f32 %v2803, 0.7978846
      %v2836 = vmul.f32 %v2804, 0.7978846
      %v2837 = vmul.f32 %v2805, 0.7978846
      %v2838 = vmul.f32 %v2806, 0.7978846
      %v2839 = vmul.f32 %v2807, 0.7978846
      %v2840 = vmul.f32 %v2808, 0.7978846
      %v2841 = vmul.f32 %v2809, 0.7978846
      %v2842 = vmul.f32 %v2810, 0.7978846
      %v2843 = vmul.f32 %v2811, 0.7978846
      %v2844 = vtanh.pop %v2812
      %v2845 = vtanh.pop %v2813
      %v2846 = vtanh.pop %v2814
      %v2847 = vtanh.pop %v2815
      %v2848 = vtanh.pop %v2816
      %v2849 = vtanh.pop %v2817
      %v2850 = vtanh.pop %v2818
      %v2851 = vtanh.pop %v2819
      %v2852 = vtanh.pop %v2820
      %v2853 = vtanh.pop %v2821
      %v2854 = vtanh.pop %v2822
      %v2855 = vtanh.pop %v2823
      %v2856 = vtanh.pop %v2824
      %v2857 = vtanh.pop %v2825
      %v2858 = vtanh.pop %v2826
      %v2859 = vtanh.pop %v2827
      %v2860 = vtanh.pop %v2828
      %v2861 = vtanh.pop %v2829
      %v2862 = vtanh.pop %v2830
      %v2863 = vtanh.pop %v2831
      %v2864 = vtanh.pop %v2832
      %v2865 = vtanh.pop %v2833
      %v2866 = vtanh.pop %v2834
      %v2867 = vtanh.pop %v2835
      %v2868 = vtanh.pop %v2836
      %v2869 = vtanh.pop %v2837
      %v2870 = vtanh.pop %v2838
      %v2871 = vtanh.pop %v2839
      %v2872 = vtanh.pop %v2840
      %v2873 = vtanh.pop %v2841
      %v2874 = vtanh.pop %v2842
      %v2875 = vtanh.pop %v2843
      %v2876 = vadd.f32 %v2844, 1.0
      %v2877 = vadd.f32 %v2845, 1.0
      %v2878 = vadd.f32 %v2846, 1.0
      %v2879 = vadd.f32 %v2847, 1.0
      %v2880 = vadd.f32 %v2848, 1.0
      %v2881 = vadd.f32 %v2849, 1.0
      %v2882 = vadd.f32 %v2850, 1.0
      %v2883 = vadd.f32 %v2851, 1.0
      %v2884 = vadd.f32 %v2852, 1.0
      %v2885 = vadd.f32 %v2853, 1.0
      %v2886 = vadd.f32 %v2854, 1.0
      %v2887 = vadd.f32 %v2855, 1.0
      %v2888 = vadd.f32 %v2856, 1.0
      %v2889 = vadd.f32 %v2857, 1.0
      %v2890 = vadd.f32 %v2858, 1.0
      %v2891 = vadd.f32 %v2859, 1.0
      %v2892 = vadd.f32 %v2860, 1.0
      %v2893 = vadd.f32 %v2861, 1.0
      %v2894 = vadd.f32 %v2862, 1.0
      %v2895 = vadd.f32 %v2863, 1.0
      %v2896 = vadd.f32 %v2864, 1.0
      %v2897 = vadd.f32 %v2865, 1.0
      %v2898 = vadd.f32 %v2866, 1.0
      %v2899 = vadd.f32 %v2867, 1.0
      %v2900 = vadd.f32 %v2868, 1.0
      %v2901 = vadd.f32 %v2869, 1.0
      %v2902 = vadd.f32 %v2870, 1.0
      %v2903 = vadd.f32 %v2871, 1.0
      %v2904 = vadd.f32 %v2872, 1.0
      %v2905 = vadd.f32 %v2873, 1.0
      %v2906 = vadd.f32 %v2874, 1.0
      %v2907 = vadd.f32 %v2875, 1.0
      %v2908 = vmul.f32 %v2876, 0.5
      %v2909 = vmul.f32 %v2877, 0.5
      %v2910 = vmul.f32 %v2878, 0.5
      %v2911 = vmul.f32 %v2879, 0.5
      %v2912 = vmul.f32 %v2880, 0.5
      %v2913 = vmul.f32 %v2881, 0.5
      %v2914 = vmul.f32 %v2882, 0.5
      %v2915 = vmul.f32 %v2883, 0.5
      %v2916 = vmul.f32 %v2884, 0.5
      %v2917 = vmul.f32 %v2885, 0.5
      %v2918 = vmul.f32 %v2886, 0.5
      %v2919 = vmul.f32 %v2887, 0.5
      %v2920 = vmul.f32 %v2888, 0.5
      %v2921 = vmul.f32 %v2889, 0.5
      %v2922 = vmul.f32 %v2890, 0.5
      %v2923 = vmul.f32 %v2891, 0.5
      %v2924 = vmul.f32 %v2892, 0.5
      %v2925 = vmul.f32 %v2893, 0.5
      %v2926 = vmul.f32 %v2894, 0.5
      %v2927 = vmul.f32 %v2895, 0.5
      %v2928 = vmul.f32 %v2896, 0.5
      %v2929 = vmul.f32 %v2897, 0.5
      %v2930 = vmul.f32 %v2898, 0.5
      %v2931 = vmul.f32 %v2899, 0.5
      %v2932 = vmul.f32 %v2900, 0.5
      %v2933 = vmul.f32 %v2901, 0.5
      %v2934 = vmul.f32 %v2902, 0.5
      %v2935 = vmul.f32 %v2903, 0.5
      %v2936 = vmul.f32 %v2904, 0.5
      %v2937 = vmul.f32 %v2905, 0.5
      %v2938 = vmul.f32 %v2906, 0.5
      %v2939 = vmul.f32 %v2907, 0.5
      %v2940 = vmul.f32 %v2606, %v2908
      %v2941 = vmul.f32 %v2608, %v2909
      %v2942 = vmul.f32 %v2610, %v2910
      %v2943 = vmul.f32 %v2612, %v2911
      %v2944 = vmul.f32 %v2616, %v2912
      %v2945 = vmul.f32 %v2618, %v2913
      %v2946 = vmul.f32 %v2620, %v2914
      %v2947 = vmul.f32 %v2622, %v2915
      %v2948 = vmul.f32 %v2626, %v2916
      %v2949 = vmul.f32 %v2628, %v2917
      %v2950 = vmul.f32 %v2630, %v2918
      %v2951 = vmul.f32 %v2632, %v2919
      %v2952 = vmul.f32 %v2636, %v2920
      %v2953 = vmul.f32 %v2638, %v2921
      %v2954 = vmul.f32 %v2640, %v2922
      %v2955 = vmul.f32 %v2642, %v2923
      %v2956 = vmul.f32 %v2646, %v2924
      %v2957 = vmul.f32 %v2648, %v2925
      %v2958 = vmul.f32 %v2650, %v2926
      %v2959 = vmul.f32 %v2652, %v2927
      %v2960 = vmul.f32 %v2656, %v2928
      %v2961 = vmul.f32 %v2658, %v2929
      %v2962 = vmul.f32 %v2660, %v2930
      %v2963 = vmul.f32 %v2662, %v2931
      %v2964 = vmul.f32 %v2666, %v2932
      %v2965 = vmul.f32 %v2668, %v2933
      %v2966 = vmul.f32 %v2670, %v2934
      %v2967 = vmul.f32 %v2672, %v2935
      %v2968 = vmul.f32 %v2676, %v2936
      %v2969 = vmul.f32 %v2678, %v2937
      %v2970 = vmul.f32 %v2680, %v2938
      %v2971 = vmul.f32 %v2682, %v2939
      %v2972 = vpack.c.bf16 %v2942, %v2940
      %v2973 = vpack.c.bf16 %v2943, %v2941
      %v2974 = vpack.c.bf16 %v2946, %v2944
      %v2975 = vpack.c.bf16 %v2947, %v2945
      %v2976 = vpack.c.bf16 %v2950, %v2948
      %v2977 = vpack.c.bf16 %v2951, %v2949
      %v2978 = vpack.c.bf16 %v2954, %v2952
      %v2979 = vpack.c.bf16 %v2955, %v2953
      %v2980 = vpack.c.bf16 %v2958, %v2956
      %v2981 = vpack.c.bf16 %v2959, %v2957
      %v2982 = vpack.c.bf16 %v2962, %v2960
      %v2983 = vpack.c.bf16 %v2963, %v2961
      %v2984 = vpack.c.bf16 %v2966, %v2964
      %v2985 = vpack.c.bf16 %v2967, %v2965
      %v2986 = vpack.c.bf16 %v2970, %v2968
      %v2987 = vpack.c.bf16 %v2971, %v2969
      %v2988 = vld [vmem:[%s3 + $0x200] sm:$0xff]
      %v2989 = vld [vmem:[%s3 + $0x208] sm:$0xff]
      %v2990 = vld [vmem:[%s3 + $0x210] sm:$0xff]
      %v2991 = vld [vmem:[%s3 + $0x218] sm:$0xff]
      %v2992 = vld [vmem:[%s3 + $0x220] sm:$0xff]
      %v2993 = vld [vmem:[%s3 + $0x228] sm:$0xff]
      %v2994 = vld [vmem:[%s3 + $0x230] sm:$0xff]
      %v2995 = vld [vmem:[%s3 + $0x238] sm:$0xff]
      %v2996 = vld [vmem:[%s3 + $0x240] sm:$0xff]
      %v2997 = vld [vmem:[%s3 + $0x248] sm:$0xff]
      %v2998 = vld [vmem:[%s3 + $0x250] sm:$0xff]
      %v2999 = vld [vmem:[%s3 + $0x258] sm:$0xff]
      %v3000 = vld [vmem:[%s3 + $0x260] sm:$0xff]
      %v3001 = vld [vmem:[%s3 + $0x268] sm:$0xff]
      %v3002 = vld [vmem:[%s3 + $0x270] sm:$0xff]
      %v3003 = vld [vmem:[%s3 + $0x278] sm:$0xff]
      %v3004 = vld [vmem:[%s3 + $0x280] sm:$0xff]
      %v3005 = vld [vmem:[%s3 + $0x288] sm:$0xff]
      %v3006 = vld [vmem:[%s3 + $0x290] sm:$0xff]
      %v3007 = vld [vmem:[%s3 + $0x298] sm:$0xff]
      %v3008 = vld [vmem:[%s3 + $0x2a0] sm:$0xff]
      %v3009 = vld [vmem:[%s3 + $0x2a8] sm:$0xff]
      %v3010 = vld [vmem:[%s3 + $0x2b0] sm:$0xff]
      %v3011 = vld [vmem:[%s3 + $0x2b8] sm:$0xff]
      %v3012 = vld [vmem:[%s3 + $0x2c0] sm:$0xff]
      %v3013 = vld [vmem:[%s3 + $0x2c8] sm:$0xff]
      %v3014 = vld [vmem:[%s3 + $0x2d0] sm:$0xff]
      %v3015 = vld [vmem:[%s3 + $0x2d8] sm:$0xff]
      %v3016 = vld [vmem:[%s3 + $0x2e0] sm:$0xff]
      %v3017 = vld [vmem:[%s3 + $0x2e8] sm:$0xff]
      %v3018 = vld [vmem:[%s3 + $0x2f0] sm:$0xff]
      %v3019 = vld [vmem:[%s3 + $0x2f8] sm:$0xff]
      %v3052 = vunpack.c.l.b16 %v2988
      %v3053 = vunpack.c.h.b16 %v2988
      %v3054 = vunpack.c.l.b16 %v2989
      %v3055 = vunpack.c.h.b16 %v2989
      %v3056 = vunpack.c.l.b16 %v2990
      %v3057 = vunpack.c.h.b16 %v2990
      %v3058 = vunpack.c.l.b16 %v2991
      %v3059 = vunpack.c.h.b16 %v2991
      %v3060 = vunpack.c.l.b16 %v2992
      %v3061 = vunpack.c.h.b16 %v2992
      %v3062 = vunpack.c.l.b16 %v2993
      %v3063 = vunpack.c.h.b16 %v2993
      %v3064 = vunpack.c.l.b16 %v2994
      %v3065 = vunpack.c.h.b16 %v2994
      %v3066 = vunpack.c.l.b16 %v2995
      %v3067 = vunpack.c.h.b16 %v2995
      %v3068 = vunpack.c.l.b16 %v2996
      %v3069 = vunpack.c.h.b16 %v2996
      %v3070 = vunpack.c.l.b16 %v2997
      %v3071 = vunpack.c.h.b16 %v2997
      %v3072 = vunpack.c.l.b16 %v2998
      %v3073 = vunpack.c.h.b16 %v2998
      %v3074 = vunpack.c.l.b16 %v2999
      %v3075 = vunpack.c.h.b16 %v2999
      %v3076 = vunpack.c.l.b16 %v3000
      %v3077 = vunpack.c.h.b16 %v3000
      %v3078 = vunpack.c.l.b16 %v3001
      %v3079 = vunpack.c.h.b16 %v3001
      %v3080 = vunpack.c.l.b16 %v3002
      %v3081 = vunpack.c.h.b16 %v3002
      %v3082 = vunpack.c.l.b16 %v3003
      %v3083 = vunpack.c.h.b16 %v3003
      %v3084 = vunpack.c.l.b16 %v3004
      %v3085 = vunpack.c.h.b16 %v3004
      %v3086 = vunpack.c.l.b16 %v3005
      %v3087 = vunpack.c.h.b16 %v3005
      %v3088 = vunpack.c.l.b16 %v3006
      %v3089 = vunpack.c.h.b16 %v3006
      %v3090 = vunpack.c.l.b16 %v3007
      %v3091 = vunpack.c.h.b16 %v3007
      %v3092 = vunpack.c.l.b16 %v3008
      %v3093 = vunpack.c.h.b16 %v3008
      %v3094 = vunpack.c.l.b16 %v3009
      %v3095 = vunpack.c.h.b16 %v3009
      %v3096 = vunpack.c.l.b16 %v3010
      %v3097 = vunpack.c.h.b16 %v3010
      %v3098 = vunpack.c.l.b16 %v3011
      %v3099 = vunpack.c.h.b16 %v3011
      %v3100 = vunpack.c.l.b16 %v3012
      %v3101 = vunpack.c.h.b16 %v3012
      %v3102 = vunpack.c.l.b16 %v3013
      %v3103 = vunpack.c.h.b16 %v3013
      %v3104 = vunpack.c.l.b16 %v3014
      %v3105 = vunpack.c.h.b16 %v3014
      %v3106 = vunpack.c.l.b16 %v3015
      %v3107 = vunpack.c.h.b16 %v3015
      %v3108 = vunpack.c.l.b16 %v3016
      %v3109 = vunpack.c.h.b16 %v3016
      %v3110 = vunpack.c.l.b16 %v3017
      %v3111 = vunpack.c.h.b16 %v3017
      %v3112 = vunpack.c.l.b16 %v3018
      %v3113 = vunpack.c.h.b16 %v3018
      %v3114 = vunpack.c.l.b16 %v3019
      %v3115 = vunpack.c.h.b16 %v3019
      %v3116 = vpack.c.b16 %v3054, %v3052
      %v3117 = vpack.c.b16 %v3055, %v3053
      %v3118 = vpack.c.b16 %v3058, %v3056
      %v3119 = vpack.c.b16 %v3059, %v3057
      %v3120 = vpack.c.b16 %v3062, %v3060
      %v3121 = vpack.c.b16 %v3063, %v3061
      %v3122 = vpack.c.b16 %v3066, %v3064
      %v3123 = vpack.c.b16 %v3067, %v3065
      %v3124 = vpack.c.b16 %v3070, %v3068
      %v3125 = vpack.c.b16 %v3071, %v3069
      %v3126 = vpack.c.b16 %v3074, %v3072
      %v3127 = vpack.c.b16 %v3075, %v3073
      %v3128 = vpack.c.b16 %v3078, %v3076
      %v3129 = vpack.c.b16 %v3079, %v3077
      %v3130 = vpack.c.b16 %v3082, %v3080
      %v3131 = vpack.c.b16 %v3083, %v3081
      %v3132 = vpack.c.b16 %v3086, %v3084
      %v3133 = vpack.c.b16 %v3087, %v3085
      %v3134 = vpack.c.b16 %v3090, %v3088
      %v3135 = vpack.c.b16 %v3091, %v3089
      %v3136 = vpack.c.b16 %v3094, %v3092
      %v3137 = vpack.c.b16 %v3095, %v3093
      %v3138 = vpack.c.b16 %v3098, %v3096
      %v3139 = vpack.c.b16 %v3099, %v3097
      %v3140 = vpack.c.b16 %v3102, %v3100
      %v3141 = vpack.c.b16 %v3103, %v3101
      %v3142 = vpack.c.b16 %v3106, %v3104
      %v3143 = vpack.c.b16 %v3107, %v3105
      %v3144 = vpack.c.b16 %v3110, %v3108
      %v3145 = vpack.c.b16 %v3111, %v3109
      %v3146 = vpack.c.b16 %v3114, %v3112
      %v3147 = vpack.c.b16 %v3115, %v3113
      %3180 = vmatprep.subr.bf16.mxu0 %v3117
      %3181 = vmatpush1.bf16.msra.mxu0 %v3116
      %3182 = vmatprep.subr.bf16.mxu0 %v3119
      %3183 = vmatpush1.bf16.msra.mxu0 %v3118
      %3184 = vmatprep.subr.bf16.mxu0 %v3121
      %3185 = vmatpush1.bf16.msra.mxu0 %v3120
      %3186 = vmatprep.subr.bf16.mxu0 %v3123
      %3187 = vmatpush1.bf16.msra.mxu0 %v3122
      %3188 = vmatprep.subr.bf16.mxu0 %v3125
      %3189 = vmatpush1.bf16.msra.mxu0 %v3124
      %3190 = vmatprep.subr.bf16.mxu0 %v3127
      %3191 = vmatpush1.bf16.msra.mxu0 %v3126
      %3192 = vmatprep.subr.bf16.mxu0 %v3129
      %3193 = vmatpush1.bf16.msra.mxu0 %v3128
      %3194 = vmatprep.subr.bf16.mxu0 %v3131
      %3195 = vmatpush1.bf16.msra.mxu0 %v3130
      %3196 = vmatprep.subr.bf16.mxu0 %v3133
      %3197 = vmatpush1.bf16.msra.mxu0 %v3132
      %3198 = vmatprep.subr.bf16.mxu0 %v3135
      %3199 = vmatpush1.bf16.msra.mxu0 %v3134
      %3200 = vmatprep.subr.bf16.mxu0 %v3137
      %3201 = vmatpush1.bf16.msra.mxu0 %v3136
      %3202 = vmatprep.subr.bf16.mxu0 %v3139
      %3203 = vmatpush1.bf16.msra.mxu0 %v3138
      %3204 = vmatprep.subr.bf16.mxu0 %v3141
      %3205 = vmatpush1.bf16.msra.mxu0 %v3140
      %3206 = vmatprep.subr.bf16.mxu0 %v3143
      %3207 = vmatpush1.bf16.msra.mxu0 %v3142
      %3208 = vmatprep.subr.bf16.mxu0 %v3145
      %3209 = vmatpush1.bf16.msra.mxu0 %v3144
      %3210 = vmatprep.subr.bf16.mxu0 %v3147
      %3211 = vmatpush1.bf16.msra.mxu0 %v3146
      %3212 = vmatprep.mubr.bf16.mxu0 %v2973
      %3213 = vmatmul.mubr.bf16.gmra.mrb[0].mxu0 %v2972
      %v3214 = vpop.f32.mrb[0].mxu0
      %v3215 = vadd.f32 0.0, %v3214
      %v3216 = vpop.f32.mrb[0].mxu0
      %v3217 = vadd.f32 0.0, %v3216
      %v3218 = vpop.f32.mrb[0].mxu0
      %v3219 = vadd.f32 0.0, %v3218
      %v3220 = vpop.f32.mrb[0].mxu0
      %v3221 = vadd.f32 0.0, %v3220
      %3222 = vmatprep.mubr.bf16.mxu0 %v2975
      %3223 = vmatmul.mubr.bf16.gmra.mrb[0].mxu0 %v2974
      %v3224 = vpop.f32.mrb[0].mxu0
      %v3225 = vadd.f32 0.0, %v3224
      %v3226 = vpop.f32.mrb[0].mxu0
      %v3227 = vadd.f32 0.0, %v3226
      %v3228 = vpop.f32.mrb[0].mxu0
      %v3229 = vadd.f32 0.0, %v3228
      %v3230 = vpop.f32.mrb[0].mxu0
      %v3231 = vadd.f32 0.0, %v3230
      %3232 = vmatprep.mubr.bf16.mxu0 %v2977
      %3233 = vmatmul.mubr.bf16.gmra.mrb[0].mxu0 %v2976
      %v3234 = vpop.f32.mrb[0].mxu0
      %v3235 = vadd.f32 0.0, %v3234
      %v3236 = vpop.f32.mrb[0].mxu0
      %v3237 = vadd.f32 0.0, %v3236
      %v3238 = vpop.f32.mrb[0].mxu0
      %v3239 = vadd.f32 0.0, %v3238
      %v3240 = vpop.f32.mrb[0].mxu0
      %v3241 = vadd.f32 0.0, %v3240
      %3242 = vmatprep.mubr.bf16.mxu0 %v2979
      %3243 = vmatmul.mubr.bf16.gmra.mrb[0].mxu0 %v2978
      %v3244 = vpop.f32.mrb[0].mxu0
      %v3245 = vadd.f32 0.0, %v3244
      %v3246 = vpop.f32.mrb[0].mxu0
      %v3247 = vadd.f32 0.0, %v3246
      %v3248 = vpop.f32.mrb[0].mxu0
      %v3249 = vadd.f32 0.0, %v3248
      %v3250 = vpop.f32.mrb[0].mxu0
      %v3251 = vadd.f32 0.0, %v3250
      %3252 = vmatprep.mubr.bf16.mxu0 %v2981
      %3253 = vmatmul.mubr.bf16.gmra.mrb[0].mxu0 %v2980
      %v3254 = vpop.f32.mrb[0].mxu0
      %v3255 = vadd.f32 0.0, %v3254
      %v3256 = vpop.f32.mrb[0].mxu0
      %v3257 = vadd.f32 0.0, %v3256
      %v3258 = vpop.f32.mrb[0].mxu0
      %v3259 = vadd.f32 0.0, %v3258
      %v3260 = vpop.f32.mrb[0].mxu0
      %v3261 = vadd.f32 0.0, %v3260
      %3262 = vmatprep.mubr.bf16.mxu0 %v2983
      %3263 = vmatmul.mubr.bf16.gmra.mrb[0].mxu0 %v2982
      %v3264 = vpop.f32.mrb[0].mxu0
      %v3265 = vadd.f32 0.0, %v3264
      %v3266 = vpop.f32.mrb[0].mxu0
      %v3267 = vadd.f32 0.0, %v3266
      %v3268 = vpop.f32.mrb[0].mxu0
      %v3269 = vadd.f32 0.0, %v3268
      %v3270 = vpop.f32.mrb[0].mxu0
      %v3271 = vadd.f32 0.0, %v3270
      %3272 = vmatprep.mubr.bf16.mxu0 %v2985
      %3273 = vmatmul.mubr.bf16.gmra.mrb[0].mxu0 %v2984
      %v3274 = vpop.f32.mrb[0].mxu0
      %v3275 = vadd.f32 0.0, %v3274
      %v3276 = vpop.f32.mrb[0].mxu0
      %v3277 = vadd.f32 0.0, %v3276
      %v3278 = vpop.f32.mrb[0].mxu0
      %v3279 = vadd.f32 0.0, %v3278
      %v3280 = vpop.f32.mrb[0].mxu0
      %v3281 = vadd.f32 0.0, %v3280
      %3282 = vmatprep.mubr.bf16.mxu0 %v2987
      %3283 = vmatmul.mubr.bf16.gmra.mrb[0].mxu0 %v2986
      %v3284 = vpop.f32.mrb[0].mxu0
      %v3285 = vadd.f32 0.0, %v3284
      %v3286 = vpop.f32.mrb[0].mxu0
      %v3287 = vadd.f32 0.0, %v3286
      %v3288 = vpop.f32.mrb[0].mxu0
      %v3289 = vadd.f32 0.0, %v3288
      %v3290 = vpop.f32.mrb[0].mxu0
      %v3291 = vadd.f32 0.0, %v3290
      %3292 = vdwg.mxu0
      %v3293 = vadd.f32 %v2335, %v3215
      %v3294 = vadd.f32 %v2336, %v3217
      %v3295 = vadd.f32 %v2337, %v3219
      %v3296 = vadd.f32 %v2338, %v3221
      %v3297 = vadd.f32 %v2339, %v3225
      %v3298 = vadd.f32 %v2340, %v3227
      %v3299 = vadd.f32 %v2341, %v3229
      %v3300 = vadd.f32 %v2342, %v3231
      %v3301 = vadd.f32 %v2343, %v3235
      %v3302 = vadd.f32 %v2344, %v3237
      %v3303 = vadd.f32 %v2345, %v3239
      %v3304 = vadd.f32 %v2346, %v3241
      %v3305 = vadd.f32 %v2347, %v3245
      %v3306 = vadd.f32 %v2348, %v3247
      %v3307 = vadd.f32 %v2349, %v3249
      %v3308 = vadd.f32 %v2350, %v3251
      %v3309 = vadd.f32 %v2351, %v3255
      %v3310 = vadd.f32 %v2352, %v3257
      %v3311 = vadd.f32 %v2353, %v3259
      %v3312 = vadd.f32 %v2354, %v3261
      %v3313 = vadd.f32 %v2355, %v3265
      %v3314 = vadd.f32 %v2356, %v3267
      %v3315 = vadd.f32 %v2357, %v3269
      %v3316 = vadd.f32 %v2358, %v3271
      %v3317 = vadd.f32 %v2359, %v3275
      %v3318 = vadd.f32 %v2360, %v3277
      %v3319 = vadd.f32 %v2361, %v3279
      %v3320 = vadd.f32 %v2362, %v3281
      %v3321 = vadd.f32 %v2363, %v3285
      %v3322 = vadd.f32 %v2364, %v3287
      %v3323 = vadd.f32 %v2365, %v3289
      %v3324 = vadd.f32 %v2366, %v3291
      %v3325 = vld [vmem:[%s1 + $0x18] sm:$0xff]
      %v3326 = vld [vmem:[%s1 + $0x38] sm:$0xff]
      %v3327 = vld [vmem:[%s1 + $0x58] sm:$0xff]
      %v3328 = vld [vmem:[%s1 + $0x78] sm:$0xff]
      %v3329 = vld [vmem:[%s1 + $0x98] sm:$0xff]
      %v3330 = vld [vmem:[%s1 + $0xb8] sm:$0xff]
      %v3331 = vld [vmem:[%s1 + $0xd8] sm:$0xff]
      %v3332 = vld [vmem:[%s1 + $0xf8] sm:$0xff]
      %v3333 = vld [vmem:[%s1 + $0x118] sm:$0xff]
      %v3334 = vld [vmem:[%s1 + $0x138] sm:$0xff]
      %v3335 = vld [vmem:[%s1 + $0x158] sm:$0xff]
      %v3336 = vld [vmem:[%s1 + $0x178] sm:$0xff]
      %v3337 = vld [vmem:[%s1 + $0x198] sm:$0xff]
      %v3338 = vld [vmem:[%s1 + $0x1b8] sm:$0xff]
      %v3339 = vld [vmem:[%s1 + $0x1d8] sm:$0xff]
      %v3340 = vld [vmem:[%s1 + $0x1f8] sm:$0xff]
      %v3341 = vld [vmem:[%s1 + $0x218] sm:$0xff]
      %v3342 = vld [vmem:[%s1 + $0x238] sm:$0xff]
      %v3343 = vld [vmem:[%s1 + $0x258] sm:$0xff]
      %v3344 = vld [vmem:[%s1 + $0x278] sm:$0xff]
      %v3345 = vld [vmem:[%s1 + $0x298] sm:$0xff]
      %v3346 = vld [vmem:[%s1 + $0x2b8] sm:$0xff]
      %v3347 = vld [vmem:[%s1 + $0x2d8] sm:$0xff]
      %v3348 = vld [vmem:[%s1 + $0x2f8] sm:$0xff]
      %v3349 = vld [vmem:[%s1 + $0x318] sm:$0xff]
      %v3350 = vld [vmem:[%s1 + $0x338] sm:$0xff]
      %v3351 = vld [vmem:[%s1 + $0x358] sm:$0xff]
      %v3352 = vld [vmem:[%s1 + $0x378] sm:$0xff]
      %v3353 = vld [vmem:[%s1 + $0x398] sm:$0xff]
      %v3354 = vld [vmem:[%s1 + $0x3b8] sm:$0xff]
      %v3355 = vld [vmem:[%s1 + $0x3d8] sm:$0xff]
      %v3356 = vld [vmem:[%s1 + $0x3f8] sm:$0xff]
      %v3357 = vld [vmem:[%s2 + $0x6] sm:$0x3]
      %v3359 = vlaneseq
      %v3360 = vshrl.u32 %v3359, 7
      %v3361 = vsub.s32 0, %v3360
      %v3362 = vrot.slane %v3357, %v3361
      %v3363 = vlaneseq
      %v3364 = vshrl.u32 %v3363, 7
      %v3365 = vsub.s32 1, %v3364
      %v3366 = vrot.slane %v3357, %v3365
      %v3401 = vunpack.c.l.b16 %v3325
      %v3402 = vunpack.c.h.b16 %v3325
      %v3403 = vunpack.c.l.b16 %v3326
      %v3404 = vunpack.c.h.b16 %v3326
      %v3405 = vunpack.c.l.b16 %v3327
      %v3406 = vunpack.c.h.b16 %v3327
      %v3407 = vunpack.c.l.b16 %v3328
      %v3408 = vunpack.c.h.b16 %v3328
      %v3409 = vunpack.c.l.b16 %v3329
      %v3410 = vunpack.c.h.b16 %v3329
      %v3411 = vunpack.c.l.b16 %v3330
      %v3412 = vunpack.c.h.b16 %v3330
      %v3413 = vunpack.c.l.b16 %v3331
      %v3414 = vunpack.c.h.b16 %v3331
      %v3415 = vunpack.c.l.b16 %v3332
      %v3416 = vunpack.c.h.b16 %v3332
      %v3417 = vunpack.c.l.b16 %v3333
      %v3418 = vunpack.c.h.b16 %v3333
      %v3419 = vunpack.c.l.b16 %v3334
      %v3420 = vunpack.c.h.b16 %v3334
      %v3421 = vunpack.c.l.b16 %v3335
      %v3422 = vunpack.c.h.b16 %v3335
      %v3423 = vunpack.c.l.b16 %v3336
      %v3424 = vunpack.c.h.b16 %v3336
      %v3425 = vunpack.c.l.b16 %v3337
      %v3426 = vunpack.c.h.b16 %v3337
      %v3427 = vunpack.c.l.b16 %v3338
      %v3428 = vunpack.c.h.b16 %v3338
      %v3429 = vunpack.c.l.b16 %v3339
      %v3430 = vunpack.c.h.b16 %v3339
      %v3431 = vunpack.c.l.b16 %v3340
      %v3432 = vunpack.c.h.b16 %v3340
      %v3433 = vunpack.c.l.b16 %v3341
      %v3434 = vunpack.c.h.b16 %v3341
      %v3435 = vunpack.c.l.b16 %v3342
      %v3436 = vunpack.c.h.b16 %v3342
      %v3437 = vunpack.c.l.b16 %v3343
      %v3438 = vunpack.c.h.b16 %v3343
      %v3439 = vunpack.c.l.b16 %v3344
      %v3440 = vunpack.c.h.b16 %v3344
      %v3441 = vunpack.c.l.b16 %v3345
      %v3442 = vunpack.c.h.b16 %v3345
      %v3443 = vunpack.c.l.b16 %v3346
      %v3444 = vunpack.c.h.b16 %v3346
      %v3445 = vunpack.c.l.b16 %v3347
      %v3446 = vunpack.c.h.b16 %v3347
      %v3447 = vunpack.c.l.b16 %v3348
      %v3448 = vunpack.c.h.b16 %v3348
      %v3449 = vunpack.c.l.b16 %v3349
      %v3450 = vunpack.c.h.b16 %v3349
      %v3451 = vunpack.c.l.b16 %v3350
      %v3452 = vunpack.c.h.b16 %v3350
      %v3453 = vunpack.c.l.b16 %v3351
      %v3454 = vunpack.c.h.b16 %v3351
      %v3455 = vunpack.c.l.b16 %v3352
      %v3456 = vunpack.c.h.b16 %v3352
      %v3457 = vunpack.c.l.b16 %v3353
      %v3458 = vunpack.c.h.b16 %v3353
      %v3459 = vunpack.c.l.b16 %v3354
      %v3460 = vunpack.c.h.b16 %v3354
      %v3461 = vunpack.c.l.b16 %v3355
      %v3462 = vunpack.c.h.b16 %v3355
      %v3463 = vunpack.c.l.b16 %v3356
      %v3464 = vunpack.c.h.b16 %v3356
      %v3465 = vpack.c.b16 %v3403, %v3401
      %v3466 = vpack.c.b16 %v3404, %v3402
      %v3467 = vpack.c.b16 %v3407, %v3405
      %v3468 = vpack.c.b16 %v3408, %v3406
      %v3469 = vpack.c.b16 %v3411, %v3409
      %v3470 = vpack.c.b16 %v3412, %v3410
      %v3471 = vpack.c.b16 %v3415, %v3413
      %v3472 = vpack.c.b16 %v3416, %v3414
      %v3473 = vpack.c.b16 %v3419, %v3417
      %v3474 = vpack.c.b16 %v3420, %v3418
      %v3475 = vpack.c.b16 %v3423, %v3421
      %v3476 = vpack.c.b16 %v3424, %v3422
      %v3477 = vpack.c.b16 %v3427, %v3425
      %v3478 = vpack.c.b16 %v3428, %v3426
      %v3479 = vpack.c.b16 %v3431, %v3429
      %v3480 = vpack.c.b16 %v3432, %v3430
      %v3481 = vpack.c.b16 %v3435, %v3433
      %v3482 = vpack.c.b16 %v3436, %v3434
      %v3483 = vpack.c.b16 %v3439, %v3437
      %v3484 = vpack.c.b16 %v3440, %v3438
      %v3485 = vpack.c.b16 %v3443, %v3441
      %v3486 = vpack.c.b16 %v3444, %v3442
      %v3487 = vpack.c.b16 %v3447, %v3445
      %v3488 = vpack.c.b16 %v3448, %v3446
      %v3489 = vpack.c.b16 %v3451, %v3449
      %v3490 = vpack.c.b16 %v3452, %v3450
      %v3491 = vpack.c.b16 %v3455, %v3453
      %v3492 = vpack.c.b16 %v3456, %v3454
      %v3493 = vpack.c.b16 %v3459, %v3457
      %v3494 = vpack.c.b16 %v3460, %v3458
      %v3495 = vpack.c.b16 %v3463, %v3461
      %v3496 = vpack.c.b16 %v3464, %v3462
      %3529 = vmatprep.subr.bf16.mxu0 %v3466
      %3530 = vmatpush1.bf16.msra.mxu0 %v3465
      %3531 = vmatprep.subr.bf16.mxu0 %v3468
      %3532 = vmatpush1.bf16.msra.mxu0 %v3467
      %3533 = vmatprep.subr.bf16.mxu0 %v3470
      %3534 = vmatpush1.bf16.msra.mxu0 %v3469
      %3535 = vmatprep.subr.bf16.mxu0 %v3472
      %3536 = vmatpush1.bf16.msra.mxu0 %v3471
      %3537 = vmatprep.subr.bf16.mxu0 %v3474
      %3538 = vmatpush1.bf16.msra.mxu0 %v3473
      %3539 = vmatprep.subr.bf16.mxu0 %v3476
      %3540 = vmatpush1.bf16.msra.mxu0 %v3475
      %3541 = vmatprep.subr.bf16.mxu0 %v3478
      %3542 = vmatpush1.bf16.msra.mxu0 %v3477
      %3543 = vmatprep.subr.bf16.mxu0 %v3480
      %3544 = vmatpush1.bf16.msra.mxu0 %v3479
      %3545 = vmatprep.subr.bf16.mxu0 %v3482
      %3546 = vmatpush1.bf16.msra.mxu0 %v3481
      %3547 = vmatprep.subr.bf16.mxu0 %v3484
      %3548 = vmatpush1.bf16.msra.mxu0 %v3483
      %3549 = vmatprep.subr.bf16.mxu0 %v3486
      %3550 = vmatpush1.bf16.msra.mxu0 %v3485
      %3551 = vmatprep.subr.bf16.mxu0 %v3488
      %3552 = vmatpush1.bf16.msra.mxu0 %v3487
      %3553 = vmatprep.subr.bf16.mxu0 %v3490
      %3554 = vmatpush1.bf16.msra.mxu0 %v3489
      %3555 = vmatprep.subr.bf16.mxu0 %v3492
      %3556 = vmatpush1.bf16.msra.mxu0 %v3491
      %3557 = vmatprep.subr.bf16.mxu0 %v3494
      %3558 = vmatpush1.bf16.msra.mxu0 %v3493
      %3559 = vmatprep.subr.bf16.mxu0 %v3496
      %3560 = vmatpush1.bf16.msra.mxu0 %v3495
      %3561 = vmatprep.mubr.bf16.mxu0 %v464
      %3562 = vmatmul.mubr.bf16.gmra.mrb[0].mxu0 %v463
      %v3563 = vpop.f32.mrb[0].mxu0
      %v3564 = vadd.f32 %v3362, %v3563
      %v3565 = vpop.f32.mrb[0].mxu0
      %v3566 = vadd.f32 %v3366, %v3565
      %v3567 = vpop.f32.mrb[0].mxu0
      %v3568 = vadd.f32 %v3362, %v3567
      %v3569 = vpop.f32.mrb[0].mxu0
      %v3570 = vadd.f32 %v3366, %v3569
      %3571 = vmatprep.mubr.bf16.mxu0 %v466
      %3572 = vmatmul.mubr.bf16.gmra.mrb[0].mxu0 %v465
      %v3573 = vpop.f32.mrb[0].mxu0
      %v3574 = vadd.f32 %v3362, %v3573
      %v3575 = vpop.f32.mrb[0].mxu0
      %v3576 = vadd.f32 %v3366, %v3575
      %v3577 = vpop.f32.mrb[0].mxu0
      %v3578 = vadd.f32 %v3362, %v3577
      %v3579 = vpop.f32.mrb[0].mxu0
      %v3580 = vadd.f32 %v3366, %v3579
      %3581 = vmatprep.mubr.bf16.mxu0 %v468
      %3582 = vmatmul.mubr.bf16.gmra.mrb[0].mxu0 %v467
      %v3583 = vpop.f32.mrb[0].mxu0
      %v3584 = vadd.f32 %v3362, %v3583
      %v3585 = vpop.f32.mrb[0].mxu0
      %v3586 = vadd.f32 %v3366, %v3585
      %v3587 = vpop.f32.mrb[0].mxu0
      %v3588 = vadd.f32 %v3362, %v3587
      %v3589 = vpop.f32.mrb[0].mxu0
      %v3590 = vadd.f32 %v3366, %v3589
      %3591 = vmatprep.mubr.bf16.mxu0 %v470
      %3592 = vmatmul.mubr.bf16.gmra.mrb[0].mxu0 %v469
      %v3593 = vpop.f32.mrb[0].mxu0
      %v3594 = vadd.f32 %v3362, %v3593
      %v3595 = vpop.f32.mrb[0].mxu0
      %v3596 = vadd.f32 %v3366, %v3595
      %v3597 = vpop.f32.mrb[0].mxu0
      %v3598 = vadd.f32 %v3362, %v3597
      %v3599 = vpop.f32.mrb[0].mxu0
      %v3600 = vadd.f32 %v3366, %v3599
      %3601 = vmatprep.mubr.bf16.mxu0 %v472
      %3602 = vmatmul.mubr.bf16.gmra.mrb[0].mxu0 %v471
      %v3603 = vpop.f32.mrb[0].mxu0
      %v3604 = vadd.f32 %v3362, %v3603
      %v3605 = vpop.f32.mrb[0].mxu0
      %v3606 = vadd.f32 %v3366, %v3605
      %v3607 = vpop.f32.mrb[0].mxu0
      %v3608 = vadd.f32 %v3362, %v3607
      %v3609 = vpop.f32.mrb[0].mxu0
      %v3610 = vadd.f32 %v3366, %v3609
      %3611 = vmatprep.mubr.bf16.mxu0 %v474
      %3612 = vmatmul.mubr.bf16.gmra.mrb[0].mxu0 %v473
      %v3613 = vpop.f32.mrb[0].mxu0
      %v3614 = vadd.f32 %v3362, %v3613
      %v3615 = vpop.f32.mrb[0].mxu0
      %v3616 = vadd.f32 %v3366, %v3615
      %v3617 = vpop.f32.mrb[0].mxu0
      %v3618 = vadd.f32 %v3362, %v3617
      %v3619 = vpop.f32.mrb[0].mxu0
      %v3620 = vadd.f32 %v3366, %v3619
      %3621 = vmatprep.mubr.bf16.mxu0 %v476
      %3622 = vmatmul.mubr.bf16.gmra.mrb[0].mxu0 %v475
      %v3623 = vpop.f32.mrb[0].mxu0
      %v3624 = vadd.f32 %v3362, %v3623
      %v3625 = vpop.f32.mrb[0].mxu0
      %v3626 = vadd.f32 %v3366, %v3625
      %v3627 = vpop.f32.mrb[0].mxu0
      %v3628 = vadd.f32 %v3362, %v3627
      %v3629 = vpop.f32.mrb[0].mxu0
      %v3630 = vadd.f32 %v3366, %v3629
      %3631 = vmatprep.mubr.bf16.mxu0 %v478
      %3632 = vmatmul.mubr.bf16.gmra.mrb[0].mxu0 %v477
      %v3633 = vpop.f32.mrb[0].mxu0
      %v3634 = vadd.f32 %v3362, %v3633
      %v3635 = vpop.f32.mrb[0].mxu0
      %v3636 = vadd.f32 %v3366, %v3635
      %v3637 = vpop.f32.mrb[0].mxu0
      %v3638 = vadd.f32 %v3362, %v3637
      %v3639 = vpop.f32.mrb[0].mxu0
      %v3640 = vadd.f32 %v3366, %v3639
      %3641 = vdwg.mxu0
      %v3642 = vmul.f32 %v3564, %v3564
      %v3643 = vmul.f32 %v3566, %v3566
      %v3644 = vmul.f32 %v3568, %v3568
      %v3645 = vmul.f32 %v3570, %v3570
      %v3646 = vmul.f32 %v3574, %v3574
      %v3647 = vmul.f32 %v3576, %v3576
      %v3648 = vmul.f32 %v3578, %v3578
      %v3649 = vmul.f32 %v3580, %v3580
      %v3650 = vmul.f32 %v3584, %v3584
      %v3651 = vmul.f32 %v3586, %v3586
      %v3652 = vmul.f32 %v3588, %v3588
      %v3653 = vmul.f32 %v3590, %v3590
      %v3654 = vmul.f32 %v3594, %v3594
      %v3655 = vmul.f32 %v3596, %v3596
      %v3656 = vmul.f32 %v3598, %v3598
      %v3657 = vmul.f32 %v3600, %v3600
      %v3658 = vmul.f32 %v3604, %v3604
      %v3659 = vmul.f32 %v3606, %v3606
      %v3660 = vmul.f32 %v3608, %v3608
      %v3661 = vmul.f32 %v3610, %v3610
      %v3662 = vmul.f32 %v3614, %v3614
      %v3663 = vmul.f32 %v3616, %v3616
      %v3664 = vmul.f32 %v3618, %v3618
      %v3665 = vmul.f32 %v3620, %v3620
      %v3666 = vmul.f32 %v3624, %v3624
      %v3667 = vmul.f32 %v3626, %v3626
      %v3668 = vmul.f32 %v3628, %v3628
      %v3669 = vmul.f32 %v3630, %v3630
      %v3670 = vmul.f32 %v3634, %v3634
      %v3671 = vmul.f32 %v3636, %v3636
      %v3672 = vmul.f32 %v3638, %v3638
      %v3673 = vmul.f32 %v3640, %v3640
      %v3674 = vmul.f32 %v3564, %v3642
      %v3675 = vmul.f32 %v3566, %v3643
      %v3676 = vmul.f32 %v3568, %v3644
      %v3677 = vmul.f32 %v3570, %v3645
      %v3678 = vmul.f32 %v3574, %v3646
      %v3679 = vmul.f32 %v3576, %v3647
      %v3680 = vmul.f32 %v3578, %v3648
      %v3681 = vmul.f32 %v3580, %v3649
      %v3682 = vmul.f32 %v3584, %v3650
      %v3683 = vmul.f32 %v3586, %v3651
      %v3684 = vmul.f32 %v3588, %v3652
      %v3685 = vmul.f32 %v3590, %v3653
      %v3686 = vmul.f32 %v3594, %v3654
      %v3687 = vmul.f32 %v3596, %v3655
      %v3688 = vmul.f32 %v3598, %v3656
      %v3689 = vmul.f32 %v3600, %v3657
      %v3690 = vmul.f32 %v3604, %v3658
      %v3691 = vmul.f32 %v3606, %v3659
      %v3692 = vmul.f32 %v3608, %v3660
      %v3693 = vmul.f32 %v3610, %v3661
      %v3694 = vmul.f32 %v3614, %v3662
      %v3695 = vmul.f32 %v3616, %v3663
      %v3696 = vmul.f32 %v3618, %v3664
      %v3697 = vmul.f32 %v3620, %v3665
      %v3698 = vmul.f32 %v3624, %v3666
      %v3699 = vmul.f32 %v3626, %v3667
      %v3700 = vmul.f32 %v3628, %v3668
      %v3701 = vmul.f32 %v3630, %v3669
      %v3702 = vmul.f32 %v3634, %v3670
      %v3703 = vmul.f32 %v3636, %v3671
      %v3704 = vmul.f32 %v3638, %v3672
      %v3705 = vmul.f32 %v3640, %v3673
      %v3706 = vmul.f32 %v3674, 0.044715
      %v3707 = vmul.f32 %v3675, 0.044715
      %v3708 = vmul.f32 %v3676, 0.044715
      %v3709 = vmul.f32 %v3677, 0.044715
      %v3710 = vmul.f32 %v3678, 0.044715
      %v3711 = vmul.f32 %v3679, 0.044715
      %v3712 = vmul.f32 %v3680, 0.044715
      %v3713 = vmul.f32 %v3681, 0.044715
      %v3714 = vmul.f32 %v3682, 0.044715
      %v3715 = vmul.f32 %v3683, 0.044715
      %v3716 = vmul.f32 %v3684, 0.044715
      %v3717 = vmul.f32 %v3685, 0.044715
      %v3718 = vmul.f32 %v3686, 0.044715
      %v3719 = vmul.f32 %v3687, 0.044715
      %v3720 = vmul.f32 %v3688, 0.044715
      %v3721 = vmul.f32 %v3689, 0.044715
      %v3722 = vmul.f32 %v3690, 0.044715
      %v3723 = vmul.f32 %v3691, 0.044715
      %v3724 = vmul.f32 %v3692, 0.044715
      %v3725 = vmul.f32 %v3693, 0.044715
      %v3726 = vmul.f32 %v3694, 0.044715
      %v3727 = vmul.f32 %v3695, 0.044715
      %v3728 = vmul.f32 %v3696, 0.044715
      %v3729 = vmul.f32 %v3697, 0.044715
      %v3730 = vmul.f32 %v3698, 0.044715
      %v3731 = vmul.f32 %v3699, 0.044715
      %v3732 = vmul.f32 %v3700, 0.044715
      %v3733 = vmul.f32 %v3701, 0.044715
      %v3734 = vmul.f32 %v3702, 0.044715
      %v3735 = vmul.f32 %v3703, 0.044715
      %v3736 = vmul.f32 %v3704, 0.044715
      %v3737 = vmul.f32 %v3705, 0.044715
      %v3738 = vadd.f32 %v3564, %v3706
      %v3739 = vadd.f32 %v3566, %v3707
      %v3740 = vadd.f32 %v3568, %v3708
      %v3741 = vadd.f32 %v3570, %v3709
      %v3742 = vadd.f32 %v3574, %v3710
      %v3743 = vadd.f32 %v3576, %v3711
      %v3744 = vadd.f32 %v3578, %v3712
      %v3745 = vadd.f32 %v3580, %v3713
      %v3746 = vadd.f32 %v3584, %v3714
      %v3747 = vadd.f32 %v3586, %v3715
      %v3748 = vadd.f32 %v3588, %v3716
      %v3749 = vadd.f32 %v3590, %v3717
      %v3750 = vadd.f32 %v3594, %v3718
      %v3751 = vadd.f32 %v3596, %v3719
      %v3752 = vadd.f32 %v3598, %v3720
      %v3753 = vadd.f32 %v3600, %v3721
      %v3754 = vadd.f32 %v3604, %v3722
      %v3755 = vadd.f32 %v3606, %v3723
      %v3756 = vadd.f32 %v3608, %v3724
      %v3757 = vadd.f32 %v3610, %v3725
      %v3758 = vadd.f32 %v3614, %v3726
      %v3759 = vadd.f32 %v3616, %v3727
      %v3760 = vadd.f32 %v3618, %v3728
      %v3761 = vadd.f32 %v3620, %v3729
      %v3762 = vadd.f32 %v3624, %v3730
      %v3763 = vadd.f32 %v3626, %v3731
      %v3764 = vadd.f32 %v3628, %v3732
      %v3765 = vadd.f32 %v3630, %v3733
      %v3766 = vadd.f32 %v3634, %v3734
      %v3767 = vadd.f32 %v3636, %v3735
      %v3768 = vadd.f32 %v3638, %v3736
      %v3769 = vadd.f32 %v3640, %v3737
      %v3770 = vmul.f32 %v3738, 0.7978846
      %v3771 = vmul.f32 %v3739, 0.7978846
      %v3772 = vmul.f32 %v3740, 0.7978846
      %v3773 = vmul.f32 %v3741, 0.7978846
      %v3774 = vmul.f32 %v3742, 0.7978846
      %v3775 = vmul.f32 %v3743, 0.7978846
      %v3776 = vmul.f32 %v3744, 0.7978846
      %v3777 = vmul.f32 %v3745, 0.7978846
      %v3778 = vmul.f32 %v3746, 0.7978846
      %v3779 = vmul.f32 %v3747, 0.7978846
      %v3780 = vmul.f32 %v3748, 0.7978846
      %v3781 = vmul.f32 %v3749, 0.7978846
      %v3782 = vmul.f32 %v3750, 0.7978846
      %v3783 = vmul.f32 %v3751, 0.7978846
      %v3784 = vmul.f32 %v3752, 0.7978846
      %v3785 = vmul.f32 %v3753, 0.7978846
      %v3786 = vmul.f32 %v3754, 0.7978846
      %v3787 = vmul.f32 %v3755, 0.7978846
      %v3788 = vmul.f32 %v3756, 0.7978846
      %v3789 = vmul.f32 %v3757, 0.7978846
      %v3790 = vmul.f32 %v3758, 0.7978846
      %v3791 = vmul.f32 %v3759, 0.7978846
      %v3792 = vmul.f32 %v3760, 0.7978846
      %v3793 = vmul.f32 %v3761, 0.7978846
      %v3794 = vmul.f32 %v3762, 0.7978846
      %v3795 = vmul.f32 %v3763, 0.7978846
      %v3796 = vmul.f32 %v3764, 0.7978846
      %v3797 = vmul.f32 %v3765, 0.7978846
      %v3798 = vmul.f32 %v3766, 0.7978846
      %v3799 = vmul.f32 %v3767, 0.7978846
      %v3800 = vmul.f32 %v3768, 0.7978846
      %v3801 = vmul.f32 %v3769, 0.7978846
      %v3802 = vtanh.pop %v3770
      %v3803 = vtanh.pop %v3771
      %v3804 = vtanh.pop %v3772
      %v3805 = vtanh.pop %v3773
      %v3806 = vtanh.pop %v3774
      %v3807 = vtanh.pop %v3775
      %v3808 = vtanh.pop %v3776
      %v3809 = vtanh.pop %v3777
      %v3810 = vtanh.pop %v3778
      %v3811 = vtanh.pop %v3779
      %v3812 = vtanh.pop %v3780
      %v3813 = vtanh.pop %v3781
      %v3814 = vtanh.pop %v3782
      %v3815 = vtanh.pop %v3783
      %v3816 = vtanh.pop %v3784
      %v3817 = vtanh.pop %v3785
      %v3818 = vtanh.pop %v3786
      %v3819 = vtanh.pop %v3787
      %v3820 = vtanh.pop %v3788
      %v3821 = vtanh.pop %v3789
      %v3822 = vtanh.pop %v3790
      %v3823 = vtanh.pop %v3791
      %v3824 = vtanh.pop %v3792
      %v3825 = vtanh.pop %v3793
      %v3826 = vtanh.pop %v3794
      %v3827 = vtanh.pop %v3795
      %v3828 = vtanh.pop %v3796
      %v3829 = vtanh.pop %v3797
      %v3830 = vtanh.pop %v3798
      %v3831 = vtanh.pop %v3799
      %v3832 = vtanh.pop %v3800
      %v3833 = vtanh.pop %v3801
      %v3834 = vadd.f32 %v3802, 1.0
      %v3835 = vadd.f32 %v3803, 1.0
      %v3836 = vadd.f32 %v3804, 1.0
      %v3837 = vadd.f32 %v3805, 1.0
      %v3838 = vadd.f32 %v3806, 1.0
      %v3839 = vadd.f32 %v3807, 1.0
      %v3840 = vadd.f32 %v3808, 1.0
      %v3841 = vadd.f32 %v3809, 1.0
      %v3842 = vadd.f32 %v3810, 1.0
      %v3843 = vadd.f32 %v3811, 1.0
      %v3844 = vadd.f32 %v3812, 1.0
      %v3845 = vadd.f32 %v3813, 1.0
      %v3846 = vadd.f32 %v3814, 1.0
      %v3847 = vadd.f32 %v3815, 1.0
      %v3848 = vadd.f32 %v3816, 1.0
      %v3849 = vadd.f32 %v3817, 1.0
      %v3850 = vadd.f32 %v3818, 1.0
      %v3851 = vadd.f32 %v3819, 1.0
      %v3852 = vadd.f32 %v3820, 1.0
      %v3853 = vadd.f32 %v3821, 1.0
      %v3854 = vadd.f32 %v3822, 1.0
      %v3855 = vadd.f32 %v3823, 1.0
      %v3856 = vadd.f32 %v3824, 1.0
      %v3857 = vadd.f32 %v3825, 1.0
      %v3858 = vadd.f32 %v3826, 1.0
      %v3859 = vadd.f32 %v3827, 1.0
      %v3860 = vadd.f32 %v3828, 1.0
      %v3861 = vadd.f32 %v3829, 1.0
      %v3862 = vadd.f32 %v3830, 1.0
      %v3863 = vadd.f32 %v3831, 1.0
      %v3864 = vadd.f32 %v3832, 1.0
      %v3865 = vadd.f32 %v3833, 1.0
      %v3866 = vmul.f32 %v3834, 0.5
      %v3867 = vmul.f32 %v3835, 0.5
      %v3868 = vmul.f32 %v3836, 0.5
      %v3869 = vmul.f32 %v3837, 0.5
      %v3870 = vmul.f32 %v3838, 0.5
      %v3871 = vmul.f32 %v3839, 0.5
      %v3872 = vmul.f32 %v3840, 0.5
      %v3873 = vmul.f32 %v3841, 0.5
      %v3874 = vmul.f32 %v3842, 0.5
      %v3875 = vmul.f32 %v3843, 0.5
      %v3876 = vmul.f32 %v3844, 0.5
      %v3877 = vmul.f32 %v3845, 0.5
      %v3878 = vmul.f32 %v3846, 0.5
      %v3879 = vmul.f32 %v3847, 0.5
      %v3880 = vmul.f32 %v3848, 0.5
      %v3881 = vmul.f32 %v3849, 0.5
      %v3882 = vmul.f32 %v3850, 0.5
      %v3883 = vmul.f32 %v3851, 0.5
      %v3884 = vmul.f32 %v3852, 0.5
      %v3885 = vmul.f32 %v3853, 0.5
      %v3886 = vmul.f32 %v3854, 0.5
      %v3887 = vmul.f32 %v3855, 0.5
      %v3888 = vmul.f32 %v3856, 0.5
      %v3889 = vmul.f32 %v3857, 0.5
      %v3890 = vmul.f32 %v3858, 0.5
      %v3891 = vmul.f32 %v3859, 0.5
      %v3892 = vmul.f32 %v3860, 0.5
      %v3893 = vmul.f32 %v3861, 0.5
      %v3894 = vmul.f32 %v3862, 0.5
      %v3895 = vmul.f32 %v3863, 0.5
      %v3896 = vmul.f32 %v3864, 0.5
      %v3897 = vmul.f32 %v3865, 0.5
      %v3898 = vmul.f32 %v3564, %v3866
      %v3899 = vmul.f32 %v3566, %v3867
      %v3900 = vmul.f32 %v3568, %v3868
      %v3901 = vmul.f32 %v3570, %v3869
      %v3902 = vmul.f32 %v3574, %v3870
      %v3903 = vmul.f32 %v3576, %v3871
      %v3904 = vmul.f32 %v3578, %v3872
      %v3905 = vmul.f32 %v3580, %v3873
      %v3906 = vmul.f32 %v3584, %v3874
      %v3907 = vmul.f32 %v3586, %v3875
      %v3908 = vmul.f32 %v3588, %v3876
      %v3909 = vmul.f32 %v3590, %v3877
      %v3910 = vmul.f32 %v3594, %v3878
      %v3911 = vmul.f32 %v3596, %v3879
      %v3912 = vmul.f32 %v3598, %v3880
      %v3913 = vmul.f32 %v3600, %v3881
      %v3914 = vmul.f32 %v3604, %v3882
      %v3915 = vmul.f32 %v3606, %v3883
      %v3916 = vmul.f32 %v3608, %v3884
      %v3917 = vmul.f32 %v3610, %v3885
      %v3918 = vmul.f32 %v3614, %v3886
      %v3919 = vmul.f32 %v3616, %v3887
      %v3920 = vmul.f32 %v3618, %v3888
      %v3921 = vmul.f32 %v3620, %v3889
      %v3922 = vmul.f32 %v3624, %v3890
      %v3923 = vmul.f32 %v3626, %v3891
      %v3924 = vmul.f32 %v3628, %v3892
      %v3925 = vmul.f32 %v3630, %v3893
      %v3926 = vmul.f32 %v3634, %v3894
      %v3927 = vmul.f32 %v3636, %v3895
      %v3928 = vmul.f32 %v3638, %v3896
      %v3929 = vmul.f32 %v3640, %v3897
      %v3930 = vpack.c.bf16 %v3900, %v3898
      %v3931 = vpack.c.bf16 %v3901, %v3899
      %v3932 = vpack.c.bf16 %v3904, %v3902
      %v3933 = vpack.c.bf16 %v3905, %v3903
      %v3934 = vpack.c.bf16 %v3908, %v3906
      %v3935 = vpack.c.bf16 %v3909, %v3907
      %v3936 = vpack.c.bf16 %v3912, %v3910
      %v3937 = vpack.c.bf16 %v3913, %v3911
      %v3938 = vpack.c.bf16 %v3916, %v3914
      %v3939 = vpack.c.bf16 %v3917, %v3915
      %v3940 = vpack.c.bf16 %v3920, %v3918
      %v3941 = vpack.c.bf16 %v3921, %v3919
      %v3942 = vpack.c.bf16 %v3924, %v3922
      %v3943 = vpack.c.bf16 %v3925, %v3923
      %v3944 = vpack.c.bf16 %v3928, %v3926
      %v3945 = vpack.c.bf16 %v3929, %v3927
      %v3946 = vld [vmem:[%s3 + $0x300] sm:$0xff]
      %v3947 = vld [vmem:[%s3 + $0x308] sm:$0xff]
      %v3948 = vld [vmem:[%s3 + $0x310] sm:$0xff]
      %v3949 = vld [vmem:[%s3 + $0x318] sm:$0xff]
      %v3950 = vld [vmem:[%s3 + $0x320] sm:$0xff]
      %v3951 = vld [vmem:[%s3 + $0x328] sm:$0xff]
      %v3952 = vld [vmem:[%s3 + $0x330] sm:$0xff]
      %v3953 = vld [vmem:[%s3 + $0x338] sm:$0xff]
      %v3954 = vld [vmem:[%s3 + $0x340] sm:$0xff]
      %v3955 = vld [vmem:[%s3 + $0x348] sm:$0xff]
      %v3956 = vld [vmem:[%s3 + $0x350] sm:$0xff]
      %v3957 = vld [vmem:[%s3 + $0x358] sm:$0xff]
      %v3958 = vld [vmem:[%s3 + $0x360] sm:$0xff]
      %v3959 = vld [vmem:[%s3 + $0x368] sm:$0xff]
      %v3960 = vld [vmem:[%s3 + $0x370] sm:$0xff]
      %v3961 = vld [vmem:[%s3 + $0x378] sm:$0xff]
      %v3962 = vld [vmem:[%s3 + $0x380] sm:$0xff]
      %v3963 = vld [vmem:[%s3 + $0x388] sm:$0xff]
      %v3964 = vld [vmem:[%s3 + $0x390] sm:$0xff]
      %v3965 = vld [vmem:[%s3 + $0x398] sm:$0xff]
      %v3966 = vld [vmem:[%s3 + $0x3a0] sm:$0xff]
      %v3967 = vld [vmem:[%s3 + $0x3a8] sm:$0xff]
      %v3968 = vld [vmem:[%s3 + $0x3b0] sm:$0xff]
      %v3969 = vld [vmem:[%s3 + $0x3b8] sm:$0xff]
      %v3970 = vld [vmem:[%s3 + $0x3c0] sm:$0xff]
      %v3971 = vld [vmem:[%s3 + $0x3c8] sm:$0xff]
      %v3972 = vld [vmem:[%s3 + $0x3d0] sm:$0xff]
      %v3973 = vld [vmem:[%s3 + $0x3d8] sm:$0xff]
      %v3974 = vld [vmem:[%s3 + $0x3e0] sm:$0xff]
      %v3975 = vld [vmem:[%s3 + $0x3e8] sm:$0xff]
      %v3976 = vld [vmem:[%s3 + $0x3f0] sm:$0xff]
      %v3977 = vld [vmem:[%s3 + $0x3f8] sm:$0xff]
      %v4010 = vunpack.c.l.b16 %v3946
      %v4011 = vunpack.c.h.b16 %v3946
      %v4012 = vunpack.c.l.b16 %v3947
      %v4013 = vunpack.c.h.b16 %v3947
      %v4014 = vunpack.c.l.b16 %v3948
      %v4015 = vunpack.c.h.b16 %v3948
      %v4016 = vunpack.c.l.b16 %v3949
      %v4017 = vunpack.c.h.b16 %v3949
      %v4018 = vunpack.c.l.b16 %v3950
      %v4019 = vunpack.c.h.b16 %v3950
      %v4020 = vunpack.c.l.b16 %v3951
      %v4021 = vunpack.c.h.b16 %v3951
      %v4022 = vunpack.c.l.b16 %v3952
      %v4023 = vunpack.c.h.b16 %v3952
      %v4024 = vunpack.c.l.b16 %v3953
      %v4025 = vunpack.c.h.b16 %v3953
      %v4026 = vunpack.c.l.b16 %v3954
      %v4027 = vunpack.c.h.b16 %v3954
      %v4028 = vunpack.c.l.b16 %v3955
      %v4029 = vunpack.c.h.b16 %v3955
      %v4030 = vunpack.c.l.b16 %v3956
      %v4031 = vunpack.c.h.b16 %v3956
      %v4032 = vunpack.c.l.b16 %v3957
      %v4033 = vunpack.c.h.b16 %v3957
      %v4034 = vunpack.c.l.b16 %v3958
      %v4035 = vunpack.c.h.b16 %v3958
      %v4036 = vunpack.c.l.b16 %v3959
      %v4037 = vunpack.c.h.b16 %v3959
      %v4038 = vunpack.c.l.b16 %v3960
      %v4039 = vunpack.c.h.b16 %v3960
      %v4040 = vunpack.c.l.b16 %v3961
      %v4041 = vunpack.c.h.b16 %v3961
      %v4042 = vunpack.c.l.b16 %v3962
      %v4043 = vunpack.c.h.b16 %v3962
      %v4044 = vunpack.c.l.b16 %v3963
      %v4045 = vunpack.c.h.b16 %v3963
      %v4046 = vunpack.c.l.b16 %v3964
      %v4047 = vunpack.c.h.b16 %v3964
      %v4048 = vunpack.c.l.b16 %v3965
      %v4049 = vunpack.c.h.b16 %v3965
      %v4050 = vunpack.c.l.b16 %v3966
      %v4051 = vunpack.c.h.b16 %v3966
      %v4052 = vunpack.c.l.b16 %v3967
      %v4053 = vunpack.c.h.b16 %v3967
      %v4054 = vunpack.c.l.b16 %v3968
      %v4055 = vunpack.c.h.b16 %v3968
      %v4056 = vunpack.c.l.b16 %v3969
      %v4057 = vunpack.c.h.b16 %v3969
      %v4058 = vunpack.c.l.b16 %v3970
      %v4059 = vunpack.c.h.b16 %v3970
      %v4060 = vunpack.c.l.b16 %v3971
      %v4061 = vunpack.c.h.b16 %v3971
      %v4062 = vunpack.c.l.b16 %v3972
      %v4063 = vunpack.c.h.b16 %v3972
      %v4064 = vunpack.c.l.b16 %v3973
      %v4065 = vunpack.c.h.b16 %v3973
      %v4066 = vunpack.c.l.b16 %v3974
      %v4067 = vunpack.c.h.b16 %v3974
      %v4068 = vunpack.c.l.b16 %v3975
      %v4069 = vunpack.c.h.b16 %v3975
      %v4070 = vunpack.c.l.b16 %v3976
      %v4071 = vunpack.c.h.b16 %v3976
      %v4072 = vunpack.c.l.b16 %v3977
      %v4073 = vunpack.c.h.b16 %v3977
      %v4074 = vpack.c.b16 %v4012, %v4010
      %v4075 = vpack.c.b16 %v4013, %v4011
      %v4076 = vpack.c.b16 %v4016, %v4014
      %v4077 = vpack.c.b16 %v4017, %v4015
      %v4078 = vpack.c.b16 %v4020, %v4018
      %v4079 = vpack.c.b16 %v4021, %v4019
      %v4080 = vpack.c.b16 %v4024, %v4022
      %v4081 = vpack.c.b16 %v4025, %v4023
      %v4082 = vpack.c.b16 %v4028, %v4026
      %v4083 = vpack.c.b16 %v4029, %v4027
      %v4084 = vpack.c.b16 %v4032, %v4030
      %v4085 = vpack.c.b16 %v4033, %v4031
      %v4086 = vpack.c.b16 %v4036, %v4034
      %v4087 = vpack.c.b16 %v4037, %v4035
      %v4088 = vpack.c.b16 %v4040, %v4038
      %v4089 = vpack.c.b16 %v4041, %v4039
      %v4090 = vpack.c.b16 %v4044, %v4042
      %v4091 = vpack.c.b16 %v4045, %v4043
      %v4092 = vpack.c.b16 %v4048, %v4046
      %v4093 = vpack.c.b16 %v4049, %v4047
      %v4094 = vpack.c.b16 %v4052, %v4050
      %v4095 = vpack.c.b16 %v4053, %v4051
      %v4096 = vpack.c.b16 %v4056, %v4054
      %v4097 = vpack.c.b16 %v4057, %v4055
      %v4098 = vpack.c.b16 %v4060, %v4058
      %v4099 = vpack.c.b16 %v4061, %v4059
      %v4100 = vpack.c.b16 %v4064, %v4062
      %v4101 = vpack.c.b16 %v4065, %v4063
      %v4102 = vpack.c.b16 %v4068, %v4066
      %v4103 = vpack.c.b16 %v4069, %v4067
      %v4104 = vpack.c.b16 %v4072, %v4070
      %v4105 = vpack.c.b16 %v4073, %v4071
      %4138 = vmatprep.subr.bf16.mxu0 %v4075
      %4139 = vmatpush1.bf16.msra.mxu0 %v4074
      %4140 = vmatprep.subr.bf16.mxu0 %v4077
      %4141 = vmatpush1.bf16.msra.mxu0 %v4076
      %4142 = vmatprep.subr.bf16.mxu0 %v4079
      %4143 = vmatpush1.bf16.msra.mxu0 %v4078
      %4144 = vmatprep.subr.bf16.mxu0 %v4081
      %4145 = vmatpush1.bf16.msra.mxu0 %v4080
      %4146 = vmatprep.subr.bf16.mxu0 %v4083
      %4147 = vmatpush1.bf16.msra.mxu0 %v4082
      %4148 = vmatprep.subr.bf16.mxu0 %v4085
      %4149 = vmatpush1.bf16.msra.mxu0 %v4084
      %4150 = vmatprep.subr.bf16.mxu0 %v4087
      %4151 = vmatpush1.bf16.msra.mxu0 %v4086
      %4152 = vmatprep.subr.bf16.mxu0 %v4089
      %4153 = vmatpush1.bf16.msra.mxu0 %v4088
      %4154 = vmatprep.subr.bf16.mxu0 %v4091
      %4155 = vmatpush1.bf16.msra.mxu0 %v4090
      %4156 = vmatprep.subr.bf16.mxu0 %v4093
      %4157 = vmatpush1.bf16.msra.mxu0 %v4092
      %4158 = vmatprep.subr.bf16.mxu0 %v4095
      %4159 = vmatpush1.bf16.msra.mxu0 %v4094
      %4160 = vmatprep.subr.bf16.mxu0 %v4097
      %4161 = vmatpush1.bf16.msra.mxu0 %v4096
      %4162 = vmatprep.subr.bf16.mxu0 %v4099
      %4163 = vmatpush1.bf16.msra.mxu0 %v4098
      %4164 = vmatprep.subr.bf16.mxu0 %v4101
      %4165 = vmatpush1.bf16.msra.mxu0 %v4100
      %4166 = vmatprep.subr.bf16.mxu0 %v4103
      %4167 = vmatpush1.bf16.msra.mxu0 %v4102
      %4168 = vmatprep.subr.bf16.mxu0 %v4105
      %4169 = vmatpush1.bf16.msra.mxu0 %v4104
      %4170 = vmatprep.mubr.bf16.mxu0 %v3931
      %4171 = vmatmul.mubr.bf16.gmra.mrb[0].mxu0 %v3930
      %v4172 = vpop.f32.mrb[0].mxu0
      %v4173 = vadd.f32 0.0, %v4172
      %v4174 = vpop.f32.mrb[0].mxu0
      %v4175 = vadd.f32 0.0, %v4174
      %v4176 = vpop.f32.mrb[0].mxu0
      %v4177 = vadd.f32 0.0, %v4176
      %v4178 = vpop.f32.mrb[0].mxu0
      %v4179 = vadd.f32 0.0, %v4178
      %4180 = vmatprep.mubr.bf16.mxu0 %v3933
      %4181 = vmatmul.mubr.bf16.gmra.mrb[0].mxu0 %v3932
      %v4182 = vpop.f32.mrb[0].mxu0
      %v4183 = vadd.f32 0.0, %v4182
      %v4184 = vpop.f32.mrb[0].mxu0
      %v4185 = vadd.f32 0.0, %v4184
      %v4186 = vpop.f32.mrb[0].mxu0
      %v4187 = vadd.f32 0.0, %v4186
      %v4188 = vpop.f32.mrb[0].mxu0
      %v4189 = vadd.f32 0.0, %v4188
      %4190 = vmatprep.mubr.bf16.mxu0 %v3935
      %4191 = vmatmul.mubr.bf16.gmra.mrb[0].mxu0 %v3934
      %v4192 = vpop.f32.mrb[0].mxu0
      %v4193 = vadd.f32 0.0, %v4192
      %v4194 = vpop.f32.mrb[0].mxu0
      %v4195 = vadd.f32 0.0, %v4194
      %v4196 = vpop.f32.mrb[0].mxu0
      %v4197 = vadd.f32 0.0, %v4196
      %v4198 = vpop.f32.mrb[0].mxu0
      %v4199 = vadd.f32 0.0, %v4198
      %4200 = vmatprep.mubr.bf16.mxu0 %v3937
      %4201 = vmatmul.mubr.bf16.gmra.mrb[0].mxu0 %v3936
      %v4202 = vpop.f32.mrb[0].mxu0
      %v4203 = vadd.f32 0.0, %v4202
      %v4204 = vpop.f32.mrb[0].mxu0
      %v4205 = vadd.f32 0.0, %v4204
      %v4206 = vpop.f32.mrb[0].mxu0
      %v4207 = vadd.f32 0.0, %v4206
      %v4208 = vpop.f32.mrb[0].mxu0
      %v4209 = vadd.f32 0.0, %v4208
      %4210 = vmatprep.mubr.bf16.mxu0 %v3939
      %4211 = vmatmul.mubr.bf16.gmra.mrb[0].mxu0 %v3938
      %v4212 = vpop.f32.mrb[0].mxu0
      %v4213 = vadd.f32 0.0, %v4212
      %v4214 = vpop.f32.mrb[0].mxu0
      %v4215 = vadd.f32 0.0, %v4214
      %v4216 = vpop.f32.mrb[0].mxu0
      %v4217 = vadd.f32 0.0, %v4216
      %v4218 = vpop.f32.mrb[0].mxu0
      %v4219 = vadd.f32 0.0, %v4218
      %4220 = vmatprep.mubr.bf16.mxu0 %v3941
      %4221 = vmatmul.mubr.bf16.gmra.mrb[0].mxu0 %v3940
      %v4222 = vpop.f32.mrb[0].mxu0
      %v4223 = vadd.f32 0.0, %v4222
      %v4224 = vpop.f32.mrb[0].mxu0
      %v4225 = vadd.f32 0.0, %v4224
      %v4226 = vpop.f32.mrb[0].mxu0
      %v4227 = vadd.f32 0.0, %v4226
      %v4228 = vpop.f32.mrb[0].mxu0
      %v4229 = vadd.f32 0.0, %v4228
      %4230 = vmatprep.mubr.bf16.mxu0 %v3943
      %4231 = vmatmul.mubr.bf16.gmra.mrb[0].mxu0 %v3942
      %v4232 = vpop.f32.mrb[0].mxu0
      %v4233 = vadd.f32 0.0, %v4232
      %v4234 = vpop.f32.mrb[0].mxu0
      %v4235 = vadd.f32 0.0, %v4234
      %v4236 = vpop.f32.mrb[0].mxu0
      %v4237 = vadd.f32 0.0, %v4236
      %v4238 = vpop.f32.mrb[0].mxu0
      %v4239 = vadd.f32 0.0, %v4238
      %4240 = vmatprep.mubr.bf16.mxu0 %v3945
      %4241 = vmatmul.mubr.bf16.gmra.mrb[0].mxu0 %v3944
      %v4242 = vpop.f32.mrb[0].mxu0
      %v4243 = vadd.f32 0.0, %v4242
      %v4244 = vpop.f32.mrb[0].mxu0
      %v4245 = vadd.f32 0.0, %v4244
      %v4246 = vpop.f32.mrb[0].mxu0
      %v4247 = vadd.f32 0.0, %v4246
      %v4248 = vpop.f32.mrb[0].mxu0
      %v4249 = vadd.f32 0.0, %v4248
      %4250 = vdwg.mxu0
      %v4251 = vadd.f32 %v3293, %v4173
      %v4252 = vadd.f32 %v3294, %v4175
      %v4253 = vadd.f32 %v3295, %v4177
      %v4254 = vadd.f32 %v3296, %v4179
      %v4255 = vadd.f32 %v3297, %v4183
      %v4256 = vadd.f32 %v3298, %v4185
      %v4257 = vadd.f32 %v3299, %v4187
      %v4258 = vadd.f32 %v3300, %v4189
      %v4259 = vadd.f32 %v3301, %v4193
      %v4260 = vadd.f32 %v3302, %v4195
      %v4261 = vadd.f32 %v3303, %v4197
      %v4262 = vadd.f32 %v3304, %v4199
      %v4263 = vadd.f32 %v3305, %v4203
      %v4264 = vadd.f32 %v3306, %v4205
      %v4265 = vadd.f32 %v3307, %v4207
      %v4266 = vadd.f32 %v3308, %v4209
      %v4267 = vadd.f32 %v3309, %v4213
      %v4268 = vadd.f32 %v3310, %v4215
      %v4269 = vadd.f32 %v3311, %v4217
      %v4270 = vadd.f32 %v3312, %v4219
      %v4271 = vadd.f32 %v3313, %v4223
      %v4272 = vadd.f32 %v3314, %v4225
      %v4273 = vadd.f32 %v3315, %v4227
      %v4274 = vadd.f32 %v3316, %v4229
      %v4275 = vadd.f32 %v3317, %v4233
      %v4276 = vadd.f32 %v3318, %v4235
      %v4277 = vadd.f32 %v3319, %v4237
      %v4278 = vadd.f32 %v3320, %v4239
      %v4279 = vadd.f32 %v3321, %v4243
      %v4280 = vadd.f32 %v3322, %v4245
      %v4281 = vadd.f32 %v3323, %v4247
      %v4282 = vadd.f32 %v3324, %v4249
      %v4283 = vld [vmem:[%s5] sm:$0x3]
      %v4284 = vld [vmem:[%s6] sm:$0x3]
      %v4285 = vadd.f32 %v4251, %v4252
      %4286 = vadd.xlane.f32.xlu0 %v4285
      %v4287 = vpop.xlane.xlu0 %4286
      %v4288 = vadd.f32 %v4253, %v4254
      %4289 = vadd.xlane.f32.xlu0 %v4288
      %v4290 = vpop.xlane.xlu0 %4289
      %v4291 = vadd.f32 %v4255, %v4256
      %4292 = vadd.xlane.f32.xlu0 %v4291
      %v4293 = vpop.xlane.xlu0 %4292
      %v4294 = vadd.f32 %v4257, %v4258
      %4295 = vadd.xlane.f32.xlu0 %v4294
      %v4296 = vpop.xlane.xlu0 %4295
      %v4297 = vadd.f32 %v4259, %v4260
      %4298 = vadd.xlane.f32.xlu0 %v4297
      %v4299 = vpop.xlane.xlu0 %4298
      %v4300 = vadd.f32 %v4261, %v4262
      %4301 = vadd.xlane.f32.xlu0 %v4300
      %v4302 = vpop.xlane.xlu0 %4301
      %v4303 = vadd.f32 %v4263, %v4264
      %4304 = vadd.xlane.f32.xlu0 %v4303
      %v4305 = vpop.xlane.xlu0 %4304
      %v4306 = vadd.f32 %v4265, %v4266
      %4307 = vadd.xlane.f32.xlu0 %v4306
      %v4308 = vpop.xlane.xlu0 %4307
      %v4309 = vadd.f32 %v4267, %v4268
      %4310 = vadd.xlane.f32.xlu0 %v4309
      %v4311 = vpop.xlane.xlu0 %4310
      %v4312 = vadd.f32 %v4269, %v4270
      %4313 = vadd.xlane.f32.xlu0 %v4312
      %v4314 = vpop.xlane.xlu0 %4313
      %v4315 = vadd.f32 %v4271, %v4272
      %4316 = vadd.xlane.f32.xlu0 %v4315
      %v4317 = vpop.xlane.xlu0 %4316
      %v4318 = vadd.f32 %v4273, %v4274
      %4319 = vadd.xlane.f32.xlu0 %v4318
      %v4320 = vpop.xlane.xlu0 %4319
      %v4321 = vadd.f32 %v4275, %v4276
      %4322 = vadd.xlane.f32.xlu0 %v4321
      %v4323 = vpop.xlane.xlu0 %4322
      %v4324 = vadd.f32 %v4277, %v4278
      %4325 = vadd.xlane.f32.xlu0 %v4324
      %v4326 = vpop.xlane.xlu0 %4325
      %v4327 = vadd.f32 %v4279, %v4280
      %4328 = vadd.xlane.f32.xlu0 %v4327
      %v4329 = vpop.xlane.xlu0 %4328
      %v4330 = vadd.f32 %v4281, %v4282
      %4331 = vadd.xlane.f32.xlu0 %v4330
      %v4332 = vpop.xlane.xlu0 %4331
      %v4333 = vrcp.pop 256.0
      %v4334 = vmul.f32 %v4287, %v4333
      %v4335 = vmul.f32 %v4290, %v4333
      %v4336 = vmul.f32 %v4293, %v4333
      %v4337 = vmul.f32 %v4296, %v4333
      %v4338 = vmul.f32 %v4299, %v4333
      %v4339 = vmul.f32 %v4302, %v4333
      %v4340 = vmul.f32 %v4305, %v4333
      %v4341 = vmul.f32 %v4308, %v4333
      %v4342 = vmul.f32 %v4311, %v4333
      %v4343 = vmul.f32 %v4314, %v4333
      %v4344 = vmul.f32 %v4317, %v4333
      %v4345 = vmul.f32 %v4320, %v4333
      %v4346 = vmul.f32 %v4323, %v4333
      %v4347 = vmul.f32 %v4326, %v4333
      %v4348 = vmul.f32 %v4329, %v4333
      %v4349 = vmul.f32 %v4332, %v4333
      %v4350 = vsub.f32 %v4251, %v4334
      %v4351 = vsub.f32 %v4252, %v4334
      %v4352 = vsub.f32 %v4253, %v4335
      %v4353 = vsub.f32 %v4254, %v4335
      %v4354 = vsub.f32 %v4255, %v4336
      %v4355 = vsub.f32 %v4256, %v4336
      %v4356 = vsub.f32 %v4257, %v4337
      %v4357 = vsub.f32 %v4258, %v4337
      %v4358 = vsub.f32 %v4259, %v4338
      %v4359 = vsub.f32 %v4260, %v4338
      %v4360 = vsub.f32 %v4261, %v4339
      %v4361 = vsub.f32 %v4262, %v4339
      %v4362 = vsub.f32 %v4263, %v4340
      %v4363 = vsub.f32 %v4264, %v4340
      %v4364 = vsub.f32 %v4265, %v4341
      %v4365 = vsub.f32 %v4266, %v4341
      %v4366 = vsub.f32 %v4267, %v4342
      %v4367 = vsub.f32 %v4268, %v4342
      %v4368 = vsub.f32 %v4269, %v4343
      %v4369 = vsub.f32 %v4270, %v4343
      %v4370 = vsub.f32 %v4271, %v4344
      %v4371 = vsub.f32 %v4272, %v4344
      %v4372 = vsub.f32 %v4273, %v4345
      %v4373 = vsub.f32 %v4274, %v4345
      %v4374 = vsub.f32 %v4275, %v4346
      %v4375 = vsub.f32 %v4276, %v4346
      %v4376 = vsub.f32 %v4277, %v4347
      %v4377 = vsub.f32 %v4278, %v4347
      %v4378 = vsub.f32 %v4279, %v4348
      %v4379 = vsub.f32 %v4280, %v4348
      %v4380 = vsub.f32 %v4281, %v4349
      %v4381 = vsub.f32 %v4282, %v4349
      %v4382 = vmul.f32 %v4350, %v4350
      %v4383 = vmul.f32 %v4351, %v4351
      %v4384 = vmul.f32 %v4352, %v4352
      %v4385 = vmul.f32 %v4353, %v4353
      %v4386 = vmul.f32 %v4354, %v4354
      %v4387 = vmul.f32 %v4355, %v4355
      %v4388 = vmul.f32 %v4356, %v4356
      %v4389 = vmul.f32 %v4357, %v4357
      %v4390 = vmul.f32 %v4358, %v4358
      %v4391 = vmul.f32 %v4359, %v4359
      %v4392 = vmul.f32 %v4360, %v4360
      %v4393 = vmul.f32 %v4361, %v4361
      %v4394 = vmul.f32 %v4362, %v4362
      %v4395 = vmul.f32 %v4363, %v4363
      %v4396 = vmul.f32 %v4364, %v4364
      %v4397 = vmul.f32 %v4365, %v4365
      %v4398 = vmul.f32 %v4366, %v4366
      %v4399 = vmul.f32 %v4367, %v4367
      %v4400 = vmul.f32 %v4368, %v4368
      %v4401 = vmul.f32 %v4369, %v4369
      %v4402 = vmul.f32 %v4370, %v4370
      %v4403 = vmul.f32 %v4371, %v4371
      %v4404 = vmul.f32 %v4372, %v4372
      %v4405 = vmul.f32 %v4373, %v4373
      %v4406 = vmul.f32 %v4374, %v4374
      %v4407 = vmul.f32 %v4375, %v4375
      %v4408 = vmul.f32 %v4376, %v4376
      %v4409 = vmul.f32 %v4377, %v4377
      %v4410 = vmul.f32 %v4378, %v4378
      %v4411 = vmul.f32 %v4379, %v4379
      %v4412 = vmul.f32 %v4380, %v4380
      %v4413 = vmul.f32 %v4381, %v4381
      %v4414 = vadd.f32 %v4382, %v4383
      %4415 = vadd.xlane.f32.xlu0 %v4414
      %v4416 = vpop.xlane.xlu0 %4415
      %v4417 = vadd.f32 %v4384, %v4385
      %4418 = vadd.xlane.f32.xlu0 %v4417
      %v4419 = vpop.xlane.xlu0 %4418
      %v4420 = vadd.f32 %v4386, %v4387
      %4421 = vadd.xlane.f32.xlu0 %v4420
      %v4422 = vpop.xlane.xlu0 %4421
      %v4423 = vadd.f32 %v4388, %v4389
      %4424 = vadd.xlane.f32.xlu0 %v4423
      %v4425 = vpop.xlane.xlu0 %4424
      %v4426 = vadd.f32 %v4390, %v4391
      %4427 = vadd.xlane.f32.xlu0 %v4426
      %v4428 = vpop.xlane.xlu0 %4427
      %v4429 = vadd.f32 %v4392, %v4393
      %4430 = vadd.xlane.f32.xlu0 %v4429
      %v4431 = vpop.xlane.xlu0 %4430
      %v4432 = vadd.f32 %v4394, %v4395
      %4433 = vadd.xlane.f32.xlu0 %v4432
      %v4434 = vpop.xlane.xlu0 %4433
      %v4435 = vadd.f32 %v4396, %v4397
      %4436 = vadd.xlane.f32.xlu0 %v4435
      %v4437 = vpop.xlane.xlu0 %4436
      %v4438 = vadd.f32 %v4398, %v4399
      %4439 = vadd.xlane.f32.xlu0 %v4438
      %v4440 = vpop.xlane.xlu0 %4439
      %v4441 = vadd.f32 %v4400, %v4401
      %4442 = vadd.xlane.f32.xlu0 %v4441
      %v4443 = vpop.xlane.xlu0 %4442
      %v4444 = vadd.f32 %v4402, %v4403
      %4445 = vadd.xlane.f32.xlu0 %v4444
      %v4446 = vpop.xlane.xlu0 %4445
      %v4447 = vadd.f32 %v4404, %v4405
      %4448 = vadd.xlane.f32.xlu0 %v4447
      %v4449 = vpop.xlane.xlu0 %4448
      %v4450 = vadd.f32 %v4406, %v4407
      %4451 = vadd.xlane.f32.xlu0 %v4450
      %v4452 = vpop.xlane.xlu0 %4451
      %v4453 = vadd.f32 %v4408, %v4409
      %4454 = vadd.xlane.f32.xlu0 %v4453
      %v4455 = vpop.xlane.xlu0 %4454
      %v4456 = vadd.f32 %v4410, %v4411
      %4457 = vadd.xlane.f32.xlu0 %v4456
      %v4458 = vpop.xlane.xlu0 %4457
      %v4459 = vadd.f32 %v4412, %v4413
      %4460 = vadd.xlane.f32.xlu0 %v4459
      %v4461 = vpop.xlane.xlu0 %4460
      %v4462 = vmul.f32 %v4416, %v4333
      %v4463 = vmul.f32 %v4419, %v4333
      %v4464 = vmul.f32 %v4422, %v4333
      %v4465 = vmul.f32 %v4425, %v4333
      %v4466 = vmul.f32 %v4428, %v4333
      %v4467 = vmul.f32 %v4431, %v4333
      %v4468 = vmul.f32 %v4434, %v4333
      %v4469 = vmul.f32 %v4437, %v4333
      %v4470 = vmul.f32 %v4440, %v4333
      %v4471 = vmul.f32 %v4443, %v4333
      %v4472 = vmul.f32 %v4446, %v4333
      %v4473 = vmul.f32 %v4449, %v4333
      %v4474 = vmul.f32 %v4452, %v4333
      %v4475 = vmul.f32 %v4455, %v4333
      %v4476 = vmul.f32 %v4458, %v4333
      %v4477 = vmul.f32 %v4461, %v4333
      %v4478 = vadd.f32 %v4462, 1e-12
      %v4479 = vadd.f32 %v4463, 1e-12
      %v4480 = vadd.f32 %v4464, 1e-12
      %v4481 = vadd.f32 %v4465, 1e-12
      %v4482 = vadd.f32 %v4466, 1e-12
      %v4483 = vadd.f32 %v4467, 1e-12
      %v4484 = vadd.f32 %v4468, 1e-12
      %v4485 = vadd.f32 %v4469, 1e-12
      %v4486 = vadd.f32 %v4470, 1e-12
      %v4487 = vadd.f32 %v4471, 1e-12
      %v4488 = vadd.f32 %v4472, 1e-12
      %v4489 = vadd.f32 %v4473, 1e-12
      %v4490 = vadd.f32 %v4474, 1e-12
      %v4491 = vadd.f32 %v4475, 1e-12
      %v4492 = vadd.f32 %v4476, 1e-12
      %v4493 = vadd.f32 %v4477, 1e-12
      %v4494 = vrsqrt.pop %v4478
      %v4495 = vrsqrt.pop %v4479
      %v4496 = vrsqrt.pop %v4480
      %v4497 = vrsqrt.pop %v4481
      %v4498 = vrsqrt.pop %v4482
      %v4499 = vrsqrt.pop %v4483
      %v4500 = vrsqrt.pop %v4484
      %v4501 = vrsqrt.pop %v4485
      %v4502 = vrsqrt.pop %v4486
      %v4503 = vrsqrt.pop %v4487
      %v4504 = vrsqrt.pop %v4488
      %v4505 = vrsqrt.pop %v4489
      %v4506 = vrsqrt.pop %v4490
      %v4507 = vrsqrt.pop %v4491
      %v4508 = vrsqrt.pop %v4492
      %v4509 = vrsqrt.pop %v4493
      %v4510 = vmul.f32 %v4350, %v4494
      %v4511 = vmul.f32 %v4351, %v4494
      %v4512 = vmul.f32 %v4352, %v4495
      %v4513 = vmul.f32 %v4353, %v4495
      %v4514 = vmul.f32 %v4354, %v4496
      %v4515 = vmul.f32 %v4355, %v4496
      %v4516 = vmul.f32 %v4356, %v4497
      %v4517 = vmul.f32 %v4357, %v4497
      %v4518 = vmul.f32 %v4358, %v4498
      %v4519 = vmul.f32 %v4359, %v4498
      %v4520 = vmul.f32 %v4360, %v4499
      %v4521 = vmul.f32 %v4361, %v4499
      %v4522 = vmul.f32 %v4362, %v4500
      %v4523 = vmul.f32 %v4363, %v4500
      %v4524 = vmul.f32 %v4364, %v4501
      %v4525 = vmul.f32 %v4365, %v4501
      %v4526 = vmul.f32 %v4366, %v4502
      %v4527 = vmul.f32 %v4367, %v4502
      %v4528 = vmul.f32 %v4368, %v4503
      %v4529 = vmul.f32 %v4369, %v4503
      %v4530 = vmul.f32 %v4370, %v4504
      %v4531 = vmul.f32 %v4371, %v4504
      %v4532 = vmul.f32 %v4372, %v4505
      %v4533 = vmul.f32 %v4373, %v4505
      %v4534 = vmul.f32 %v4374, %v4506
      %v4535 = vmul.f32 %v4375, %v4506
      %v4536 = vmul.f32 %v4376, %v4507
      %v4537 = vmul.f32 %v4377, %v4507
      %v4538 = vmul.f32 %v4378, %v4508
      %v4539 = vmul.f32 %v4379, %v4508
      %v4540 = vmul.f32 %v4380, %v4509
      %v4541 = vmul.f32 %v4381, %v4509
      %v4543 = vlaneseq
      %v4544 = vshrl.u32 %v4543, 7
      %v4545 = vsub.s32 0, %v4544
      %v4546 = vrot.slane %v4283, %v4545
      %v4547 = vlaneseq
      %v4548 = vshrl.u32 %v4547, 7
      %v4549 = vsub.s32 1, %v4548
      %v4550 = vrot.slane %v4283, %v4549
      %v4553 = vmul.f32 %v4510, %v4546
      %v4554 = vmul.f32 %v4511, %v4550
      %v4555 = vmul.f32 %v4512, %v4546
      %v4556 = vmul.f32 %v4513, %v4550
      %v4557 = vmul.f32 %v4514, %v4546
      %v4558 = vmul.f32 %v4515, %v4550
      %v4559 = vmul.f32 %v4516, %v4546
      %v4560 = vmul.f32 %v4517, %v4550
      %v4561 = vmul.f32 %v4518, %v4546
      %v4562 = vmul.f32 %v4519, %v4550
      %v4563 = vmul.f32 %v4520, %v4546
      %v4564 = vmul.f32 %v4521, %v4550
      %v4565 = vmul.f32 %v4522, %v4546
      %v4566 = vmul.f32 %v4523, %v4550
      %v4567 = vmul.f32 %v4524, %v4546
      %v4568 = vmul.f32 %v4525, %v4550
      %v4569 = vmul.f32 %v4526, %v4546
      %v4570 = vmul.f32 %v4527, %v4550
      %v4571 = vmul.f32 %v4528, %v4546
      %v4572 = vmul.f32 %v4529, %v4550
      %v4573 = vmul.f32 %v4530, %v4546
      %v4574 = vmul.f32 %v4531, %v4550
      %v4575 = vmul.f32 %v4532, %v4546
      %v4576 = vmul.f32 %v4533, %v4550
      %v4577 = vmul.f32 %v4534, %v4546
      %v4578 = vmul.f32 %v4535, %v4550
      %v4579 = vmul.f32 %v4536, %v4546
      %v4580 = vmul.f32 %v4537, %v4550
      %v4581 = vmul.f32 %v4538, %v4546
      %v4582 = vmul.f32 %v4539, %v4550
      %v4583 = vmul.f32 %v4540, %v4546
      %v4584 = vmul.f32 %v4541, %v4550
      %v4586 = vlaneseq
      %v4587 = vshrl.u32 %v4586, 7
      %v4588 = vsub.s32 0, %v4587
      %v4589 = vrot.slane %v4284, %v4588
      %v4590 = vlaneseq
      %v4591 = vshrl.u32 %v4590, 7
      %v4592 = vsub.s32 1, %v4591
      %v4593 = vrot.slane %v4284, %v4592
      %v4596 = vadd.f32 %v4553, %v4589
      %v4597 = vadd.f32 %v4554, %v4593
      %v4598 = vadd.f32 %v4555, %v4589
      %v4599 = vadd.f32 %v4556, %v4593
      %v4600 = vadd.f32 %v4557, %v4589
      %v4601 = vadd.f32 %v4558, %v4593
      %v4602 = vadd.f32 %v4559, %v4589
      %v4603 = vadd.f32 %v4560, %v4593
      %v4604 = vadd.f32 %v4561, %v4589
      %v4605 = vadd.f32 %v4562, %v4593
      %v4606 = vadd.f32 %v4563, %v4589
      %v4607 = vadd.f32 %v4564, %v4593
      %v4608 = vadd.f32 %v4565, %v4589
      %v4609 = vadd.f32 %v4566, %v4593
      %v4610 = vadd.f32 %v4567, %v4589
      %v4611 = vadd.f32 %v4568, %v4593
      %v4612 = vadd.f32 %v4569, %v4589
      %v4613 = vadd.f32 %v4570, %v4593
      %v4614 = vadd.f32 %v4571, %v4589
      %v4615 = vadd.f32 %v4572, %v4593
      %v4616 = vadd.f32 %v4573, %v4589
      %v4617 = vadd.f32 %v4574, %v4593
      %v4618 = vadd.f32 %v4575, %v4589
      %v4619 = vadd.f32 %v4576, %v4593
      %v4620 = vadd.f32 %v4577, %v4589
      %v4621 = vadd.f32 %v4578, %v4593
      %v4622 = vadd.f32 %v4579, %v4589
      %v4623 = vadd.f32 %v4580, %v4593
      %v4624 = vadd.f32 %v4581, %v4589
      %v4625 = vadd.f32 %v4582, %v4593
      %v4626 = vadd.f32 %v4583, %v4589
      %v4627 = vadd.f32 %v4584, %v4593
      %v4628 = vpack.c.bf16 %v4598, %v4596
      %v4629 = vpack.c.bf16 %v4599, %v4597
      %v4630 = vpack.c.bf16 %v4602, %v4600
      %v4631 = vpack.c.bf16 %v4603, %v4601
      %v4632 = vpack.c.bf16 %v4606, %v4604
      %v4633 = vpack.c.bf16 %v4607, %v4605
      %v4634 = vpack.c.bf16 %v4610, %v4608
      %v4635 = vpack.c.bf16 %v4611, %v4609
      %v4636 = vpack.c.bf16 %v4614, %v4612
      %v4637 = vpack.c.bf16 %v4615, %v4613
      %v4638 = vpack.c.bf16 %v4618, %v4616
      %v4639 = vpack.c.bf16 %v4619, %v4617
      %v4640 = vpack.c.bf16 %v4622, %v4620
      %v4641 = vpack.c.bf16 %v4623, %v4621
      %v4642 = vpack.c.bf16 %v4626, %v4624
      %v4643 = vpack.c.bf16 %v4627, %v4625
      %v4660 = vunpack.c.l.b16 %v4628
      %v4661 = vunpack.c.l.b16 %v4629
      %v4662 = vunpack.c.h.b16 %v4628
      %v4663 = vunpack.c.h.b16 %v4629
      %v4664 = vunpack.c.l.b16 %v4630
      %v4665 = vunpack.c.l.b16 %v4631
      %v4666 = vunpack.c.h.b16 %v4630
      %v4667 = vunpack.c.h.b16 %v4631
      %v4668 = vunpack.c.l.b16 %v4632
      %v4669 = vunpack.c.l.b16 %v4633
      %v4670 = vunpack.c.h.b16 %v4632
      %v4671 = vunpack.c.h.b16 %v4633
      %v4672 = vunpack.c.l.b16 %v4634
      %v4673 = vunpack.c.l.b16 %v4635
      %v4674 = vunpack.c.h.b16 %v4634
      %v4675 = vunpack.c.h.b16 %v4635
      %v4676 = vunpack.c.l.b16 %v4636
      %v4677 = vunpack.c.l.b16 %v4637
      %v4678 = vunpack.c.h.b16 %v4636
      %v4679 = vunpack.c.h.b16 %v4637
      %v4680 = vunpack.c.l.b16 %v4638
      %v4681 = vunpack.c.l.b16 %v4639
      %v4682 = vunpack.c.h.b16 %v4638
      %v4683 = vunpack.c.h.b16 %v4639
      %v4684 = vunpack.c.l.b16 %v4640
      %v4685 = vunpack.c.l.b16 %v4641
      %v4686 = vunpack.c.h.b16 %v4640
      %v4687 = vunpack.c.h.b16 %v4641
      %v4688 = vunpack.c.l.b16 %v4642
      %v4689 = vunpack.c.l.b16 %v4643
      %v4690 = vunpack.c.h.b16 %v4642
      %v4691 = vunpack.c.h.b16 %v4643
      %v4692 = vpack.c.b16 %v4661, %v4660
      %v4693 = vpack.c.b16 %v4663, %v4662
      %v4694 = vpack.c.b16 %v4665, %v4664
      %v4695 = vpack.c.b16 %v4667, %v4666
      %v4696 = vpack.c.b16 %v4669, %v4668
      %v4697 = vpack.c.b16 %v4671, %v4670
      %v4698 = vpack.c.b16 %v4673, %v4672
      %v4699 = vpack.c.b16 %v4675, %v4674
      %v4700 = vpack.c.b16 %v4677, %v4676
      %v4701 = vpack.c.b16 %v4679, %v4678
      %v4702 = vpack.c.b16 %v4681, %v4680
      %v4703 = vpack.c.b16 %v4683, %v4682
      %v4704 = vpack.c.b16 %v4685, %v4684
      %v4705 = vpack.c.b16 %v4687, %v4686
      %v4706 = vpack.c.b16 %v4689, %v4688
      %v4707 = vpack.c.b16 %v4691, %v4690
      %4724 = vst [vmem:[%s278] sm:$0xff] %v4692
      %4725 = vst [vmem:[%s278 + $0x8] sm:$0xff] %v4693
      %4726 = vst [vmem:[%s278 + $0x10] sm:$0xff] %v4694
      %4727 = vst [vmem:[%s278 + $0x18] sm:$0xff] %v4695
      %4728 = vst [vmem:[%s278 + $0x20] sm:$0xff] %v4696
      %4729 = vst [vmem:[%s278 + $0x28] sm:$0xff] %v4697
      %4730 = vst [vmem:[%s278 + $0x30] sm:$0xff] %v4698
      %4731 = vst [vmem:[%s278 + $0x38] sm:$0xff] %v4699
      %4732 = vst [vmem:[%s278 + $0x40] sm:$0xff] %v4700
      %4733 = vst [vmem:[%s278 + $0x48] sm:$0xff] %v4701
      %4734 = vst [vmem:[%s278 + $0x50] sm:$0xff] %v4702
      %4735 = vst [vmem:[%s278 + $0x58] sm:$0xff] %v4703
      %4736 = vst [vmem:[%s278 + $0x60] sm:$0xff] %v4704
      %4737 = vst [vmem:[%s278 + $0x68] sm:$0xff] %v4705
      %4738 = vst [vmem:[%s278 + $0x70] sm:$0xff] %v4706
      %4739 = vst [vmem:[%s278 + $0x78] sm:$0xff] %v4707
      %p4740 = scmp.lt.s32.totalorder %s18, 1
      %s4741 = scalar_select %p4740, %s18, 1
      %s4742 = smul.addr %s4741, 32
      %s4743 = smul.addr %s4742, 4
      %s4744 = scalar_lea.vmem %s7, %s4743
      // Predicated region
      $region49: #{bert_forward.7} parent=47 // pred_check
        %p4745 = pneg %p188
      $region50: #{bert_forward.7} parent=47 // pred_check_branch
        %4747 = sbr.rel (%p4745) target = $region52
      $region51: #{bert_forward.7} parent=47 // pred_region
        _
      $region52: #{bert_forward.7} parent=47 // pred_fallthru
        _
    $region48: #{bert_forward.7} parent=5 // pred_fallthru
      _
    %p4748 = scmp.le.s32.totalorder 2, %s13
    // Predicated region
    $region53: #{bert_forward.7} parent=5 // pred_check
      %p4749 = pneg %p4748
    $region54: #{bert_forward.7} parent=5 // pred_check_branch
      %4751 = sbr.rel (%p4749) target = $region56
    $region55: #{bert_forward.7} parent=5 // pred_region
      %s4752 = ssub.s32 %s13, 2
      // Predicated region
      $region57: #{bert_forward.7} parent=55 // pred_check
        %p4753 = pneg %p194
      $region58: #{bert_forward.7} parent=55 // pred_check_branch
        %4755 = sbr.rel (%p4753) target = $region60
      $region59: #{bert_forward.7} parent=55 // pred_region
        %p4756 = scmp.lt.s32.totalorder %s19, 1
        %s4757 = scalar_select %p4756, %s19, 1
        %s4758 = smul.addr %s4757, 32
        %s4759 = smul.addr %s4758, 4
        %s4760 = scalar_lea.vmem %s7, %s4759
      $region60: #{bert_forward.7} parent=55 // pred_fallthru
        _
    $region56: #{bert_forward.7} parent=5 // pred_fallthru
      _
  $region6: #{bert_forward.7} parent=0 // loop_footer
    %s17 = sadd.s32 1, %s13
  $region7: #{bert_forward.7} parent=0 // loop_footer_branch
    %12 = sbr.rel target = $region3
  $region8: #{bert_forward.7} parent=0 // loop_exit
    _

</llo_original>
